<compile_context>
chip_gen: v7x
topology: tpu7x:2x2x1
jax: 0.10.0
libtpu: 0.0.40
codegen_flags: <defaults>
</compile_context>

<pallas_src>
import jax
import jax.numpy as jnp
from jax import lax
from jax.experimental import pallas as pl
from jax.experimental.pallas import tpu as pltpu

_EPS = 1e-5
_K = 4          # every deconv in this model is 4x4
_S = 2          # layers 2-4 stride
_LANE = 128     # lane-dense padding for the final 3-channel output


# ----------------------------- Pallas kernels ------------------------------

def _batch_stats(ys, cnt):
    """Single-pass per-channel mean/var over a list of (M, C) f32 tiles."""
    s1 = sum(jnp.sum(y, axis=0, keepdims=True) for y in ys)
    s2 = sum(jnp.sum(y * y, axis=0, keepdims=True) for y in ys)
    mean = s1 / cnt
    var = jnp.maximum(s2 / cnt - mean * mean, 0.0)
    return mean, var


def _layer1_kernel(z_ref, w_ref, b_ref, g_ref, be_ref, o_ref):
    """deconv1 on a 1x1 input == 16 outer-product matmuls, fused with BN + ReLU.

    z: (N, 100)  w: (16, 100, C1)  b/g/be: (1, C1)  o: (16, N, C1)
    (leading 16 = output spatial position ky*4+kx).
    """
    z = z_ref[...]
    b = b_ref[...]
    ys = [jnp.dot(z, w_ref[s], preferred_element_type=jnp.float32) + b
          for s in range(16)]
    cnt = float(16 * ys[0].shape[0])               # N*H*W samples per channel
    mean, var = _batch_stats(ys, cnt)
    scale = lax.rsqrt(var + _EPS) * g_ref[...]
    shift = be_ref[...] - mean * scale
    for s in range(16):
        o_ref[s] = jnp.maximum(ys[s] * scale + shift, 0.0)


def _deconv_bn_relu_kernel(x_ref, w_ref, b_ref, g_ref, be_ref, o_ref):
    """4 stride-phase matmuls (no structural zeros) + batch-stat BN + ReLU.

    x: (4, Mp, 4*Cin)  w: (4, 4*Cin, Cout)  b/g/be: (1, Cout)  o: (4, Mp, Cout).
    BN statistics are taken over all 4 phases and all Mp rows == the full
    (N, OH, OW) output, exactly like nn.BatchNorm2d in training mode.
    """
    b = b_ref[...]
    ys = [jnp.dot(x_ref[p], w_ref[p], preferred_element_type=jnp.float32) + b
          for p in range(4)]
    cnt = float(4 * ys[0].shape[0])
    mean, var = _batch_stats(ys, cnt)
    scale = lax.rsqrt(var + _EPS) * g_ref[...]
    shift = be_ref[...] - mean * scale
    for p in range(4):
        o_ref[p] = jnp.maximum(ys[p] * scale + shift, 0.0)


def _deconv_sigmoid_kernel(x_ref, w_ref, b_ref, o_ref):
    """4 stride-phase matmuls + bias + sigmoid (channels lane-padded to 128)."""
    b = b_ref[...]
    for p in range(4):
        y = jnp.dot(x_ref[p], w_ref[p], preferred_element_type=jnp.float32) + b
        o_ref[p] = jax.nn.sigmoid(y)


# ------------------------------ kernel wrappers -----------------------------

def _full_spec(shape):
    zeros = (0,) * len(shape)
    return pl.BlockSpec(shape, lambda i: zeros)


_CPARAMS = pltpu.CompilerParams(
    dimension_semantics=("arbitrary",),
    vmem_limit_bytes=32 * 1024 * 1024,
)


def _layer1(z, w1, b1, g1, be1):
    N = z.shape[0]
    c1 = w1.shape[1]
    # (Cin, Cout, K, K) -> (K*K, Cin, Cout): one (100, c1) matrix per output pixel.
    w = jnp.transpose(w1, (2, 3, 0, 1)).reshape(16, 100, c1)
    out = pl.pallas_call(
        _layer1_kernel,
        out_shape=jax.ShapeDtypeStruct((16, N, c1), jnp.float32),
        grid=(1,),
        in_specs=[_full_spec((N, 100)), _full_spec((16, 100, c1)),
                  _full_spec((1, c1)), _full_spec((1, c1)), _full_spec((1, c1))],
        out_specs=_full_spec((16, N, c1)),
        compiler_params=_CPARAMS,
        cost_estimate=pl.CostEstimate(
            flops=2 * 16 * N * 100 * c1, transcendentals=0,
            bytes_accessed=(N * 100 + 16 * 100 * c1) * 2 + 16 * N * c1 * 4 + 3 * c1 * 4),
    )(z.astype(jnp.bfloat16), w.astype(jnp.bfloat16),
      b1.reshape(1, c1), g1.reshape(1, c1), be1.reshape(1, c1))
    # (16, N, c1) -> NHWC (N, 4, 4, c1)
    return jnp.transpose(out, (1, 0, 2)).reshape(N, 4, 4, c1)


# ------------- stride-phase decomposition (JAX glue, data movement only) -----

def _phase_taps(padding, parity):
    """1-D taps for K=4, stride=2.  Returns (flipped/forward-conv) kernel taps k
    and input offsets d such that output row 2m+parity uses input rows m+d
    (zero outside range)."""
    q = _K - 1 - padding
    ks = [k for k in range(_K) if (k - (q - parity)) % 2 == 0]
    ds = [(parity + k - q) // 2 for k in ks]
    return ks, ds


def _phase_decompose(x, w_t, padding):
    """x: (N, IH, IW, Cin) NHWC; w_t: ConvTranspose2d weight (Cin, Cout, 4, 4).

    Returns X_phases (4, N*OHp*OWp, 4*Cin), W_phases (4, 4*Cin, Cout), (N,OHp,OWp)
    where output[n, 2m+py, 2l+px, :] = X_phases[py*2+px] @ W_phases[py*2+px] + b.
    """
    N, IH, IW, Cin = x.shape
    OH = (IH - 1) * _S - 2 * padding + _K
    OW = (IW - 1) * _S - 2 * padding + _K
    OHp, OWp = OH // 2, OW // 2
    xp = jnp.pad(x, ((0, 0), (1, 1), (1, 1), (0, 0)))   # halo of 1 covers all taps
    xs, ws = [], []
    for py in range(2):
        kys, dys = _phase_taps(padding, py)
        for px in range(2):
            kxs, dxs = _phase_taps(padding, px)
            cols, rows = [], []
            for ky, dy in zip(kys, dys):
                for kx, dx in zip(kxs, dxs):
                    cols.append(xp[:, dy + 1:dy + 1 + OHp, dx + 1:dx + 1 + OWp, :])
                    # flipped tap of the equivalent forward conv
                    rows.append(w_t[:, :, _K - 1 - ky, _K - 1 - kx])      # (Cin, Cout)
            xs.append(jnp.concatenate(cols, axis=-1).reshape(N * OHp * OWp, 4 * Cin))
            ws.append(jnp.concatenate(rows, axis=0))                      # (4*Cin, Cout)
    return jnp.stack(xs, axis=0), jnp.stack(ws, axis=0), (N, OHp, OWp)


def _phase_interleave(out, N, OHp, OWp):
    """(4, N*OHp*OWp, C) phase-major -> (N, 2*OHp, 2*OWp, C)."""
    C = out.shape[-1]
    y = out.reshape(2, 2, N, OHp, OWp, C)
    return jnp.transpose(y, (2, 3, 0, 4, 1, 5)).reshape(N, 2 * OHp, 2 * OWp, C)


def deconv_bn_relu(x, w_t, b, g, be, *, padding):
    Xp, Wp, (N, OHp, OWp) = _phase_decompose(x, w_t, padding)
    Cout = w_t.shape[1]
    Mp, Kp = Xp.shape[1], Xp.shape[2]
    out = pl.pallas_call(
        _deconv_bn_relu_kernel,
        out_shape=jax.ShapeDtypeStruct((4, Mp, Cout), jnp.float32),
        grid=(1,),
        in_specs=[_full_spec((4, Mp, Kp)), _full_spec((4, Kp, Cout)),
                  _full_spec((1, Cout)), _full_spec((1, Cout)), _full_spec((1, Cout))],
        out_specs=_full_spec((4, Mp, Cout)),
        compiler_params=_CPARAMS,
        cost_estimate=pl.CostEstimate(
            flops=2 * 4 * Mp * Kp * Cout, transcendentals=4 * Cout,
            bytes_accessed=4 * Mp * Kp * 2 + 4 * Kp * Cout * 2 + 4 * Mp * Cout * 4),
    )(Xp.astype(jnp.bfloat16), Wp.astype(jnp.bfloat16),
      b.reshape(1, Cout), g.reshape(1, Cout), be.reshape(1, Cout))
    return _phase_interleave(out, N, OHp, OWp)


def deconv_sigmoid(x, w_t, b, *, padding):
    Xp, Wp, (N, OHp, OWp) = _phase_decompose(x, w_t, padding)
    Cout = w_t.shape[1]
    Mp, Kp = Xp.shape[1], Xp.shape[2]
    # Lane-dense output: pad Cout (=3) to 128 with zero weights/bias; slice after.
    Cpad = _LANE
    Wpad = jnp.zeros((4, Kp, Cpad), jnp.float32).at[:, :, :Cout].set(Wp)
    bpad = jnp.zeros((1, Cpad), jnp.float32).at[:, :Cout].set(b.reshape(1, Cout))
    out = pl.pallas_call(
        _deconv_sigmoid_kernel,
        out_shape=jax.ShapeDtypeStruct((4, Mp, Cpad), jnp.float32),
        grid=(1,),
        in_specs=[_full_spec((4, Mp, Kp)), _full_spec((4, Kp, Cpad)),
                  _full_spec((1, Cpad))],
        out_specs=_full_spec((4, Mp, Cpad)),
        compiler_params=_CPARAMS,
        cost_estimate=pl.CostEstimate(
            flops=2 * 4 * Mp * Kp * Cpad, transcendentals=4 * Mp * Cpad,
            bytes_accessed=4 * Mp * Kp * 2 + 4 * Kp * Cpad * 2 + 4 * Mp * Cpad * 4),
    )(Xp.astype(jnp.bfloat16), Wpad.astype(jnp.bfloat16), bpad)
    return _phase_interleave(out[:, :, :Cout], N, OHp, OWp)


# ------------------------------ Generator ----------------------------------

def init_params(key, nf):
    """Deterministic synthetic params (DCGAN-style init). nf == module's `bs`."""
    ks = jax.random.split(key, 10)
    c1, c2, c3 = nf * 8, nf * 4, nf * 2

    def conv_w(k, cin, cout):
        return jax.random.normal(k, (cin, cout, 4, 4), jnp.float32) * 0.02

    return dict(
        w1=conv_w(ks[0], 100, c1), b1=jnp.zeros((c1,), jnp.float32),
        g1=1.0 + 0.02 * jax.random.normal(ks[1], (c1,), jnp.float32),
        be1=0.02 * jax.random.normal(ks[2], (c1,), jnp.float32),
        w2=conv_w(ks[3], c1, c2), b2=jnp.zeros((c2,), jnp.float32),
        g2=1.0 + 0.02 * jax.random.normal(ks[4], (c2,), jnp.float32),
        be2=0.02 * jax.random.normal(ks[5], (c2,), jnp.float32),
        w3=conv_w(ks[6], c2, c3), b3=jnp.zeros((c3,), jnp.float32),
        g3=1.0 + 0.02 * jax.random.normal(ks[7], (c3,), jnp.float32),
        be3=0.02 * jax.random.normal(ks[8], (c3,), jnp.float32),
        w4=conv_w(ks[9], c3, 3), b4=jnp.zeros((3,), jnp.float32),
    )


def generator_forward(params, z):
    """z: (N, 100) -> (N, 3, 28, 28), matching the PyTorch Generator.forward."""
    x = _layer1(z, params["w1"], params["b1"], params["g1"], params["be1"])       # (N,4,4,8nf)
    x = deconv_bn_relu(x, params["w2"], params["b2"], params["g2"], params["be2"],
                       padding=1)                                                 # (N,8,8,4nf)
    x = deconv_bn_relu(x, params["w3"], params["b3"], params["g3"], params["be3"],
                       padding=2)                                                 # (N,14,14,2nf)
    x = deconv_sigmoid(x, params["w4"], params["b4"], padding=1)                  # (N,28,28,3)
    return jnp.transpose(x, (0, 3, 1, 2))                                         # NCHW


# --------------------- pure-JAX reference (correctness check) ---------------

def _ref_conv_transpose(x, w_t, b, *, stride, padding):
    rhs = jnp.transpose(w_t[:, :, ::-1, ::-1], (2, 3, 0, 1))   # (K, K, Cin, Cout)
    pad = _K - 1 - padding
    y = lax.conv_general_dilated(
        x, rhs, window_strides=(1, 1), padding=((pad, pad), (pad, pad)),
        lhs_dilation=(stride, stride),
        dimension_numbers=("NHWC", "HWIO", "NHWC"),
        precision=lax.Precision.HIGHEST)
    return y + b


def _ref_bn_relu(x, g, be):
    mean = jnp.mean(x, axis=(0, 1, 2), keepdims=True)
    var = jnp.mean((x - mean) ** 2, axis=(0, 1, 2), keepdims=True)
    return jnp.maximum((x - mean) * lax.rsqrt(var + _EPS) * g + be, 0.0)


def reference_forward(params, z):
    N = z.shape[0]
    x = z.reshape(N, 1, 1, 100)
    x = _ref_conv_transpose(x, params["w1"], params["b1"], stride=1, padding=0)
    x = _ref_bn_relu(x, params["g1"], params["be1"])
    x = _ref_conv_transpose(x, params["w2"], params["b2"], stride=2, padding=1)
    x = _ref_bn_relu(x, params["g2"], params["be2"])
    x = _ref_conv_transpose(x, params["w3"], params["b3"], stride=2, padding=2)
    x = _ref_bn_relu(x, params["g3"], params["be3"])
    x = _ref_conv_transpose(x, params["w4"], params["b4"], stride=2, padding=1)
    x = jax.nn.sigmoid(x)
    return jnp.transpose(x, (0, 3, 1, 2))


if __name__ == "__main__":
    nf = 8        # the module's `bs` knob (64 in the checkpoint); small here
    batch = 2
    key = jax.random.PRNGKey(0)
    pkey, zkey = jax.random.split(key)
    params = init_params(pkey, nf)
    z = jax.random.normal(zkey, (batch, 100), jnp.float32)

    out = jax.jit(generator_forward)(params, z)
    out = jax.block_until_ready(out)

    assert out.shape == (batch, 3, 28, 28), out.shape
    assert out.dtype == jnp.float32
    assert bool(jnp.all(jnp.isfinite(out)))
    assert bool(jnp.all((out >= 0.0) & (out <= 1.0)))   # sigmoid output range

    ref = jax.block_until_ready(jax.jit(reference_forward)(params, z))
    max_err = float(jnp.max(jnp.abs(out - ref)))
    assert max_err < 5e-2, f"max |pallas - reference| = {max_err}"

    print("KERNEL_OK")
</pallas_src>

<mosaic_0001>
module attributes {stable_mosaic.version = 11 : i64} {
  func.func @_layer1_kernel(%arg0: i32, %arg1: memref<2x100xbf16, #tpu.memory_space<vmem>>, %arg2: memref<16x100x64xbf16, #tpu.memory_space<vmem>>, %arg3: memref<1x64xf32, #tpu.memory_space<vmem>>, %arg4: memref<1x64xf32, #tpu.memory_space<vmem>>, %arg5: memref<1x64xf32, #tpu.memory_space<vmem>>, %arg6: memref<16x2x64xf32, #tpu.memory_space<vmem>>) attributes {dimension_semantics = [#tpu.dimension_semantics<arbitrary>], iteration_bounds = array<i64: 1>, scalar_prefetch = 0 : i64, scratch_operands = 0 : i64, tpu.core_type = #tpu.core_type<tc>, window_params = [{pipeline_mode = #tpu.pipeline_mode<synchronous>, transform_indices = @transform_0, window_bounds = array<i64: 2, 100>}, {pipeline_mode = #tpu.pipeline_mode<synchronous>, transform_indices = @transform_1, window_bounds = array<i64: 16, 100, 64>}, {pipeline_mode = #tpu.pipeline_mode<synchronous>, transform_indices = @transform_2, window_bounds = array<i64: 1, 64>}, {pipeline_mode = #tpu.pipeline_mode<synchronous>, transform_indices = @transform_3, window_bounds = array<i64: 1, 64>}, {pipeline_mode = #tpu.pipeline_mode<synchronous>, transform_indices = @transform_4, window_bounds = array<i64: 1, 64>}, {pipeline_mode = #tpu.pipeline_mode<synchronous>, transform_indices = @transform_5, window_bounds = array<i64: 16, 2, 64>}]} {
    %c0 = arith.constant 0 : index
    %c0_0 = arith.constant 0 : index
    %0 = vector.load %arg1[%c0, %c0_0] : memref<2x100xbf16, #tpu.memory_space<vmem>>, vector<2x100xbf16>
    %c0_1 = arith.constant 0 : index
    %c0_2 = arith.constant 0 : index
    %1 = vector.load %arg3[%c0_1, %c0_2] : memref<1x64xf32, #tpu.memory_space<vmem>>, vector<1x64xf32>
    %c0_3 = arith.constant 0 : index
    %c0_4 = arith.constant 0 : index
    %c0_5 = arith.constant 0 : index
    %2 = vector.load %arg2[%c0_3, %c0_4, %c0_5] : memref<16x100x64xbf16, #tpu.memory_space<vmem>>, vector<1x100x64xbf16>
    %3 = vector.shape_cast %2 : vector<1x100x64xbf16> to vector<100x64xbf16>
    %cst = arith.constant dense<0.000000e+00> : vector<2x64xf32>
    %4 = tpu.matmul %0, %3, %cst {dimension_numbers = #tpu.dot_dimension_numbers<[1], [0], [0], [1], [0, 0, 1, 1], [], []>} : vector<2x100xbf16>, vector<100x64xbf16>, vector<2x64xf32> -> vector<2x64xf32>
    %5 = vector.broadcast %1 : vector<1x64xf32> to vector<2x64xf32>
    %6 = arith.addf %4, %5 : vector<2x64xf32>
    %c1 = arith.constant 1 : index
    %c0_6 = arith.constant 0 : index
    %c0_7 = arith.constant 0 : index
    %7 = vector.load %arg2[%c1, %c0_6, %c0_7] : memref<16x100x64xbf16, #tpu.memory_space<vmem>>, vector<1x100x64xbf16>
    %8 = vector.shape_cast %7 : vector<1x100x64xbf16> to vector<100x64xbf16>
    %cst_8 = arith.constant dense<0.000000e+00> : vector<2x64xf32>
    %9 = tpu.matmul %0, %8, %cst_8 {dimension_numbers = #tpu.dot_dimension_numbers<[1], [0], [0], [1], [0, 0, 1, 1], [], []>} : vector<2x100xbf16>, vector<100x64xbf16>, vector<2x64xf32> -> vector<2x64xf32>
    %10 = vector.broadcast %1 : vector<1x64xf32> to vector<2x64xf32>
    %11 = arith.addf %9, %10 : vector<2x64xf32>
    %c2 = arith.constant 2 : index
    %c0_9 = arith.constant 0 : index
    %c0_10 = arith.constant 0 : index
    %12 = vector.load %arg2[%c2, %c0_9, %c0_10] : memref<16x100x64xbf16, #tpu.memory_space<vmem>>, vector<1x100x64xbf16>
    %13 = vector.shape_cast %12 : vector<1x100x64xbf16> to vector<100x64xbf16>
    %cst_11 = arith.constant dense<0.000000e+00> : vector<2x64xf32>
    %14 = tpu.matmul %0, %13, %cst_11 {dimension_numbers = #tpu.dot_dimension_numbers<[1], [0], [0], [1], [0, 0, 1, 1], [], []>} : vector<2x100xbf16>, vector<100x64xbf16>, vector<2x64xf32> -> vector<2x64xf32>
    %15 = vector.broadcast %1 : vector<1x64xf32> to vector<2x64xf32>
    %16 = arith.addf %14, %15 : vector<2x64xf32>
    %c3 = arith.constant 3 : index
    %c0_12 = arith.constant 0 : index
    %c0_13 = arith.constant 0 : index
    %17 = vector.load %arg2[%c3, %c0_12, %c0_13] : memref<16x100x64xbf16, #tpu.memory_space<vmem>>, vector<1x100x64xbf16>
    %18 = vector.shape_cast %17 : vector<1x100x64xbf16> to vector<100x64xbf16>
    %cst_14 = arith.constant dense<0.000000e+00> : vector<2x64xf32>
    %19 = tpu.matmul %0, %18, %cst_14 {dimension_numbers = #tpu.dot_dimension_numbers<[1], [0], [0], [1], [0, 0, 1, 1], [], []>} : vector<2x100xbf16>, vector<100x64xbf16>, vector<2x64xf32> -> vector<2x64xf32>
    %20 = vector.broadcast %1 : vector<1x64xf32> to vector<2x64xf32>
    %21 = arith.addf %19, %20 : vector<2x64xf32>
    %c4 = arith.constant 4 : index
    %c0_15 = arith.constant 0 : index
    %c0_16 = arith.constant 0 : index
    %22 = vector.load %arg2[%c4, %c0_15, %c0_16] : memref<16x100x64xbf16, #tpu.memory_space<vmem>>, vector<1x100x64xbf16>
    %23 = vector.shape_cast %22 : vector<1x100x64xbf16> to vector<100x64xbf16>
    %cst_17 = arith.constant dense<0.000000e+00> : vector<2x64xf32>
    %24 = tpu.matmul %0, %23, %cst_17 {dimension_numbers = #tpu.dot_dimension_numbers<[1], [0], [0], [1], [0, 0, 1, 1], [], []>} : vector<2x100xbf16>, vector<100x64xbf16>, vector<2x64xf32> -> vector<2x64xf32>
    %25 = vector.broadcast %1 : vector<1x64xf32> to vector<2x64xf32>
    %26 = arith.addf %24, %25 : vector<2x64xf32>
    %c5 = arith.constant 5 : index
    %c0_18 = arith.constant 0 : index
    %c0_19 = arith.constant 0 : index
    %27 = vector.load %arg2[%c5, %c0_18, %c0_19] : memref<16x100x64xbf16, #tpu.memory_space<vmem>>, vector<1x100x64xbf16>
    %28 = vector.shape_cast %27 : vector<1x100x64xbf16> to vector<100x64xbf16>
    %cst_20 = arith.constant dense<0.000000e+00> : vector<2x64xf32>
    %29 = tpu.matmul %0, %28, %cst_20 {dimension_numbers = #tpu.dot_dimension_numbers<[1], [0], [0], [1], [0, 0, 1, 1], [], []>} : vector<2x100xbf16>, vector<100x64xbf16>, vector<2x64xf32> -> vector<2x64xf32>
    %30 = vector.broadcast %1 : vector<1x64xf32> to vector<2x64xf32>
    %31 = arith.addf %29, %30 : vector<2x64xf32>
    %c6 = arith.constant 6 : index
    %c0_21 = arith.constant 0 : index
    %c0_22 = arith.constant 0 : index
    %32 = vector.load %arg2[%c6, %c0_21, %c0_22] : memref<16x100x64xbf16, #tpu.memory_space<vmem>>, vector<1x100x64xbf16>
    %33 = vector.shape_cast %32 : vector<1x100x64xbf16> to vector<100x64xbf16>
    %cst_23 = arith.constant dense<0.000000e+00> : vector<2x64xf32>
    %34 = tpu.matmul %0, %33, %cst_23 {dimension_numbers = #tpu.dot_dimension_numbers<[1], [0], [0], [1], [0, 0, 1, 1], [], []>} : vector<2x100xbf16>, vector<100x64xbf16>, vector<2x64xf32> -> vector<2x64xf32>
    %35 = vector.broadcast %1 : vector<1x64xf32> to vector<2x64xf32>
    %36 = arith.addf %34, %35 : vector<2x64xf32>
    %c7 = arith.constant 7 : index
    %c0_24 = arith.constant 0 : index
    %c0_25 = arith.constant 0 : index
    %37 = vector.load %arg2[%c7, %c0_24, %c0_25] : memref<16x100x64xbf16, #tpu.memory_space<vmem>>, vector<1x100x64xbf16>
    %38 = vector.shape_cast %37 : vector<1x100x64xbf16> to vector<100x64xbf16>
    %cst_26 = arith.constant dense<0.000000e+00> : vector<2x64xf32>
    %39 = tpu.matmul %0, %38, %cst_26 {dimension_numbers = #tpu.dot_dimension_numbers<[1], [0], [0], [1], [0, 0, 1, 1], [], []>} : vector<2x100xbf16>, vector<100x64xbf16>, vector<2x64xf32> -> vector<2x64xf32>
    %40 = vector.broadcast %1 : vector<1x64xf32> to vector<2x64xf32>
    %41 = arith.addf %39, %40 : vector<2x64xf32>
    %c8 = arith.constant 8 : index
    %c0_27 = arith.constant 0 : index
    %c0_28 = arith.constant 0 : index
    %42 = vector.load %arg2[%c8, %c0_27, %c0_28] : memref<16x100x64xbf16, #tpu.memory_space<vmem>>, vector<1x100x64xbf16>
    %43 = vector.shape_cast %42 : vector<1x100x64xbf16> to vector<100x64xbf16>
    %cst_29 = arith.constant dense<0.000000e+00> : vector<2x64xf32>
    %44 = tpu.matmul %0, %43, %cst_29 {dimension_numbers = #tpu.dot_dimension_numbers<[1], [0], [0], [1], [0, 0, 1, 1], [], []>} : vector<2x100xbf16>, vector<100x64xbf16>, vector<2x64xf32> -> vector<2x64xf32>
    %45 = vector.broadcast %1 : vector<1x64xf32> to vector<2x64xf32>
    %46 = arith.addf %44, %45 : vector<2x64xf32>
    %c9 = arith.constant 9 : index
    %c0_30 = arith.constant 0 : index
    %c0_31 = arith.constant 0 : index
    %47 = vector.load %arg2[%c9, %c0_30, %c0_31] : memref<16x100x64xbf16, #tpu.memory_space<vmem>>, vector<1x100x64xbf16>
    %48 = vector.shape_cast %47 : vector<1x100x64xbf16> to vector<100x64xbf16>
    %cst_32 = arith.constant dense<0.000000e+00> : vector<2x64xf32>
    %49 = tpu.matmul %0, %48, %cst_32 {dimension_numbers = #tpu.dot_dimension_numbers<[1], [0], [0], [1], [0, 0, 1, 1], [], []>} : vector<2x100xbf16>, vector<100x64xbf16>, vector<2x64xf32> -> vector<2x64xf32>
    %50 = vector.broadcast %1 : vector<1x64xf32> to vector<2x64xf32>
    %51 = arith.addf %49, %50 : vector<2x64xf32>
    %c10 = arith.constant 10 : index
    %c0_33 = arith.constant 0 : index
    %c0_34 = arith.constant 0 : index
    %52 = vector.load %arg2[%c10, %c0_33, %c0_34] : memref<16x100x64xbf16, #tpu.memory_space<vmem>>, vector<1x100x64xbf16>
    %53 = vector.shape_cast %52 : vector<1x100x64xbf16> to vector<100x64xbf16>
    %cst_35 = arith.constant dense<0.000000e+00> : vector<2x64xf32>
    %54 = tpu.matmul %0, %53, %cst_35 {dimension_numbers = #tpu.dot_dimension_numbers<[1], [0], [0], [1], [0, 0, 1, 1], [], []>} : vector<2x100xbf16>, vector<100x64xbf16>, vector<2x64xf32> -> vector<2x64xf32>
    %55 = vector.broadcast %1 : vector<1x64xf32> to vector<2x64xf32>
    %56 = arith.addf %54, %55 : vector<2x64xf32>
    %c11 = arith.constant 11 : index
    %c0_36 = arith.constant 0 : index
    %c0_37 = arith.constant 0 : index
    %57 = vector.load %arg2[%c11, %c0_36, %c0_37] : memref<16x100x64xbf16, #tpu.memory_space<vmem>>, vector<1x100x64xbf16>
    %58 = vector.shape_cast %57 : vector<1x100x64xbf16> to vector<100x64xbf16>
    %cst_38 = arith.constant dense<0.000000e+00> : vector<2x64xf32>
    %59 = tpu.matmul %0, %58, %cst_38 {dimension_numbers = #tpu.dot_dimension_numbers<[1], [0], [0], [1], [0, 0, 1, 1], [], []>} : vector<2x100xbf16>, vector<100x64xbf16>, vector<2x64xf32> -> vector<2x64xf32>
    %60 = vector.broadcast %1 : vector<1x64xf32> to vector<2x64xf32>
    %61 = arith.addf %59, %60 : vector<2x64xf32>
    %c12 = arith.constant 12 : index
    %c0_39 = arith.constant 0 : index
    %c0_40 = arith.constant 0 : index
    %62 = vector.load %arg2[%c12, %c0_39, %c0_40] : memref<16x100x64xbf16, #tpu.memory_space<vmem>>, vector<1x100x64xbf16>
    %63 = vector.shape_cast %62 : vector<1x100x64xbf16> to vector<100x64xbf16>
    %cst_41 = arith.constant dense<0.000000e+00> : vector<2x64xf32>
    %64 = tpu.matmul %0, %63, %cst_41 {dimension_numbers = #tpu.dot_dimension_numbers<[1], [0], [0], [1], [0, 0, 1, 1], [], []>} : vector<2x100xbf16>, vector<100x64xbf16>, vector<2x64xf32> -> vector<2x64xf32>
    %65 = vector.broadcast %1 : vector<1x64xf32> to vector<2x64xf32>
    %66 = arith.addf %64, %65 : vector<2x64xf32>
    %c13 = arith.constant 13 : index
    %c0_42 = arith.constant 0 : index
    %c0_43 = arith.constant 0 : index
    %67 = vector.load %arg2[%c13, %c0_42, %c0_43] : memref<16x100x64xbf16, #tpu.memory_space<vmem>>, vector<1x100x64xbf16>
    %68 = vector.shape_cast %67 : vector<1x100x64xbf16> to vector<100x64xbf16>
    %cst_44 = arith.constant dense<0.000000e+00> : vector<2x64xf32>
    %69 = tpu.matmul %0, %68, %cst_44 {dimension_numbers = #tpu.dot_dimension_numbers<[1], [0], [0], [1], [0, 0, 1, 1], [], []>} : vector<2x100xbf16>, vector<100x64xbf16>, vector<2x64xf32> -> vector<2x64xf32>
    %70 = vector.broadcast %1 : vector<1x64xf32> to vector<2x64xf32>
    %71 = arith.addf %69, %70 : vector<2x64xf32>
    %c14 = arith.constant 14 : index
    %c0_45 = arith.constant 0 : index
    %c0_46 = arith.constant 0 : index
    %72 = vector.load %arg2[%c14, %c0_45, %c0_46] : memref<16x100x64xbf16, #tpu.memory_space<vmem>>, vector<1x100x64xbf16>
    %73 = vector.shape_cast %72 : vector<1x100x64xbf16> to vector<100x64xbf16>
    %cst_47 = arith.constant dense<0.000000e+00> : vector<2x64xf32>
    %74 = tpu.matmul %0, %73, %cst_47 {dimension_numbers = #tpu.dot_dimension_numbers<[1], [0], [0], [1], [0, 0, 1, 1], [], []>} : vector<2x100xbf16>, vector<100x64xbf16>, vector<2x64xf32> -> vector<2x64xf32>
    %75 = vector.broadcast %1 : vector<1x64xf32> to vector<2x64xf32>
    %76 = arith.addf %74, %75 : vector<2x64xf32>
    %c15 = arith.constant 15 : index
    %c0_48 = arith.constant 0 : index
    %c0_49 = arith.constant 0 : index
    %77 = vector.load %arg2[%c15, %c0_48, %c0_49] : memref<16x100x64xbf16, #tpu.memory_space<vmem>>, vector<1x100x64xbf16>
    %78 = vector.shape_cast %77 : vector<1x100x64xbf16> to vector<100x64xbf16>
    %cst_50 = arith.constant dense<0.000000e+00> : vector<2x64xf32>
    %79 = tpu.matmul %0, %78, %cst_50 {dimension_numbers = #tpu.dot_dimension_numbers<[1], [0], [0], [1], [0, 0, 1, 1], [], []>} : vector<2x100xbf16>, vector<100x64xbf16>, vector<2x64xf32> -> vector<2x64xf32>
    %80 = vector.broadcast %1 : vector<1x64xf32> to vector<2x64xf32>
    %81 = arith.addf %79, %80 : vector<2x64xf32>
    %cst_51 = arith.constant dense<0.000000e+00> : vector<64xf32>
    %82 = vector.multi_reduction <add>, %6, %cst_51 [0] : vector<2x64xf32> to vector<64xf32>
    %83 = vector.shape_cast %82 : vector<64xf32> to vector<1x64xf32>
    %cst_52 = arith.constant 0.000000e+00 : f32
    %84 = vector.broadcast %cst_52 : f32 to vector<1x64xf32>
    %85 = arith.addf %84, %83 : vector<1x64xf32>
    %cst_53 = arith.constant dense<0.000000e+00> : vector<64xf32>
    %86 = vector.multi_reduction <add>, %11, %cst_53 [0] : vector<2x64xf32> to vector<64xf32>
    %87 = vector.shape_cast %86 : vector<64xf32> to vector<1x64xf32>
    %88 = arith.addf %85, %87 : vector<1x64xf32>
    %cst_54 = arith.constant dense<0.000000e+00> : vector<64xf32>
    %89 = vector.multi_reduction <add>, %16, %cst_54 [0] : vector<2x64xf32> to vector<64xf32>
    %90 = vector.shape_cast %89 : vector<64xf32> to vector<1x64xf32>
    %91 = arith.addf %88, %90 : vector<1x64xf32>
    %cst_55 = arith.constant dense<0.000000e+00> : vector<64xf32>
    %92 = vector.multi_reduction <add>, %21, %cst_55 [0] : vector<2x64xf32> to vector<64xf32>
    %93 = vector.shape_cast %92 : vector<64xf32> to vector<1x64xf32>
    %94 = arith.addf %91, %93 : vector<1x64xf32>
    %cst_56 = arith.constant dense<0.000000e+00> : vector<64xf32>
    %95 = vector.multi_reduction <add>, %26, %cst_56 [0] : vector<2x64xf32> to vector<64xf32>
    %96 = vector.shape_cast %95 : vector<64xf32> to vector<1x64xf32>
    %97 = arith.addf %94, %96 : vector<1x64xf32>
    %cst_57 = arith.constant dense<0.000000e+00> : vector<64xf32>
    %98 = vector.multi_reduction <add>, %31, %cst_57 [0] : vector<2x64xf32> to vector<64xf32>
    %99 = vector.shape_cast %98 : vector<64xf32> to vector<1x64xf32>
    %100 = arith.addf %97, %99 : vector<1x64xf32>
    %cst_58 = arith.constant dense<0.000000e+00> : vector<64xf32>
    %101 = vector.multi_reduction <add>, %36, %cst_58 [0] : vector<2x64xf32> to vector<64xf32>
    %102 = vector.shape_cast %101 : vector<64xf32> to vector<1x64xf32>
    %103 = arith.addf %100, %102 : vector<1x64xf32>
    %cst_59 = arith.constant dense<0.000000e+00> : vector<64xf32>
    %104 = vector.multi_reduction <add>, %41, %cst_59 [0] : vector<2x64xf32> to vector<64xf32>
    %105 = vector.shape_cast %104 : vector<64xf32> to vector<1x64xf32>
    %106 = arith.addf %103, %105 : vector<1x64xf32>
    %cst_60 = arith.constant dense<0.000000e+00> : vector<64xf32>
    %107 = vector.multi_reduction <add>, %46, %cst_60 [0] : vector<2x64xf32> to vector<64xf32>
    %108 = vector.shape_cast %107 : vector<64xf32> to vector<1x64xf32>
    %109 = arith.addf %106, %108 : vector<1x64xf32>
    %cst_61 = arith.constant dense<0.000000e+00> : vector<64xf32>
    %110 = vector.multi_reduction <add>, %51, %cst_61 [0] : vector<2x64xf32> to vector<64xf32>
    %111 = vector.shape_cast %110 : vector<64xf32> to vector<1x64xf32>
    %112 = arith.addf %109, %111 : vector<1x64xf32>
    %cst_62 = arith.constant dense<0.000000e+00> : vector<64xf32>
    %113 = vector.multi_reduction <add>, %56, %cst_62 [0] : vector<2x64xf32> to vector<64xf32>
    %114 = vector.shape_cast %113 : vector<64xf32> to vector<1x64xf32>
    %115 = arith.addf %112, %114 : vector<1x64xf32>
    %cst_63 = arith.constant dense<0.000000e+00> : vector<64xf32>
    %116 = vector.multi_reduction <add>, %61, %cst_63 [0] : vector<2x64xf32> to vector<64xf32>
    %117 = vector.shape_cast %116 : vector<64xf32> to vector<1x64xf32>
    %118 = arith.addf %115, %117 : vector<1x64xf32>
    %cst_64 = arith.constant dense<0.000000e+00> : vector<64xf32>
    %119 = vector.multi_reduction <add>, %66, %cst_64 [0] : vector<2x64xf32> to vector<64xf32>
    %120 = vector.shape_cast %119 : vector<64xf32> to vector<1x64xf32>
    %121 = arith.addf %118, %120 : vector<1x64xf32>
    %cst_65 = arith.constant dense<0.000000e+00> : vector<64xf32>
    %122 = vector.multi_reduction <add>, %71, %cst_65 [0] : vector<2x64xf32> to vector<64xf32>
    %123 = vector.shape_cast %122 : vector<64xf32> to vector<1x64xf32>
    %124 = arith.addf %121, %123 : vector<1x64xf32>
    %cst_66 = arith.constant dense<0.000000e+00> : vector<64xf32>
    %125 = vector.multi_reduction <add>, %76, %cst_66 [0] : vector<2x64xf32> to vector<64xf32>
    %126 = vector.shape_cast %125 : vector<64xf32> to vector<1x64xf32>
    %127 = arith.addf %124, %126 : vector<1x64xf32>
    %cst_67 = arith.constant dense<0.000000e+00> : vector<64xf32>
    %128 = vector.multi_reduction <add>, %81, %cst_67 [0] : vector<2x64xf32> to vector<64xf32>
    %129 = vector.shape_cast %128 : vector<64xf32> to vector<1x64xf32>
    %130 = arith.addf %127, %129 : vector<1x64xf32>
    %131 = arith.mulf %6, %6 : vector<2x64xf32>
    %cst_68 = arith.constant dense<0.000000e+00> : vector<64xf32>
    %132 = vector.multi_reduction <add>, %131, %cst_68 [0] : vector<2x64xf32> to vector<64xf32>
    %133 = vector.shape_cast %132 : vector<64xf32> to vector<1x64xf32>
    %cst_69 = arith.constant 0.000000e+00 : f32
    %134 = vector.broadcast %cst_69 : f32 to vector<1x64xf32>
    %135 = arith.addf %134, %133 : vector<1x64xf32>
    %136 = arith.mulf %11, %11 : vector<2x64xf32>
    %cst_70 = arith.constant dense<0.000000e+00> : vector<64xf32>
    %137 = vector.multi_reduction <add>, %136, %cst_70 [0] : vector<2x64xf32> to vector<64xf32>
    %138 = vector.shape_cast %137 : vector<64xf32> to vector<1x64xf32>
    %139 = arith.addf %135, %138 : vector<1x64xf32>
    %140 = arith.mulf %16, %16 : vector<2x64xf32>
    %cst_71 = arith.constant dense<0.000000e+00> : vector<64xf32>
    %141 = vector.multi_reduction <add>, %140, %cst_71 [0] : vector<2x64xf32> to vector<64xf32>
    %142 = vector.shape_cast %141 : vector<64xf32> to vector<1x64xf32>
    %143 = arith.addf %139, %142 : vector<1x64xf32>
    %144 = arith.mulf %21, %21 : vector<2x64xf32>
    %cst_72 = arith.constant dense<0.000000e+00> : vector<64xf32>
    %145 = vector.multi_reduction <add>, %144, %cst_72 [0] : vector<2x64xf32> to vector<64xf32>
    %146 = vector.shape_cast %145 : vector<64xf32> to vector<1x64xf32>
    %147 = arith.addf %143, %146 : vector<1x64xf32>
    %148 = arith.mulf %26, %26 : vector<2x64xf32>
    %cst_73 = arith.constant dense<0.000000e+00> : vector<64xf32>
    %149 = vector.multi_reduction <add>, %148, %cst_73 [0] : vector<2x64xf32> to vector<64xf32>
    %150 = vector.shape_cast %149 : vector<64xf32> to vector<1x64xf32>
    %151 = arith.addf %147, %150 : vector<1x64xf32>
    %152 = arith.mulf %31, %31 : vector<2x64xf32>
    %cst_74 = arith.constant dense<0.000000e+00> : vector<64xf32>
    %153 = vector.multi_reduction <add>, %152, %cst_74 [0] : vector<2x64xf32> to vector<64xf32>
    %154 = vector.shape_cast %153 : vector<64xf32> to vector<1x64xf32>
    %155 = arith.addf %151, %154 : vector<1x64xf32>
    %156 = arith.mulf %36, %36 : vector<2x64xf32>
    %cst_75 = arith.constant dense<0.000000e+00> : vector<64xf32>
    %157 = vector.multi_reduction <add>, %156, %cst_75 [0] : vector<2x64xf32> to vector<64xf32>
    %158 = vector.shape_cast %157 : vector<64xf32> to vector<1x64xf32>
    %159 = arith.addf %155, %158 : vector<1x64xf32>
    %160 = arith.mulf %41, %41 : vector<2x64xf32>
    %cst_76 = arith.constant dense<0.000000e+00> : vector<64xf32>
    %161 = vector.multi_reduction <add>, %160, %cst_76 [0] : vector<2x64xf32> to vector<64xf32>
    %162 = vector.shape_cast %161 : vector<64xf32> to vector<1x64xf32>
    %163 = arith.addf %159, %162 : vector<1x64xf32>
    %164 = arith.mulf %46, %46 : vector<2x64xf32>
    %cst_77 = arith.constant dense<0.000000e+00> : vector<64xf32>
    %165 = vector.multi_reduction <add>, %164, %cst_77 [0] : vector<2x64xf32> to vector<64xf32>
    %166 = vector.shape_cast %165 : vector<64xf32> to vector<1x64xf32>
    %167 = arith.addf %163, %166 : vector<1x64xf32>
    %168 = arith.mulf %51, %51 : vector<2x64xf32>
    %cst_78 = arith.constant dense<0.000000e+00> : vector<64xf32>
    %169 = vector.multi_reduction <add>, %168, %cst_78 [0] : vector<2x64xf32> to vector<64xf32>
    %170 = vector.shape_cast %169 : vector<64xf32> to vector<1x64xf32>
    %171 = arith.addf %167, %170 : vector<1x64xf32>
    %172 = arith.mulf %56, %56 : vector<2x64xf32>
    %cst_79 = arith.constant dense<0.000000e+00> : vector<64xf32>
    %173 = vector.multi_reduction <add>, %172, %cst_79 [0] : vector<2x64xf32> to vector<64xf32>
    %174 = vector.shape_cast %173 : vector<64xf32> to vector<1x64xf32>
    %175 = arith.addf %171, %174 : vector<1x64xf32>
    %176 = arith.mulf %61, %61 : vector<2x64xf32>
    %cst_80 = arith.constant dense<0.000000e+00> : vector<64xf32>
    %177 = vector.multi_reduction <add>, %176, %cst_80 [0] : vector<2x64xf32> to vector<64xf32>
    %178 = vector.shape_cast %177 : vector<64xf32> to vector<1x64xf32>
    %179 = arith.addf %175, %178 : vector<1x64xf32>
    %180 = arith.mulf %66, %66 : vector<2x64xf32>
    %cst_81 = arith.constant dense<0.000000e+00> : vector<64xf32>
    %181 = vector.multi_reduction <add>, %180, %cst_81 [0] : vector<2x64xf32> to vector<64xf32>
    %182 = vector.shape_cast %181 : vector<64xf32> to vector<1x64xf32>
    %183 = arith.addf %179, %182 : vector<1x64xf32>
    %184 = arith.mulf %71, %71 : vector<2x64xf32>
    %cst_82 = arith.constant dense<0.000000e+00> : vector<64xf32>
    %185 = vector.multi_reduction <add>, %184, %cst_82 [0] : vector<2x64xf32> to vector<64xf32>
    %186 = vector.shape_cast %185 : vector<64xf32> to vector<1x64xf32>
    %187 = arith.addf %183, %186 : vector<1x64xf32>
    %188 = arith.mulf %76, %76 : vector<2x64xf32>
    %cst_83 = arith.constant dense<0.000000e+00> : vector<64xf32>
    %189 = vector.multi_reduction <add>, %188, %cst_83 [0] : vector<2x64xf32> to vector<64xf32>
    %190 = vector.shape_cast %189 : vector<64xf32> to vector<1x64xf32>
    %191 = arith.addf %187, %190 : vector<1x64xf32>
    %192 = arith.mulf %81, %81 : vector<2x64xf32>
    %cst_84 = arith.constant dense<0.000000e+00> : vector<64xf32>
    %193 = vector.multi_reduction <add>, %192, %cst_84 [0] : vector<2x64xf32> to vector<64xf32>
    %194 = vector.shape_cast %193 : vector<64xf32> to vector<1x64xf32>
    %195 = arith.addf %191, %194 : vector<1x64xf32>
    %cst_85 = arith.constant 3.200000e+01 : f32
    %196 = vector.broadcast %cst_85 : f32 to vector<1x64xf32>
    %197 = arith.divf %130, %196 : vector<1x64xf32>
    %cst_86 = arith.constant 3.200000e+01 : f32
    %198 = vector.broadcast %cst_86 : f32 to vector<1x64xf32>
    %199 = arith.divf %195, %198 : vector<1x64xf32>
    %200 = arith.mulf %197, %197 : vector<1x64xf32>
    %201 = arith.subf %199, %200 : vector<1x64xf32>
    %cst_87 = arith.constant 0.000000e+00 : f32
    %202 = vector.broadcast %cst_87 : f32 to vector<1x64xf32>
    %203 = arith.maximumf %201, %202 : vector<1x64xf32>
    %cst_88 = arith.constant 9.99999974E-6 : f32
    %204 = vector.broadcast %cst_88 : f32 to vector<1x64xf32>
    %205 = arith.addf %203, %204 : vector<1x64xf32>
    %206 = math.rsqrt %205 : vector<1x64xf32>
    %c0_89 = arith.constant 0 : index
    %c0_90 = arith.constant 0 : index
    %207 = vector.load %arg4[%c0_89, %c0_90] : memref<1x64xf32, #tpu.memory_space<vmem>>, vector<1x64xf32>
    %208 = arith.mulf %206, %207 : vector<1x64xf32>
    %c0_91 = arith.constant 0 : index
    %c0_92 = arith.constant 0 : index
    %209 = vector.load %arg5[%c0_91, %c0_92] : memref<1x64xf32, #tpu.memory_space<vmem>>, vector<1x64xf32>
    %210 = arith.mulf %197, %208 : vector<1x64xf32>
    %211 = arith.subf %209, %210 : vector<1x64xf32>
    %212 = vector.broadcast %208 : vector<1x64xf32> to vector<2x64xf32>
    %213 = arith.mulf %6, %212 : vector<2x64xf32>
    %214 = vector.broadcast %211 : vector<1x64xf32> to vector<2x64xf32>
    %215 = arith.addf %213, %214 : vector<2x64xf32>
    %cst_93 = arith.constant 0.000000e+00 : f32
    %216 = vector.broadcast %cst_93 : f32 to vector<2x64xf32>
    %217 = arith.maximumf %215, %216 : vector<2x64xf32>
    %c0_94 = arith.constant 0 : index
    %c0_95 = arith.constant 0 : index
    %c0_96 = arith.constant 0 : index
    %218 = vector.load %arg6[%c0_94, %c0_95, %c0_96] : memref<16x2x64xf32, #tpu.memory_space<vmem>>, vector<1x2x64xf32>
    %219 = vector.shape_cast %218 : vector<1x2x64xf32> to vector<2x64xf32>
    %220 = vector.shape_cast %217 : vector<2x64xf32> to vector<1x2x64xf32>
    tpu.vector_store %arg6[%c0_94, %c0_95, %c0_96], %220 {strides = array<i32>} : memref<16x2x64xf32, #tpu.memory_space<vmem>>, vector<1x2x64xf32>,
    %221 = vector.broadcast %208 : vector<1x64xf32> to vector<2x64xf32>
    %222 = arith.mulf %11, %221 : vector<2x64xf32>
    %223 = vector.broadcast %211 : vector<1x64xf32> to vector<2x64xf32>
    %224 = arith.addf %222, %223 : vector<2x64xf32>
    %cst_97 = arith.constant 0.000000e+00 : f32
    %225 = vector.broadcast %cst_97 : f32 to vector<2x64xf32>
    %226 = arith.maximumf %224, %225 : vector<2x64xf32>
    %c1_98 = arith.constant 1 : index
    %c0_99 = arith.constant 0 : index
    %c0_100 = arith.constant 0 : index
    %227 = vector.load %arg6[%c1_98, %c0_99, %c0_100] : memref<16x2x64xf32, #tpu.memory_space<vmem>>, vector<1x2x64xf32>
    %228 = vector.shape_cast %227 : vector<1x2x64xf32> to vector<2x64xf32>
    %229 = vector.shape_cast %226 : vector<2x64xf32> to vector<1x2x64xf32>
    tpu.vector_store %arg6[%c1_98, %c0_99, %c0_100], %229 {strides = array<i32>} : memref<16x2x64xf32, #tpu.memory_space<vmem>>, vector<1x2x64xf32>,
    %230 = vector.broadcast %208 : vector<1x64xf32> to vector<2x64xf32>
    %231 = arith.mulf %16, %230 : vector<2x64xf32>
    %232 = vector.broadcast %211 : vector<1x64xf32> to vector<2x64xf32>
    %233 = arith.addf %231, %232 : vector<2x64xf32>
    %cst_101 = arith.constant 0.000000e+00 : f32
    %234 = vector.broadcast %cst_101 : f32 to vector<2x64xf32>
    %235 = arith.maximumf %233, %234 : vector<2x64xf32>
    %c2_102 = arith.constant 2 : index
    %c0_103 = arith.constant 0 : index
    %c0_104 = arith.constant 0 : index
    %236 = vector.load %arg6[%c2_102, %c0_103, %c0_104] : memref<16x2x64xf32, #tpu.memory_space<vmem>>, vector<1x2x64xf32>
    %237 = vector.shape_cast %236 : vector<1x2x64xf32> to vector<2x64xf32>
    %238 = vector.shape_cast %235 : vector<2x64xf32> to vector<1x2x64xf32>
    tpu.vector_store %arg6[%c2_102, %c0_103, %c0_104], %238 {strides = array<i32>} : memref<16x2x64xf32, #tpu.memory_space<vmem>>, vector<1x2x64xf32>,
    %239 = vector.broadcast %208 : vector<1x64xf32> to vector<2x64xf32>
    %240 = arith.mulf %21, %239 : vector<2x64xf32>
    %241 = vector.broadcast %211 : vector<1x64xf32> to vector<2x64xf32>
    %242 = arith.addf %240, %241 : vector<2x64xf32>
    %cst_105 = arith.constant 0.000000e+00 : f32
    %243 = vector.broadcast %cst_105 : f32 to vector<2x64xf32>
    %244 = arith.maximumf %242, %243 : vector<2x64xf32>
    %c3_106 = arith.constant 3 : index
    %c0_107 = arith.constant 0 : index
    %c0_108 = arith.constant 0 : index
    %245 = vector.load %arg6[%c3_106, %c0_107, %c0_108] : memref<16x2x64xf32, #tpu.memory_space<vmem>>, vector<1x2x64xf32>
    %246 = vector.shape_cast %245 : vector<1x2x64xf32> to vector<2x64xf32>
    %247 = vector.shape_cast %244 : vector<2x64xf32> to vector<1x2x64xf32>
    tpu.vector_store %arg6[%c3_106, %c0_107, %c0_108], %247 {strides = array<i32>} : memref<16x2x64xf32, #tpu.memory_space<vmem>>, vector<1x2x64xf32>,
    %248 = vector.broadcast %208 : vector<1x64xf32> to vector<2x64xf32>
    %249 = arith.mulf %26, %248 : vector<2x64xf32>
    %250 = vector.broadcast %211 : vector<1x64xf32> to vector<2x64xf32>
    %251 = arith.addf %249, %250 : vector<2x64xf32>
    %cst_109 = arith.constant 0.000000e+00 : f32
    %252 = vector.broadcast %cst_109 : f32 to vector<2x64xf32>
    %253 = arith.maximumf %251, %252 : vector<2x64xf32>
    %c4_110 = arith.constant 4 : index
    %c0_111 = arith.constant 0 : index
    %c0_112 = arith.constant 0 : index
    %254 = vector.load %arg6[%c4_110, %c0_111, %c0_112] : memref<16x2x64xf32, #tpu.memory_space<vmem>>, vector<1x2x64xf32>
    %255 = vector.shape_cast %254 : vector<1x2x64xf32> to vector<2x64xf32>
    %256 = vector.shape_cast %253 : vector<2x64xf32> to vector<1x2x64xf32>
    tpu.vector_store %arg6[%c4_110, %c0_111, %c0_112], %256 {strides = array<i32>} : memref<16x2x64xf32, #tpu.memory_space<vmem>>, vector<1x2x64xf32>,
    %257 = vector.broadcast %208 : vector<1x64xf32> to vector<2x64xf32>
    %258 = arith.mulf %31, %257 : vector<2x64xf32>
    %259 = vector.broadcast %211 : vector<1x64xf32> to vector<2x64xf32>
    %260 = arith.addf %258, %259 : vector<2x64xf32>
    %cst_113 = arith.constant 0.000000e+00 : f32
    %261 = vector.broadcast %cst_113 : f32 to vector<2x64xf32>
    %262 = arith.maximumf %260, %261 : vector<2x64xf32>
    %c5_114 = arith.constant 5 : index
    %c0_115 = arith.constant 0 : index
    %c0_116 = arith.constant 0 : index
    %263 = vector.load %arg6[%c5_114, %c0_115, %c0_116] : memref<16x2x64xf32, #tpu.memory_space<vmem>>, vector<1x2x64xf32>
    %264 = vector.shape_cast %263 : vector<1x2x64xf32> to vector<2x64xf32>
    %265 = vector.shape_cast %262 : vector<2x64xf32> to vector<1x2x64xf32>
    tpu.vector_store %arg6[%c5_114, %c0_115, %c0_116], %265 {strides = array<i32>} : memref<16x2x64xf32, #tpu.memory_space<vmem>>, vector<1x2x64xf32>,
    %266 = vector.broadcast %208 : vector<1x64xf32> to vector<2x64xf32>
    %267 = arith.mulf %36, %266 : vector<2x64xf32>
    %268 = vector.broadcast %211 : vector<1x64xf32> to vector<2x64xf32>
    %269 = arith.addf %267, %268 : vector<2x64xf32>
    %cst_117 = arith.constant 0.000000e+00 : f32
    %270 = vector.broadcast %cst_117 : f32 to vector<2x64xf32>
    %271 = arith.maximumf %269, %270 : vector<2x64xf32>
    %c6_118 = arith.constant 6 : index
    %c0_119 = arith.constant 0 : index
    %c0_120 = arith.constant 0 : index
    %272 = vector.load %arg6[%c6_118, %c0_119, %c0_120] : memref<16x2x64xf32, #tpu.memory_space<vmem>>, vector<1x2x64xf32>
    %273 = vector.shape_cast %272 : vector<1x2x64xf32> to vector<2x64xf32>
    %274 = vector.shape_cast %271 : vector<2x64xf32> to vector<1x2x64xf32>
    tpu.vector_store %arg6[%c6_118, %c0_119, %c0_120], %274 {strides = array<i32>} : memref<16x2x64xf32, #tpu.memory_space<vmem>>, vector<1x2x64xf32>,
    %275 = vector.broadcast %208 : vector<1x64xf32> to vector<2x64xf32>
    %276 = arith.mulf %41, %275 : vector<2x64xf32>
    %277 = vector.broadcast %211 : vector<1x64xf32> to vector<2x64xf32>
    %278 = arith.addf %276, %277 : vector<2x64xf32>
    %cst_121 = arith.constant 0.000000e+00 : f32
    %279 = vector.broadcast %cst_121 : f32 to vector<2x64xf32>
    %280 = arith.maximumf %278, %279 : vector<2x64xf32>
    %c7_122 = arith.constant 7 : index
    %c0_123 = arith.constant 0 : index
    %c0_124 = arith.constant 0 : index
    %281 = vector.load %arg6[%c7_122, %c0_123, %c0_124] : memref<16x2x64xf32, #tpu.memory_space<vmem>>, vector<1x2x64xf32>
    %282 = vector.shape_cast %281 : vector<1x2x64xf32> to vector<2x64xf32>
    %283 = vector.shape_cast %280 : vector<2x64xf32> to vector<1x2x64xf32>
    tpu.vector_store %arg6[%c7_122, %c0_123, %c0_124], %283 {strides = array<i32>} : memref<16x2x64xf32, #tpu.memory_space<vmem>>, vector<1x2x64xf32>,
    %284 = vector.broadcast %208 : vector<1x64xf32> to vector<2x64xf32>
    %285 = arith.mulf %46, %284 : vector<2x64xf32>
    %286 = vector.broadcast %211 : vector<1x64xf32> to vector<2x64xf32>
    %287 = arith.addf %285, %286 : vector<2x64xf32>
    %cst_125 = arith.constant 0.000000e+00 : f32
    %288 = vector.broadcast %cst_125 : f32 to vector<2x64xf32>
    %289 = arith.maximumf %287, %288 : vector<2x64xf32>
    %c8_126 = arith.constant 8 : index
    %c0_127 = arith.constant 0 : index
    %c0_128 = arith.constant 0 : index
    %290 = vector.load %arg6[%c8_126, %c0_127, %c0_128] : memref<16x2x64xf32, #tpu.memory_space<vmem>>, vector<1x2x64xf32>
    %291 = vector.shape_cast %290 : vector<1x2x64xf32> to vector<2x64xf32>
    %292 = vector.shape_cast %289 : vector<2x64xf32> to vector<1x2x64xf32>
    tpu.vector_store %arg6[%c8_126, %c0_127, %c0_128], %292 {strides = array<i32>} : memref<16x2x64xf32, #tpu.memory_space<vmem>>, vector<1x2x64xf32>,
    %293 = vector.broadcast %208 : vector<1x64xf32> to vector<2x64xf32>
    %294 = arith.mulf %51, %293 : vector<2x64xf32>
    %295 = vector.broadcast %211 : vector<1x64xf32> to vector<2x64xf32>
    %296 = arith.addf %294, %295 : vector<2x64xf32>
    %cst_129 = arith.constant 0.000000e+00 : f32
    %297 = vector.broadcast %cst_129 : f32 to vector<2x64xf32>
    %298 = arith.maximumf %296, %297 : vector<2x64xf32>
    %c9_130 = arith.constant 9 : index
    %c0_131 = arith.constant 0 : index
    %c0_132 = arith.constant 0 : index
    %299 = vector.load %arg6[%c9_130, %c0_131, %c0_132] : memref<16x2x64xf32, #tpu.memory_space<vmem>>, vector<1x2x64xf32>
    %300 = vector.shape_cast %299 : vector<1x2x64xf32> to vector<2x64xf32>
    %301 = vector.shape_cast %298 : vector<2x64xf32> to vector<1x2x64xf32>
    tpu.vector_store %arg6[%c9_130, %c0_131, %c0_132], %301 {strides = array<i32>} : memref<16x2x64xf32, #tpu.memory_space<vmem>>, vector<1x2x64xf32>,
    %302 = vector.broadcast %208 : vector<1x64xf32> to vector<2x64xf32>
    %303 = arith.mulf %56, %302 : vector<2x64xf32>
    %304 = vector.broadcast %211 : vector<1x64xf32> to vector<2x64xf32>
    %305 = arith.addf %303, %304 : vector<2x64xf32>
    %cst_133 = arith.constant 0.000000e+00 : f32
    %306 = vector.broadcast %cst_133 : f32 to vector<2x64xf32>
    %307 = arith.maximumf %305, %306 : vector<2x64xf32>
    %c10_134 = arith.constant 10 : index
    %c0_135 = arith.constant 0 : index
    %c0_136 = arith.constant 0 : index
    %308 = vector.load %arg6[%c10_134, %c0_135, %c0_136] : memref<16x2x64xf32, #tpu.memory_space<vmem>>, vector<1x2x64xf32>
    %309 = vector.shape_cast %308 : vector<1x2x64xf32> to vector<2x64xf32>
    %310 = vector.shape_cast %307 : vector<2x64xf32> to vector<1x2x64xf32>
    tpu.vector_store %arg6[%c10_134, %c0_135, %c0_136], %310 {strides = array<i32>} : memref<16x2x64xf32, #tpu.memory_space<vmem>>, vector<1x2x64xf32>,
    %311 = vector.broadcast %208 : vector<1x64xf32> to vector<2x64xf32>
    %312 = arith.mulf %61, %311 : vector<2x64xf32>
    %313 = vector.broadcast %211 : vector<1x64xf32> to vector<2x64xf32>
    %314 = arith.addf %312, %313 : vector<2x64xf32>
    %cst_137 = arith.constant 0.000000e+00 : f32
    %315 = vector.broadcast %cst_137 : f32 to vector<2x64xf32>
    %316 = arith.maximumf %314, %315 : vector<2x64xf32>
    %c11_138 = arith.constant 11 : index
    %c0_139 = arith.constant 0 : index
    %c0_140 = arith.constant 0 : index
    %317 = vector.load %arg6[%c11_138, %c0_139, %c0_140] : memref<16x2x64xf32, #tpu.memory_space<vmem>>, vector<1x2x64xf32>
    %318 = vector.shape_cast %317 : vector<1x2x64xf32> to vector<2x64xf32>
    %319 = vector.shape_cast %316 : vector<2x64xf32> to vector<1x2x64xf32>
    tpu.vector_store %arg6[%c11_138, %c0_139, %c0_140], %319 {strides = array<i32>} : memref<16x2x64xf32, #tpu.memory_space<vmem>>, vector<1x2x64xf32>,
    %320 = vector.broadcast %208 : vector<1x64xf32> to vector<2x64xf32>
    %321 = arith.mulf %66, %320 : vector<2x64xf32>
    %322 = vector.broadcast %211 : vector<1x64xf32> to vector<2x64xf32>
    %323 = arith.addf %321, %322 : vector<2x64xf32>
    %cst_141 = arith.constant 0.000000e+00 : f32
    %324 = vector.broadcast %cst_141 : f32 to vector<2x64xf32>
    %325 = arith.maximumf %323, %324 : vector<2x64xf32>
    %c12_142 = arith.constant 12 : index
    %c0_143 = arith.constant 0 : index
    %c0_144 = arith.constant 0 : index
    %326 = vector.load %arg6[%c12_142, %c0_143, %c0_144] : memref<16x2x64xf32, #tpu.memory_space<vmem>>, vector<1x2x64xf32>
    %327 = vector.shape_cast %326 : vector<1x2x64xf32> to vector<2x64xf32>
    %328 = vector.shape_cast %325 : vector<2x64xf32> to vector<1x2x64xf32>
    tpu.vector_store %arg6[%c12_142, %c0_143, %c0_144], %328 {strides = array<i32>} : memref<16x2x64xf32, #tpu.memory_space<vmem>>, vector<1x2x64xf32>,
    %329 = vector.broadcast %208 : vector<1x64xf32> to vector<2x64xf32>
    %330 = arith.mulf %71, %329 : vector<2x64xf32>
    %331 = vector.broadcast %211 : vector<1x64xf32> to vector<2x64xf32>
    %332 = arith.addf %330, %331 : vector<2x64xf32>
    %cst_145 = arith.constant 0.000000e+00 : f32
    %333 = vector.broadcast %cst_145 : f32 to vector<2x64xf32>
    %334 = arith.maximumf %332, %333 : vector<2x64xf32>
    %c13_146 = arith.constant 13 : index
    %c0_147 = arith.constant 0 : index
    %c0_148 = arith.constant 0 : index
    %335 = vector.load %arg6[%c13_146, %c0_147, %c0_148] : memref<16x2x64xf32, #tpu.memory_space<vmem>>, vector<1x2x64xf32>
    %336 = vector.shape_cast %335 : vector<1x2x64xf32> to vector<2x64xf32>
    %337 = vector.shape_cast %334 : vector<2x64xf32> to vector<1x2x64xf32>
    tpu.vector_store %arg6[%c13_146, %c0_147, %c0_148], %337 {strides = array<i32>} : memref<16x2x64xf32, #tpu.memory_space<vmem>>, vector<1x2x64xf32>,
    %338 = vector.broadcast %208 : vector<1x64xf32> to vector<2x64xf32>
    %339 = arith.mulf %76, %338 : vector<2x64xf32>
    %340 = vector.broadcast %211 : vector<1x64xf32> to vector<2x64xf32>
    %341 = arith.addf %339, %340 : vector<2x64xf32>
    %cst_149 = arith.constant 0.000000e+00 : f32
    %342 = vector.broadcast %cst_149 : f32 to vector<2x64xf32>
    %343 = arith.maximumf %341, %342 : vector<2x64xf32>
    %c14_150 = arith.constant 14 : index
    %c0_151 = arith.constant 0 : index
    %c0_152 = arith.constant 0 : index
    %344 = vector.load %arg6[%c14_150, %c0_151, %c0_152] : memref<16x2x64xf32, #tpu.memory_space<vmem>>, vector<1x2x64xf32>
    %345 = vector.shape_cast %344 : vector<1x2x64xf32> to vector<2x64xf32>
    %346 = vector.shape_cast %343 : vector<2x64xf32> to vector<1x2x64xf32>
    tpu.vector_store %arg6[%c14_150, %c0_151, %c0_152], %346 {strides = array<i32>} : memref<16x2x64xf32, #tpu.memory_space<vmem>>, vector<1x2x64xf32>,
    %347 = vector.broadcast %208 : vector<1x64xf32> to vector<2x64xf32>
    %348 = arith.mulf %81, %347 : vector<2x64xf32>
    %349 = vector.broadcast %211 : vector<1x64xf32> to vector<2x64xf32>
    %350 = arith.addf %348, %349 : vector<2x64xf32>
    %cst_153 = arith.constant 0.000000e+00 : f32
    %351 = vector.broadcast %cst_153 : f32 to vector<2x64xf32>
    %352 = arith.maximumf %350, %351 : vector<2x64xf32>
    %c15_154 = arith.constant 15 : index
    %c0_155 = arith.constant 0 : index
    %c0_156 = arith.constant 0 : index
    %353 = vector.load %arg6[%c15_154, %c0_155, %c0_156] : memref<16x2x64xf32, #tpu.memory_space<vmem>>, vector<1x2x64xf32>
    %354 = vector.shape_cast %353 : vector<1x2x64xf32> to vector<2x64xf32>
    %355 = vector.shape_cast %352 : vector<2x64xf32> to vector<1x2x64xf32>
    tpu.vector_store %arg6[%c15_154, %c0_155, %c0_156], %355 {strides = array<i32>} : memref<16x2x64xf32, #tpu.memory_space<vmem>>, vector<1x2x64xf32>,
    return
  }
  func.func @transform_0(%arg0: i32) -> (i32, i32) {
    %c0_i32 = arith.constant 0 : i32
    %c0_i32_0 = arith.constant 0 : i32
    %c0_i32_1 = arith.constant 0 : i32
    return %c0_i32, %c0_i32_0 : i32, i32
  }
  func.func @transform_1(%arg0: i32) -> (i32, i32, i32) {
    %c0_i32 = arith.constant 0 : i32
    %c0_i32_0 = arith.constant 0 : i32
    %c0_i32_1 = arith.constant 0 : i32
    %c0_i32_2 = arith.constant 0 : i32
    return %c0_i32, %c0_i32_0, %c0_i32_1 : i32, i32, i32
  }
  func.func @transform_2(%arg0: i32) -> (i32, i32) {
    %c0_i32 = arith.constant 0 : i32
    %c0_i32_0 = arith.constant 0 : i32
    %c0_i32_1 = arith.constant 0 : i32
    return %c0_i32, %c0_i32_0 : i32, i32
  }
  func.func @transform_3(%arg0: i32) -> (i32, i32) {
    %c0_i32 = arith.constant 0 : i32
    %c0_i32_0 = arith.constant 0 : i32
    %c0_i32_1 = arith.constant 0 : i32
    return %c0_i32, %c0_i32_0 : i32, i32
  }
  func.func @transform_4(%arg0: i32) -> (i32, i32) {
    %c0_i32 = arith.constant 0 : i32
    %c0_i32_0 = arith.constant 0 : i32
    %c0_i32_1 = arith.constant 0 : i32
    return %c0_i32, %c0_i32_0 : i32, i32
  }
  func.func @transform_5(%arg0: i32) -> (i32, i32, i32) {
    %c0_i32 = arith.constant 0 : i32
    %c0_i32_0 = arith.constant 0 : i32
    %c0_i32_1 = arith.constant 0 : i32
    %c0_i32_2 = arith.constant 0 : i32
    return %c0_i32, %c0_i32_0, %c0_i32_1 : i32, i32, i32
  }
}

module attributes {stable_mosaic.version = 11 : i64} {
  func.func @_deconv_bn_relu_kernel(%arg0: i32, %arg1: memref<4x32x256xbf16, #tpu.memory_space<vmem>>, %arg2: memref<4x256x32xbf16, #tpu.memory_space<vmem>>, %arg3: memref<1x32xf32, #tpu.memory_space<vmem>>, %arg4: memref<1x32xf32, #tpu.memory_space<vmem>>, %arg5: memref<1x32xf32, #tpu.memory_space<vmem>>, %arg6: memref<4x32x32xf32, #tpu.memory_space<vmem>>) attributes {dimension_semantics = [#tpu.dimension_semantics<arbitrary>], iteration_bounds = array<i64: 1>, scalar_prefetch = 0 : i64, scratch_operands = 0 : i64, tpu.core_type = #tpu.core_type<tc>, window_params = [{pipeline_mode = #tpu.pipeline_mode<synchronous>, transform_indices = @transform_0, window_bounds = array<i64: 4, 32, 256>}, {pipeline_mode = #tpu.pipeline_mode<synchronous>, transform_indices = @transform_1, window_bounds = array<i64: 4, 256, 32>}, {pipeline_mode = #tpu.pipeline_mode<synchronous>, transform_indices = @transform_2, window_bounds = array<i64: 1, 32>}, {pipeline_mode = #tpu.pipeline_mode<synchronous>, transform_indices = @transform_3, window_bounds = array<i64: 1, 32>}, {pipeline_mode = #tpu.pipeline_mode<synchronous>, transform_indices = @transform_4, window_bounds = array<i64: 1, 32>}, {pipeline_mode = #tpu.pipeline_mode<synchronous>, transform_indices = @transform_5, window_bounds = array<i64: 4, 32, 32>}]} {
    %c0 = arith.constant 0 : index
    %c0_0 = arith.constant 0 : index
    %0 = vector.load %arg3[%c0, %c0_0] : memref<1x32xf32, #tpu.memory_space<vmem>>, vector<1x32xf32>
    %c0_1 = arith.constant 0 : index
    %c0_2 = arith.constant 0 : index
    %c0_3 = arith.constant 0 : index
    %1 = vector.load %arg1[%c0_1, %c0_2, %c0_3] : memref<4x32x256xbf16, #tpu.memory_space<vmem>>, vector<1x32x256xbf16>
    %2 = vector.shape_cast %1 : vector<1x32x256xbf16> to vector<32x256xbf16>
    %c0_4 = arith.constant 0 : index
    %c0_5 = arith.constant 0 : index
    %c0_6 = arith.constant 0 : index
    %3 = vector.load %arg2[%c0_4, %c0_5, %c0_6] : memref<4x256x32xbf16, #tpu.memory_space<vmem>>, vector<1x256x32xbf16>
    %4 = vector.shape_cast %3 : vector<1x256x32xbf16> to vector<256x32xbf16>
    %cst = arith.constant dense<0.000000e+00> : vector<32x32xf32>
    %5 = tpu.matmul %2, %4, %cst {dimension_numbers = #tpu.dot_dimension_numbers<[1], [0], [0], [1], [0, 0, 1, 1], [], []>} : vector<32x256xbf16>, vector<256x32xbf16>, vector<32x32xf32> -> vector<32x32xf32>
    %6 = vector.broadcast %0 : vector<1x32xf32> to vector<32x32xf32>
    %7 = arith.addf %5, %6 : vector<32x32xf32>
    %c1 = arith.constant 1 : index
    %c0_7 = arith.constant 0 : index
    %c0_8 = arith.constant 0 : index
    %8 = vector.load %arg1[%c1, %c0_7, %c0_8] : memref<4x32x256xbf16, #tpu.memory_space<vmem>>, vector<1x32x256xbf16>
    %9 = vector.shape_cast %8 : vector<1x32x256xbf16> to vector<32x256xbf16>
    %c1_9 = arith.constant 1 : index
    %c0_10 = arith.constant 0 : index
    %c0_11 = arith.constant 0 : index
    %10 = vector.load %arg2[%c1_9, %c0_10, %c0_11] : memref<4x256x32xbf16, #tpu.memory_space<vmem>>, vector<1x256x32xbf16>
    %11 = vector.shape_cast %10 : vector<1x256x32xbf16> to vector<256x32xbf16>
    %cst_12 = arith.constant dense<0.000000e+00> : vector<32x32xf32>
    %12 = tpu.matmul %9, %11, %cst_12 {dimension_numbers = #tpu.dot_dimension_numbers<[1], [0], [0], [1], [0, 0, 1, 1], [], []>} : vector<32x256xbf16>, vector<256x32xbf16>, vector<32x32xf32> -> vector<32x32xf32>
    %13 = vector.broadcast %0 : vector<1x32xf32> to vector<32x32xf32>
    %14 = arith.addf %12, %13 : vector<32x32xf32>
    %c2 = arith.constant 2 : index
    %c0_13 = arith.constant 0 : index
    %c0_14 = arith.constant 0 : index
    %15 = vector.load %arg1[%c2, %c0_13, %c0_14] : memref<4x32x256xbf16, #tpu.memory_space<vmem>>, vector<1x32x256xbf16>
    %16 = vector.shape_cast %15 : vector<1x32x256xbf16> to vector<32x256xbf16>
    %c2_15 = arith.constant 2 : index
    %c0_16 = arith.constant 0 : index
    %c0_17 = arith.constant 0 : index
    %17 = vector.load %arg2[%c2_15, %c0_16, %c0_17] : memref<4x256x32xbf16, #tpu.memory_space<vmem>>, vector<1x256x32xbf16>
    %18 = vector.shape_cast %17 : vector<1x256x32xbf16> to vector<256x32xbf16>
    %cst_18 = arith.constant dense<0.000000e+00> : vector<32x32xf32>
    %19 = tpu.matmul %16, %18, %cst_18 {dimension_numbers = #tpu.dot_dimension_numbers<[1], [0], [0], [1], [0, 0, 1, 1], [], []>} : vector<32x256xbf16>, vector<256x32xbf16>, vector<32x32xf32> -> vector<32x32xf32>
    %20 = vector.broadcast %0 : vector<1x32xf32> to vector<32x32xf32>
    %21 = arith.addf %19, %20 : vector<32x32xf32>
    %c3 = arith.constant 3 : index
    %c0_19 = arith.constant 0 : index
    %c0_20 = arith.constant 0 : index
    %22 = vector.load %arg1[%c3, %c0_19, %c0_20] : memref<4x32x256xbf16, #tpu.memory_space<vmem>>, vector<1x32x256xbf16>
    %23 = vector.shape_cast %22 : vector<1x32x256xbf16> to vector<32x256xbf16>
    %c3_21 = arith.constant 3 : index
    %c0_22 = arith.constant 0 : index
    %c0_23 = arith.constant 0 : index
    %24 = vector.load %arg2[%c3_21, %c0_22, %c0_23] : memref<4x256x32xbf16, #tpu.memory_space<vmem>>, vector<1x256x32xbf16>
    %25 = vector.shape_cast %24 : vector<1x256x32xbf16> to vector<256x32xbf16>
    %cst_24 = arith.constant dense<0.000000e+00> : vector<32x32xf32>
    %26 = tpu.matmul %23, %25, %cst_24 {dimension_numbers = #tpu.dot_dimension_numbers<[1], [0], [0], [1], [0, 0, 1, 1], [], []>} : vector<32x256xbf16>, vector<256x32xbf16>, vector<32x32xf32> -> vector<32x32xf32>
    %27 = vector.broadcast %0 : vector<1x32xf32> to vector<32x32xf32>
    %28 = arith.addf %26, %27 : vector<32x32xf32>
    %cst_25 = arith.constant dense<0.000000e+00> : vector<32xf32>
    %29 = vector.multi_reduction <add>, %7, %cst_25 [0] : vector<32x32xf32> to vector<32xf32>
    %30 = vector.shape_cast %29 : vector<32xf32> to vector<1x32xf32>
    %cst_26 = arith.constant 0.000000e+00 : f32
    %31 = vector.broadcast %cst_26 : f32 to vector<1x32xf32>
    %32 = arith.addf %31, %30 : vector<1x32xf32>
    %cst_27 = arith.constant dense<0.000000e+00> : vector<32xf32>
    %33 = vector.multi_reduction <add>, %14, %cst_27 [0] : vector<32x32xf32> to vector<32xf32>
    %34 = vector.shape_cast %33 : vector<32xf32> to vector<1x32xf32>
    %35 = arith.addf %32, %34 : vector<1x32xf32>
    %cst_28 = arith.constant dense<0.000000e+00> : vector<32xf32>
    %36 = vector.multi_reduction <add>, %21, %cst_28 [0] : vector<32x32xf32> to vector<32xf32>
    %37 = vector.shape_cast %36 : vector<32xf32> to vector<1x32xf32>
    %38 = arith.addf %35, %37 : vector<1x32xf32>
    %cst_29 = arith.constant dense<0.000000e+00> : vector<32xf32>
    %39 = vector.multi_reduction <add>, %28, %cst_29 [0] : vector<32x32xf32> to vector<32xf32>
    %40 = vector.shape_cast %39 : vector<32xf32> to vector<1x32xf32>
    %41 = arith.addf %38, %40 : vector<1x32xf32>
    %42 = arith.mulf %7, %7 : vector<32x32xf32>
    %cst_30 = arith.constant dense<0.000000e+00> : vector<32xf32>
    %43 = vector.multi_reduction <add>, %42, %cst_30 [0] : vector<32x32xf32> to vector<32xf32>
    %44 = vector.shape_cast %43 : vector<32xf32> to vector<1x32xf32>
    %cst_31 = arith.constant 0.000000e+00 : f32
    %45 = vector.broadcast %cst_31 : f32 to vector<1x32xf32>
    %46 = arith.addf %45, %44 : vector<1x32xf32>
    %47 = arith.mulf %14, %14 : vector<32x32xf32>
    %cst_32 = arith.constant dense<0.000000e+00> : vector<32xf32>
    %48 = vector.multi_reduction <add>, %47, %cst_32 [0] : vector<32x32xf32> to vector<32xf32>
    %49 = vector.shape_cast %48 : vector<32xf32> to vector<1x32xf32>
    %50 = arith.addf %46, %49 : vector<1x32xf32>
    %51 = arith.mulf %21, %21 : vector<32x32xf32>
    %cst_33 = arith.constant dense<0.000000e+00> : vector<32xf32>
    %52 = vector.multi_reduction <add>, %51, %cst_33 [0] : vector<32x32xf32> to vector<32xf32>
    %53 = vector.shape_cast %52 : vector<32xf32> to vector<1x32xf32>
    %54 = arith.addf %50, %53 : vector<1x32xf32>
    %55 = arith.mulf %28, %28 : vector<32x32xf32>
    %cst_34 = arith.constant dense<0.000000e+00> : vector<32xf32>
    %56 = vector.multi_reduction <add>, %55, %cst_34 [0] : vector<32x32xf32> to vector<32xf32>
    %57 = vector.shape_cast %56 : vector<32xf32> to vector<1x32xf32>
    %58 = arith.addf %54, %57 : vector<1x32xf32>
    %cst_35 = arith.constant 1.280000e+02 : f32
    %59 = vector.broadcast %cst_35 : f32 to vector<1x32xf32>
    %60 = arith.divf %41, %59 : vector<1x32xf32>
    %cst_36 = arith.constant 1.280000e+02 : f32
    %61 = vector.broadcast %cst_36 : f32 to vector<1x32xf32>
    %62 = arith.divf %58, %61 : vector<1x32xf32>
    %63 = arith.mulf %60, %60 : vector<1x32xf32>
    %64 = arith.subf %62, %63 : vector<1x32xf32>
    %cst_37 = arith.constant 0.000000e+00 : f32
    %65 = vector.broadcast %cst_37 : f32 to vector<1x32xf32>
    %66 = arith.maximumf %64, %65 : vector<1x32xf32>
    %cst_38 = arith.constant 9.99999974E-6 : f32
    %67 = vector.broadcast %cst_38 : f32 to vector<1x32xf32>
    %68 = arith.addf %66, %67 : vector<1x32xf32>
    %69 = math.rsqrt %68 : vector<1x32xf32>
    %c0_39 = arith.constant 0 : index
    %c0_40 = arith.constant 0 : index
    %70 = vector.load %arg4[%c0_39, %c0_40] : memref<1x32xf32, #tpu.memory_space<vmem>>, vector<1x32xf32>
    %71 = arith.mulf %69, %70 : vector<1x32xf32>
    %c0_41 = arith.constant 0 : index
    %c0_42 = arith.constant 0 : index
    %72 = vector.load %arg5[%c0_41, %c0_42] : memref<1x32xf32, #tpu.memory_space<vmem>>, vector<1x32xf32>
    %73 = arith.mulf %60, %71 : vector<1x32xf32>
    %74 = arith.subf %72, %73 : vector<1x32xf32>
    %75 = vector.broadcast %71 : vector<1x32xf32> to vector<32x32xf32>
    %76 = arith.mulf %7, %75 : vector<32x32xf32>
    %77 = vector.broadcast %74 : vector<1x32xf32> to vector<32x32xf32>
    %78 = arith.addf %76, %77 : vector<32x32xf32>
    %cst_43 = arith.constant 0.000000e+00 : f32
    %79 = vector.broadcast %cst_43 : f32 to vector<32x32xf32>
    %80 = arith.maximumf %78, %79 : vector<32x32xf32>
    %c0_44 = arith.constant 0 : index
    %c0_45 = arith.constant 0 : index
    %c0_46 = arith.constant 0 : index
    %81 = vector.load %arg6[%c0_44, %c0_45, %c0_46] : memref<4x32x32xf32, #tpu.memory_space<vmem>>, vector<1x32x32xf32>
    %82 = vector.shape_cast %81 : vector<1x32x32xf32> to vector<32x32xf32>
    %83 = vector.shape_cast %80 : vector<32x32xf32> to vector<1x32x32xf32>
    tpu.vector_store %arg6[%c0_44, %c0_45, %c0_46], %83 {strides = array<i32>} : memref<4x32x32xf32, #tpu.memory_space<vmem>>, vector<1x32x32xf32>,
    %84 = vector.broadcast %71 : vector<1x32xf32> to vector<32x32xf32>
    %85 = arith.mulf %14, %84 : vector<32x32xf32>
    %86 = vector.broadcast %74 : vector<1x32xf32> to vector<32x32xf32>
    %87 = arith.addf %85, %86 : vector<32x32xf32>
    %cst_47 = arith.constant 0.000000e+00 : f32
    %88 = vector.broadcast %cst_47 : f32 to vector<32x32xf32>
    %89 = arith.maximumf %87, %88 : vector<32x32xf32>
    %c1_48 = arith.constant 1 : index
    %c0_49 = arith.constant 0 : index
    %c0_50 = arith.constant 0 : index
    %90 = vector.load %arg6[%c1_48, %c0_49, %c0_50] : memref<4x32x32xf32, #tpu.memory_space<vmem>>, vector<1x32x32xf32>
    %91 = vector.shape_cast %90 : vector<1x32x32xf32> to vector<32x32xf32>
    %92 = vector.shape_cast %89 : vector<32x32xf32> to vector<1x32x32xf32>
    tpu.vector_store %arg6[%c1_48, %c0_49, %c0_50], %92 {strides = array<i32>} : memref<4x32x32xf32, #tpu.memory_space<vmem>>, vector<1x32x32xf32>,
    %93 = vector.broadcast %71 : vector<1x32xf32> to vector<32x32xf32>
    %94 = arith.mulf %21, %93 : vector<32x32xf32>
    %95 = vector.broadcast %74 : vector<1x32xf32> to vector<32x32xf32>
    %96 = arith.addf %94, %95 : vector<32x32xf32>
    %cst_51 = arith.constant 0.000000e+00 : f32
    %97 = vector.broadcast %cst_51 : f32 to vector<32x32xf32>
    %98 = arith.maximumf %96, %97 : vector<32x32xf32>
    %c2_52 = arith.constant 2 : index
    %c0_53 = arith.constant 0 : index
    %c0_54 = arith.constant 0 : index
    %99 = vector.load %arg6[%c2_52, %c0_53, %c0_54] : memref<4x32x32xf32, #tpu.memory_space<vmem>>, vector<1x32x32xf32>
    %100 = vector.shape_cast %99 : vector<1x32x32xf32> to vector<32x32xf32>
    %101 = vector.shape_cast %98 : vector<32x32xf32> to vector<1x32x32xf32>
    tpu.vector_store %arg6[%c2_52, %c0_53, %c0_54], %101 {strides = array<i32>} : memref<4x32x32xf32, #tpu.memory_space<vmem>>, vector<1x32x32xf32>,
    %102 = vector.broadcast %71 : vector<1x32xf32> to vector<32x32xf32>
    %103 = arith.mulf %28, %102 : vector<32x32xf32>
    %104 = vector.broadcast %74 : vector<1x32xf32> to vector<32x32xf32>
    %105 = arith.addf %103, %104 : vector<32x32xf32>
    %cst_55 = arith.constant 0.000000e+00 : f32
    %106 = vector.broadcast %cst_55 : f32 to vector<32x32xf32>
    %107 = arith.maximumf %105, %106 : vector<32x32xf32>
    %c3_56 = arith.constant 3 : index
    %c0_57 = arith.constant 0 : index
    %c0_58 = arith.constant 0 : index
    %108 = vector.load %arg6[%c3_56, %c0_57, %c0_58] : memref<4x32x32xf32, #tpu.memory_space<vmem>>, vector<1x32x32xf32>
    %109 = vector.shape_cast %108 : vector<1x32x32xf32> to vector<32x32xf32>
    %110 = vector.shape_cast %107 : vector<32x32xf32> to vector<1x32x32xf32>
    tpu.vector_store %arg6[%c3_56, %c0_57, %c0_58], %110 {strides = array<i32>} : memref<4x32x32xf32, #tpu.memory_space<vmem>>, vector<1x32x32xf32>,
    return
  }
  func.func @transform_0(%arg0: i32) -> (i32, i32, i32) {
    %c0_i32 = arith.constant 0 : i32
    %c0_i32_0 = arith.constant 0 : i32
    %c0_i32_1 = arith.constant 0 : i32
    %c0_i32_2 = arith.constant 0 : i32
    return %c0_i32, %c0_i32_0, %c0_i32_1 : i32, i32, i32
  }
  func.func @transform_1(%arg0: i32) -> (i32, i32, i32) {
    %c0_i32 = arith.constant 0 : i32
    %c0_i32_0 = arith.constant 0 : i32
    %c0_i32_1 = arith.constant 0 : i32
    %c0_i32_2 = arith.constant 0 : i32
    return %c0_i32, %c0_i32_0, %c0_i32_1 : i32, i32, i32
  }
  func.func @transform_2(%arg0: i32) -> (i32, i32) {
    %c0_i32 = arith.constant 0 : i32
    %c0_i32_0 = arith.constant 0 : i32
    %c0_i32_1 = arith.constant 0 : i32
    return %c0_i32, %c0_i32_0 : i32, i32
  }
  func.func @transform_3(%arg0: i32) -> (i32, i32) {
    %c0_i32 = arith.constant 0 : i32
    %c0_i32_0 = arith.constant 0 : i32
    %c0_i32_1 = arith.constant 0 : i32
    return %c0_i32, %c0_i32_0 : i32, i32
  }
  func.func @transform_4(%arg0: i32) -> (i32, i32) {
    %c0_i32 = arith.constant 0 : i32
    %c0_i32_0 = arith.constant 0 : i32
    %c0_i32_1 = arith.constant 0 : i32
    return %c0_i32, %c0_i32_0 : i32, i32
  }
  func.func @transform_5(%arg0: i32) -> (i32, i32, i32) {
    %c0_i32 = arith.constant 0 : i32
    %c0_i32_0 = arith.constant 0 : i32
    %c0_i32_1 = arith.constant 0 : i32
    %c0_i32_2 = arith.constant 0 : i32
    return %c0_i32, %c0_i32_0, %c0_i32_1 : i32, i32, i32
  }
}

module attributes {stable_mosaic.version = 11 : i64} {
  func.func @_deconv_bn_relu_kernel(%arg0: i32, %arg1: memref<4x98x128xbf16, #tpu.memory_space<vmem>>, %arg2: memref<4x128x16xbf16, #tpu.memory_space<vmem>>, %arg3: memref<1x16xf32, #tpu.memory_space<vmem>>, %arg4: memref<1x16xf32, #tpu.memory_space<vmem>>, %arg5: memref<1x16xf32, #tpu.memory_space<vmem>>, %arg6: memref<4x98x16xf32, #tpu.memory_space<vmem>>) attributes {dimension_semantics = [#tpu.dimension_semantics<arbitrary>], iteration_bounds = array<i64: 1>, scalar_prefetch = 0 : i64, scratch_operands = 0 : i64, tpu.core_type = #tpu.core_type<tc>, window_params = [{pipeline_mode = #tpu.pipeline_mode<synchronous>, transform_indices = @transform_0, window_bounds = array<i64: 4, 98, 128>}, {pipeline_mode = #tpu.pipeline_mode<synchronous>, transform_indices = @transform_1, window_bounds = array<i64: 4, 128, 16>}, {pipeline_mode = #tpu.pipeline_mode<synchronous>, transform_indices = @transform_2, window_bounds = array<i64: 1, 16>}, {pipeline_mode = #tpu.pipeline_mode<synchronous>, transform_indices = @transform_3, window_bounds = array<i64: 1, 16>}, {pipeline_mode = #tpu.pipeline_mode<synchronous>, transform_indices = @transform_4, window_bounds = array<i64: 1, 16>}, {pipeline_mode = #tpu.pipeline_mode<synchronous>, transform_indices = @transform_5, window_bounds = array<i64: 4, 98, 16>}]} {
    %c0 = arith.constant 0 : index
    %c0_0 = arith.constant 0 : index
    %0 = vector.load %arg3[%c0, %c0_0] : memref<1x16xf32, #tpu.memory_space<vmem>>, vector<1x16xf32>
    %c0_1 = arith.constant 0 : index
    %c0_2 = arith.constant 0 : index
    %c0_3 = arith.constant 0 : index
    %1 = vector.load %arg1[%c0_1, %c0_2, %c0_3] : memref<4x98x128xbf16, #tpu.memory_space<vmem>>, vector<1x98x128xbf16>
    %2 = vector.shape_cast %1 : vector<1x98x128xbf16> to vector<98x128xbf16>
    %c0_4 = arith.constant 0 : index
    %c0_5 = arith.constant 0 : index
    %c0_6 = arith.constant 0 : index
    %3 = vector.load %arg2[%c0_4, %c0_5, %c0_6] : memref<4x128x16xbf16, #tpu.memory_space<vmem>>, vector<1x128x16xbf16>
    %4 = vector.shape_cast %3 : vector<1x128x16xbf16> to vector<128x16xbf16>
    %cst = arith.constant dense<0.000000e+00> : vector<98x16xf32>
    %5 = tpu.matmul %2, %4, %cst {dimension_numbers = #tpu.dot_dimension_numbers<[1], [0], [0], [1], [0, 0, 1, 1], [], []>} : vector<98x128xbf16>, vector<128x16xbf16>, vector<98x16xf32> -> vector<98x16xf32>
    %6 = vector.broadcast %0 : vector<1x16xf32> to vector<98x16xf32>
    %7 = arith.addf %5, %6 : vector<98x16xf32>
    %c1 = arith.constant 1 : index
    %c0_7 = arith.constant 0 : index
    %c0_8 = arith.constant 0 : index
    %8 = vector.load %arg1[%c1, %c0_7, %c0_8] : memref<4x98x128xbf16, #tpu.memory_space<vmem>>, vector<1x98x128xbf16>
    %9 = vector.shape_cast %8 : vector<1x98x128xbf16> to vector<98x128xbf16>
    %c1_9 = arith.constant 1 : index
    %c0_10 = arith.constant 0 : index
    %c0_11 = arith.constant 0 : index
    %10 = vector.load %arg2[%c1_9, %c0_10, %c0_11] : memref<4x128x16xbf16, #tpu.memory_space<vmem>>, vector<1x128x16xbf16>
    %11 = vector.shape_cast %10 : vector<1x128x16xbf16> to vector<128x16xbf16>
    %cst_12 = arith.constant dense<0.000000e+00> : vector<98x16xf32>
    %12 = tpu.matmul %9, %11, %cst_12 {dimension_numbers = #tpu.dot_dimension_numbers<[1], [0], [0], [1], [0, 0, 1, 1], [], []>} : vector<98x128xbf16>, vector<128x16xbf16>, vector<98x16xf32> -> vector<98x16xf32>
    %13 = vector.broadcast %0 : vector<1x16xf32> to vector<98x16xf32>
    %14 = arith.addf %12, %13 : vector<98x16xf32>
    %c2 = arith.constant 2 : index
    %c0_13 = arith.constant 0 : index
    %c0_14 = arith.constant 0 : index
    %15 = vector.load %arg1[%c2, %c0_13, %c0_14] : memref<4x98x128xbf16, #tpu.memory_space<vmem>>, vector<1x98x128xbf16>
    %16 = vector.shape_cast %15 : vector<1x98x128xbf16> to vector<98x128xbf16>
    %c2_15 = arith.constant 2 : index
    %c0_16 = arith.constant 0 : index
    %c0_17 = arith.constant 0 : index
    %17 = vector.load %arg2[%c2_15, %c0_16, %c0_17] : memref<4x128x16xbf16, #tpu.memory_space<vmem>>, vector<1x128x16xbf16>
    %18 = vector.shape_cast %17 : vector<1x128x16xbf16> to vector<128x16xbf16>
    %cst_18 = arith.constant dense<0.000000e+00> : vector<98x16xf32>
    %19 = tpu.matmul %16, %18, %cst_18 {dimension_numbers = #tpu.dot_dimension_numbers<[1], [0], [0], [1], [0, 0, 1, 1], [], []>} : vector<98x128xbf16>, vector<128x16xbf16>, vector<98x16xf32> -> vector<98x16xf32>
    %20 = vector.broadcast %0 : vector<1x16xf32> to vector<98x16xf32>
    %21 = arith.addf %19, %20 : vector<98x16xf32>
    %c3 = arith.constant 3 : index
    %c0_19 = arith.constant 0 : index
    %c0_20 = arith.constant 0 : index
    %22 = vector.load %arg1[%c3, %c0_19, %c0_20] : memref<4x98x128xbf16, #tpu.memory_space<vmem>>, vector<1x98x128xbf16>
    %23 = vector.shape_cast %22 : vector<1x98x128xbf16> to vector<98x128xbf16>
    %c3_21 = arith.constant 3 : index
    %c0_22 = arith.constant 0 : index
    %c0_23 = arith.constant 0 : index
    %24 = vector.load %arg2[%c3_21, %c0_22, %c0_23] : memref<4x128x16xbf16, #tpu.memory_space<vmem>>, vector<1x128x16xbf16>
    %25 = vector.shape_cast %24 : vector<1x128x16xbf16> to vector<128x16xbf16>
    %cst_24 = arith.constant dense<0.000000e+00> : vector<98x16xf32>
    %26 = tpu.matmul %23, %25, %cst_24 {dimension_numbers = #tpu.dot_dimension_numbers<[1], [0], [0], [1], [0, 0, 1, 1], [], []>} : vector<98x128xbf16>, vector<128x16xbf16>, vector<98x16xf32> -> vector<98x16xf32>
    %27 = vector.broadcast %0 : vector<1x16xf32> to vector<98x16xf32>
    %28 = arith.addf %26, %27 : vector<98x16xf32>
    %cst_25 = arith.constant dense<0.000000e+00> : vector<16xf32>
    %29 = vector.multi_reduction <add>, %7, %cst_25 [0] : vector<98x16xf32> to vector<16xf32>
    %30 = vector.shape_cast %29 : vector<16xf32> to vector<1x16xf32>
    %cst_26 = arith.constant 0.000000e+00 : f32
    %31 = vector.broadcast %cst_26 : f32 to vector<1x16xf32>
    %32 = arith.addf %31, %30 : vector<1x16xf32>
    %cst_27 = arith.constant dense<0.000000e+00> : vector<16xf32>
    %33 = vector.multi_reduction <add>, %14, %cst_27 [0] : vector<98x16xf32> to vector<16xf32>
    %34 = vector.shape_cast %33 : vector<16xf32> to vector<1x16xf32>
    %35 = arith.addf %32, %34 : vector<1x16xf32>
    %cst_28 = arith.constant dense<0.000000e+00> : vector<16xf32>
    %36 = vector.multi_reduction <add>, %21, %cst_28 [0] : vector<98x16xf32> to vector<16xf32>
    %37 = vector.shape_cast %36 : vector<16xf32> to vector<1x16xf32>
    %38 = arith.addf %35, %37 : vector<1x16xf32>
    %cst_29 = arith.constant dense<0.000000e+00> : vector<16xf32>
    %39 = vector.multi_reduction <add>, %28, %cst_29 [0] : vector<98x16xf32> to vector<16xf32>
    %40 = vector.shape_cast %39 : vector<16xf32> to vector<1x16xf32>
    %41 = arith.addf %38, %40 : vector<1x16xf32>
    %42 = arith.mulf %7, %7 : vector<98x16xf32>
    %cst_30 = arith.constant dense<0.000000e+00> : vector<16xf32>
    %43 = vector.multi_reduction <add>, %42, %cst_30 [0] : vector<98x16xf32> to vector<16xf32>
    %44 = vector.shape_cast %43 : vector<16xf32> to vector<1x16xf32>
    %cst_31 = arith.constant 0.000000e+00 : f32
    %45 = vector.broadcast %cst_31 : f32 to vector<1x16xf32>
    %46 = arith.addf %45, %44 : vector<1x16xf32>
    %47 = arith.mulf %14, %14 : vector<98x16xf32>
    %cst_32 = arith.constant dense<0.000000e+00> : vector<16xf32>
    %48 = vector.multi_reduction <add>, %47, %cst_32 [0] : vector<98x16xf32> to vector<16xf32>
    %49 = vector.shape_cast %48 : vector<16xf32> to vector<1x16xf32>
    %50 = arith.addf %46, %49 : vector<1x16xf32>
    %51 = arith.mulf %21, %21 : vector<98x16xf32>
    %cst_33 = arith.constant dense<0.000000e+00> : vector<16xf32>
    %52 = vector.multi_reduction <add>, %51, %cst_33 [0] : vector<98x16xf32> to vector<16xf32>
    %53 = vector.shape_cast %52 : vector<16xf32> to vector<1x16xf32>
    %54 = arith.addf %50, %53 : vector<1x16xf32>
    %55 = arith.mulf %28, %28 : vector<98x16xf32>
    %cst_34 = arith.constant dense<0.000000e+00> : vector<16xf32>
    %56 = vector.multi_reduction <add>, %55, %cst_34 [0] : vector<98x16xf32> to vector<16xf32>
    %57 = vector.shape_cast %56 : vector<16xf32> to vector<1x16xf32>
    %58 = arith.addf %54, %57 : vector<1x16xf32>
    %cst_35 = arith.constant 3.920000e+02 : f32
    %59 = vector.broadcast %cst_35 : f32 to vector<1x16xf32>
    %60 = arith.divf %41, %59 : vector<1x16xf32>
    %cst_36 = arith.constant 3.920000e+02 : f32
    %61 = vector.broadcast %cst_36 : f32 to vector<1x16xf32>
    %62 = arith.divf %58, %61 : vector<1x16xf32>
    %63 = arith.mulf %60, %60 : vector<1x16xf32>
    %64 = arith.subf %62, %63 : vector<1x16xf32>
    %cst_37 = arith.constant 0.000000e+00 : f32
    %65 = vector.broadcast %cst_37 : f32 to vector<1x16xf32>
    %66 = arith.maximumf %64, %65 : vector<1x16xf32>
    %cst_38 = arith.constant 9.99999974E-6 : f32
    %67 = vector.broadcast %cst_38 : f32 to vector<1x16xf32>
    %68 = arith.addf %66, %67 : vector<1x16xf32>
    %69 = math.rsqrt %68 : vector<1x16xf32>
    %c0_39 = arith.constant 0 : index
    %c0_40 = arith.constant 0 : index
    %70 = vector.load %arg4[%c0_39, %c0_40] : memref<1x16xf32, #tpu.memory_space<vmem>>, vector<1x16xf32>
    %71 = arith.mulf %69, %70 : vector<1x16xf32>
    %c0_41 = arith.constant 0 : index
    %c0_42 = arith.constant 0 : index
    %72 = vector.load %arg5[%c0_41, %c0_42] : memref<1x16xf32, #tpu.memory_space<vmem>>, vector<1x16xf32>
    %73 = arith.mulf %60, %71 : vector<1x16xf32>
    %74 = arith.subf %72, %73 : vector<1x16xf32>
    %75 = vector.broadcast %71 : vector<1x16xf32> to vector<98x16xf32>
    %76 = arith.mulf %7, %75 : vector<98x16xf32>
    %77 = vector.broadcast %74 : vector<1x16xf32> to vector<98x16xf32>
    %78 = arith.addf %76, %77 : vector<98x16xf32>
    %cst_43 = arith.constant 0.000000e+00 : f32
    %79 = vector.broadcast %cst_43 : f32 to vector<98x16xf32>
    %80 = arith.maximumf %78, %79 : vector<98x16xf32>
    %c0_44 = arith.constant 0 : index
    %c0_45 = arith.constant 0 : index
    %c0_46 = arith.constant 0 : index
    %81 = vector.load %arg6[%c0_44, %c0_45, %c0_46] : memref<4x98x16xf32, #tpu.memory_space<vmem>>, vector<1x98x16xf32>
    %82 = vector.shape_cast %81 : vector<1x98x16xf32> to vector<98x16xf32>
    %83 = vector.shape_cast %80 : vector<98x16xf32> to vector<1x98x16xf32>
    tpu.vector_store %arg6[%c0_44, %c0_45, %c0_46], %83 {strides = array<i32>} : memref<4x98x16xf32, #tpu.memory_space<vmem>>, vector<1x98x16xf32>,
    %84 = vector.broadcast %71 : vector<1x16xf32> to vector<98x16xf32>
    %85 = arith.mulf %14, %84 : vector<98x16xf32>
    %86 = vector.broadcast %74 : vector<1x16xf32> to vector<98x16xf32>
    %87 = arith.addf %85, %86 : vector<98x16xf32>
    %cst_47 = arith.constant 0.000000e+00 : f32
    %88 = vector.broadcast %cst_47 : f32 to vector<98x16xf32>
    %89 = arith.maximumf %87, %88 : vector<98x16xf32>
    %c1_48 = arith.constant 1 : index
    %c0_49 = arith.constant 0 : index
    %c0_50 = arith.constant 0 : index
    %90 = vector.load %arg6[%c1_48, %c0_49, %c0_50] : memref<4x98x16xf32, #tpu.memory_space<vmem>>, vector<1x98x16xf32>
    %91 = vector.shape_cast %90 : vector<1x98x16xf32> to vector<98x16xf32>
    %92 = vector.shape_cast %89 : vector<98x16xf32> to vector<1x98x16xf32>
    tpu.vector_store %arg6[%c1_48, %c0_49, %c0_50], %92 {strides = array<i32>} : memref<4x98x16xf32, #tpu.memory_space<vmem>>, vector<1x98x16xf32>,
    %93 = vector.broadcast %71 : vector<1x16xf32> to vector<98x16xf32>
    %94 = arith.mulf %21, %93 : vector<98x16xf32>
    %95 = vector.broadcast %74 : vector<1x16xf32> to vector<98x16xf32>
    %96 = arith.addf %94, %95 : vector<98x16xf32>
    %cst_51 = arith.constant 0.000000e+00 : f32
    %97 = vector.broadcast %cst_51 : f32 to vector<98x16xf32>
    %98 = arith.maximumf %96, %97 : vector<98x16xf32>
    %c2_52 = arith.constant 2 : index
    %c0_53 = arith.constant 0 : index
    %c0_54 = arith.constant 0 : index
    %99 = vector.load %arg6[%c2_52, %c0_53, %c0_54] : memref<4x98x16xf32, #tpu.memory_space<vmem>>, vector<1x98x16xf32>
    %100 = vector.shape_cast %99 : vector<1x98x16xf32> to vector<98x16xf32>
    %101 = vector.shape_cast %98 : vector<98x16xf32> to vector<1x98x16xf32>
    tpu.vector_store %arg6[%c2_52, %c0_53, %c0_54], %101 {strides = array<i32>} : memref<4x98x16xf32, #tpu.memory_space<vmem>>, vector<1x98x16xf32>,
    %102 = vector.broadcast %71 : vector<1x16xf32> to vector<98x16xf32>
    %103 = arith.mulf %28, %102 : vector<98x16xf32>
    %104 = vector.broadcast %74 : vector<1x16xf32> to vector<98x16xf32>
    %105 = arith.addf %103, %104 : vector<98x16xf32>
    %cst_55 = arith.constant 0.000000e+00 : f32
    %106 = vector.broadcast %cst_55 : f32 to vector<98x16xf32>
    %107 = arith.maximumf %105, %106 : vector<98x16xf32>
    %c3_56 = arith.constant 3 : index
    %c0_57 = arith.constant 0 : index
    %c0_58 = arith.constant 0 : index
    %108 = vector.load %arg6[%c3_56, %c0_57, %c0_58] : memref<4x98x16xf32, #tpu.memory_space<vmem>>, vector<1x98x16xf32>
    %109 = vector.shape_cast %108 : vector<1x98x16xf32> to vector<98x16xf32>
    %110 = vector.shape_cast %107 : vector<98x16xf32> to vector<1x98x16xf32>
    tpu.vector_store %arg6[%c3_56, %c0_57, %c0_58], %110 {strides = array<i32>} : memref<4x98x16xf32, #tpu.memory_space<vmem>>, vector<1x98x16xf32>,
    return
  }
  func.func @transform_0(%arg0: i32) -> (i32, i32, i32) {
    %c0_i32 = arith.constant 0 : i32
    %c0_i32_0 = arith.constant 0 : i32
    %c0_i32_1 = arith.constant 0 : i32
    %c0_i32_2 = arith.constant 0 : i32
    return %c0_i32, %c0_i32_0, %c0_i32_1 : i32, i32, i32
  }
  func.func @transform_1(%arg0: i32) -> (i32, i32, i32) {
    %c0_i32 = arith.constant 0 : i32
    %c0_i32_0 = arith.constant 0 : i32
    %c0_i32_1 = arith.constant 0 : i32
    %c0_i32_2 = arith.constant 0 : i32
    return %c0_i32, %c0_i32_0, %c0_i32_1 : i32, i32, i32
  }
  func.func @transform_2(%arg0: i32) -> (i32, i32) {
    %c0_i32 = arith.constant 0 : i32
    %c0_i32_0 = arith.constant 0 : i32
    %c0_i32_1 = arith.constant 0 : i32
    return %c0_i32, %c0_i32_0 : i32, i32
  }
  func.func @transform_3(%arg0: i32) -> (i32, i32) {
    %c0_i32 = arith.constant 0 : i32
    %c0_i32_0 = arith.constant 0 : i32
    %c0_i32_1 = arith.constant 0 : i32
    return %c0_i32, %c0_i32_0 : i32, i32
  }
  func.func @transform_4(%arg0: i32) -> (i32, i32) {
    %c0_i32 = arith.constant 0 : i32
    %c0_i32_0 = arith.constant 0 : i32
    %c0_i32_1 = arith.constant 0 : i32
    return %c0_i32, %c0_i32_0 : i32, i32
  }
  func.func @transform_5(%arg0: i32) -> (i32, i32, i32) {
    %c0_i32 = arith.constant 0 : i32
    %c0_i32_0 = arith.constant 0 : i32
    %c0_i32_1 = arith.constant 0 : i32
    %c0_i32_2 = arith.constant 0 : i32
    return %c0_i32, %c0_i32_0, %c0_i32_1 : i32, i32, i32
  }
}

module attributes {stable_mosaic.version = 11 : i64} {
  func.func @_deconv_sigmoid_kernel(%arg0: i32, %arg1: memref<4x392x64xbf16, #tpu.memory_space<vmem>>, %arg2: memref<4x64x128xbf16, #tpu.memory_space<vmem>>, %arg3: memref<1x128xf32, #tpu.memory_space<vmem>>, %arg4: memref<4x392x128xf32, #tpu.memory_space<vmem>>) attributes {dimension_semantics = [#tpu.dimension_semantics<arbitrary>], iteration_bounds = array<i64: 1>, scalar_prefetch = 0 : i64, scratch_operands = 0 : i64, tpu.core_type = #tpu.core_type<tc>, window_params = [{pipeline_mode = #tpu.pipeline_mode<synchronous>, transform_indices = @transform_0, window_bounds = array<i64: 4, 392, 64>}, {pipeline_mode = #tpu.pipeline_mode<synchronous>, transform_indices = @transform_1, window_bounds = array<i64: 4, 64, 128>}, {pipeline_mode = #tpu.pipeline_mode<synchronous>, transform_indices = @transform_2, window_bounds = array<i64: 1, 128>}, {pipeline_mode = #tpu.pipeline_mode<synchronous>, transform_indices = @transform_3, window_bounds = array<i64: 4, 392, 128>}]} {
    %c0 = arith.constant 0 : index
    %c0_0 = arith.constant 0 : index
    %0 = vector.load %arg3[%c0, %c0_0] : memref<1x128xf32, #tpu.memory_space<vmem>>, vector<1x128xf32>
    %c0_1 = arith.constant 0 : index
    %c0_2 = arith.constant 0 : index
    %c0_3 = arith.constant 0 : index
    %1 = vector.load %arg1[%c0_1, %c0_2, %c0_3] : memref<4x392x64xbf16, #tpu.memory_space<vmem>>, vector<1x392x64xbf16>
    %2 = vector.shape_cast %1 : vector<1x392x64xbf16> to vector<392x64xbf16>
    %c0_4 = arith.constant 0 : index
    %c0_5 = arith.constant 0 : index
    %c0_6 = arith.constant 0 : index
    %3 = vector.load %arg2[%c0_4, %c0_5, %c0_6] : memref<4x64x128xbf16, #tpu.memory_space<vmem>>, vector<1x64x128xbf16>
    %4 = vector.shape_cast %3 : vector<1x64x128xbf16> to vector<64x128xbf16>
    %cst = arith.constant dense<0.000000e+00> : vector<392x128xf32>
    %5 = tpu.matmul %2, %4, %cst {dimension_numbers = #tpu.dot_dimension_numbers<[1], [0], [0], [1], [0, 0, 1, 1], [], []>} : vector<392x64xbf16>, vector<64x128xbf16>, vector<392x128xf32> -> vector<392x128xf32>
    %6 = vector.broadcast %0 : vector<1x128xf32> to vector<392x128xf32>
    %7 = arith.addf %5, %6 : vector<392x128xf32>
    %8 = arith.negf %7 : vector<392x128xf32>
    %9 = math.exp %8 : vector<392x128xf32>
    %cst_7 = arith.constant 1.000000e+00 : f32
    %10 = vector.broadcast %cst_7 : f32 to vector<392x128xf32>
    %11 = arith.addf %10, %9 : vector<392x128xf32>
    %12 = arith.divf %10, %11 : vector<392x128xf32>
    %c0_8 = arith.constant 0 : index
    %c0_9 = arith.constant 0 : index
    %c0_10 = arith.constant 0 : index
    %13 = vector.load %arg4[%c0_8, %c0_9, %c0_10] : memref<4x392x128xf32, #tpu.memory_space<vmem>>, vector<1x392x128xf32>
    %14 = vector.shape_cast %13 : vector<1x392x128xf32> to vector<392x128xf32>
    %15 = vector.shape_cast %12 : vector<392x128xf32> to vector<1x392x128xf32>
    tpu.vector_store %arg4[%c0_8, %c0_9, %c0_10], %15 {strides = array<i32>} : memref<4x392x128xf32, #tpu.memory_space<vmem>>, vector<1x392x128xf32>,
    %c1 = arith.constant 1 : index
    %c0_11 = arith.constant 0 : index
    %c0_12 = arith.constant 0 : index
    %16 = vector.load %arg1[%c1, %c0_11, %c0_12] : memref<4x392x64xbf16, #tpu.memory_space<vmem>>, vector<1x392x64xbf16>
    %17 = vector.shape_cast %16 : vector<1x392x64xbf16> to vector<392x64xbf16>
    %c1_13 = arith.constant 1 : index
    %c0_14 = arith.constant 0 : index
    %c0_15 = arith.constant 0 : index
    %18 = vector.load %arg2[%c1_13, %c0_14, %c0_15] : memref<4x64x128xbf16, #tpu.memory_space<vmem>>, vector<1x64x128xbf16>
    %19 = vector.shape_cast %18 : vector<1x64x128xbf16> to vector<64x128xbf16>
    %cst_16 = arith.constant dense<0.000000e+00> : vector<392x128xf32>
    %20 = tpu.matmul %17, %19, %cst_16 {dimension_numbers = #tpu.dot_dimension_numbers<[1], [0], [0], [1], [0, 0, 1, 1], [], []>} : vector<392x64xbf16>, vector<64x128xbf16>, vector<392x128xf32> -> vector<392x128xf32>
    %21 = vector.broadcast %0 : vector<1x128xf32> to vector<392x128xf32>
    %22 = arith.addf %20, %21 : vector<392x128xf32>
    %23 = arith.negf %22 : vector<392x128xf32>
    %24 = math.exp %23 : vector<392x128xf32>
    %cst_17 = arith.constant 1.000000e+00 : f32
    %25 = vector.broadcast %cst_17 : f32 to vector<392x128xf32>
    %26 = arith.addf %25, %24 : vector<392x128xf32>
    %27 = arith.divf %25, %26 : vector<392x128xf32>
    %c1_18 = arith.constant 1 : index
    %c0_19 = arith.constant 0 : index
    %c0_20 = arith.constant 0 : index
    %28 = vector.load %arg4[%c1_18, %c0_19, %c0_20] : memref<4x392x128xf32, #tpu.memory_space<vmem>>, vector<1x392x128xf32>
    %29 = vector.shape_cast %28 : vector<1x392x128xf32> to vector<392x128xf32>
    %30 = vector.shape_cast %27 : vector<392x128xf32> to vector<1x392x128xf32>
    tpu.vector_store %arg4[%c1_18, %c0_19, %c0_20], %30 {strides = array<i32>} : memref<4x392x128xf32, #tpu.memory_space<vmem>>, vector<1x392x128xf32>,
    %c2 = arith.constant 2 : index
    %c0_21 = arith.constant 0 : index
    %c0_22 = arith.constant 0 : index
    %31 = vector.load %arg1[%c2, %c0_21, %c0_22] : memref<4x392x64xbf16, #tpu.memory_space<vmem>>, vector<1x392x64xbf16>
    %32 = vector.shape_cast %31 : vector<1x392x64xbf16> to vector<392x64xbf16>
    %c2_23 = arith.constant 2 : index
    %c0_24 = arith.constant 0 : index
    %c0_25 = arith.constant 0 : index
    %33 = vector.load %arg2[%c2_23, %c0_24, %c0_25] : memref<4x64x128xbf16, #tpu.memory_space<vmem>>, vector<1x64x128xbf16>
    %34 = vector.shape_cast %33 : vector<1x64x128xbf16> to vector<64x128xbf16>
    %cst_26 = arith.constant dense<0.000000e+00> : vector<392x128xf32>
    %35 = tpu.matmul %32, %34, %cst_26 {dimension_numbers = #tpu.dot_dimension_numbers<[1], [0], [0], [1], [0, 0, 1, 1], [], []>} : vector<392x64xbf16>, vector<64x128xbf16>, vector<392x128xf32> -> vector<392x128xf32>
    %36 = vector.broadcast %0 : vector<1x128xf32> to vector<392x128xf32>
    %37 = arith.addf %35, %36 : vector<392x128xf32>
    %38 = arith.negf %37 : vector<392x128xf32>
    %39 = math.exp %38 : vector<392x128xf32>
    %cst_27 = arith.constant 1.000000e+00 : f32
    %40 = vector.broadcast %cst_27 : f32 to vector<392x128xf32>
    %41 = arith.addf %40, %39 : vector<392x128xf32>
    %42 = arith.divf %40, %41 : vector<392x128xf32>
    %c2_28 = arith.constant 2 : index
    %c0_29 = arith.constant 0 : index
    %c0_30 = arith.constant 0 : index
    %43 = vector.load %arg4[%c2_28, %c0_29, %c0_30] : memref<4x392x128xf32, #tpu.memory_space<vmem>>, vector<1x392x128xf32>
    %44 = vector.shape_cast %43 : vector<1x392x128xf32> to vector<392x128xf32>
    %45 = vector.shape_cast %42 : vector<392x128xf32> to vector<1x392x128xf32>
    tpu.vector_store %arg4[%c2_28, %c0_29, %c0_30], %45 {strides = array<i32>} : memref<4x392x128xf32, #tpu.memory_space<vmem>>, vector<1x392x128xf32>,
    %c3 = arith.constant 3 : index
    %c0_31 = arith.constant 0 : index
    %c0_32 = arith.constant 0 : index
    %46 = vector.load %arg1[%c3, %c0_31, %c0_32] : memref<4x392x64xbf16, #tpu.memory_space<vmem>>, vector<1x392x64xbf16>
    %47 = vector.shape_cast %46 : vector<1x392x64xbf16> to vector<392x64xbf16>
    %c3_33 = arith.constant 3 : index
    %c0_34 = arith.constant 0 : index
    %c0_35 = arith.constant 0 : index
    %48 = vector.load %arg2[%c3_33, %c0_34, %c0_35] : memref<4x64x128xbf16, #tpu.memory_space<vmem>>, vector<1x64x128xbf16>
    %49 = vector.shape_cast %48 : vector<1x64x128xbf16> to vector<64x128xbf16>
    %cst_36 = arith.constant dense<0.000000e+00> : vector<392x128xf32>
    %50 = tpu.matmul %47, %49, %cst_36 {dimension_numbers = #tpu.dot_dimension_numbers<[1], [0], [0], [1], [0, 0, 1, 1], [], []>} : vector<392x64xbf16>, vector<64x128xbf16>, vector<392x128xf32> -> vector<392x128xf32>
    %51 = vector.broadcast %0 : vector<1x128xf32> to vector<392x128xf32>
    %52 = arith.addf %50, %51 : vector<392x128xf32>
    %53 = arith.negf %52 : vector<392x128xf32>
    %54 = math.exp %53 : vector<392x128xf32>
    %cst_37 = arith.constant 1.000000e+00 : f32
    %55 = vector.broadcast %cst_37 : f32 to vector<392x128xf32>
    %56 = arith.addf %55, %54 : vector<392x128xf32>
    %57 = arith.divf %55, %56 : vector<392x128xf32>
    %c3_38 = arith.constant 3 : index
    %c0_39 = arith.constant 0 : index
    %c0_40 = arith.constant 0 : index
    %58 = vector.load %arg4[%c3_38, %c0_39, %c0_40] : memref<4x392x128xf32, #tpu.memory_space<vmem>>, vector<1x392x128xf32>
    %59 = vector.shape_cast %58 : vector<1x392x128xf32> to vector<392x128xf32>
    %60 = vector.shape_cast %57 : vector<392x128xf32> to vector<1x392x128xf32>
    tpu.vector_store %arg4[%c3_38, %c0_39, %c0_40], %60 {strides = array<i32>} : memref<4x392x128xf32, #tpu.memory_space<vmem>>, vector<1x392x128xf32>,
    return
  }
  func.func @transform_0(%arg0: i32) -> (i32, i32, i32) {
    %c0_i32 = arith.constant 0 : i32
    %c0_i32_0 = arith.constant 0 : i32
    %c0_i32_1 = arith.constant 0 : i32
    %c0_i32_2 = arith.constant 0 : i32
    return %c0_i32, %c0_i32_0, %c0_i32_1 : i32, i32, i32
  }
  func.func @transform_1(%arg0: i32) -> (i32, i32, i32) {
    %c0_i32 = arith.constant 0 : i32
    %c0_i32_0 = arith.constant 0 : i32
    %c0_i32_1 = arith.constant 0 : i32
    %c0_i32_2 = arith.constant 0 : i32
    return %c0_i32, %c0_i32_0, %c0_i32_1 : i32, i32, i32
  }
  func.func @transform_2(%arg0: i32) -> (i32, i32) {
    %c0_i32 = arith.constant 0 : i32
    %c0_i32_0 = arith.constant 0 : i32
    %c0_i32_1 = arith.constant 0 : i32
    return %c0_i32, %c0_i32_0 : i32, i32
  }
  func.func @transform_3(%arg0: i32) -> (i32, i32, i32) {
    %c0_i32 = arith.constant 0 : i32
    %c0_i32_0 = arith.constant 0 : i32
    %c0_i32_1 = arith.constant 0 : i32
    %c0_i32_2 = arith.constant 0 : i32
    return %c0_i32, %c0_i32_0, %c0_i32_1 : i32, i32, i32
  }
}

</mosaic_0001>

<llo_original>
// kernel: generator_forward.4
$region0: #{generator_forward.4}
  #allocation0 [shape = 'u32[]', space=smem, size = 0x4, offset = 0x4, fixed_abs, tag = 'smem constant byte address 0x4 - core index']
  #allocation1 [shape = 'u32[144,128]{1,0:T(1,128)}', space=vmem, size = 0x12000, scoped, tag = 'internal scratch']
  %s0 = inlined_call_operand.vmem [shape: bf16[2,100], index: 0, kind: input, shape index: {}]
  %s1 = inlined_call_operand.vmem [shape: bf16[16,100,64], index: 1, kind: input, shape index: {}]
  %s2 = inlined_call_operand.vmem [shape: f32[1,64], index: 2, kind: input, shape index: {}]
  %s3 = inlined_call_operand.vmem [shape: f32[1,64], index: 3, kind: input, shape index: {}]
  %s4 = inlined_call_operand.vmem [shape: f32[1,64], index: 4, kind: input, shape index: {}]
  %s5 = inlined_call_operand.vmem [shape: f32[16,2,64], index: 5, kind: output, shape index: {}]
  %s6 = sld [smem:[#allocation0]]
  $region30: #{generator_forward.4} parent=0
    _
  %s8 = ssub.s32 1, %s6
  %s9 = scalar_select 0, %s8, %s6
  // Predicated region
  $region2: #{generator_forward.4} parent=0 // pred_check
    _
  $region3: #{generator_forward.4} parent=0 // pred_check_branch
    %11 = sbr.rel (0) target = $region5
  $region4: #{generator_forward.4} parent=0 // pred_region
    _
  $region5: #{generator_forward.4} parent=0 // pred_fallthru
    _
  // Predicated region
  $region6: #{generator_forward.4} parent=0 // pred_check
    _
  $region7: #{generator_forward.4} parent=0 // pred_check_branch
    %13 = sbr.rel (0) target = $region9
  $region8: #{generator_forward.4} parent=0 // pred_region
    _
  $region9: #{generator_forward.4} parent=0 // pred_fallthru
    _
  // Predicated region
  $region10: #{generator_forward.4} parent=0 // pred_check
    _
  $region11: #{generator_forward.4} parent=0 // pred_check_branch
    %15 = sbr.rel (0) target = $region13
  $region12: #{generator_forward.4} parent=0 // pred_region
    _
  $region13: #{generator_forward.4} parent=0 // pred_fallthru
    _
  // Predicated region
  $region14: #{generator_forward.4} parent=0 // pred_check
    _
  $region15: #{generator_forward.4} parent=0 // pred_check_branch
    %17 = sbr.rel (0) target = $region17
  $region16: #{generator_forward.4} parent=0 // pred_region
    _
  $region17: #{generator_forward.4} parent=0 // pred_fallthru
    _
  // Predicated region
  $region18: #{generator_forward.4} parent=0 // pred_check
    _
  $region19: #{generator_forward.4} parent=0 // pred_check_branch
    %19 = sbr.rel (0) target = $region21
  $region20: #{generator_forward.4} parent=0 // pred_region
    _
  $region21: #{generator_forward.4} parent=0 // pred_fallthru
    _
  %v21 = vld [vmem:[%s0] sm:$0x1]
  %v22 = vld [vmem:[%s2] sm:$0x1]
  %v23 = vld [vmem:[%s1] sm:$0xf]
  %v24 = vld [vmem:[%s1 + $0x4] sm:$0xf]
  %v25 = vld [vmem:[%s1 + $0x8] sm:$0xf]
  %v26 = vld [vmem:[%s1 + $0xc] sm:$0xf]
  %v27 = vld [vmem:[%s1 + $0x10] sm:$0xf]
  %v28 = vld [vmem:[%s1 + $0x14] sm:$0xf]
  %v29 = vld [vmem:[%s1 + $0x18] sm:$0xf]
  %v30 = vld [vmem:[%s1 + $0x1c] sm:$0xf]
  %v31 = vld [vmem:[%s1 + $0x20] sm:$0xf]
  %v32 = vld [vmem:[%s1 + $0x24] sm:$0xf]
  %v33 = vld [vmem:[%s1 + $0x28] sm:$0xf]
  %v34 = vld [vmem:[%s1 + $0x2c] sm:$0xf]
  %v35 = vld [vmem:[%s1 + $0x30] sm:$0x3]
  %v37 = vlaneseq
  %v38 = vshrl.u32 %v37, 7
  %v39 = vsub.s32 0, %v38
  %v40 = vrot.slane %v22, %v39
  %v55 = vunpack.c.l.b16 %v23
  %v56 = vunpack.c.l.b16 %v24
  %v57 = vunpack.c.l.b16 %v25
  %v58 = vunpack.c.l.b16 %v26
  %v59 = vunpack.c.l.b16 %v27
  %v60 = vunpack.c.l.b16 %v28
  %v61 = vunpack.c.l.b16 %v29
  %v62 = vunpack.c.l.b16 %v30
  %v63 = vunpack.c.l.b16 %v31
  %v64 = vunpack.c.l.b16 %v32
  %v65 = vunpack.c.l.b16 %v33
  %v66 = vunpack.c.l.b16 %v34
  %v67 = vunpack.c.l.b16 %v35
  %v68 = vpack.c.b16 %v56, %v55
  %v69 = vpack.c.b16 %v58, %v57
  %v70 = vpack.c.b16 %v60, %v59
  %v71 = vpack.c.b16 %v62, %v61
  %v72 = vpack.c.b16 %v64, %v63
  %v73 = vpack.c.b16 %v66, %v65
  %v74 = vpack.c.b16 %v67, %v67
  %vm81 = vcmask 818176
  %v83 = vsel %vm81, %v21, 0
  %vm85 = vcmask 1041408
  %v87 = vsel %vm85, %v74, 0
  %89 = vmatprep.subr.bf16.mxu0 0
  %90 = vmatpush1.bf16.msra.mxu0 %v68
  %91 = vmatprep.subr.bf16.mxu0 0
  %92 = vmatpush1.bf16.msra.mxu0 %v69
  %93 = vmatprep.subr.bf16.mxu0 0
  %94 = vmatpush1.bf16.msra.mxu0 %v70
  %95 = vmatprep.subr.bf16.mxu0 0
  %96 = vmatpush1.bf16.msra.mxu0 %v71
  %97 = vmatprep.subr.bf16.mxu0 0
  %98 = vmatpush1.bf16.msra.mxu0 %v72
  %99 = vmatprep.subr.bf16.mxu0 0
  %100 = vmatpush1.bf16.msra.mxu0 %v73
  %101 = vmatprep.subr.bf16.mxu0 0
  %102 = vmatpush1.bf16.msra.mxu0 %v87
  %103 = vmatprep.subr.bf16.mxu0 0
  %104 = vmatpush1.bf16.msra.mxu0 0
  %105 = vmatprep.subr.bf16.mxu0 0
  %106 = vmatpush1.bf16.msra.mxu0 0
  %107 = vmatprep.subr.bf16.mxu0 0
  %108 = vmatpush1.bf16.msra.mxu0 0
  %109 = vmatprep.subr.bf16.mxu0 0
  %110 = vmatpush1.bf16.msra.mxu0 0
  %111 = vmatprep.subr.bf16.mxu0 0
  %112 = vmatpush1.bf16.msra.mxu0 0
  %113 = vmatprep.subr.bf16.mxu0 0
  %114 = vmatpush1.bf16.msra.mxu0 0
  %115 = vmatprep.subr.bf16.mxu0 0
  %116 = vmatpush1.bf16.msra.mxu0 0
  %117 = vmatprep.subr.bf16.mxu0 0
  %118 = vmatpush1.bf16.msra.mxu0 0
  %119 = vmatprep.subr.bf16.mxu0 0
  %120 = vmatpush1.bf16.msra.mxu0 0
  %121 = vmatprep.mubr.bf16.mxu0 0
  %122 = vmatmul.mubr.bf16.gmra.mrb[0].mxu0 %v83
  %v123 = vpop.f32.mrb[0].mxu0
  %v124 = vadd.f32 %v40, %v123
  %v125 = vpop.f32.mrb[0].mxu0
  %v126 = vpop.f32.mrb[0].mxu0
  %v127 = vpop.f32.mrb[0].mxu0
  %128 = vdwg.mxu0
  %s129 = scalar_lea.vmem %s1, 52
  %v130 = vld [vmem:[%s129] sm:$0xf]
  %v131 = vld [vmem:[%s129 + $0x4] sm:$0xf]
  %v132 = vld [vmem:[%s129 + $0x8] sm:$0xf]
  %v133 = vld [vmem:[%s129 + $0xc] sm:$0xf]
  %v134 = vld [vmem:[%s129 + $0x10] sm:$0xf]
  %v135 = vld [vmem:[%s129 + $0x14] sm:$0xf]
  %v136 = vld [vmem:[%s129 + $0x18] sm:$0xf]
  %v137 = vld [vmem:[%s129 + $0x1c] sm:$0xf]
  %v138 = vld [vmem:[%s129 + $0x20] sm:$0xf]
  %v139 = vld [vmem:[%s129 + $0x24] sm:$0xf]
  %v140 = vld [vmem:[%s129 + $0x28] sm:$0xf]
  %v141 = vld [vmem:[%s129 + $0x2c] sm:$0xf]
  %v142 = vld [vmem:[%s129 + $0x30] sm:$0x3]
  %v156 = vunpack.c.l.b16 %v130
  %v157 = vunpack.c.l.b16 %v131
  %v158 = vunpack.c.l.b16 %v132
  %v159 = vunpack.c.l.b16 %v133
  %v160 = vunpack.c.l.b16 %v134
  %v161 = vunpack.c.l.b16 %v135
  %v162 = vunpack.c.l.b16 %v136
  %v163 = vunpack.c.l.b16 %v137
  %v164 = vunpack.c.l.b16 %v138
  %v165 = vunpack.c.l.b16 %v139
  %v166 = vunpack.c.l.b16 %v140
  %v167 = vunpack.c.l.b16 %v141
  %v168 = vunpack.c.l.b16 %v142
  %v169 = vpack.c.b16 %v157, %v156
  %v170 = vpack.c.b16 %v159, %v158
  %v171 = vpack.c.b16 %v161, %v160
  %v172 = vpack.c.b16 %v163, %v162
  %v173 = vpack.c.b16 %v165, %v164
  %v174 = vpack.c.b16 %v167, %v166
  %v175 = vpack.c.b16 %v168, %v168
  %v183 = vsel %vm85, %v175, 0
  %185 = vmatprep.subr.bf16.mxu0 0
  %186 = vmatpush1.bf16.msra.mxu0 %v169
  %187 = vmatprep.subr.bf16.mxu0 0
  %188 = vmatpush1.bf16.msra.mxu0 %v170
  %189 = vmatprep.subr.bf16.mxu0 0
  %190 = vmatpush1.bf16.msra.mxu0 %v171
  %191 = vmatprep.subr.bf16.mxu0 0
  %192 = vmatpush1.bf16.msra.mxu0 %v172
  %193 = vmatprep.subr.bf16.mxu0 0
  %194 = vmatpush1.bf16.msra.mxu0 %v173
  %195 = vmatprep.subr.bf16.mxu0 0
  %196 = vmatpush1.bf16.msra.mxu0 %v174
  %197 = vmatprep.subr.bf16.mxu0 0
  %198 = vmatpush1.bf16.msra.mxu0 %v183
  %199 = vmatprep.subr.bf16.mxu0 0
  %200 = vmatpush1.bf16.msra.mxu0 0
  %201 = vmatprep.subr.bf16.mxu0 0
  %202 = vmatpush1.bf16.msra.mxu0 0
  %203 = vmatprep.subr.bf16.mxu0 0
  %204 = vmatpush1.bf16.msra.mxu0 0
  %205 = vmatprep.subr.bf16.mxu0 0
  %206 = vmatpush1.bf16.msra.mxu0 0
  %207 = vmatprep.subr.bf16.mxu0 0
  %208 = vmatpush1.bf16.msra.mxu0 0
  %209 = vmatprep.subr.bf16.mxu0 0
  %210 = vmatpush1.bf16.msra.mxu0 0
  %211 = vmatprep.subr.bf16.mxu0 0
  %212 = vmatpush1.bf16.msra.mxu0 0
  %213 = vmatprep.subr.bf16.mxu0 0
  %214 = vmatpush1.bf16.msra.mxu0 0
  %215 = vmatprep.subr.bf16.mxu0 0
  %216 = vmatpush1.bf16.msra.mxu0 0
  %217 = vmatprep.mubr.bf16.mxu0 0
  %218 = vmatmul.mubr.bf16.gmra.mrb[0].mxu0 %v83
  %v219 = vpop.f32.mrb[0].mxu0
  %v220 = vadd.f32 %v40, %v219
  %v221 = vpop.f32.mrb[0].mxu0
  %v222 = vpop.f32.mrb[0].mxu0
  %v223 = vpop.f32.mrb[0].mxu0
  %224 = vdwg.mxu0
  %s225 = scalar_lea.vmem %s1, 104
  %v226 = vld [vmem:[%s225] sm:$0xf]
  %v227 = vld [vmem:[%s225 + $0x4] sm:$0xf]
  %v228 = vld [vmem:[%s225 + $0x8] sm:$0xf]
  %v229 = vld [vmem:[%s225 + $0xc] sm:$0xf]
  %v230 = vld [vmem:[%s225 + $0x10] sm:$0xf]
  %v231 = vld [vmem:[%s225 + $0x14] sm:$0xf]
  %v232 = vld [vmem:[%s225 + $0x18] sm:$0xf]
  %v233 = vld [vmem:[%s225 + $0x1c] sm:$0xf]
  %v234 = vld [vmem:[%s225 + $0x20] sm:$0xf]
  %v235 = vld [vmem:[%s225 + $0x24] sm:$0xf]
  %v236 = vld [vmem:[%s225 + $0x28] sm:$0xf]
  %v237 = vld [vmem:[%s225 + $0x2c] sm:$0xf]
  %v238 = vld [vmem:[%s225 + $0x30] sm:$0x3]
  %v252 = vunpack.c.l.b16 %v226
  %v253 = vunpack.c.l.b16 %v227
  %v254 = vunpack.c.l.b16 %v228
  %v255 = vunpack.c.l.b16 %v229
  %v256 = vunpack.c.l.b16 %v230
  %v257 = vunpack.c.l.b16 %v231
  %v258 = vunpack.c.l.b16 %v232
  %v259 = vunpack.c.l.b16 %v233
  %v260 = vunpack.c.l.b16 %v234
  %v261 = vunpack.c.l.b16 %v235
  %v262 = vunpack.c.l.b16 %v236
  %v263 = vunpack.c.l.b16 %v237
  %v264 = vunpack.c.l.b16 %v238
  %v265 = vpack.c.b16 %v253, %v252
  %v266 = vpack.c.b16 %v255, %v254
  %v267 = vpack.c.b16 %v257, %v256
  %v268 = vpack.c.b16 %v259, %v258
  %v269 = vpack.c.b16 %v261, %v260
  %v270 = vpack.c.b16 %v263, %v262
  %v271 = vpack.c.b16 %v264, %v264
  %v279 = vsel %vm85, %v271, 0
  %281 = vmatprep.subr.bf16.mxu0 0
  %282 = vmatpush1.bf16.msra.mxu0 %v265
  %283 = vmatprep.subr.bf16.mxu0 0
  %284 = vmatpush1.bf16.msra.mxu0 %v266
  %285 = vmatprep.subr.bf16.mxu0 0
  %286 = vmatpush1.bf16.msra.mxu0 %v267
  %287 = vmatprep.subr.bf16.mxu0 0
  %288 = vmatpush1.bf16.msra.mxu0 %v268
  %289 = vmatprep.subr.bf16.mxu0 0
  %290 = vmatpush1.bf16.msra.mxu0 %v269
  %291 = vmatprep.subr.bf16.mxu0 0
  %292 = vmatpush1.bf16.msra.mxu0 %v270
  %293 = vmatprep.subr.bf16.mxu0 0
  %294 = vmatpush1.bf16.msra.mxu0 %v279
  %295 = vmatprep.subr.bf16.mxu0 0
  %296 = vmatpush1.bf16.msra.mxu0 0
  %297 = vmatprep.subr.bf16.mxu0 0
  %298 = vmatpush1.bf16.msra.mxu0 0
  %299 = vmatprep.subr.bf16.mxu0 0
  %300 = vmatpush1.bf16.msra.mxu0 0
  %301 = vmatprep.subr.bf16.mxu0 0
  %302 = vmatpush1.bf16.msra.mxu0 0
  %303 = vmatprep.subr.bf16.mxu0 0
  %304 = vmatpush1.bf16.msra.mxu0 0
  %305 = vmatprep.subr.bf16.mxu0 0
  %306 = vmatpush1.bf16.msra.mxu0 0
  %307 = vmatprep.subr.bf16.mxu0 0
  %308 = vmatpush1.bf16.msra.mxu0 0
  %309 = vmatprep.subr.bf16.mxu0 0
  %310 = vmatpush1.bf16.msra.mxu0 0
  %311 = vmatprep.subr.bf16.mxu0 0
  %312 = vmatpush1.bf16.msra.mxu0 0
  %313 = vmatprep.mubr.bf16.mxu0 0
  %314 = vmatmul.mubr.bf16.gmra.mrb[0].mxu0 %v83
  %v315 = vpop.f32.mrb[0].mxu0
  %v316 = vadd.f32 %v40, %v315
  %v317 = vpop.f32.mrb[0].mxu0
  %v318 = vpop.f32.mrb[0].mxu0
  %v319 = vpop.f32.mrb[0].mxu0
  %320 = vdwg.mxu0
  %s321 = scalar_lea.vmem %s1, 156
  %v322 = vld [vmem:[%s321] sm:$0xf]
  %v323 = vld [vmem:[%s321 + $0x4] sm:$0xf]
  %v324 = vld [vmem:[%s321 + $0x8] sm:$0xf]
  %v325 = vld [vmem:[%s321 + $0xc] sm:$0xf]
  %v326 = vld [vmem:[%s321 + $0x10] sm:$0xf]
  %v327 = vld [vmem:[%s321 + $0x14] sm:$0xf]
  %v328 = vld [vmem:[%s321 + $0x18] sm:$0xf]
  %v329 = vld [vmem:[%s321 + $0x1c] sm:$0xf]
  %v330 = vld [vmem:[%s321 + $0x20] sm:$0xf]
  %v331 = vld [vmem:[%s321 + $0x24] sm:$0xf]
  %v332 = vld [vmem:[%s321 + $0x28] sm:$0xf]
  %v333 = vld [vmem:[%s321 + $0x2c] sm:$0xf]
  %v334 = vld [vmem:[%s321 + $0x30] sm:$0x3]
  %v348 = vunpack.c.l.b16 %v322
  %v349 = vunpack.c.l.b16 %v323
  %v350 = vunpack.c.l.b16 %v324
  %v351 = vunpack.c.l.b16 %v325
  %v352 = vunpack.c.l.b16 %v326
  %v353 = vunpack.c.l.b16 %v327
  %v354 = vunpack.c.l.b16 %v328
  %v355 = vunpack.c.l.b16 %v329
  %v356 = vunpack.c.l.b16 %v330
  %v357 = vunpack.c.l.b16 %v331
  %v358 = vunpack.c.l.b16 %v332
  %v359 = vunpack.c.l.b16 %v333
  %v360 = vunpack.c.l.b16 %v334
  %v361 = vpack.c.b16 %v349, %v348
  %v362 = vpack.c.b16 %v351, %v350
  %v363 = vpack.c.b16 %v353, %v352
  %v364 = vpack.c.b16 %v355, %v354
  %v365 = vpack.c.b16 %v357, %v356
  %v366 = vpack.c.b16 %v359, %v358
  %v367 = vpack.c.b16 %v360, %v360
  %v375 = vsel %vm85, %v367, 0
  %377 = vmatprep.subr.bf16.mxu0 0
  %378 = vmatpush1.bf16.msra.mxu0 %v361
  %379 = vmatprep.subr.bf16.mxu0 0
  %380 = vmatpush1.bf16.msra.mxu0 %v362
  %381 = vmatprep.subr.bf16.mxu0 0
  %382 = vmatpush1.bf16.msra.mxu0 %v363
  %383 = vmatprep.subr.bf16.mxu0 0
  %384 = vmatpush1.bf16.msra.mxu0 %v364
  %385 = vmatprep.subr.bf16.mxu0 0
  %386 = vmatpush1.bf16.msra.mxu0 %v365
  %387 = vmatprep.subr.bf16.mxu0 0
  %388 = vmatpush1.bf16.msra.mxu0 %v366
  %389 = vmatprep.subr.bf16.mxu0 0
  %390 = vmatpush1.bf16.msra.mxu0 %v375
  %391 = vmatprep.subr.bf16.mxu0 0
  %392 = vmatpush1.bf16.msra.mxu0 0
  %393 = vmatprep.subr.bf16.mxu0 0
  %394 = vmatpush1.bf16.msra.mxu0 0
  %395 = vmatprep.subr.bf16.mxu0 0
  %396 = vmatpush1.bf16.msra.mxu0 0
  %397 = vmatprep.subr.bf16.mxu0 0
  %398 = vmatpush1.bf16.msra.mxu0 0
  %399 = vmatprep.subr.bf16.mxu0 0
  %400 = vmatpush1.bf16.msra.mxu0 0
  %401 = vmatprep.subr.bf16.mxu0 0
  %402 = vmatpush1.bf16.msra.mxu0 0
  %403 = vmatprep.subr.bf16.mxu0 0
  %404 = vmatpush1.bf16.msra.mxu0 0
  %405 = vmatprep.subr.bf16.mxu0 0
  %406 = vmatpush1.bf16.msra.mxu0 0
  %407 = vmatprep.subr.bf16.mxu0 0
  %408 = vmatpush1.bf16.msra.mxu0 0
  %409 = vmatprep.mubr.bf16.mxu0 0
  %410 = vmatmul.mubr.bf16.gmra.mrb[0].mxu0 %v83
  %v411 = vpop.f32.mrb[0].mxu0
  %v412 = vadd.f32 %v40, %v411
  %v413 = vpop.f32.mrb[0].mxu0
  %v414 = vpop.f32.mrb[0].mxu0
  %v415 = vpop.f32.mrb[0].mxu0
  %416 = vdwg.mxu0
  %s417 = scalar_lea.vmem %s1, 208
  %v418 = vld [vmem:[%s417] sm:$0xf]
  %v419 = vld [vmem:[%s417 + $0x4] sm:$0xf]
  %v420 = vld [vmem:[%s417 + $0x8] sm:$0xf]
  %v421 = vld [vmem:[%s417 + $0xc] sm:$0xf]
  %v422 = vld [vmem:[%s417 + $0x10] sm:$0xf]
  %v423 = vld [vmem:[%s417 + $0x14] sm:$0xf]
  %v424 = vld [vmem:[%s417 + $0x18] sm:$0xf]
  %v425 = vld [vmem:[%s417 + $0x1c] sm:$0xf]
  %v426 = vld [vmem:[%s417 + $0x20] sm:$0xf]
  %v427 = vld [vmem:[%s417 + $0x24] sm:$0xf]
  %v428 = vld [vmem:[%s417 + $0x28] sm:$0xf]
  %v429 = vld [vmem:[%s417 + $0x2c] sm:$0xf]
  %v430 = vld [vmem:[%s417 + $0x30] sm:$0x3]
  %v444 = vunpack.c.l.b16 %v418
  %v445 = vunpack.c.l.b16 %v419
  %v446 = vunpack.c.l.b16 %v420
  %v447 = vunpack.c.l.b16 %v421
  %v448 = vunpack.c.l.b16 %v422
  %v449 = vunpack.c.l.b16 %v423
  %v450 = vunpack.c.l.b16 %v424
  %v451 = vunpack.c.l.b16 %v425
  %v452 = vunpack.c.l.b16 %v426
  %v453 = vunpack.c.l.b16 %v427
  %v454 = vunpack.c.l.b16 %v428
  %v455 = vunpack.c.l.b16 %v429
  %v456 = vunpack.c.l.b16 %v430
  %v457 = vpack.c.b16 %v445, %v444
  %v458 = vpack.c.b16 %v447, %v446
  %v459 = vpack.c.b16 %v449, %v448
  %v460 = vpack.c.b16 %v451, %v450
  %v461 = vpack.c.b16 %v453, %v452
  %v462 = vpack.c.b16 %v455, %v454
  %v463 = vpack.c.b16 %v456, %v456
  %v471 = vsel %vm85, %v463, 0
  %473 = vmatprep.subr.bf16.mxu0 0
  %474 = vmatpush1.bf16.msra.mxu0 %v457
  %475 = vmatprep.subr.bf16.mxu0 0
  %476 = vmatpush1.bf16.msra.mxu0 %v458
  %477 = vmatprep.subr.bf16.mxu0 0
  %478 = vmatpush1.bf16.msra.mxu0 %v459
  %479 = vmatprep.subr.bf16.mxu0 0
  %480 = vmatpush1.bf16.msra.mxu0 %v460
  %481 = vmatprep.subr.bf16.mxu0 0
  %482 = vmatpush1.bf16.msra.mxu0 %v461
  %483 = vmatprep.subr.bf16.mxu0 0
  %484 = vmatpush1.bf16.msra.mxu0 %v462
  %485 = vmatprep.subr.bf16.mxu0 0
  %486 = vmatpush1.bf16.msra.mxu0 %v471
  %487 = vmatprep.subr.bf16.mxu0 0
  %488 = vmatpush1.bf16.msra.mxu0 0
  %489 = vmatprep.subr.bf16.mxu0 0
  %490 = vmatpush1.bf16.msra.mxu0 0
  %491 = vmatprep.subr.bf16.mxu0 0
  %492 = vmatpush1.bf16.msra.mxu0 0
  %493 = vmatprep.subr.bf16.mxu0 0
  %494 = vmatpush1.bf16.msra.mxu0 0
  %495 = vmatprep.subr.bf16.mxu0 0
  %496 = vmatpush1.bf16.msra.mxu0 0
  %497 = vmatprep.subr.bf16.mxu0 0
  %498 = vmatpush1.bf16.msra.mxu0 0
  %499 = vmatprep.subr.bf16.mxu0 0
  %500 = vmatpush1.bf16.msra.mxu0 0
  %501 = vmatprep.subr.bf16.mxu0 0
  %502 = vmatpush1.bf16.msra.mxu0 0
  %503 = vmatprep.subr.bf16.mxu0 0
  %504 = vmatpush1.bf16.msra.mxu0 0
  %505 = vmatprep.mubr.bf16.mxu0 0
  %506 = vmatmul.mubr.bf16.gmra.mrb[0].mxu0 %v83
  %v507 = vpop.f32.mrb[0].mxu0
  %v508 = vadd.f32 %v40, %v507
  %v509 = vpop.f32.mrb[0].mxu0
  %v510 = vpop.f32.mrb[0].mxu0
  %v511 = vpop.f32.mrb[0].mxu0
  %512 = vdwg.mxu0
  %s513 = scalar_lea.vmem %s1, 260
  %v514 = vld [vmem:[%s513] sm:$0xf]
  %v515 = vld [vmem:[%s513 + $0x4] sm:$0xf]
  %v516 = vld [vmem:[%s513 + $0x8] sm:$0xf]
  %v517 = vld [vmem:[%s513 + $0xc] sm:$0xf]
  %v518 = vld [vmem:[%s513 + $0x10] sm:$0xf]
  %v519 = vld [vmem:[%s513 + $0x14] sm:$0xf]
  %v520 = vld [vmem:[%s513 + $0x18] sm:$0xf]
  %v521 = vld [vmem:[%s513 + $0x1c] sm:$0xf]
  %v522 = vld [vmem:[%s513 + $0x20] sm:$0xf]
  %v523 = vld [vmem:[%s513 + $0x24] sm:$0xf]
  %v524 = vld [vmem:[%s513 + $0x28] sm:$0xf]
  %v525 = vld [vmem:[%s513 + $0x2c] sm:$0xf]
  %v526 = vld [vmem:[%s513 + $0x30] sm:$0x3]
  %v540 = vunpack.c.l.b16 %v514
  %v541 = vunpack.c.l.b16 %v515
  %v542 = vunpack.c.l.b16 %v516
  %v543 = vunpack.c.l.b16 %v517
  %v544 = vunpack.c.l.b16 %v518
  %v545 = vunpack.c.l.b16 %v519
  %v546 = vunpack.c.l.b16 %v520
  %v547 = vunpack.c.l.b16 %v521
  %v548 = vunpack.c.l.b16 %v522
  %v549 = vunpack.c.l.b16 %v523
  %v550 = vunpack.c.l.b16 %v524
  %v551 = vunpack.c.l.b16 %v525
  %v552 = vunpack.c.l.b16 %v526
  %v553 = vpack.c.b16 %v541, %v540
  %v554 = vpack.c.b16 %v543, %v542
  %v555 = vpack.c.b16 %v545, %v544
  %v556 = vpack.c.b16 %v547, %v546
  %v557 = vpack.c.b16 %v549, %v548
  %v558 = vpack.c.b16 %v551, %v550
  %v559 = vpack.c.b16 %v552, %v552
  %v567 = vsel %vm85, %v559, 0
  %569 = vmatprep.subr.bf16.mxu0 0
  %570 = vmatpush1.bf16.msra.mxu0 %v553
  %571 = vmatprep.subr.bf16.mxu0 0
  %572 = vmatpush1.bf16.msra.mxu0 %v554
  %573 = vmatprep.subr.bf16.mxu0 0
  %574 = vmatpush1.bf16.msra.mxu0 %v555
  %575 = vmatprep.subr.bf16.mxu0 0
  %576 = vmatpush1.bf16.msra.mxu0 %v556
  %577 = vmatprep.subr.bf16.mxu0 0
  %578 = vmatpush1.bf16.msra.mxu0 %v557
  %579 = vmatprep.subr.bf16.mxu0 0
  %580 = vmatpush1.bf16.msra.mxu0 %v558
  %581 = vmatprep.subr.bf16.mxu0 0
  %582 = vmatpush1.bf16.msra.mxu0 %v567
  %583 = vmatprep.subr.bf16.mxu0 0
  %584 = vmatpush1.bf16.msra.mxu0 0
  %585 = vmatprep.subr.bf16.mxu0 0
  %586 = vmatpush1.bf16.msra.mxu0 0
  %587 = vmatprep.subr.bf16.mxu0 0
  %588 = vmatpush1.bf16.msra.mxu0 0
  %589 = vmatprep.subr.bf16.mxu0 0
  %590 = vmatpush1.bf16.msra.mxu0 0
  %591 = vmatprep.subr.bf16.mxu0 0
  %592 = vmatpush1.bf16.msra.mxu0 0
  %593 = vmatprep.subr.bf16.mxu0 0
  %594 = vmatpush1.bf16.msra.mxu0 0
  %595 = vmatprep.subr.bf16.mxu0 0
  %596 = vmatpush1.bf16.msra.mxu0 0
  %597 = vmatprep.subr.bf16.mxu0 0
  %598 = vmatpush1.bf16.msra.mxu0 0
  %599 = vmatprep.subr.bf16.mxu0 0
  %600 = vmatpush1.bf16.msra.mxu0 0
  %601 = vmatprep.mubr.bf16.mxu0 0
  %602 = vmatmul.mubr.bf16.gmra.mrb[0].mxu0 %v83
  %v603 = vpop.f32.mrb[0].mxu0
  %v604 = vadd.f32 %v40, %v603
  %v605 = vpop.f32.mrb[0].mxu0
  %v606 = vpop.f32.mrb[0].mxu0
  %v607 = vpop.f32.mrb[0].mxu0
  %608 = vdwg.mxu0
  %s609 = scalar_lea.vmem %s1, 312
  %v610 = vld [vmem:[%s609] sm:$0xf]
  %v611 = vld [vmem:[%s609 + $0x4] sm:$0xf]
  %v612 = vld [vmem:[%s609 + $0x8] sm:$0xf]
  %v613 = vld [vmem:[%s609 + $0xc] sm:$0xf]
  %v614 = vld [vmem:[%s609 + $0x10] sm:$0xf]
  %v615 = vld [vmem:[%s609 + $0x14] sm:$0xf]
  %v616 = vld [vmem:[%s609 + $0x18] sm:$0xf]
  %v617 = vld [vmem:[%s609 + $0x1c] sm:$0xf]
  %v618 = vld [vmem:[%s609 + $0x20] sm:$0xf]
  %v619 = vld [vmem:[%s609 + $0x24] sm:$0xf]
  %v620 = vld [vmem:[%s609 + $0x28] sm:$0xf]
  %v621 = vld [vmem:[%s609 + $0x2c] sm:$0xf]
  %v622 = vld [vmem:[%s609 + $0x30] sm:$0x3]
  %v636 = vunpack.c.l.b16 %v610
  %v637 = vunpack.c.l.b16 %v611
  %v638 = vunpack.c.l.b16 %v612
  %v639 = vunpack.c.l.b16 %v613
  %v640 = vunpack.c.l.b16 %v614
  %v641 = vunpack.c.l.b16 %v615
  %v642 = vunpack.c.l.b16 %v616
  %v643 = vunpack.c.l.b16 %v617
  %v644 = vunpack.c.l.b16 %v618
  %v645 = vunpack.c.l.b16 %v619
  %v646 = vunpack.c.l.b16 %v620
  %v647 = vunpack.c.l.b16 %v621
  %v648 = vunpack.c.l.b16 %v622
  %v649 = vpack.c.b16 %v637, %v636
  %v650 = vpack.c.b16 %v639, %v638
  %v651 = vpack.c.b16 %v641, %v640
  %v652 = vpack.c.b16 %v643, %v642
  %v653 = vpack.c.b16 %v645, %v644
  %v654 = vpack.c.b16 %v647, %v646
  %v655 = vpack.c.b16 %v648, %v648
  %v663 = vsel %vm85, %v655, 0
  %665 = vmatprep.subr.bf16.mxu0 0
  %666 = vmatpush1.bf16.msra.mxu0 %v649
  %667 = vmatprep.subr.bf16.mxu0 0
  %668 = vmatpush1.bf16.msra.mxu0 %v650
  %669 = vmatprep.subr.bf16.mxu0 0
  %670 = vmatpush1.bf16.msra.mxu0 %v651
  %671 = vmatprep.subr.bf16.mxu0 0
  %672 = vmatpush1.bf16.msra.mxu0 %v652
  %673 = vmatprep.subr.bf16.mxu0 0
  %674 = vmatpush1.bf16.msra.mxu0 %v653
  %675 = vmatprep.subr.bf16.mxu0 0
  %676 = vmatpush1.bf16.msra.mxu0 %v654
  %677 = vmatprep.subr.bf16.mxu0 0
  %678 = vmatpush1.bf16.msra.mxu0 %v663
  %679 = vmatprep.subr.bf16.mxu0 0
  %680 = vmatpush1.bf16.msra.mxu0 0
  %681 = vmatprep.subr.bf16.mxu0 0
  %682 = vmatpush1.bf16.msra.mxu0 0
  %683 = vmatprep.subr.bf16.mxu0 0
  %684 = vmatpush1.bf16.msra.mxu0 0
  %685 = vmatprep.subr.bf16.mxu0 0
  %686 = vmatpush1.bf16.msra.mxu0 0
  %687 = vmatprep.subr.bf16.mxu0 0
  %688 = vmatpush1.bf16.msra.mxu0 0
  %689 = vmatprep.subr.bf16.mxu0 0
  %690 = vmatpush1.bf16.msra.mxu0 0
  %691 = vmatprep.subr.bf16.mxu0 0
  %692 = vmatpush1.bf16.msra.mxu0 0
  %693 = vmatprep.subr.bf16.mxu0 0
  %694 = vmatpush1.bf16.msra.mxu0 0
  %695 = vmatprep.subr.bf16.mxu0 0
  %696 = vmatpush1.bf16.msra.mxu0 0
  %697 = vmatprep.mubr.bf16.mxu0 0
  %698 = vmatmul.mubr.bf16.gmra.mrb[0].mxu0 %v83
  %v699 = vpop.f32.mrb[0].mxu0
  %v700 = vadd.f32 %v40, %v699
  %v701 = vpop.f32.mrb[0].mxu0
  %v702 = vpop.f32.mrb[0].mxu0
  %v703 = vpop.f32.mrb[0].mxu0
  %704 = vdwg.mxu0
  %s705 = scalar_lea.vmem %s1, 364
  %v706 = vld [vmem:[%s705] sm:$0xf]
  %v707 = vld [vmem:[%s705 + $0x4] sm:$0xf]
  %v708 = vld [vmem:[%s705 + $0x8] sm:$0xf]
  %v709 = vld [vmem:[%s705 + $0xc] sm:$0xf]
  %v710 = vld [vmem:[%s705 + $0x10] sm:$0xf]
  %v711 = vld [vmem:[%s705 + $0x14] sm:$0xf]
  %v712 = vld [vmem:[%s705 + $0x18] sm:$0xf]
  %v713 = vld [vmem:[%s705 + $0x1c] sm:$0xf]
  %v714 = vld [vmem:[%s705 + $0x20] sm:$0xf]
  %v715 = vld [vmem:[%s705 + $0x24] sm:$0xf]
  %v716 = vld [vmem:[%s705 + $0x28] sm:$0xf]
  %v717 = vld [vmem:[%s705 + $0x2c] sm:$0xf]
  %v718 = vld [vmem:[%s705 + $0x30] sm:$0x3]
  %v732 = vunpack.c.l.b16 %v706
  %v733 = vunpack.c.l.b16 %v707
  %v734 = vunpack.c.l.b16 %v708
  %v735 = vunpack.c.l.b16 %v709
  %v736 = vunpack.c.l.b16 %v710
  %v737 = vunpack.c.l.b16 %v711
  %v738 = vunpack.c.l.b16 %v712
  %v739 = vunpack.c.l.b16 %v713
  %v740 = vunpack.c.l.b16 %v714
  %v741 = vunpack.c.l.b16 %v715
  %v742 = vunpack.c.l.b16 %v716
  %v743 = vunpack.c.l.b16 %v717
  %v744 = vunpack.c.l.b16 %v718
  %v745 = vpack.c.b16 %v733, %v732
  %v746 = vpack.c.b16 %v735, %v734
  %v747 = vpack.c.b16 %v737, %v736
  %v748 = vpack.c.b16 %v739, %v738
  %v749 = vpack.c.b16 %v741, %v740
  %v750 = vpack.c.b16 %v743, %v742
  %v751 = vpack.c.b16 %v744, %v744
  %v759 = vsel %vm85, %v751, 0
  %761 = vmatprep.subr.bf16.mxu0 0
  %762 = vmatpush1.bf16.msra.mxu0 %v745
  %763 = vmatprep.subr.bf16.mxu0 0
  %764 = vmatpush1.bf16.msra.mxu0 %v746
  %765 = vmatprep.subr.bf16.mxu0 0
  %766 = vmatpush1.bf16.msra.mxu0 %v747
  %767 = vmatprep.subr.bf16.mxu0 0
  %768 = vmatpush1.bf16.msra.mxu0 %v748
  %769 = vmatprep.subr.bf16.mxu0 0
  %770 = vmatpush1.bf16.msra.mxu0 %v749
  %771 = vmatprep.subr.bf16.mxu0 0
  %772 = vmatpush1.bf16.msra.mxu0 %v750
  %773 = vmatprep.subr.bf16.mxu0 0
  %774 = vmatpush1.bf16.msra.mxu0 %v759
  %775 = vmatprep.subr.bf16.mxu0 0
  %776 = vmatpush1.bf16.msra.mxu0 0
  %777 = vmatprep.subr.bf16.mxu0 0
  %778 = vmatpush1.bf16.msra.mxu0 0
  %779 = vmatprep.subr.bf16.mxu0 0
  %780 = vmatpush1.bf16.msra.mxu0 0
  %781 = vmatprep.subr.bf16.mxu0 0
  %782 = vmatpush1.bf16.msra.mxu0 0
  %783 = vmatprep.subr.bf16.mxu0 0
  %784 = vmatpush1.bf16.msra.mxu0 0
  %785 = vmatprep.subr.bf16.mxu0 0
  %786 = vmatpush1.bf16.msra.mxu0 0
  %787 = vmatprep.subr.bf16.mxu0 0
  %788 = vmatpush1.bf16.msra.mxu0 0
  %789 = vmatprep.subr.bf16.mxu0 0
  %790 = vmatpush1.bf16.msra.mxu0 0
  %791 = vmatprep.subr.bf16.mxu0 0
  %792 = vmatpush1.bf16.msra.mxu0 0
  %793 = vmatprep.mubr.bf16.mxu0 0
  %794 = vmatmul.mubr.bf16.gmra.mrb[0].mxu0 %v83
  %v795 = vpop.f32.mrb[0].mxu0
  %v796 = vadd.f32 %v40, %v795
  %v797 = vpop.f32.mrb[0].mxu0
  %v798 = vpop.f32.mrb[0].mxu0
  %v799 = vpop.f32.mrb[0].mxu0
  %800 = vdwg.mxu0
  %s801 = scalar_lea.vmem %s1, 416
  %v802 = vld [vmem:[%s801] sm:$0xf]
  %v803 = vld [vmem:[%s801 + $0x4] sm:$0xf]
  %v804 = vld [vmem:[%s801 + $0x8] sm:$0xf]
  %v805 = vld [vmem:[%s801 + $0xc] sm:$0xf]
  %v806 = vld [vmem:[%s801 + $0x10] sm:$0xf]
  %v807 = vld [vmem:[%s801 + $0x14] sm:$0xf]
  %v808 = vld [vmem:[%s801 + $0x18] sm:$0xf]
  %v809 = vld [vmem:[%s801 + $0x1c] sm:$0xf]
  %v810 = vld [vmem:[%s801 + $0x20] sm:$0xf]
  %v811 = vld [vmem:[%s801 + $0x24] sm:$0xf]
  %v812 = vld [vmem:[%s801 + $0x28] sm:$0xf]
  %v813 = vld [vmem:[%s801 + $0x2c] sm:$0xf]
  %v814 = vld [vmem:[%s801 + $0x30] sm:$0x3]
  %v828 = vunpack.c.l.b16 %v802
  %v829 = vunpack.c.l.b16 %v803
  %v830 = vunpack.c.l.b16 %v804
  %v831 = vunpack.c.l.b16 %v805
  %v832 = vunpack.c.l.b16 %v806
  %v833 = vunpack.c.l.b16 %v807
  %v834 = vunpack.c.l.b16 %v808
  %v835 = vunpack.c.l.b16 %v809
  %v836 = vunpack.c.l.b16 %v810
  %v837 = vunpack.c.l.b16 %v811
  %v838 = vunpack.c.l.b16 %v812
  %v839 = vunpack.c.l.b16 %v813
  %v840 = vunpack.c.l.b16 %v814
  %v841 = vpack.c.b16 %v829, %v828
  %v842 = vpack.c.b16 %v831, %v830
  %v843 = vpack.c.b16 %v833, %v832
  %v844 = vpack.c.b16 %v835, %v834
  %v845 = vpack.c.b16 %v837, %v836
  %v846 = vpack.c.b16 %v839, %v838
  %v847 = vpack.c.b16 %v840, %v840
  %v855 = vsel %vm85, %v847, 0
  %857 = vmatprep.subr.bf16.mxu0 0
  %858 = vmatpush1.bf16.msra.mxu0 %v841
  %859 = vmatprep.subr.bf16.mxu0 0
  %860 = vmatpush1.bf16.msra.mxu0 %v842
  %861 = vmatprep.subr.bf16.mxu0 0
  %862 = vmatpush1.bf16.msra.mxu0 %v843
  %863 = vmatprep.subr.bf16.mxu0 0
  %864 = vmatpush1.bf16.msra.mxu0 %v844
  %865 = vmatprep.subr.bf16.mxu0 0
  %866 = vmatpush1.bf16.msra.mxu0 %v845
  %867 = vmatprep.subr.bf16.mxu0 0
  %868 = vmatpush1.bf16.msra.mxu0 %v846
  %869 = vmatprep.subr.bf16.mxu0 0
  %870 = vmatpush1.bf16.msra.mxu0 %v855
  %871 = vmatprep.subr.bf16.mxu0 0
  %872 = vmatpush1.bf16.msra.mxu0 0
  %873 = vmatprep.subr.bf16.mxu0 0
  %874 = vmatpush1.bf16.msra.mxu0 0
  %875 = vmatprep.subr.bf16.mxu0 0
  %876 = vmatpush1.bf16.msra.mxu0 0
  %877 = vmatprep.subr.bf16.mxu0 0
  %878 = vmatpush1.bf16.msra.mxu0 0
  %879 = vmatprep.subr.bf16.mxu0 0
  %880 = vmatpush1.bf16.msra.mxu0 0
  %881 = vmatprep.subr.bf16.mxu0 0
  %882 = vmatpush1.bf16.msra.mxu0 0
  %883 = vmatprep.subr.bf16.mxu0 0
  %884 = vmatpush1.bf16.msra.mxu0 0
  %885 = vmatprep.subr.bf16.mxu0 0
  %886 = vmatpush1.bf16.msra.mxu0 0
  %887 = vmatprep.subr.bf16.mxu0 0
  %888 = vmatpush1.bf16.msra.mxu0 0
  %889 = vmatprep.mubr.bf16.mxu0 0
  %890 = vmatmul.mubr.bf16.gmra.mrb[0].mxu0 %v83
  %v891 = vpop.f32.mrb[0].mxu0
  %v892 = vadd.f32 %v40, %v891
  %v893 = vpop.f32.mrb[0].mxu0
  %v894 = vpop.f32.mrb[0].mxu0
  %v895 = vpop.f32.mrb[0].mxu0
  %896 = vdwg.mxu0
  %s897 = scalar_lea.vmem %s1, 468
  %v898 = vld [vmem:[%s897] sm:$0xf]
  %v899 = vld [vmem:[%s897 + $0x4] sm:$0xf]
  %v900 = vld [vmem:[%s897 + $0x8] sm:$0xf]
  %v901 = vld [vmem:[%s897 + $0xc] sm:$0xf]
  %v902 = vld [vmem:[%s897 + $0x10] sm:$0xf]
  %v903 = vld [vmem:[%s897 + $0x14] sm:$0xf]
  %v904 = vld [vmem:[%s897 + $0x18] sm:$0xf]
  %v905 = vld [vmem:[%s897 + $0x1c] sm:$0xf]
  %v906 = vld [vmem:[%s897 + $0x20] sm:$0xf]
  %v907 = vld [vmem:[%s897 + $0x24] sm:$0xf]
  %v908 = vld [vmem:[%s897 + $0x28] sm:$0xf]
  %v909 = vld [vmem:[%s897 + $0x2c] sm:$0xf]
  %v910 = vld [vmem:[%s897 + $0x30] sm:$0x3]
  %v924 = vunpack.c.l.b16 %v898
  %v925 = vunpack.c.l.b16 %v899
  %v926 = vunpack.c.l.b16 %v900
  %v927 = vunpack.c.l.b16 %v901
  %v928 = vunpack.c.l.b16 %v902
  %v929 = vunpack.c.l.b16 %v903
  %v930 = vunpack.c.l.b16 %v904
  %v931 = vunpack.c.l.b16 %v905
  %v932 = vunpack.c.l.b16 %v906
  %v933 = vunpack.c.l.b16 %v907
  %v934 = vunpack.c.l.b16 %v908
  %v935 = vunpack.c.l.b16 %v909
  %v936 = vunpack.c.l.b16 %v910
  %v937 = vpack.c.b16 %v925, %v924
  %v938 = vpack.c.b16 %v927, %v926
  %v939 = vpack.c.b16 %v929, %v928
  %v940 = vpack.c.b16 %v931, %v930
  %v941 = vpack.c.b16 %v933, %v932
  %v942 = vpack.c.b16 %v935, %v934
  %v943 = vpack.c.b16 %v936, %v936
  %v951 = vsel %vm85, %v943, 0
  %953 = vmatprep.subr.bf16.mxu0 0
  %954 = vmatpush1.bf16.msra.mxu0 %v937
  %955 = vmatprep.subr.bf16.mxu0 0
  %956 = vmatpush1.bf16.msra.mxu0 %v938
  %957 = vmatprep.subr.bf16.mxu0 0
  %958 = vmatpush1.bf16.msra.mxu0 %v939
  %959 = vmatprep.subr.bf16.mxu0 0
  %960 = vmatpush1.bf16.msra.mxu0 %v940
  %961 = vmatprep.subr.bf16.mxu0 0
  %962 = vmatpush1.bf16.msra.mxu0 %v941
  %963 = vmatprep.subr.bf16.mxu0 0
  %964 = vmatpush1.bf16.msra.mxu0 %v942
  %965 = vmatprep.subr.bf16.mxu0 0
  %966 = vmatpush1.bf16.msra.mxu0 %v951
  %967 = vmatprep.subr.bf16.mxu0 0
  %968 = vmatpush1.bf16.msra.mxu0 0
  %969 = vmatprep.subr.bf16.mxu0 0
  %970 = vmatpush1.bf16.msra.mxu0 0
  %971 = vmatprep.subr.bf16.mxu0 0
  %972 = vmatpush1.bf16.msra.mxu0 0
  %973 = vmatprep.subr.bf16.mxu0 0
  %974 = vmatpush1.bf16.msra.mxu0 0
  %975 = vmatprep.subr.bf16.mxu0 0
  %976 = vmatpush1.bf16.msra.mxu0 0
  %977 = vmatprep.subr.bf16.mxu0 0
  %978 = vmatpush1.bf16.msra.mxu0 0
  %979 = vmatprep.subr.bf16.mxu0 0
  %980 = vmatpush1.bf16.msra.mxu0 0
  %981 = vmatprep.subr.bf16.mxu0 0
  %982 = vmatpush1.bf16.msra.mxu0 0
  %983 = vmatprep.subr.bf16.mxu0 0
  %984 = vmatpush1.bf16.msra.mxu0 0
  %985 = vmatprep.mubr.bf16.mxu0 0
  %986 = vmatmul.mubr.bf16.gmra.mrb[0].mxu0 %v83
  %v987 = vpop.f32.mrb[0].mxu0
  %v988 = vadd.f32 %v40, %v987
  %v989 = vpop.f32.mrb[0].mxu0
  %v990 = vpop.f32.mrb[0].mxu0
  %v991 = vpop.f32.mrb[0].mxu0
  %992 = vdwg.mxu0
  %s993 = scalar_lea.vmem %s1, 520
  %v994 = vld [vmem:[%s993] sm:$0xf]
  %v995 = vld [vmem:[%s993 + $0x4] sm:$0xf]
  %v996 = vld [vmem:[%s993 + $0x8] sm:$0xf]
  %v997 = vld [vmem:[%s993 + $0xc] sm:$0xf]
  %v998 = vld [vmem:[%s993 + $0x10] sm:$0xf]
  %v999 = vld [vmem:[%s993 + $0x14] sm:$0xf]
  %v1000 = vld [vmem:[%s993 + $0x18] sm:$0xf]
  %v1001 = vld [vmem:[%s993 + $0x1c] sm:$0xf]
  %v1002 = vld [vmem:[%s993 + $0x20] sm:$0xf]
  %v1003 = vld [vmem:[%s993 + $0x24] sm:$0xf]
  %v1004 = vld [vmem:[%s993 + $0x28] sm:$0xf]
  %v1005 = vld [vmem:[%s993 + $0x2c] sm:$0xf]
  %v1006 = vld [vmem:[%s993 + $0x30] sm:$0x3]
  %v1020 = vunpack.c.l.b16 %v994
  %v1021 = vunpack.c.l.b16 %v995
  %v1022 = vunpack.c.l.b16 %v996
  %v1023 = vunpack.c.l.b16 %v997
  %v1024 = vunpack.c.l.b16 %v998
  %v1025 = vunpack.c.l.b16 %v999
  %v1026 = vunpack.c.l.b16 %v1000
  %v1027 = vunpack.c.l.b16 %v1001
  %v1028 = vunpack.c.l.b16 %v1002
  %v1029 = vunpack.c.l.b16 %v1003
  %v1030 = vunpack.c.l.b16 %v1004
  %v1031 = vunpack.c.l.b16 %v1005
  %v1032 = vunpack.c.l.b16 %v1006
  %v1033 = vpack.c.b16 %v1021, %v1020
  %v1034 = vpack.c.b16 %v1023, %v1022
  %v1035 = vpack.c.b16 %v1025, %v1024
  %v1036 = vpack.c.b16 %v1027, %v1026
  %v1037 = vpack.c.b16 %v1029, %v1028
  %v1038 = vpack.c.b16 %v1031, %v1030
  %v1039 = vpack.c.b16 %v1032, %v1032
  %v1047 = vsel %vm85, %v1039, 0
  %1049 = vmatprep.subr.bf16.mxu0 0
  %1050 = vmatpush1.bf16.msra.mxu0 %v1033
  %1051 = vmatprep.subr.bf16.mxu0 0
  %1052 = vmatpush1.bf16.msra.mxu0 %v1034
  %1053 = vmatprep.subr.bf16.mxu0 0
  %1054 = vmatpush1.bf16.msra.mxu0 %v1035
  %1055 = vmatprep.subr.bf16.mxu0 0
  %1056 = vmatpush1.bf16.msra.mxu0 %v1036
  %1057 = vmatprep.subr.bf16.mxu0 0
  %1058 = vmatpush1.bf16.msra.mxu0 %v1037
  %1059 = vmatprep.subr.bf16.mxu0 0
  %1060 = vmatpush1.bf16.msra.mxu0 %v1038
  %1061 = vmatprep.subr.bf16.mxu0 0
  %1062 = vmatpush1.bf16.msra.mxu0 %v1047
  %1063 = vmatprep.subr.bf16.mxu0 0
  %1064 = vmatpush1.bf16.msra.mxu0 0
  %1065 = vmatprep.subr.bf16.mxu0 0
  %1066 = vmatpush1.bf16.msra.mxu0 0
  %1067 = vmatprep.subr.bf16.mxu0 0
  %1068 = vmatpush1.bf16.msra.mxu0 0
  %1069 = vmatprep.subr.bf16.mxu0 0
  %1070 = vmatpush1.bf16.msra.mxu0 0
  %1071 = vmatprep.subr.bf16.mxu0 0
  %1072 = vmatpush1.bf16.msra.mxu0 0
  %1073 = vmatprep.subr.bf16.mxu0 0
  %1074 = vmatpush1.bf16.msra.mxu0 0
  %1075 = vmatprep.subr.bf16.mxu0 0
  %1076 = vmatpush1.bf16.msra.mxu0 0
  %1077 = vmatprep.subr.bf16.mxu0 0
  %1078 = vmatpush1.bf16.msra.mxu0 0
  %1079 = vmatprep.subr.bf16.mxu0 0
  %1080 = vmatpush1.bf16.msra.mxu0 0
  %1081 = vmatprep.mubr.bf16.mxu0 0
  %1082 = vmatmul.mubr.bf16.gmra.mrb[0].mxu0 %v83
  %v1083 = vpop.f32.mrb[0].mxu0
  %v1084 = vadd.f32 %v40, %v1083
  %v1085 = vpop.f32.mrb[0].mxu0
  %v1086 = vpop.f32.mrb[0].mxu0
  %v1087 = vpop.f32.mrb[0].mxu0
  %1088 = vdwg.mxu0
  %s1089 = scalar_lea.vmem %s1, 572
  %v1090 = vld [vmem:[%s1089] sm:$0xf]
  %v1091 = vld [vmem:[%s1089 + $0x4] sm:$0xf]
  %v1092 = vld [vmem:[%s1089 + $0x8] sm:$0xf]
  %v1093 = vld [vmem:[%s1089 + $0xc] sm:$0xf]
  %v1094 = vld [vmem:[%s1089 + $0x10] sm:$0xf]
  %v1095 = vld [vmem:[%s1089 + $0x14] sm:$0xf]
  %v1096 = vld [vmem:[%s1089 + $0x18] sm:$0xf]
  %v1097 = vld [vmem:[%s1089 + $0x1c] sm:$0xf]
  %v1098 = vld [vmem:[%s1089 + $0x20] sm:$0xf]
  %v1099 = vld [vmem:[%s1089 + $0x24] sm:$0xf]
  %v1100 = vld [vmem:[%s1089 + $0x28] sm:$0xf]
  %v1101 = vld [vmem:[%s1089 + $0x2c] sm:$0xf]
  %v1102 = vld [vmem:[%s1089 + $0x30] sm:$0x3]
  %v1116 = vunpack.c.l.b16 %v1090
  %v1117 = vunpack.c.l.b16 %v1091
  %v1118 = vunpack.c.l.b16 %v1092
  %v1119 = vunpack.c.l.b16 %v1093
  %v1120 = vunpack.c.l.b16 %v1094
  %v1121 = vunpack.c.l.b16 %v1095
  %v1122 = vunpack.c.l.b16 %v1096
  %v1123 = vunpack.c.l.b16 %v1097
  %v1124 = vunpack.c.l.b16 %v1098
  %v1125 = vunpack.c.l.b16 %v1099
  %v1126 = vunpack.c.l.b16 %v1100
  %v1127 = vunpack.c.l.b16 %v1101
  %v1128 = vunpack.c.l.b16 %v1102
  %v1129 = vpack.c.b16 %v1117, %v1116
  %v1130 = vpack.c.b16 %v1119, %v1118
  %v1131 = vpack.c.b16 %v1121, %v1120
  %v1132 = vpack.c.b16 %v1123, %v1122
  %v1133 = vpack.c.b16 %v1125, %v1124
  %v1134 = vpack.c.b16 %v1127, %v1126
  %v1135 = vpack.c.b16 %v1128, %v1128
  %v1143 = vsel %vm85, %v1135, 0
  %1145 = vmatprep.subr.bf16.mxu0 0
  %1146 = vmatpush1.bf16.msra.mxu0 %v1129
  %1147 = vmatprep.subr.bf16.mxu0 0
  %1148 = vmatpush1.bf16.msra.mxu0 %v1130
  %1149 = vmatprep.subr.bf16.mxu0 0
  %1150 = vmatpush1.bf16.msra.mxu0 %v1131
  %1151 = vmatprep.subr.bf16.mxu0 0
  %1152 = vmatpush1.bf16.msra.mxu0 %v1132
  %1153 = vmatprep.subr.bf16.mxu0 0
  %1154 = vmatpush1.bf16.msra.mxu0 %v1133
  %1155 = vmatprep.subr.bf16.mxu0 0
  %1156 = vmatpush1.bf16.msra.mxu0 %v1134
  %1157 = vmatprep.subr.bf16.mxu0 0
  %1158 = vmatpush1.bf16.msra.mxu0 %v1143
  %1159 = vmatprep.subr.bf16.mxu0 0
  %1160 = vmatpush1.bf16.msra.mxu0 0
  %1161 = vmatprep.subr.bf16.mxu0 0
  %1162 = vmatpush1.bf16.msra.mxu0 0
  %1163 = vmatprep.subr.bf16.mxu0 0
  %1164 = vmatpush1.bf16.msra.mxu0 0
  %1165 = vmatprep.subr.bf16.mxu0 0
  %1166 = vmatpush1.bf16.msra.mxu0 0
  %1167 = vmatprep.subr.bf16.mxu0 0
  %1168 = vmatpush1.bf16.msra.mxu0 0
  %1169 = vmatprep.subr.bf16.mxu0 0
  %1170 = vmatpush1.bf16.msra.mxu0 0
  %1171 = vmatprep.subr.bf16.mxu0 0
  %1172 = vmatpush1.bf16.msra.mxu0 0
  %1173 = vmatprep.subr.bf16.mxu0 0
  %1174 = vmatpush1.bf16.msra.mxu0 0
  %1175 = vmatprep.subr.bf16.mxu0 0
  %1176 = vmatpush1.bf16.msra.mxu0 0
  %1177 = vmatprep.mubr.bf16.mxu0 0
  %1178 = vmatmul.mubr.bf16.gmra.mrb[0].mxu0 %v83
  %v1179 = vpop.f32.mrb[0].mxu0
  %v1180 = vadd.f32 %v40, %v1179
  %v1181 = vpop.f32.mrb[0].mxu0
  %v1182 = vpop.f32.mrb[0].mxu0
  %v1183 = vpop.f32.mrb[0].mxu0
  %1184 = vdwg.mxu0
  %s1185 = scalar_lea.vmem %s1, 624
  %v1186 = vld [vmem:[%s1185] sm:$0xf]
  %v1187 = vld [vmem:[%s1185 + $0x4] sm:$0xf]
  %v1188 = vld [vmem:[%s1185 + $0x8] sm:$0xf]
  %v1189 = vld [vmem:[%s1185 + $0xc] sm:$0xf]
  %v1190 = vld [vmem:[%s1185 + $0x10] sm:$0xf]
  %v1191 = vld [vmem:[%s1185 + $0x14] sm:$0xf]
  %v1192 = vld [vmem:[%s1185 + $0x18] sm:$0xf]
  %v1193 = vld [vmem:[%s1185 + $0x1c] sm:$0xf]
  %v1194 = vld [vmem:[%s1185 + $0x20] sm:$0xf]
  %v1195 = vld [vmem:[%s1185 + $0x24] sm:$0xf]
  %v1196 = vld [vmem:[%s1185 + $0x28] sm:$0xf]
  %v1197 = vld [vmem:[%s1185 + $0x2c] sm:$0xf]
  %v1198 = vld [vmem:[%s1185 + $0x30] sm:$0x3]
  %v1212 = vunpack.c.l.b16 %v1186
  %v1213 = vunpack.c.l.b16 %v1187
  %v1214 = vunpack.c.l.b16 %v1188
  %v1215 = vunpack.c.l.b16 %v1189
  %v1216 = vunpack.c.l.b16 %v1190
  %v1217 = vunpack.c.l.b16 %v1191
  %v1218 = vunpack.c.l.b16 %v1192
  %v1219 = vunpack.c.l.b16 %v1193
  %v1220 = vunpack.c.l.b16 %v1194
  %v1221 = vunpack.c.l.b16 %v1195
  %v1222 = vunpack.c.l.b16 %v1196
  %v1223 = vunpack.c.l.b16 %v1197
  %v1224 = vunpack.c.l.b16 %v1198
  %v1225 = vpack.c.b16 %v1213, %v1212
  %v1226 = vpack.c.b16 %v1215, %v1214
  %v1227 = vpack.c.b16 %v1217, %v1216
  %v1228 = vpack.c.b16 %v1219, %v1218
  %v1229 = vpack.c.b16 %v1221, %v1220
  %v1230 = vpack.c.b16 %v1223, %v1222
  %v1231 = vpack.c.b16 %v1224, %v1224
  %v1239 = vsel %vm85, %v1231, 0
  %1241 = vmatprep.subr.bf16.mxu0 0
  %1242 = vmatpush1.bf16.msra.mxu0 %v1225
  %1243 = vmatprep.subr.bf16.mxu0 0
  %1244 = vmatpush1.bf16.msra.mxu0 %v1226
  %1245 = vmatprep.subr.bf16.mxu0 0
  %1246 = vmatpush1.bf16.msra.mxu0 %v1227
  %1247 = vmatprep.subr.bf16.mxu0 0
  %1248 = vmatpush1.bf16.msra.mxu0 %v1228
  %1249 = vmatprep.subr.bf16.mxu0 0
  %1250 = vmatpush1.bf16.msra.mxu0 %v1229
  %1251 = vmatprep.subr.bf16.mxu0 0
  %1252 = vmatpush1.bf16.msra.mxu0 %v1230
  %1253 = vmatprep.subr.bf16.mxu0 0
  %1254 = vmatpush1.bf16.msra.mxu0 %v1239
  %1255 = vmatprep.subr.bf16.mxu0 0
  %1256 = vmatpush1.bf16.msra.mxu0 0
  %1257 = vmatprep.subr.bf16.mxu0 0
  %1258 = vmatpush1.bf16.msra.mxu0 0
  %1259 = vmatprep.subr.bf16.mxu0 0
  %1260 = vmatpush1.bf16.msra.mxu0 0
  %1261 = vmatprep.subr.bf16.mxu0 0
  %1262 = vmatpush1.bf16.msra.mxu0 0
  %1263 = vmatprep.subr.bf16.mxu0 0
  %1264 = vmatpush1.bf16.msra.mxu0 0
  %1265 = vmatprep.subr.bf16.mxu0 0
  %1266 = vmatpush1.bf16.msra.mxu0 0
  %1267 = vmatprep.subr.bf16.mxu0 0
  %1268 = vmatpush1.bf16.msra.mxu0 0
  %1269 = vmatprep.subr.bf16.mxu0 0
  %1270 = vmatpush1.bf16.msra.mxu0 0
  %1271 = vmatprep.subr.bf16.mxu0 0
  %1272 = vmatpush1.bf16.msra.mxu0 0
  %1273 = vmatprep.mubr.bf16.mxu0 0
  %1274 = vmatmul.mubr.bf16.gmra.mrb[0].mxu0 %v83
  %v1275 = vpop.f32.mrb[0].mxu0
  %v1276 = vadd.f32 %v40, %v1275
  %v1277 = vpop.f32.mrb[0].mxu0
  %v1278 = vpop.f32.mrb[0].mxu0
  %v1279 = vpop.f32.mrb[0].mxu0
  %1280 = vdwg.mxu0
  %s1281 = scalar_lea.vmem %s1, 676
  %v1282 = vld [vmem:[%s1281] sm:$0xf]
  %v1283 = vld [vmem:[%s1281 + $0x4] sm:$0xf]
  %v1284 = vld [vmem:[%s1281 + $0x8] sm:$0xf]
  %v1285 = vld [vmem:[%s1281 + $0xc] sm:$0xf]
  %v1286 = vld [vmem:[%s1281 + $0x10] sm:$0xf]
  %v1287 = vld [vmem:[%s1281 + $0x14] sm:$0xf]
  %v1288 = vld [vmem:[%s1281 + $0x18] sm:$0xf]
  %v1289 = vld [vmem:[%s1281 + $0x1c] sm:$0xf]
  %v1290 = vld [vmem:[%s1281 + $0x20] sm:$0xf]
  %v1291 = vld [vmem:[%s1281 + $0x24] sm:$0xf]
  %v1292 = vld [vmem:[%s1281 + $0x28] sm:$0xf]
  %v1293 = vld [vmem:[%s1281 + $0x2c] sm:$0xf]
  %v1294 = vld [vmem:[%s1281 + $0x30] sm:$0x3]
  %v1308 = vunpack.c.l.b16 %v1282
  %v1309 = vunpack.c.l.b16 %v1283
  %v1310 = vunpack.c.l.b16 %v1284
  %v1311 = vunpack.c.l.b16 %v1285
  %v1312 = vunpack.c.l.b16 %v1286
  %v1313 = vunpack.c.l.b16 %v1287
  %v1314 = vunpack.c.l.b16 %v1288
  %v1315 = vunpack.c.l.b16 %v1289
  %v1316 = vunpack.c.l.b16 %v1290
  %v1317 = vunpack.c.l.b16 %v1291
  %v1318 = vunpack.c.l.b16 %v1292
  %v1319 = vunpack.c.l.b16 %v1293
  %v1320 = vunpack.c.l.b16 %v1294
  %v1321 = vpack.c.b16 %v1309, %v1308
  %v1322 = vpack.c.b16 %v1311, %v1310
  %v1323 = vpack.c.b16 %v1313, %v1312
  %v1324 = vpack.c.b16 %v1315, %v1314
  %v1325 = vpack.c.b16 %v1317, %v1316
  %v1326 = vpack.c.b16 %v1319, %v1318
  %v1327 = vpack.c.b16 %v1320, %v1320
  %v1335 = vsel %vm85, %v1327, 0
  %1337 = vmatprep.subr.bf16.mxu0 0
  %1338 = vmatpush1.bf16.msra.mxu0 %v1321
  %1339 = vmatprep.subr.bf16.mxu0 0
  %1340 = vmatpush1.bf16.msra.mxu0 %v1322
  %1341 = vmatprep.subr.bf16.mxu0 0
  %1342 = vmatpush1.bf16.msra.mxu0 %v1323
  %1343 = vmatprep.subr.bf16.mxu0 0
  %1344 = vmatpush1.bf16.msra.mxu0 %v1324
  %1345 = vmatprep.subr.bf16.mxu0 0
  %1346 = vmatpush1.bf16.msra.mxu0 %v1325
  %1347 = vmatprep.subr.bf16.mxu0 0
  %1348 = vmatpush1.bf16.msra.mxu0 %v1326
  %1349 = vmatprep.subr.bf16.mxu0 0
  %1350 = vmatpush1.bf16.msra.mxu0 %v1335
  %1351 = vmatprep.subr.bf16.mxu0 0
  %1352 = vmatpush1.bf16.msra.mxu0 0
  %1353 = vmatprep.subr.bf16.mxu0 0
  %1354 = vmatpush1.bf16.msra.mxu0 0
  %1355 = vmatprep.subr.bf16.mxu0 0
  %1356 = vmatpush1.bf16.msra.mxu0 0
  %1357 = vmatprep.subr.bf16.mxu0 0
  %1358 = vmatpush1.bf16.msra.mxu0 0
  %1359 = vmatprep.subr.bf16.mxu0 0
  %1360 = vmatpush1.bf16.msra.mxu0 0
  %1361 = vmatprep.subr.bf16.mxu0 0
  %1362 = vmatpush1.bf16.msra.mxu0 0
  %1363 = vmatprep.subr.bf16.mxu0 0
  %1364 = vmatpush1.bf16.msra.mxu0 0
  %1365 = vmatprep.subr.bf16.mxu0 0
  %1366 = vmatpush1.bf16.msra.mxu0 0
  %1367 = vmatprep.subr.bf16.mxu0 0
  %1368 = vmatpush1.bf16.msra.mxu0 0
  %1369 = vmatprep.mubr.bf16.mxu0 0
  %1370 = vmatmul.mubr.bf16.gmra.mrb[0].mxu0 %v83
  %v1371 = vpop.f32.mrb[0].mxu0
  %v1372 = vadd.f32 %v40, %v1371
  %v1373 = vpop.f32.mrb[0].mxu0
  %v1374 = vpop.f32.mrb[0].mxu0
  %v1375 = vpop.f32.mrb[0].mxu0
  %1376 = vdwg.mxu0
  %s1377 = scalar_lea.vmem %s1, 728
  %v1378 = vld [vmem:[%s1377] sm:$0xf]
  %v1379 = vld [vmem:[%s1377 + $0x4] sm:$0xf]
  %v1380 = vld [vmem:[%s1377 + $0x8] sm:$0xf]
  %v1381 = vld [vmem:[%s1377 + $0xc] sm:$0xf]
  %v1382 = vld [vmem:[%s1377 + $0x10] sm:$0xf]
  %v1383 = vld [vmem:[%s1377 + $0x14] sm:$0xf]
  %v1384 = vld [vmem:[%s1377 + $0x18] sm:$0xf]
  %v1385 = vld [vmem:[%s1377 + $0x1c] sm:$0xf]
  %v1386 = vld [vmem:[%s1377 + $0x20] sm:$0xf]
  %v1387 = vld [vmem:[%s1377 + $0x24] sm:$0xf]
  %v1388 = vld [vmem:[%s1377 + $0x28] sm:$0xf]
  %v1389 = vld [vmem:[%s1377 + $0x2c] sm:$0xf]
  %v1390 = vld [vmem:[%s1377 + $0x30] sm:$0x3]
  %v1404 = vunpack.c.l.b16 %v1378
  %v1405 = vunpack.c.l.b16 %v1379
  %v1406 = vunpack.c.l.b16 %v1380
  %v1407 = vunpack.c.l.b16 %v1381
  %v1408 = vunpack.c.l.b16 %v1382
  %v1409 = vunpack.c.l.b16 %v1383
  %v1410 = vunpack.c.l.b16 %v1384
  %v1411 = vunpack.c.l.b16 %v1385
  %v1412 = vunpack.c.l.b16 %v1386
  %v1413 = vunpack.c.l.b16 %v1387
  %v1414 = vunpack.c.l.b16 %v1388
  %v1415 = vunpack.c.l.b16 %v1389
  %v1416 = vunpack.c.l.b16 %v1390
  %v1417 = vpack.c.b16 %v1405, %v1404
  %v1418 = vpack.c.b16 %v1407, %v1406
  %v1419 = vpack.c.b16 %v1409, %v1408
  %v1420 = vpack.c.b16 %v1411, %v1410
  %v1421 = vpack.c.b16 %v1413, %v1412
  %v1422 = vpack.c.b16 %v1415, %v1414
  %v1423 = vpack.c.b16 %v1416, %v1416
  %v1431 = vsel %vm85, %v1423, 0
  %1433 = vmatprep.subr.bf16.mxu0 0
  %1434 = vmatpush1.bf16.msra.mxu0 %v1417
  %1435 = vmatprep.subr.bf16.mxu0 0
  %1436 = vmatpush1.bf16.msra.mxu0 %v1418
  %1437 = vmatprep.subr.bf16.mxu0 0
  %1438 = vmatpush1.bf16.msra.mxu0 %v1419
  %1439 = vmatprep.subr.bf16.mxu0 0
  %1440 = vmatpush1.bf16.msra.mxu0 %v1420
  %1441 = vmatprep.subr.bf16.mxu0 0
  %1442 = vmatpush1.bf16.msra.mxu0 %v1421
  %1443 = vmatprep.subr.bf16.mxu0 0
  %1444 = vmatpush1.bf16.msra.mxu0 %v1422
  %1445 = vmatprep.subr.bf16.mxu0 0
  %1446 = vmatpush1.bf16.msra.mxu0 %v1431
  %1447 = vmatprep.subr.bf16.mxu0 0
  %1448 = vmatpush1.bf16.msra.mxu0 0
  %1449 = vmatprep.subr.bf16.mxu0 0
  %1450 = vmatpush1.bf16.msra.mxu0 0
  %1451 = vmatprep.subr.bf16.mxu0 0
  %1452 = vmatpush1.bf16.msra.mxu0 0
  %1453 = vmatprep.subr.bf16.mxu0 0
  %1454 = vmatpush1.bf16.msra.mxu0 0
  %1455 = vmatprep.subr.bf16.mxu0 0
  %1456 = vmatpush1.bf16.msra.mxu0 0
  %1457 = vmatprep.subr.bf16.mxu0 0
  %1458 = vmatpush1.bf16.msra.mxu0 0
  %1459 = vmatprep.subr.bf16.mxu0 0
  %1460 = vmatpush1.bf16.msra.mxu0 0
  %1461 = vmatprep.subr.bf16.mxu0 0
  %1462 = vmatpush1.bf16.msra.mxu0 0
  %1463 = vmatprep.subr.bf16.mxu0 0
  %1464 = vmatpush1.bf16.msra.mxu0 0
  %1465 = vmatprep.mubr.bf16.mxu0 0
  %1466 = vmatmul.mubr.bf16.gmra.mrb[0].mxu0 %v83
  %v1467 = vpop.f32.mrb[0].mxu0
  %v1468 = vadd.f32 %v40, %v1467
  %v1469 = vpop.f32.mrb[0].mxu0
  %v1470 = vpop.f32.mrb[0].mxu0
  %v1471 = vpop.f32.mrb[0].mxu0
  %1472 = vdwg.mxu0
  %s1473 = scalar_lea.vmem %s1, 780
  %v1474 = vld [vmem:[%s1473] sm:$0xf]
  %v1475 = vld [vmem:[%s1473 + $0x4] sm:$0xf]
  %v1476 = vld [vmem:[%s1473 + $0x8] sm:$0xf]
  %v1477 = vld [vmem:[%s1473 + $0xc] sm:$0xf]
  %v1478 = vld [vmem:[%s1473 + $0x10] sm:$0xf]
  %v1479 = vld [vmem:[%s1473 + $0x14] sm:$0xf]
  %v1480 = vld [vmem:[%s1473 + $0x18] sm:$0xf]
  %v1481 = vld [vmem:[%s1473 + $0x1c] sm:$0xf]
  %v1482 = vld [vmem:[%s1473 + $0x20] sm:$0xf]
  %v1483 = vld [vmem:[%s1473 + $0x24] sm:$0xf]
  %v1484 = vld [vmem:[%s1473 + $0x28] sm:$0xf]
  %v1485 = vld [vmem:[%s1473 + $0x2c] sm:$0xf]
  %v1486 = vld [vmem:[%s1473 + $0x30] sm:$0x3]
  %v1500 = vunpack.c.l.b16 %v1474
  %v1501 = vunpack.c.l.b16 %v1475
  %v1502 = vunpack.c.l.b16 %v1476
  %v1503 = vunpack.c.l.b16 %v1477
  %v1504 = vunpack.c.l.b16 %v1478
  %v1505 = vunpack.c.l.b16 %v1479
  %v1506 = vunpack.c.l.b16 %v1480
  %v1507 = vunpack.c.l.b16 %v1481
  %v1508 = vunpack.c.l.b16 %v1482
  %v1509 = vunpack.c.l.b16 %v1483
  %v1510 = vunpack.c.l.b16 %v1484
  %v1511 = vunpack.c.l.b16 %v1485
  %v1512 = vunpack.c.l.b16 %v1486
  %v1513 = vpack.c.b16 %v1501, %v1500
  %v1514 = vpack.c.b16 %v1503, %v1502
  %v1515 = vpack.c.b16 %v1505, %v1504
  %v1516 = vpack.c.b16 %v1507, %v1506
  %v1517 = vpack.c.b16 %v1509, %v1508
  %v1518 = vpack.c.b16 %v1511, %v1510
  %v1519 = vpack.c.b16 %v1512, %v1512
  %v1527 = vsel %vm85, %v1519, 0
  %1529 = vmatprep.subr.bf16.mxu0 0
  %1530 = vmatpush1.bf16.msra.mxu0 %v1513
  %1531 = vmatprep.subr.bf16.mxu0 0
  %1532 = vmatpush1.bf16.msra.mxu0 %v1514
  %1533 = vmatprep.subr.bf16.mxu0 0
  %1534 = vmatpush1.bf16.msra.mxu0 %v1515
  %1535 = vmatprep.subr.bf16.mxu0 0
  %1536 = vmatpush1.bf16.msra.mxu0 %v1516
  %1537 = vmatprep.subr.bf16.mxu0 0
  %1538 = vmatpush1.bf16.msra.mxu0 %v1517
  %1539 = vmatprep.subr.bf16.mxu0 0
  %1540 = vmatpush1.bf16.msra.mxu0 %v1518
  %1541 = vmatprep.subr.bf16.mxu0 0
  %1542 = vmatpush1.bf16.msra.mxu0 %v1527
  %1543 = vmatprep.subr.bf16.mxu0 0
  %1544 = vmatpush1.bf16.msra.mxu0 0
  %1545 = vmatprep.subr.bf16.mxu0 0
  %1546 = vmatpush1.bf16.msra.mxu0 0
  %1547 = vmatprep.subr.bf16.mxu0 0
  %1548 = vmatpush1.bf16.msra.mxu0 0
  %1549 = vmatprep.subr.bf16.mxu0 0
  %1550 = vmatpush1.bf16.msra.mxu0 0
  %1551 = vmatprep.subr.bf16.mxu0 0
  %1552 = vmatpush1.bf16.msra.mxu0 0
  %1553 = vmatprep.subr.bf16.mxu0 0
  %1554 = vmatpush1.bf16.msra.mxu0 0
  %1555 = vmatprep.subr.bf16.mxu0 0
  %1556 = vmatpush1.bf16.msra.mxu0 0
  %1557 = vmatprep.subr.bf16.mxu0 0
  %1558 = vmatpush1.bf16.msra.mxu0 0
  %1559 = vmatprep.subr.bf16.mxu0 0
  %1560 = vmatpush1.bf16.msra.mxu0 0
  %1561 = vmatprep.mubr.bf16.mxu0 0
  %1562 = vmatmul.mubr.bf16.gmra.mrb[0].mxu0 %v83
  %v1563 = vpop.f32.mrb[0].mxu0
  %v1564 = vadd.f32 %v40, %v1563
  %v1565 = vpop.f32.mrb[0].mxu0
  %v1566 = vpop.f32.mrb[0].mxu0
  %v1567 = vpop.f32.mrb[0].mxu0
  %1568 = vdwg.mxu0
  %vm1569 = vcmask 517120
  %v1570 = vsel %vm1569, %v124, 0.0
  %v1571 = vrot.slane %v1570, 4
  %v1572 = vadd.f32 %v1570, %v1571
  %v1573 = vrot.slane %v1572, 2
  %v1574 = vadd.f32 %v1572, %v1573
  %v1575 = vrot.slane %v1574, 1
  %v1576 = vadd.f32 %v1574, %v1575
  %v1577 = vadd.f32 %v1576, 0.0
  %v1578 = vsel %vm1569, %v220, 0.0
  %v1579 = vrot.slane %v1578, 4
  %v1580 = vadd.f32 %v1578, %v1579
  %v1581 = vrot.slane %v1580, 2
  %v1582 = vadd.f32 %v1580, %v1581
  %v1583 = vrot.slane %v1582, 1
  %v1584 = vadd.f32 %v1582, %v1583
  %v1585 = vadd.f32 %v1577, %v1584
  %v1586 = vsel %vm1569, %v316, 0.0
  %v1587 = vrot.slane %v1586, 4
  %v1588 = vadd.f32 %v1586, %v1587
  %v1589 = vrot.slane %v1588, 2
  %v1590 = vadd.f32 %v1588, %v1589
  %v1591 = vrot.slane %v1590, 1
  %v1592 = vadd.f32 %v1590, %v1591
  %v1593 = vadd.f32 %v1585, %v1592
  %v1594 = vsel %vm1569, %v412, 0.0
  %v1595 = vrot.slane %v1594, 4
  %v1596 = vadd.f32 %v1594, %v1595
  %v1597 = vrot.slane %v1596, 2
  %v1598 = vadd.f32 %v1596, %v1597
  %v1599 = vrot.slane %v1598, 1
  %v1600 = vadd.f32 %v1598, %v1599
  %v1601 = vadd.f32 %v1593, %v1600
  %v1602 = vsel %vm1569, %v508, 0.0
  %v1603 = vrot.slane %v1602, 4
  %v1604 = vadd.f32 %v1602, %v1603
  %v1605 = vrot.slane %v1604, 2
  %v1606 = vadd.f32 %v1604, %v1605
  %v1607 = vrot.slane %v1606, 1
  %v1608 = vadd.f32 %v1606, %v1607
  %v1609 = vadd.f32 %v1601, %v1608
  %v1610 = vsel %vm1569, %v604, 0.0
  %v1611 = vrot.slane %v1610, 4
  %v1612 = vadd.f32 %v1610, %v1611
  %v1613 = vrot.slane %v1612, 2
  %v1614 = vadd.f32 %v1612, %v1613
  %v1615 = vrot.slane %v1614, 1
  %v1616 = vadd.f32 %v1614, %v1615
  %v1617 = vadd.f32 %v1609, %v1616
  %v1618 = vsel %vm1569, %v700, 0.0
  %v1619 = vrot.slane %v1618, 4
  %v1620 = vadd.f32 %v1618, %v1619
  %v1621 = vrot.slane %v1620, 2
  %v1622 = vadd.f32 %v1620, %v1621
  %v1623 = vrot.slane %v1622, 1
  %v1624 = vadd.f32 %v1622, %v1623
  %v1625 = vadd.f32 %v1617, %v1624
  %v1626 = vsel %vm1569, %v796, 0.0
  %v1627 = vrot.slane %v1626, 4
  %v1628 = vadd.f32 %v1626, %v1627
  %v1629 = vrot.slane %v1628, 2
  %v1630 = vadd.f32 %v1628, %v1629
  %v1631 = vrot.slane %v1630, 1
  %v1632 = vadd.f32 %v1630, %v1631
  %v1633 = vadd.f32 %v1625, %v1632
  %v1634 = vsel %vm1569, %v892, 0.0
  %v1635 = vrot.slane %v1634, 4
  %v1636 = vadd.f32 %v1634, %v1635
  %v1637 = vrot.slane %v1636, 2
  %v1638 = vadd.f32 %v1636, %v1637
  %v1639 = vrot.slane %v1638, 1
  %v1640 = vadd.f32 %v1638, %v1639
  %v1641 = vadd.f32 %v1633, %v1640
  %v1642 = vsel %vm1569, %v988, 0.0
  %v1643 = vrot.slane %v1642, 4
  %v1644 = vadd.f32 %v1642, %v1643
  %v1645 = vrot.slane %v1644, 2
  %v1646 = vadd.f32 %v1644, %v1645
  %v1647 = vrot.slane %v1646, 1
  %v1648 = vadd.f32 %v1646, %v1647
  %v1649 = vadd.f32 %v1641, %v1648
  %v1650 = vsel %vm1569, %v1084, 0.0
  %v1651 = vrot.slane %v1650, 4
  %v1652 = vadd.f32 %v1650, %v1651
  %v1653 = vrot.slane %v1652, 2
  %v1654 = vadd.f32 %v1652, %v1653
  %v1655 = vrot.slane %v1654, 1
  %v1656 = vadd.f32 %v1654, %v1655
  %v1657 = vadd.f32 %v1649, %v1656
  %v1658 = vsel %vm1569, %v1180, 0.0
  %v1659 = vrot.slane %v1658, 4
  %v1660 = vadd.f32 %v1658, %v1659
  %v1661 = vrot.slane %v1660, 2
  %v1662 = vadd.f32 %v1660, %v1661
  %v1663 = vrot.slane %v1662, 1
  %v1664 = vadd.f32 %v1662, %v1663
  %v1665 = vadd.f32 %v1657, %v1664
  %v1666 = vsel %vm1569, %v1276, 0.0
  %v1667 = vrot.slane %v1666, 4
  %v1668 = vadd.f32 %v1666, %v1667
  %v1669 = vrot.slane %v1668, 2
  %v1670 = vadd.f32 %v1668, %v1669
  %v1671 = vrot.slane %v1670, 1
  %v1672 = vadd.f32 %v1670, %v1671
  %v1673 = vadd.f32 %v1665, %v1672
  %v1674 = vsel %vm1569, %v1372, 0.0
  %v1675 = vrot.slane %v1674, 4
  %v1676 = vadd.f32 %v1674, %v1675
  %v1677 = vrot.slane %v1676, 2
  %v1678 = vadd.f32 %v1676, %v1677
  %v1679 = vrot.slane %v1678, 1
  %v1680 = vadd.f32 %v1678, %v1679
  %v1681 = vadd.f32 %v1673, %v1680
  %v1682 = vsel %vm1569, %v1468, 0.0
  %v1683 = vrot.slane %v1682, 4
  %v1684 = vadd.f32 %v1682, %v1683
  %v1685 = vrot.slane %v1684, 2
  %v1686 = vadd.f32 %v1684, %v1685
  %v1687 = vrot.slane %v1686, 1
  %v1688 = vadd.f32 %v1686, %v1687
  %v1689 = vadd.f32 %v1681, %v1688
  %v1690 = vsel %vm1569, %v1564, 0.0
  %v1691 = vrot.slane %v1690, 4
  %v1692 = vadd.f32 %v1690, %v1691
  %v1693 = vrot.slane %v1692, 2
  %v1694 = vadd.f32 %v1692, %v1693
  %v1695 = vrot.slane %v1694, 1
  %v1696 = vadd.f32 %v1694, %v1695
  %v1697 = vadd.f32 %v1689, %v1696
  %v1698 = vmul.f32 %v124, %v124
  %v1699 = vsel %vm1569, %v1698, 0.0
  %v1700 = vrot.slane %v1699, 4
  %v1701 = vadd.f32 %v1699, %v1700
  %v1702 = vrot.slane %v1701, 2
  %v1703 = vadd.f32 %v1701, %v1702
  %v1704 = vrot.slane %v1703, 1
  %v1705 = vadd.f32 %v1703, %v1704
  %v1706 = vadd.f32 %v1705, 0.0
  %v1707 = vmul.f32 %v220, %v220
  %v1708 = vsel %vm1569, %v1707, 0.0
  %v1709 = vrot.slane %v1708, 4
  %v1710 = vadd.f32 %v1708, %v1709
  %v1711 = vrot.slane %v1710, 2
  %v1712 = vadd.f32 %v1710, %v1711
  %v1713 = vrot.slane %v1712, 1
  %v1714 = vadd.f32 %v1712, %v1713
  %v1715 = vadd.f32 %v1706, %v1714
  %v1716 = vmul.f32 %v316, %v316
  %v1717 = vsel %vm1569, %v1716, 0.0
  %v1718 = vrot.slane %v1717, 4
  %v1719 = vadd.f32 %v1717, %v1718
  %v1720 = vrot.slane %v1719, 2
  %v1721 = vadd.f32 %v1719, %v1720
  %v1722 = vrot.slane %v1721, 1
  %v1723 = vadd.f32 %v1721, %v1722
  %v1724 = vadd.f32 %v1715, %v1723
  %v1725 = vmul.f32 %v412, %v412
  %v1726 = vsel %vm1569, %v1725, 0.0
  %v1727 = vrot.slane %v1726, 4
  %v1728 = vadd.f32 %v1726, %v1727
  %v1729 = vrot.slane %v1728, 2
  %v1730 = vadd.f32 %v1728, %v1729
  %v1731 = vrot.slane %v1730, 1
  %v1732 = vadd.f32 %v1730, %v1731
  %v1733 = vadd.f32 %v1724, %v1732
  %v1734 = vmul.f32 %v508, %v508
  %v1735 = vsel %vm1569, %v1734, 0.0
  %v1736 = vrot.slane %v1735, 4
  %v1737 = vadd.f32 %v1735, %v1736
  %v1738 = vrot.slane %v1737, 2
  %v1739 = vadd.f32 %v1737, %v1738
  %v1740 = vrot.slane %v1739, 1
  %v1741 = vadd.f32 %v1739, %v1740
  %v1742 = vadd.f32 %v1733, %v1741
  %v1743 = vmul.f32 %v604, %v604
  %v1744 = vsel %vm1569, %v1743, 0.0
  %v1745 = vrot.slane %v1744, 4
  %v1746 = vadd.f32 %v1744, %v1745
  %v1747 = vrot.slane %v1746, 2
  %v1748 = vadd.f32 %v1746, %v1747
  %v1749 = vrot.slane %v1748, 1
  %v1750 = vadd.f32 %v1748, %v1749
  %v1751 = vadd.f32 %v1742, %v1750
  %v1752 = vmul.f32 %v700, %v700
  %v1753 = vsel %vm1569, %v1752, 0.0
  %v1754 = vrot.slane %v1753, 4
  %v1755 = vadd.f32 %v1753, %v1754
  %v1756 = vrot.slane %v1755, 2
  %v1757 = vadd.f32 %v1755, %v1756
  %v1758 = vrot.slane %v1757, 1
  %v1759 = vadd.f32 %v1757, %v1758
  %v1760 = vadd.f32 %v1751, %v1759
  %v1761 = vmul.f32 %v796, %v796
  %v1762 = vsel %vm1569, %v1761, 0.0
  %v1763 = vrot.slane %v1762, 4
  %v1764 = vadd.f32 %v1762, %v1763
  %v1765 = vrot.slane %v1764, 2
  %v1766 = vadd.f32 %v1764, %v1765
  %v1767 = vrot.slane %v1766, 1
  %v1768 = vadd.f32 %v1766, %v1767
  %v1769 = vadd.f32 %v1760, %v1768
  %v1770 = vmul.f32 %v892, %v892
  %v1771 = vsel %vm1569, %v1770, 0.0
  %v1772 = vrot.slane %v1771, 4
  %v1773 = vadd.f32 %v1771, %v1772
  %v1774 = vrot.slane %v1773, 2
  %v1775 = vadd.f32 %v1773, %v1774
  %v1776 = vrot.slane %v1775, 1
  %v1777 = vadd.f32 %v1775, %v1776
  %v1778 = vadd.f32 %v1769, %v1777
  %v1779 = vmul.f32 %v988, %v988
  %v1780 = vsel %vm1569, %v1779, 0.0
  %v1781 = vrot.slane %v1780, 4
  %v1782 = vadd.f32 %v1780, %v1781
  %v1783 = vrot.slane %v1782, 2
  %v1784 = vadd.f32 %v1782, %v1783
  %v1785 = vrot.slane %v1784, 1
  %v1786 = vadd.f32 %v1784, %v1785
  %v1787 = vadd.f32 %v1778, %v1786
  %v1788 = vmul.f32 %v1084, %v1084
  %v1789 = vsel %vm1569, %v1788, 0.0
  %v1790 = vrot.slane %v1789, 4
  %v1791 = vadd.f32 %v1789, %v1790
  %v1792 = vrot.slane %v1791, 2
  %v1793 = vadd.f32 %v1791, %v1792
  %v1794 = vrot.slane %v1793, 1
  %v1795 = vadd.f32 %v1793, %v1794
  %v1796 = vadd.f32 %v1787, %v1795
  %v1797 = vmul.f32 %v1180, %v1180
  %v1798 = vsel %vm1569, %v1797, 0.0
  %v1799 = vrot.slane %v1798, 4
  %v1800 = vadd.f32 %v1798, %v1799
  %v1801 = vrot.slane %v1800, 2
  %v1802 = vadd.f32 %v1800, %v1801
  %v1803 = vrot.slane %v1802, 1
  %v1804 = vadd.f32 %v1802, %v1803
  %v1805 = vadd.f32 %v1796, %v1804
  %v1806 = vmul.f32 %v1276, %v1276
  %v1807 = vsel %vm1569, %v1806, 0.0
  %v1808 = vrot.slane %v1807, 4
  %v1809 = vadd.f32 %v1807, %v1808
  %v1810 = vrot.slane %v1809, 2
  %v1811 = vadd.f32 %v1809, %v1810
  %v1812 = vrot.slane %v1811, 1
  %v1813 = vadd.f32 %v1811, %v1812
  %v1814 = vadd.f32 %v1805, %v1813
  %v1815 = vmul.f32 %v1372, %v1372
  %v1816 = vsel %vm1569, %v1815, 0.0
  %v1817 = vrot.slane %v1816, 4
  %v1818 = vadd.f32 %v1816, %v1817
  %v1819 = vrot.slane %v1818, 2
  %v1820 = vadd.f32 %v1818, %v1819
  %v1821 = vrot.slane %v1820, 1
  %v1822 = vadd.f32 %v1820, %v1821
  %v1823 = vadd.f32 %v1814, %v1822
  %v1824 = vmul.f32 %v1468, %v1468
  %v1825 = vsel %vm1569, %v1824, 0.0
  %v1826 = vrot.slane %v1825, 4
  %v1827 = vadd.f32 %v1825, %v1826
  %v1828 = vrot.slane %v1827, 2
  %v1829 = vadd.f32 %v1827, %v1828
  %v1830 = vrot.slane %v1829, 1
  %v1831 = vadd.f32 %v1829, %v1830
  %v1832 = vadd.f32 %v1823, %v1831
  %v1833 = vmul.f32 %v1564, %v1564
  %v1834 = vsel %vm1569, %v1833, 0.0
  %v1835 = vrot.slane %v1834, 4
  %v1836 = vadd.f32 %v1834, %v1835
  %v1837 = vrot.slane %v1836, 2
  %v1838 = vadd.f32 %v1836, %v1837
  %v1839 = vrot.slane %v1838, 1
  %v1840 = vadd.f32 %v1838, %v1839
  %v1841 = vadd.f32 %v1832, %v1840
  %v1842 = vrcp.pop 32.0
  %v1843 = vmul.f32 %v1697, %v1842
  %v1844 = vmul.f32 %v1841, %v1842
  %v1845 = vmul.f32 %v1843, %v1843
  %v1846 = vsub.f32 %v1844, %v1845
  %v1847 = vmax.f32 %v1846, 0.0
  %v1848 = vadd.f32 %v1847, 1e-05
  %v1849 = vrsqrt.pop %v1848
  %v1850 = vld [vmem:[%s3] sm:$0x1]
  %v1851 = vmul.f32 %v1849, %v1850
  %v1852 = vld [vmem:[%s4] sm:$0x1]
  %v1853 = vmul.f32 %v1843, %v1851
  %v1854 = vsub.f32 %v1852, %v1853
  %v1855 = vlaneseq
  %v1856 = vshrl.u32 %v1855, 7
  %v1857 = vsub.s32 0, %v1856
  %v1858 = vrot.slane %v1851, %v1857
  %v1859 = vmul.f32 %v124, %v1858
  %v1861 = vlaneseq
  %v1862 = vshrl.u32 %v1861, 7
  %v1863 = vsub.s32 0, %v1862
  %v1864 = vrot.slane %v1854, %v1863
  %v1866 = vadd.f32 %v1859, %v1864
  %v1867 = vmax.f32 %v1866, 0.0
  %1868 = vst.msk [vmem:[%s5] sm:$0x3] %vm1569, %v1867
  %v1869 = vmul.f32 %v220, %v1858
  %v1870 = vadd.f32 %v1869, %v1864
  %v1871 = vmax.f32 %v1870, 0.0
  %s1872 = scalar_lea.vmem %s5, 2
  %1873 = vst.msk [vmem:[%s1872] sm:$0x3] %vm1569, %v1871
  %v1874 = vmul.f32 %v316, %v1858
  %v1875 = vadd.f32 %v1874, %v1864
  %v1876 = vmax.f32 %v1875, 0.0
  %s1877 = scalar_lea.vmem %s5, 4
  %1878 = vst.msk [vmem:[%s1877] sm:$0x3] %vm1569, %v1876
  %v1879 = vmul.f32 %v412, %v1858
  %v1880 = vadd.f32 %v1879, %v1864
  %v1881 = vmax.f32 %v1880, 0.0
  %s1882 = scalar_lea.vmem %s5, 6
  %1883 = vst.msk [vmem:[%s1882] sm:$0x3] %vm1569, %v1881
  %v1884 = vmul.f32 %v508, %v1858
  %v1885 = vadd.f32 %v1884, %v1864
  %v1886 = vmax.f32 %v1885, 0.0
  %s1887 = scalar_lea.vmem %s5, 8
  %1888 = vst.msk [vmem:[%s1887] sm:$0x3] %vm1569, %v1886
  %v1889 = vmul.f32 %v604, %v1858
  %v1890 = vadd.f32 %v1889, %v1864
  %v1891 = vmax.f32 %v1890, 0.0
  %s1892 = scalar_lea.vmem %s5, 10
  %1893 = vst.msk [vmem:[%s1892] sm:$0x3] %vm1569, %v1891
  %v1894 = vmul.f32 %v700, %v1858
  %v1895 = vadd.f32 %v1894, %v1864
  %v1896 = vmax.f32 %v1895, 0.0
  %s1897 = scalar_lea.vmem %s5, 12
  %1898 = vst.msk [vmem:[%s1897] sm:$0x3] %vm1569, %v1896
  %v1899 = vmul.f32 %v796, %v1858
  %v1900 = vadd.f32 %v1899, %v1864
  %v1901 = vmax.f32 %v1900, 0.0
  %s1902 = scalar_lea.vmem %s5, 14
  %1903 = vst.msk [vmem:[%s1902] sm:$0x3] %vm1569, %v1901
  %v1904 = vmul.f32 %v892, %v1858
  %v1905 = vadd.f32 %v1904, %v1864
  %v1906 = vmax.f32 %v1905, 0.0
  %s1907 = scalar_lea.vmem %s5, 16
  %1908 = vst.msk [vmem:[%s1907] sm:$0x3] %vm1569, %v1906
  %v1909 = vmul.f32 %v988, %v1858
  %v1910 = vadd.f32 %v1909, %v1864
  %v1911 = vmax.f32 %v1910, 0.0
  %s1912 = scalar_lea.vmem %s5, 18
  %1913 = vst.msk [vmem:[%s1912] sm:$0x3] %vm1569, %v1911
  %v1914 = vmul.f32 %v1084, %v1858
  %v1915 = vadd.f32 %v1914, %v1864
  %v1916 = vmax.f32 %v1915, 0.0
  %s1917 = scalar_lea.vmem %s5, 20
  %1918 = vst.msk [vmem:[%s1917] sm:$0x3] %vm1569, %v1916
  %v1919 = vmul.f32 %v1180, %v1858
  %v1920 = vadd.f32 %v1919, %v1864
  %v1921 = vmax.f32 %v1920, 0.0
  %s1922 = scalar_lea.vmem %s5, 22
  %1923 = vst.msk [vmem:[%s1922] sm:$0x3] %vm1569, %v1921
  %v1924 = vmul.f32 %v1276, %v1858
  %v1925 = vadd.f32 %v1924, %v1864
  %v1926 = vmax.f32 %v1925, 0.0
  %s1927 = scalar_lea.vmem %s5, 24
  %1928 = vst.msk [vmem:[%s1927] sm:$0x3] %vm1569, %v1926
  %v1929 = vmul.f32 %v1372, %v1858
  %v1930 = vadd.f32 %v1929, %v1864
  %v1931 = vmax.f32 %v1930, 0.0
  %s1932 = scalar_lea.vmem %s5, 26
  %1933 = vst.msk [vmem:[%s1932] sm:$0x3] %vm1569, %v1931
  %v1934 = vmul.f32 %v1468, %v1858
  %v1935 = vadd.f32 %v1934, %v1864
  %v1936 = vmax.f32 %v1935, 0.0
  %s1937 = scalar_lea.vmem %s5, 28
  %1938 = vst.msk [vmem:[%s1937] sm:$0x3] %vm1569, %v1936
  %v1939 = vmul.f32 %v1564, %v1858
  %v1940 = vadd.f32 %v1939, %v1864
  %v1941 = vmax.f32 %v1940, 0.0
  %s1942 = scalar_lea.vmem %s5, 30
  %1943 = vst.msk [vmem:[%s1942] sm:$0x3] %vm1569, %v1941
  // Predicated region
  $region22: #{generator_forward.4} parent=0 // pred_check
    _
  $region23: #{generator_forward.4} parent=0 // pred_check_branch
    %1945 = sbr.rel (0) target = $region25
  $region24: #{generator_forward.4} parent=0 // pred_region
    _
  $region25: #{generator_forward.4} parent=0 // pred_fallthru
    _
  // Predicated region
  $region26: #{generator_forward.4} parent=0 // pred_check
    _
  $region27: #{generator_forward.4} parent=0 // pred_check_branch
    %1947 = sbr.rel (0) target = $region29
  $region28: #{generator_forward.4} parent=0 // pred_region
    _
  $region29: #{generator_forward.4} parent=0 // pred_fallthru
    _

// kernel: generator_forward.5
$region0: #{generator_forward.5}
  #allocation0 [shape = 'u32[]', space=smem, size = 0x4, offset = 0x4, fixed_abs, tag = 'smem constant byte address 0x4 - core index']
  #allocation1 [shape = 'u32[144,128]{1,0:T(1,128)}', space=vmem, size = 0x12000, scoped, tag = 'internal scratch']
  %s0 = inlined_call_operand.vmem [shape: bf16[4,32,256], index: 0, kind: input, shape index: {}]
  %s1 = inlined_call_operand.vmem [shape: bf16[4,256,32], index: 1, kind: input, shape index: {}]
  %s2 = inlined_call_operand.vmem [shape: f32[1,32], index: 2, kind: input, shape index: {}]
  %s3 = inlined_call_operand.vmem [shape: f32[1,32], index: 3, kind: input, shape index: {}]
  %s4 = inlined_call_operand.vmem [shape: f32[1,32], index: 4, kind: input, shape index: {}]
  %s5 = inlined_call_operand.vmem [shape: f32[4,32,32], index: 5, kind: output, shape index: {}]
  %s6 = sld [smem:[#allocation0]]
  $region30: #{generator_forward.5} parent=0
    _
  %s8 = ssub.s32 1, %s6
  %s9 = scalar_select 0, %s8, %s6
  // Predicated region
  $region2: #{generator_forward.5} parent=0 // pred_check
    _
  $region3: #{generator_forward.5} parent=0 // pred_check_branch
    %11 = sbr.rel (0) target = $region5
  $region4: #{generator_forward.5} parent=0 // pred_region
    _
  $region5: #{generator_forward.5} parent=0 // pred_fallthru
    _
  // Predicated region
  $region6: #{generator_forward.5} parent=0 // pred_check
    _
  $region7: #{generator_forward.5} parent=0 // pred_check_branch
    %13 = sbr.rel (0) target = $region9
  $region8: #{generator_forward.5} parent=0 // pred_region
    _
  $region9: #{generator_forward.5} parent=0 // pred_fallthru
    _
  // Predicated region
  $region10: #{generator_forward.5} parent=0 // pred_check
    _
  $region11: #{generator_forward.5} parent=0 // pred_check_branch
    %15 = sbr.rel (0) target = $region13
  $region12: #{generator_forward.5} parent=0 // pred_region
    _
  $region13: #{generator_forward.5} parent=0 // pred_fallthru
    _
  // Predicated region
  $region14: #{generator_forward.5} parent=0 // pred_check
    _
  $region15: #{generator_forward.5} parent=0 // pred_check_branch
    %17 = sbr.rel (0) target = $region17
  $region16: #{generator_forward.5} parent=0 // pred_region
    _
  $region17: #{generator_forward.5} parent=0 // pred_fallthru
    _
  // Predicated region
  $region18: #{generator_forward.5} parent=0 // pred_check
    _
  $region19: #{generator_forward.5} parent=0 // pred_check_branch
    %19 = sbr.rel (0) target = $region21
  $region20: #{generator_forward.5} parent=0 // pred_region
    _
  $region21: #{generator_forward.5} parent=0 // pred_fallthru
    _
  %v21 = vld [vmem:[%s2] sm:$0x1]
  %v22 = vld [vmem:[%s0] sm:$0xff]
  %v23 = vld [vmem:[%s0 + $0x8] sm:$0xff]
  %v24 = vld [vmem:[%s0 + $0x10] sm:$0xff]
  %v25 = vld [vmem:[%s0 + $0x18] sm:$0xff]
  %v26 = vld [vmem:[%s1] sm:$0xf]
  %v27 = vld [vmem:[%s1 + $0x4] sm:$0xf]
  %v28 = vld [vmem:[%s1 + $0x8] sm:$0xf]
  %v29 = vld [vmem:[%s1 + $0xc] sm:$0xf]
  %v30 = vld [vmem:[%s1 + $0x10] sm:$0xf]
  %v31 = vld [vmem:[%s1 + $0x14] sm:$0xf]
  %v32 = vld [vmem:[%s1 + $0x18] sm:$0xf]
  %v33 = vld [vmem:[%s1 + $0x1c] sm:$0xf]
  %v34 = vld [vmem:[%s1 + $0x20] sm:$0xf]
  %v35 = vld [vmem:[%s1 + $0x24] sm:$0xf]
  %v36 = vld [vmem:[%s1 + $0x28] sm:$0xf]
  %v37 = vld [vmem:[%s1 + $0x2c] sm:$0xf]
  %v38 = vld [vmem:[%s1 + $0x30] sm:$0xf]
  %v39 = vld [vmem:[%s1 + $0x34] sm:$0xf]
  %v40 = vld [vmem:[%s1 + $0x38] sm:$0xf]
  %v41 = vld [vmem:[%s1 + $0x3c] sm:$0xf]
  %v42 = vld [vmem:[%s1 + $0x40] sm:$0xf]
  %v43 = vld [vmem:[%s1 + $0x44] sm:$0xf]
  %v44 = vld [vmem:[%s1 + $0x48] sm:$0xf]
  %v45 = vld [vmem:[%s1 + $0x4c] sm:$0xf]
  %v46 = vld [vmem:[%s1 + $0x50] sm:$0xf]
  %v47 = vld [vmem:[%s1 + $0x54] sm:$0xf]
  %v48 = vld [vmem:[%s1 + $0x58] sm:$0xf]
  %v49 = vld [vmem:[%s1 + $0x5c] sm:$0xf]
  %v50 = vld [vmem:[%s1 + $0x60] sm:$0xf]
  %v51 = vld [vmem:[%s1 + $0x64] sm:$0xf]
  %v52 = vld [vmem:[%s1 + $0x68] sm:$0xf]
  %v53 = vld [vmem:[%s1 + $0x6c] sm:$0xf]
  %v54 = vld [vmem:[%s1 + $0x70] sm:$0xf]
  %v55 = vld [vmem:[%s1 + $0x74] sm:$0xf]
  %v56 = vld [vmem:[%s1 + $0x78] sm:$0xf]
  %v57 = vld [vmem:[%s1 + $0x7c] sm:$0xf]
  %v59 = vlaneseq
  %v60 = vshrl.u32 %v59, 7
  %v61 = vsub.s32 0, %v60
  %v62 = vrot.slane %v21, %v61
  %v68 = vunpack.c.l.b16 %v22
  %v69 = vunpack.c.h.b16 %v22
  %v70 = vunpack.c.l.b16 %v23
  %v71 = vunpack.c.h.b16 %v23
  %v72 = vunpack.c.l.b16 %v24
  %v73 = vunpack.c.h.b16 %v24
  %v74 = vunpack.c.l.b16 %v25
  %v75 = vunpack.c.h.b16 %v25
  %v76 = vpack.c.b16 %v70, %v68
  %v77 = vpack.c.b16 %v71, %v69
  %v78 = vpack.c.b16 %v74, %v72
  %v79 = vpack.c.b16 %v75, %v73
  %v116 = vunpack.c.l.b16 %v26
  %v117 = vunpack.c.l.b16 %v27
  %v118 = vunpack.c.l.b16 %v28
  %v119 = vunpack.c.l.b16 %v29
  %v120 = vunpack.c.l.b16 %v30
  %v121 = vunpack.c.l.b16 %v31
  %v122 = vunpack.c.l.b16 %v32
  %v123 = vunpack.c.l.b16 %v33
  %v124 = vunpack.c.l.b16 %v34
  %v125 = vunpack.c.l.b16 %v35
  %v126 = vunpack.c.l.b16 %v36
  %v127 = vunpack.c.l.b16 %v37
  %v128 = vunpack.c.l.b16 %v38
  %v129 = vunpack.c.l.b16 %v39
  %v130 = vunpack.c.l.b16 %v40
  %v131 = vunpack.c.l.b16 %v41
  %v132 = vunpack.c.l.b16 %v42
  %v133 = vunpack.c.l.b16 %v43
  %v134 = vunpack.c.l.b16 %v44
  %v135 = vunpack.c.l.b16 %v45
  %v136 = vunpack.c.l.b16 %v46
  %v137 = vunpack.c.l.b16 %v47
  %v138 = vunpack.c.l.b16 %v48
  %v139 = vunpack.c.l.b16 %v49
  %v140 = vunpack.c.l.b16 %v50
  %v141 = vunpack.c.l.b16 %v51
  %v142 = vunpack.c.l.b16 %v52
  %v143 = vunpack.c.l.b16 %v53
  %v144 = vunpack.c.l.b16 %v54
  %v145 = vunpack.c.l.b16 %v55
  %v146 = vunpack.c.l.b16 %v56
  %v147 = vunpack.c.l.b16 %v57
  %v148 = vpack.c.b16 %v117, %v116
  %v149 = vpack.c.b16 %v119, %v118
  %v150 = vpack.c.b16 %v121, %v120
  %v151 = vpack.c.b16 %v123, %v122
  %v152 = vpack.c.b16 %v125, %v124
  %v153 = vpack.c.b16 %v127, %v126
  %v154 = vpack.c.b16 %v129, %v128
  %v155 = vpack.c.b16 %v131, %v130
  %v156 = vpack.c.b16 %v133, %v132
  %v157 = vpack.c.b16 %v135, %v134
  %v158 = vpack.c.b16 %v137, %v136
  %v159 = vpack.c.b16 %v139, %v138
  %v160 = vpack.c.b16 %v141, %v140
  %v161 = vpack.c.b16 %v143, %v142
  %v162 = vpack.c.b16 %v145, %v144
  %v163 = vpack.c.b16 %v147, %v146
  %180 = vmatprep.subr.bf16.mxu0 0
  %181 = vmatpush1.bf16.msra.mxu0 %v148
  %182 = vmatprep.subr.bf16.mxu0 0
  %183 = vmatpush1.bf16.msra.mxu0 %v149
  %184 = vmatprep.subr.bf16.mxu0 0
  %185 = vmatpush1.bf16.msra.mxu0 %v150
  %186 = vmatprep.subr.bf16.mxu0 0
  %187 = vmatpush1.bf16.msra.mxu0 %v151
  %188 = vmatprep.subr.bf16.mxu0 0
  %189 = vmatpush1.bf16.msra.mxu0 %v152
  %190 = vmatprep.subr.bf16.mxu0 0
  %191 = vmatpush1.bf16.msra.mxu0 %v153
  %192 = vmatprep.subr.bf16.mxu0 0
  %193 = vmatpush1.bf16.msra.mxu0 %v154
  %194 = vmatprep.subr.bf16.mxu0 0
  %195 = vmatpush1.bf16.msra.mxu0 %v155
  %196 = vmatprep.subr.bf16.mxu0 0
  %197 = vmatpush1.bf16.msra.mxu0 %v156
  %198 = vmatprep.subr.bf16.mxu0 0
  %199 = vmatpush1.bf16.msra.mxu0 %v157
  %200 = vmatprep.subr.bf16.mxu0 0
  %201 = vmatpush1.bf16.msra.mxu0 %v158
  %202 = vmatprep.subr.bf16.mxu0 0
  %203 = vmatpush1.bf16.msra.mxu0 %v159
  %204 = vmatprep.subr.bf16.mxu0 0
  %205 = vmatpush1.bf16.msra.mxu0 %v160
  %206 = vmatprep.subr.bf16.mxu0 0
  %207 = vmatpush1.bf16.msra.mxu0 %v161
  %208 = vmatprep.subr.bf16.mxu0 0
  %209 = vmatpush1.bf16.msra.mxu0 %v162
  %210 = vmatprep.subr.bf16.mxu0 0
  %211 = vmatpush1.bf16.msra.mxu0 %v163
  %212 = vmatprep.mubr.bf16.mxu0 %v77
  %213 = vmatmul.mubr.bf16.gmra.mrb[0].mxu0 %v76
  %v214 = vpop.f32.mrb[0].mxu0
  %v215 = vadd.f32 %v62, %v214
  %v216 = vpop.f32.mrb[0].mxu0
  %v217 = vpop.f32.mrb[0].mxu0
  %v218 = vadd.f32 %v62, %v217
  %v219 = vpop.f32.mrb[0].mxu0
  %220 = vmatprep.mubr.bf16.mxu0 %v79
  %221 = vmatmul.mubr.bf16.gmra.mrb[0].mxu0 %v78
  %v222 = vpop.f32.mrb[0].mxu0
  %v223 = vadd.f32 %v62, %v222
  %v224 = vpop.f32.mrb[0].mxu0
  %v225 = vpop.f32.mrb[0].mxu0
  %v226 = vadd.f32 %v62, %v225
  %v227 = vpop.f32.mrb[0].mxu0
  %228 = vdwg.mxu0
  %s229 = scalar_lea.vmem %s0, 32
  %v230 = vld [vmem:[%s229] sm:$0xff]
  %v231 = vld [vmem:[%s229 + $0x8] sm:$0xff]
  %v232 = vld [vmem:[%s229 + $0x10] sm:$0xff]
  %v233 = vld [vmem:[%s229 + $0x18] sm:$0xff]
  %s234 = scalar_lea.vmem %s1, 128
  %v235 = vld [vmem:[%s234] sm:$0xf]
  %v236 = vld [vmem:[%s234 + $0x4] sm:$0xf]
  %v237 = vld [vmem:[%s234 + $0x8] sm:$0xf]
  %v238 = vld [vmem:[%s234 + $0xc] sm:$0xf]
  %v239 = vld [vmem:[%s234 + $0x10] sm:$0xf]
  %v240 = vld [vmem:[%s234 + $0x14] sm:$0xf]
  %v241 = vld [vmem:[%s234 + $0x18] sm:$0xf]
  %v242 = vld [vmem:[%s234 + $0x1c] sm:$0xf]
  %v243 = vld [vmem:[%s234 + $0x20] sm:$0xf]
  %v244 = vld [vmem:[%s234 + $0x24] sm:$0xf]
  %v245 = vld [vmem:[%s234 + $0x28] sm:$0xf]
  %v246 = vld [vmem:[%s234 + $0x2c] sm:$0xf]
  %v247 = vld [vmem:[%s234 + $0x30] sm:$0xf]
  %v248 = vld [vmem:[%s234 + $0x34] sm:$0xf]
  %v249 = vld [vmem:[%s234 + $0x38] sm:$0xf]
  %v250 = vld [vmem:[%s234 + $0x3c] sm:$0xf]
  %v251 = vld [vmem:[%s234 + $0x40] sm:$0xf]
  %v252 = vld [vmem:[%s234 + $0x44] sm:$0xf]
  %v253 = vld [vmem:[%s234 + $0x48] sm:$0xf]
  %v254 = vld [vmem:[%s234 + $0x4c] sm:$0xf]
  %v255 = vld [vmem:[%s234 + $0x50] sm:$0xf]
  %v256 = vld [vmem:[%s234 + $0x54] sm:$0xf]
  %v257 = vld [vmem:[%s234 + $0x58] sm:$0xf]
  %v258 = vld [vmem:[%s234 + $0x5c] sm:$0xf]
  %v259 = vld [vmem:[%s234 + $0x60] sm:$0xf]
  %v260 = vld [vmem:[%s234 + $0x64] sm:$0xf]
  %v261 = vld [vmem:[%s234 + $0x68] sm:$0xf]
  %v262 = vld [vmem:[%s234 + $0x6c] sm:$0xf]
  %v263 = vld [vmem:[%s234 + $0x70] sm:$0xf]
  %v264 = vld [vmem:[%s234 + $0x74] sm:$0xf]
  %v265 = vld [vmem:[%s234 + $0x78] sm:$0xf]
  %v266 = vld [vmem:[%s234 + $0x7c] sm:$0xf]
  %v271 = vunpack.c.l.b16 %v230
  %v272 = vunpack.c.h.b16 %v230
  %v273 = vunpack.c.l.b16 %v231
  %v274 = vunpack.c.h.b16 %v231
  %v275 = vunpack.c.l.b16 %v232
  %v276 = vunpack.c.h.b16 %v232
  %v277 = vunpack.c.l.b16 %v233
  %v278 = vunpack.c.h.b16 %v233
  %v279 = vpack.c.b16 %v273, %v271
  %v280 = vpack.c.b16 %v274, %v272
  %v281 = vpack.c.b16 %v277, %v275
  %v282 = vpack.c.b16 %v278, %v276
  %v319 = vunpack.c.l.b16 %v235
  %v320 = vunpack.c.l.b16 %v236
  %v321 = vunpack.c.l.b16 %v237
  %v322 = vunpack.c.l.b16 %v238
  %v323 = vunpack.c.l.b16 %v239
  %v324 = vunpack.c.l.b16 %v240
  %v325 = vunpack.c.l.b16 %v241
  %v326 = vunpack.c.l.b16 %v242
  %v327 = vunpack.c.l.b16 %v243
  %v328 = vunpack.c.l.b16 %v244
  %v329 = vunpack.c.l.b16 %v245
  %v330 = vunpack.c.l.b16 %v246
  %v331 = vunpack.c.l.b16 %v247
  %v332 = vunpack.c.l.b16 %v248
  %v333 = vunpack.c.l.b16 %v249
  %v334 = vunpack.c.l.b16 %v250
  %v335 = vunpack.c.l.b16 %v251
  %v336 = vunpack.c.l.b16 %v252
  %v337 = vunpack.c.l.b16 %v253
  %v338 = vunpack.c.l.b16 %v254
  %v339 = vunpack.c.l.b16 %v255
  %v340 = vunpack.c.l.b16 %v256
  %v341 = vunpack.c.l.b16 %v257
  %v342 = vunpack.c.l.b16 %v258
  %v343 = vunpack.c.l.b16 %v259
  %v344 = vunpack.c.l.b16 %v260
  %v345 = vunpack.c.l.b16 %v261
  %v346 = vunpack.c.l.b16 %v262
  %v347 = vunpack.c.l.b16 %v263
  %v348 = vunpack.c.l.b16 %v264
  %v349 = vunpack.c.l.b16 %v265
  %v350 = vunpack.c.l.b16 %v266
  %v351 = vpack.c.b16 %v320, %v319
  %v352 = vpack.c.b16 %v322, %v321
  %v353 = vpack.c.b16 %v324, %v323
  %v354 = vpack.c.b16 %v326, %v325
  %v355 = vpack.c.b16 %v328, %v327
  %v356 = vpack.c.b16 %v330, %v329
  %v357 = vpack.c.b16 %v332, %v331
  %v358 = vpack.c.b16 %v334, %v333
  %v359 = vpack.c.b16 %v336, %v335
  %v360 = vpack.c.b16 %v338, %v337
  %v361 = vpack.c.b16 %v340, %v339
  %v362 = vpack.c.b16 %v342, %v341
  %v363 = vpack.c.b16 %v344, %v343
  %v364 = vpack.c.b16 %v346, %v345
  %v365 = vpack.c.b16 %v348, %v347
  %v366 = vpack.c.b16 %v350, %v349
  %383 = vmatprep.subr.bf16.mxu0 0
  %384 = vmatpush1.bf16.msra.mxu0 %v351
  %385 = vmatprep.subr.bf16.mxu0 0
  %386 = vmatpush1.bf16.msra.mxu0 %v352
  %387 = vmatprep.subr.bf16.mxu0 0
  %388 = vmatpush1.bf16.msra.mxu0 %v353
  %389 = vmatprep.subr.bf16.mxu0 0
  %390 = vmatpush1.bf16.msra.mxu0 %v354
  %391 = vmatprep.subr.bf16.mxu0 0
  %392 = vmatpush1.bf16.msra.mxu0 %v355
  %393 = vmatprep.subr.bf16.mxu0 0
  %394 = vmatpush1.bf16.msra.mxu0 %v356
  %395 = vmatprep.subr.bf16.mxu0 0
  %396 = vmatpush1.bf16.msra.mxu0 %v357
  %397 = vmatprep.subr.bf16.mxu0 0
  %398 = vmatpush1.bf16.msra.mxu0 %v358
  %399 = vmatprep.subr.bf16.mxu0 0
  %400 = vmatpush1.bf16.msra.mxu0 %v359
  %401 = vmatprep.subr.bf16.mxu0 0
  %402 = vmatpush1.bf16.msra.mxu0 %v360
  %403 = vmatprep.subr.bf16.mxu0 0
  %404 = vmatpush1.bf16.msra.mxu0 %v361
  %405 = vmatprep.subr.bf16.mxu0 0
  %406 = vmatpush1.bf16.msra.mxu0 %v362
  %407 = vmatprep.subr.bf16.mxu0 0
  %408 = vmatpush1.bf16.msra.mxu0 %v363
  %409 = vmatprep.subr.bf16.mxu0 0
  %410 = vmatpush1.bf16.msra.mxu0 %v364
  %411 = vmatprep.subr.bf16.mxu0 0
  %412 = vmatpush1.bf16.msra.mxu0 %v365
  %413 = vmatprep.subr.bf16.mxu0 0
  %414 = vmatpush1.bf16.msra.mxu0 %v366
  %415 = vmatprep.mubr.bf16.mxu0 %v280
  %416 = vmatmul.mubr.bf16.gmra.mrb[0].mxu0 %v279
  %v417 = vpop.f32.mrb[0].mxu0
  %v418 = vadd.f32 %v62, %v417
  %v419 = vpop.f32.mrb[0].mxu0
  %v420 = vpop.f32.mrb[0].mxu0
  %v421 = vadd.f32 %v62, %v420
  %v422 = vpop.f32.mrb[0].mxu0
  %423 = vmatprep.mubr.bf16.mxu0 %v282
  %424 = vmatmul.mubr.bf16.gmra.mrb[0].mxu0 %v281
  %v425 = vpop.f32.mrb[0].mxu0
  %v426 = vadd.f32 %v62, %v425
  %v427 = vpop.f32.mrb[0].mxu0
  %v428 = vpop.f32.mrb[0].mxu0
  %v429 = vadd.f32 %v62, %v428
  %v430 = vpop.f32.mrb[0].mxu0
  %431 = vdwg.mxu0
  %s432 = scalar_lea.vmem %s0, 64
  %v433 = vld [vmem:[%s432] sm:$0xff]
  %v434 = vld [vmem:[%s432 + $0x8] sm:$0xff]
  %v435 = vld [vmem:[%s432 + $0x10] sm:$0xff]
  %v436 = vld [vmem:[%s432 + $0x18] sm:$0xff]
  %s437 = scalar_lea.vmem %s1, 256
  %v438 = vld [vmem:[%s437] sm:$0xf]
  %v439 = vld [vmem:[%s437 + $0x4] sm:$0xf]
  %v440 = vld [vmem:[%s437 + $0x8] sm:$0xf]
  %v441 = vld [vmem:[%s437 + $0xc] sm:$0xf]
  %v442 = vld [vmem:[%s437 + $0x10] sm:$0xf]
  %v443 = vld [vmem:[%s437 + $0x14] sm:$0xf]
  %v444 = vld [vmem:[%s437 + $0x18] sm:$0xf]
  %v445 = vld [vmem:[%s437 + $0x1c] sm:$0xf]
  %v446 = vld [vmem:[%s437 + $0x20] sm:$0xf]
  %v447 = vld [vmem:[%s437 + $0x24] sm:$0xf]
  %v448 = vld [vmem:[%s437 + $0x28] sm:$0xf]
  %v449 = vld [vmem:[%s437 + $0x2c] sm:$0xf]
  %v450 = vld [vmem:[%s437 + $0x30] sm:$0xf]
  %v451 = vld [vmem:[%s437 + $0x34] sm:$0xf]
  %v452 = vld [vmem:[%s437 + $0x38] sm:$0xf]
  %v453 = vld [vmem:[%s437 + $0x3c] sm:$0xf]
  %v454 = vld [vmem:[%s437 + $0x40] sm:$0xf]
  %v455 = vld [vmem:[%s437 + $0x44] sm:$0xf]
  %v456 = vld [vmem:[%s437 + $0x48] sm:$0xf]
  %v457 = vld [vmem:[%s437 + $0x4c] sm:$0xf]
  %v458 = vld [vmem:[%s437 + $0x50] sm:$0xf]
  %v459 = vld [vmem:[%s437 + $0x54] sm:$0xf]
  %v460 = vld [vmem:[%s437 + $0x58] sm:$0xf]
  %v461 = vld [vmem:[%s437 + $0x5c] sm:$0xf]
  %v462 = vld [vmem:[%s437 + $0x60] sm:$0xf]
  %v463 = vld [vmem:[%s437 + $0x64] sm:$0xf]
  %v464 = vld [vmem:[%s437 + $0x68] sm:$0xf]
  %v465 = vld [vmem:[%s437 + $0x6c] sm:$0xf]
  %v466 = vld [vmem:[%s437 + $0x70] sm:$0xf]
  %v467 = vld [vmem:[%s437 + $0x74] sm:$0xf]
  %v468 = vld [vmem:[%s437 + $0x78] sm:$0xf]
  %v469 = vld [vmem:[%s437 + $0x7c] sm:$0xf]
  %v474 = vunpack.c.l.b16 %v433
  %v475 = vunpack.c.h.b16 %v433
  %v476 = vunpack.c.l.b16 %v434
  %v477 = vunpack.c.h.b16 %v434
  %v478 = vunpack.c.l.b16 %v435
  %v479 = vunpack.c.h.b16 %v435
  %v480 = vunpack.c.l.b16 %v436
  %v481 = vunpack.c.h.b16 %v436
  %v482 = vpack.c.b16 %v476, %v474
  %v483 = vpack.c.b16 %v477, %v475
  %v484 = vpack.c.b16 %v480, %v478
  %v485 = vpack.c.b16 %v481, %v479
  %v522 = vunpack.c.l.b16 %v438
  %v523 = vunpack.c.l.b16 %v439
  %v524 = vunpack.c.l.b16 %v440
  %v525 = vunpack.c.l.b16 %v441
  %v526 = vunpack.c.l.b16 %v442
  %v527 = vunpack.c.l.b16 %v443
  %v528 = vunpack.c.l.b16 %v444
  %v529 = vunpack.c.l.b16 %v445
  %v530 = vunpack.c.l.b16 %v446
  %v531 = vunpack.c.l.b16 %v447
  %v532 = vunpack.c.l.b16 %v448
  %v533 = vunpack.c.l.b16 %v449
  %v534 = vunpack.c.l.b16 %v450
  %v535 = vunpack.c.l.b16 %v451
  %v536 = vunpack.c.l.b16 %v452
  %v537 = vunpack.c.l.b16 %v453
  %v538 = vunpack.c.l.b16 %v454
  %v539 = vunpack.c.l.b16 %v455
  %v540 = vunpack.c.l.b16 %v456
  %v541 = vunpack.c.l.b16 %v457
  %v542 = vunpack.c.l.b16 %v458
  %v543 = vunpack.c.l.b16 %v459
  %v544 = vunpack.c.l.b16 %v460
  %v545 = vunpack.c.l.b16 %v461
  %v546 = vunpack.c.l.b16 %v462
  %v547 = vunpack.c.l.b16 %v463
  %v548 = vunpack.c.l.b16 %v464
  %v549 = vunpack.c.l.b16 %v465
  %v550 = vunpack.c.l.b16 %v466
  %v551 = vunpack.c.l.b16 %v467
  %v552 = vunpack.c.l.b16 %v468
  %v553 = vunpack.c.l.b16 %v469
  %v554 = vpack.c.b16 %v523, %v522
  %v555 = vpack.c.b16 %v525, %v524
  %v556 = vpack.c.b16 %v527, %v526
  %v557 = vpack.c.b16 %v529, %v528
  %v558 = vpack.c.b16 %v531, %v530
  %v559 = vpack.c.b16 %v533, %v532
  %v560 = vpack.c.b16 %v535, %v534
  %v561 = vpack.c.b16 %v537, %v536
  %v562 = vpack.c.b16 %v539, %v538
  %v563 = vpack.c.b16 %v541, %v540
  %v564 = vpack.c.b16 %v543, %v542
  %v565 = vpack.c.b16 %v545, %v544
  %v566 = vpack.c.b16 %v547, %v546
  %v567 = vpack.c.b16 %v549, %v548
  %v568 = vpack.c.b16 %v551, %v550
  %v569 = vpack.c.b16 %v553, %v552
  %586 = vmatprep.subr.bf16.mxu0 0
  %587 = vmatpush1.bf16.msra.mxu0 %v554
  %588 = vmatprep.subr.bf16.mxu0 0
  %589 = vmatpush1.bf16.msra.mxu0 %v555
  %590 = vmatprep.subr.bf16.mxu0 0
  %591 = vmatpush1.bf16.msra.mxu0 %v556
  %592 = vmatprep.subr.bf16.mxu0 0
  %593 = vmatpush1.bf16.msra.mxu0 %v557
  %594 = vmatprep.subr.bf16.mxu0 0
  %595 = vmatpush1.bf16.msra.mxu0 %v558
  %596 = vmatprep.subr.bf16.mxu0 0
  %597 = vmatpush1.bf16.msra.mxu0 %v559
  %598 = vmatprep.subr.bf16.mxu0 0
  %599 = vmatpush1.bf16.msra.mxu0 %v560
  %600 = vmatprep.subr.bf16.mxu0 0
  %601 = vmatpush1.bf16.msra.mxu0 %v561
  %602 = vmatprep.subr.bf16.mxu0 0
  %603 = vmatpush1.bf16.msra.mxu0 %v562
  %604 = vmatprep.subr.bf16.mxu0 0
  %605 = vmatpush1.bf16.msra.mxu0 %v563
  %606 = vmatprep.subr.bf16.mxu0 0
  %607 = vmatpush1.bf16.msra.mxu0 %v564
  %608 = vmatprep.subr.bf16.mxu0 0
  %609 = vmatpush1.bf16.msra.mxu0 %v565
  %610 = vmatprep.subr.bf16.mxu0 0
  %611 = vmatpush1.bf16.msra.mxu0 %v566
  %612 = vmatprep.subr.bf16.mxu0 0
  %613 = vmatpush1.bf16.msra.mxu0 %v567
  %614 = vmatprep.subr.bf16.mxu0 0
  %615 = vmatpush1.bf16.msra.mxu0 %v568
  %616 = vmatprep.subr.bf16.mxu0 0
  %617 = vmatpush1.bf16.msra.mxu0 %v569
  %618 = vmatprep.mubr.bf16.mxu0 %v483
  %619 = vmatmul.mubr.bf16.gmra.mrb[0].mxu0 %v482
  %v620 = vpop.f32.mrb[0].mxu0
  %v621 = vadd.f32 %v62, %v620
  %v622 = vpop.f32.mrb[0].mxu0
  %v623 = vpop.f32.mrb[0].mxu0
  %v624 = vadd.f32 %v62, %v623
  %v625 = vpop.f32.mrb[0].mxu0
  %626 = vmatprep.mubr.bf16.mxu0 %v485
  %627 = vmatmul.mubr.bf16.gmra.mrb[0].mxu0 %v484
  %v628 = vpop.f32.mrb[0].mxu0
  %v629 = vadd.f32 %v62, %v628
  %v630 = vpop.f32.mrb[0].mxu0
  %v631 = vpop.f32.mrb[0].mxu0
  %v632 = vadd.f32 %v62, %v631
  %v633 = vpop.f32.mrb[0].mxu0
  %634 = vdwg.mxu0
  %s635 = scalar_lea.vmem %s0, 96
  %v636 = vld [vmem:[%s635] sm:$0xff]
  %v637 = vld [vmem:[%s635 + $0x8] sm:$0xff]
  %v638 = vld [vmem:[%s635 + $0x10] sm:$0xff]
  %v639 = vld [vmem:[%s635 + $0x18] sm:$0xff]
  %s640 = scalar_lea.vmem %s1, 384
  %v641 = vld [vmem:[%s640] sm:$0xf]
  %v642 = vld [vmem:[%s640 + $0x4] sm:$0xf]
  %v643 = vld [vmem:[%s640 + $0x8] sm:$0xf]
  %v644 = vld [vmem:[%s640 + $0xc] sm:$0xf]
  %v645 = vld [vmem:[%s640 + $0x10] sm:$0xf]
  %v646 = vld [vmem:[%s640 + $0x14] sm:$0xf]
  %v647 = vld [vmem:[%s640 + $0x18] sm:$0xf]
  %v648 = vld [vmem:[%s640 + $0x1c] sm:$0xf]
  %v649 = vld [vmem:[%s640 + $0x20] sm:$0xf]
  %v650 = vld [vmem:[%s640 + $0x24] sm:$0xf]
  %v651 = vld [vmem:[%s640 + $0x28] sm:$0xf]
  %v652 = vld [vmem:[%s640 + $0x2c] sm:$0xf]
  %v653 = vld [vmem:[%s640 + $0x30] sm:$0xf]
  %v654 = vld [vmem:[%s640 + $0x34] sm:$0xf]
  %v655 = vld [vmem:[%s640 + $0x38] sm:$0xf]
  %v656 = vld [vmem:[%s640 + $0x3c] sm:$0xf]
  %v657 = vld [vmem:[%s640 + $0x40] sm:$0xf]
  %v658 = vld [vmem:[%s640 + $0x44] sm:$0xf]
  %v659 = vld [vmem:[%s640 + $0x48] sm:$0xf]
  %v660 = vld [vmem:[%s640 + $0x4c] sm:$0xf]
  %v661 = vld [vmem:[%s640 + $0x50] sm:$0xf]
  %v662 = vld [vmem:[%s640 + $0x54] sm:$0xf]
  %v663 = vld [vmem:[%s640 + $0x58] sm:$0xf]
  %v664 = vld [vmem:[%s640 + $0x5c] sm:$0xf]
  %v665 = vld [vmem:[%s640 + $0x60] sm:$0xf]
  %v666 = vld [vmem:[%s640 + $0x64] sm:$0xf]
  %v667 = vld [vmem:[%s640 + $0x68] sm:$0xf]
  %v668 = vld [vmem:[%s640 + $0x6c] sm:$0xf]
  %v669 = vld [vmem:[%s640 + $0x70] sm:$0xf]
  %v670 = vld [vmem:[%s640 + $0x74] sm:$0xf]
  %v671 = vld [vmem:[%s640 + $0x78] sm:$0xf]
  %v672 = vld [vmem:[%s640 + $0x7c] sm:$0xf]
  %v677 = vunpack.c.l.b16 %v636
  %v678 = vunpack.c.h.b16 %v636
  %v679 = vunpack.c.l.b16 %v637
  %v680 = vunpack.c.h.b16 %v637
  %v681 = vunpack.c.l.b16 %v638
  %v682 = vunpack.c.h.b16 %v638
  %v683 = vunpack.c.l.b16 %v639
  %v684 = vunpack.c.h.b16 %v639
  %v685 = vpack.c.b16 %v679, %v677
  %v686 = vpack.c.b16 %v680, %v678
  %v687 = vpack.c.b16 %v683, %v681
  %v688 = vpack.c.b16 %v684, %v682
  %v725 = vunpack.c.l.b16 %v641
  %v726 = vunpack.c.l.b16 %v642
  %v727 = vunpack.c.l.b16 %v643
  %v728 = vunpack.c.l.b16 %v644
  %v729 = vunpack.c.l.b16 %v645
  %v730 = vunpack.c.l.b16 %v646
  %v731 = vunpack.c.l.b16 %v647
  %v732 = vunpack.c.l.b16 %v648
  %v733 = vunpack.c.l.b16 %v649
  %v734 = vunpack.c.l.b16 %v650
  %v735 = vunpack.c.l.b16 %v651
  %v736 = vunpack.c.l.b16 %v652
  %v737 = vunpack.c.l.b16 %v653
  %v738 = vunpack.c.l.b16 %v654
  %v739 = vunpack.c.l.b16 %v655
  %v740 = vunpack.c.l.b16 %v656
  %v741 = vunpack.c.l.b16 %v657
  %v742 = vunpack.c.l.b16 %v658
  %v743 = vunpack.c.l.b16 %v659
  %v744 = vunpack.c.l.b16 %v660
  %v745 = vunpack.c.l.b16 %v661
  %v746 = vunpack.c.l.b16 %v662
  %v747 = vunpack.c.l.b16 %v663
  %v748 = vunpack.c.l.b16 %v664
  %v749 = vunpack.c.l.b16 %v665
  %v750 = vunpack.c.l.b16 %v666
  %v751 = vunpack.c.l.b16 %v667
  %v752 = vunpack.c.l.b16 %v668
  %v753 = vunpack.c.l.b16 %v669
  %v754 = vunpack.c.l.b16 %v670
  %v755 = vunpack.c.l.b16 %v671
  %v756 = vunpack.c.l.b16 %v672
  %v757 = vpack.c.b16 %v726, %v725
  %v758 = vpack.c.b16 %v728, %v727
  %v759 = vpack.c.b16 %v730, %v729
  %v760 = vpack.c.b16 %v732, %v731
  %v761 = vpack.c.b16 %v734, %v733
  %v762 = vpack.c.b16 %v736, %v735
  %v763 = vpack.c.b16 %v738, %v737
  %v764 = vpack.c.b16 %v740, %v739
  %v765 = vpack.c.b16 %v742, %v741
  %v766 = vpack.c.b16 %v744, %v743
  %v767 = vpack.c.b16 %v746, %v745
  %v768 = vpack.c.b16 %v748, %v747
  %v769 = vpack.c.b16 %v750, %v749
  %v770 = vpack.c.b16 %v752, %v751
  %v771 = vpack.c.b16 %v754, %v753
  %v772 = vpack.c.b16 %v756, %v755
  %789 = vmatprep.subr.bf16.mxu0 0
  %790 = vmatpush1.bf16.msra.mxu0 %v757
  %791 = vmatprep.subr.bf16.mxu0 0
  %792 = vmatpush1.bf16.msra.mxu0 %v758
  %793 = vmatprep.subr.bf16.mxu0 0
  %794 = vmatpush1.bf16.msra.mxu0 %v759
  %795 = vmatprep.subr.bf16.mxu0 0
  %796 = vmatpush1.bf16.msra.mxu0 %v760
  %797 = vmatprep.subr.bf16.mxu0 0
  %798 = vmatpush1.bf16.msra.mxu0 %v761
  %799 = vmatprep.subr.bf16.mxu0 0
  %800 = vmatpush1.bf16.msra.mxu0 %v762
  %801 = vmatprep.subr.bf16.mxu0 0
  %802 = vmatpush1.bf16.msra.mxu0 %v763
  %803 = vmatprep.subr.bf16.mxu0 0
  %804 = vmatpush1.bf16.msra.mxu0 %v764
  %805 = vmatprep.subr.bf16.mxu0 0
  %806 = vmatpush1.bf16.msra.mxu0 %v765
  %807 = vmatprep.subr.bf16.mxu0 0
  %808 = vmatpush1.bf16.msra.mxu0 %v766
  %809 = vmatprep.subr.bf16.mxu0 0
  %810 = vmatpush1.bf16.msra.mxu0 %v767
  %811 = vmatprep.subr.bf16.mxu0 0
  %812 = vmatpush1.bf16.msra.mxu0 %v768
  %813 = vmatprep.subr.bf16.mxu0 0
  %814 = vmatpush1.bf16.msra.mxu0 %v769
  %815 = vmatprep.subr.bf16.mxu0 0
  %816 = vmatpush1.bf16.msra.mxu0 %v770
  %817 = vmatprep.subr.bf16.mxu0 0
  %818 = vmatpush1.bf16.msra.mxu0 %v771
  %819 = vmatprep.subr.bf16.mxu0 0
  %820 = vmatpush1.bf16.msra.mxu0 %v772
  %821 = vmatprep.mubr.bf16.mxu0 %v686
  %822 = vmatmul.mubr.bf16.gmra.mrb[0].mxu0 %v685
  %v823 = vpop.f32.mrb[0].mxu0
  %v824 = vadd.f32 %v62, %v823
  %v825 = vpop.f32.mrb[0].mxu0
  %v826 = vpop.f32.mrb[0].mxu0
  %v827 = vadd.f32 %v62, %v826
  %v828 = vpop.f32.mrb[0].mxu0
  %829 = vmatprep.mubr.bf16.mxu0 %v688
  %830 = vmatmul.mubr.bf16.gmra.mrb[0].mxu0 %v687
  %v831 = vpop.f32.mrb[0].mxu0
  %v832 = vadd.f32 %v62, %v831
  %v833 = vpop.f32.mrb[0].mxu0
  %v834 = vpop.f32.mrb[0].mxu0
  %v835 = vadd.f32 %v62, %v834
  %v836 = vpop.f32.mrb[0].mxu0
  %837 = vdwg.mxu0
  %vm838 = vcmask 261120
  %v839 = vsel %vm838, %v215, 0.0
  %v840 = vsel %vm838, %v218, 0.0
  %v841 = vadd.f32 %v839, %v840
  %v842 = vsel %vm838, %v223, 0.0
  %v843 = vadd.f32 %v841, %v842
  %v844 = vsel %vm838, %v226, 0.0
  %v845 = vadd.f32 %v843, %v844
  %v846 = vrot.slane %v845, 4
  %v847 = vadd.f32 %v845, %v846
  %v848 = vrot.slane %v847, 2
  %v849 = vadd.f32 %v847, %v848
  %v850 = vrot.slane %v849, 1
  %v851 = vadd.f32 %v849, %v850
  %v852 = vadd.f32 %v851, 0.0
  %v853 = vsel %vm838, %v418, 0.0
  %v854 = vsel %vm838, %v421, 0.0
  %v855 = vadd.f32 %v853, %v854
  %v856 = vsel %vm838, %v426, 0.0
  %v857 = vadd.f32 %v855, %v856
  %v858 = vsel %vm838, %v429, 0.0
  %v859 = vadd.f32 %v857, %v858
  %v860 = vrot.slane %v859, 4
  %v861 = vadd.f32 %v859, %v860
  %v862 = vrot.slane %v861, 2
  %v863 = vadd.f32 %v861, %v862
  %v864 = vrot.slane %v863, 1
  %v865 = vadd.f32 %v863, %v864
  %v866 = vadd.f32 %v852, %v865
  %v867 = vsel %vm838, %v621, 0.0
  %v868 = vsel %vm838, %v624, 0.0
  %v869 = vadd.f32 %v867, %v868
  %v870 = vsel %vm838, %v629, 0.0
  %v871 = vadd.f32 %v869, %v870
  %v872 = vsel %vm838, %v632, 0.0
  %v873 = vadd.f32 %v871, %v872
  %v874 = vrot.slane %v873, 4
  %v875 = vadd.f32 %v873, %v874
  %v876 = vrot.slane %v875, 2
  %v877 = vadd.f32 %v875, %v876
  %v878 = vrot.slane %v877, 1
  %v879 = vadd.f32 %v877, %v878
  %v880 = vadd.f32 %v866, %v879
  %v881 = vsel %vm838, %v824, 0.0
  %v882 = vsel %vm838, %v827, 0.0
  %v883 = vadd.f32 %v881, %v882
  %v884 = vsel %vm838, %v832, 0.0
  %v885 = vadd.f32 %v883, %v884
  %v886 = vsel %vm838, %v835, 0.0
  %v887 = vadd.f32 %v885, %v886
  %v888 = vrot.slane %v887, 4
  %v889 = vadd.f32 %v887, %v888
  %v890 = vrot.slane %v889, 2
  %v891 = vadd.f32 %v889, %v890
  %v892 = vrot.slane %v891, 1
  %v893 = vadd.f32 %v891, %v892
  %v894 = vadd.f32 %v880, %v893
  %v895 = vmul.f32 %v215, %v215
  %v896 = vmul.f32 %v218, %v218
  %v897 = vmul.f32 %v223, %v223
  %v898 = vmul.f32 %v226, %v226
  %v899 = vsel %vm838, %v895, 0.0
  %v900 = vsel %vm838, %v896, 0.0
  %v901 = vadd.f32 %v899, %v900
  %v902 = vsel %vm838, %v897, 0.0
  %v903 = vadd.f32 %v901, %v902
  %v904 = vsel %vm838, %v898, 0.0
  %v905 = vadd.f32 %v903, %v904
  %v906 = vrot.slane %v905, 4
  %v907 = vadd.f32 %v905, %v906
  %v908 = vrot.slane %v907, 2
  %v909 = vadd.f32 %v907, %v908
  %v910 = vrot.slane %v909, 1
  %v911 = vadd.f32 %v909, %v910
  %v912 = vadd.f32 %v911, 0.0
  %v913 = vmul.f32 %v418, %v418
  %v914 = vmul.f32 %v421, %v421
  %v915 = vmul.f32 %v426, %v426
  %v916 = vmul.f32 %v429, %v429
  %v917 = vsel %vm838, %v913, 0.0
  %v918 = vsel %vm838, %v914, 0.0
  %v919 = vadd.f32 %v917, %v918
  %v920 = vsel %vm838, %v915, 0.0
  %v921 = vadd.f32 %v919, %v920
  %v922 = vsel %vm838, %v916, 0.0
  %v923 = vadd.f32 %v921, %v922
  %v924 = vrot.slane %v923, 4
  %v925 = vadd.f32 %v923, %v924
  %v926 = vrot.slane %v925, 2
  %v927 = vadd.f32 %v925, %v926
  %v928 = vrot.slane %v927, 1
  %v929 = vadd.f32 %v927, %v928
  %v930 = vadd.f32 %v912, %v929
  %v931 = vmul.f32 %v621, %v621
  %v932 = vmul.f32 %v624, %v624
  %v933 = vmul.f32 %v629, %v629
  %v934 = vmul.f32 %v632, %v632
  %v935 = vsel %vm838, %v931, 0.0
  %v936 = vsel %vm838, %v932, 0.0
  %v937 = vadd.f32 %v935, %v936
  %v938 = vsel %vm838, %v933, 0.0
  %v939 = vadd.f32 %v937, %v938
  %v940 = vsel %vm838, %v934, 0.0
  %v941 = vadd.f32 %v939, %v940
  %v942 = vrot.slane %v941, 4
  %v943 = vadd.f32 %v941, %v942
  %v944 = vrot.slane %v943, 2
  %v945 = vadd.f32 %v943, %v944
  %v946 = vrot.slane %v945, 1
  %v947 = vadd.f32 %v945, %v946
  %v948 = vadd.f32 %v930, %v947
  %v949 = vmul.f32 %v824, %v824
  %v950 = vmul.f32 %v827, %v827
  %v951 = vmul.f32 %v832, %v832
  %v952 = vmul.f32 %v835, %v835
  %v953 = vsel %vm838, %v949, 0.0
  %v954 = vsel %vm838, %v950, 0.0
  %v955 = vadd.f32 %v953, %v954
  %v956 = vsel %vm838, %v951, 0.0
  %v957 = vadd.f32 %v955, %v956
  %v958 = vsel %vm838, %v952, 0.0
  %v959 = vadd.f32 %v957, %v958
  %v960 = vrot.slane %v959, 4
  %v961 = vadd.f32 %v959, %v960
  %v962 = vrot.slane %v961, 2
  %v963 = vadd.f32 %v961, %v962
  %v964 = vrot.slane %v963, 1
  %v965 = vadd.f32 %v963, %v964
  %v966 = vadd.f32 %v948, %v965
  %v967 = vrcp.pop 128.0
  %v968 = vmul.f32 %v894, %v967
  %v969 = vmul.f32 %v966, %v967
  %v970 = vmul.f32 %v968, %v968
  %v971 = vsub.f32 %v969, %v970
  %v972 = vmax.f32 %v971, 0.0
  %v973 = vadd.f32 %v972, 1e-05
  %v974 = vrsqrt.pop %v973
  %v975 = vld [vmem:[%s3] sm:$0x1]
  %v976 = vmul.f32 %v974, %v975
  %v977 = vld [vmem:[%s4] sm:$0x1]
  %v978 = vmul.f32 %v968, %v976
  %v979 = vsub.f32 %v977, %v978
  %v980 = vlaneseq
  %v981 = vshrl.u32 %v980, 7
  %v982 = vsub.s32 0, %v981
  %v983 = vrot.slane %v976, %v982
  %v984 = vmul.f32 %v215, %v983
  %v985 = vmul.f32 %v218, %v983
  %v986 = vmul.f32 %v223, %v983
  %v987 = vmul.f32 %v226, %v983
  %v989 = vlaneseq
  %v990 = vshrl.u32 %v989, 7
  %v991 = vsub.s32 0, %v990
  %v992 = vrot.slane %v979, %v991
  %v994 = vadd.f32 %v984, %v992
  %v995 = vadd.f32 %v985, %v992
  %v996 = vadd.f32 %v986, %v992
  %v997 = vadd.f32 %v987, %v992
  %v998 = vmax.f32 %v994, 0.0
  %v999 = vmax.f32 %v995, 0.0
  %v1000 = vmax.f32 %v996, 0.0
  %v1001 = vmax.f32 %v997, 0.0
  %1002 = vst.msk [vmem:[%s5] sm:$0xff] %vm838, %v998
  %1003 = vst.msk [vmem:[%s5 + $0x8] sm:$0xff] %vm838, %v999
  %1004 = vst.msk [vmem:[%s5 + $0x10] sm:$0xff] %vm838, %v1000
  %1005 = vst.msk [vmem:[%s5 + $0x18] sm:$0xff] %vm838, %v1001
  %v1006 = vmul.f32 %v418, %v983
  %v1007 = vmul.f32 %v421, %v983
  %v1008 = vmul.f32 %v426, %v983
  %v1009 = vmul.f32 %v429, %v983
  %v1010 = vadd.f32 %v1006, %v992
  %v1011 = vadd.f32 %v1007, %v992
  %v1012 = vadd.f32 %v1008, %v992
  %v1013 = vadd.f32 %v1009, %v992
  %v1014 = vmax.f32 %v1010, 0.0
  %v1015 = vmax.f32 %v1011, 0.0
  %v1016 = vmax.f32 %v1012, 0.0
  %v1017 = vmax.f32 %v1013, 0.0
  %s1018 = scalar_lea.vmem %s5, 32
  %1019 = vst.msk [vmem:[%s1018] sm:$0xff] %vm838, %v1014
  %1020 = vst.msk [vmem:[%s1018 + $0x8] sm:$0xff] %vm838, %v1015
  %1021 = vst.msk [vmem:[%s1018 + $0x10] sm:$0xff] %vm838, %v1016
  %1022 = vst.msk [vmem:[%s1018 + $0x18] sm:$0xff] %vm838, %v1017
  %v1023 = vmul.f32 %v621, %v983
  %v1024 = vmul.f32 %v624, %v983
  %v1025 = vmul.f32 %v629, %v983
  %v1026 = vmul.f32 %v632, %v983
  %v1027 = vadd.f32 %v1023, %v992
  %v1028 = vadd.f32 %v1024, %v992
  %v1029 = vadd.f32 %v1025, %v992
  %v1030 = vadd.f32 %v1026, %v992
  %v1031 = vmax.f32 %v1027, 0.0
  %v1032 = vmax.f32 %v1028, 0.0
  %v1033 = vmax.f32 %v1029, 0.0
  %v1034 = vmax.f32 %v1030, 0.0
  %s1035 = scalar_lea.vmem %s5, 64
  %1036 = vst.msk [vmem:[%s1035] sm:$0xff] %vm838, %v1031
  %1037 = vst.msk [vmem:[%s1035 + $0x8] sm:$0xff] %vm838, %v1032
  %1038 = vst.msk [vmem:[%s1035 + $0x10] sm:$0xff] %vm838, %v1033
  %1039 = vst.msk [vmem:[%s1035 + $0x18] sm:$0xff] %vm838, %v1034
  %v1040 = vmul.f32 %v824, %v983
  %v1041 = vmul.f32 %v827, %v983
  %v1042 = vmul.f32 %v832, %v983
  %v1043 = vmul.f32 %v835, %v983
  %v1044 = vadd.f32 %v1040, %v992
  %v1045 = vadd.f32 %v1041, %v992
  %v1046 = vadd.f32 %v1042, %v992
  %v1047 = vadd.f32 %v1043, %v992
  %v1048 = vmax.f32 %v1044, 0.0
  %v1049 = vmax.f32 %v1045, 0.0
  %v1050 = vmax.f32 %v1046, 0.0
  %v1051 = vmax.f32 %v1047, 0.0
  %s1052 = scalar_lea.vmem %s5, 96
  %1053 = vst.msk [vmem:[%s1052] sm:$0xff] %vm838, %v1048
  %1054 = vst.msk [vmem:[%s1052 + $0x8] sm:$0xff] %vm838, %v1049
  %1055 = vst.msk [vmem:[%s1052 + $0x10] sm:$0xff] %vm838, %v1050
  %1056 = vst.msk [vmem:[%s1052 + $0x18] sm:$0xff] %vm838, %v1051
  // Predicated region
  $region22: #{generator_forward.5} parent=0 // pred_check
    _
  $region23: #{generator_forward.5} parent=0 // pred_check_branch
    %1058 = sbr.rel (0) target = $region25
  $region24: #{generator_forward.5} parent=0 // pred_region
    _
  $region25: #{generator_forward.5} parent=0 // pred_fallthru
    _
  // Predicated region
  $region26: #{generator_forward.5} parent=0 // pred_check
    _
  $region27: #{generator_forward.5} parent=0 // pred_check_branch
    %1060 = sbr.rel (0) target = $region29
  $region28: #{generator_forward.5} parent=0 // pred_region
    _
  $region29: #{generator_forward.5} parent=0 // pred_fallthru
    _

// kernel: generator_forward.6
$region0: #{generator_forward.6}
  #allocation0 [shape = 'u32[]', space=smem, size = 0x4, offset = 0x4, fixed_abs, tag = 'smem constant byte address 0x4 - core index']
  #allocation1 [shape = 'u32[144,128]{1,0:T(1,128)}', space=vmem, size = 0x12000, scoped, tag = 'internal scratch']
  %s0 = inlined_call_operand.vmem [shape: bf16[4,98,128], index: 0, kind: input, shape index: {}]
  %s1 = inlined_call_operand.vmem [shape: bf16[4,128,16], index: 1, kind: input, shape index: {}]
  %s2 = inlined_call_operand.vmem [shape: f32[1,16], index: 2, kind: input, shape index: {}]
  %s3 = inlined_call_operand.vmem [shape: f32[1,16], index: 3, kind: input, shape index: {}]
  %s4 = inlined_call_operand.vmem [shape: f32[1,16], index: 4, kind: input, shape index: {}]
  %s5 = inlined_call_operand.vmem [shape: f32[4,98,16], index: 5, kind: output, shape index: {}]
  %s6 = sld [smem:[#allocation0]]
  $region30: #{generator_forward.6} parent=0
    _
  %s8 = ssub.s32 1, %s6
  %s9 = scalar_select 0, %s8, %s6
  // Predicated region
  $region2: #{generator_forward.6} parent=0 // pred_check
    _
  $region3: #{generator_forward.6} parent=0 // pred_check_branch
    %11 = sbr.rel (0) target = $region5
  $region4: #{generator_forward.6} parent=0 // pred_region
    _
  $region5: #{generator_forward.6} parent=0 // pred_fallthru
    _
  // Predicated region
  $region6: #{generator_forward.6} parent=0 // pred_check
    _
  $region7: #{generator_forward.6} parent=0 // pred_check_branch
    %13 = sbr.rel (0) target = $region9
  $region8: #{generator_forward.6} parent=0 // pred_region
    _
  $region9: #{generator_forward.6} parent=0 // pred_fallthru
    _
  // Predicated region
  $region10: #{generator_forward.6} parent=0 // pred_check
    _
  $region11: #{generator_forward.6} parent=0 // pred_check_branch
    %15 = sbr.rel (0) target = $region13
  $region12: #{generator_forward.6} parent=0 // pred_region
    _
  $region13: #{generator_forward.6} parent=0 // pred_fallthru
    _
  // Predicated region
  $region14: #{generator_forward.6} parent=0 // pred_check
    _
  $region15: #{generator_forward.6} parent=0 // pred_check_branch
    %17 = sbr.rel (0) target = $region17
  $region16: #{generator_forward.6} parent=0 // pred_region
    _
  $region17: #{generator_forward.6} parent=0 // pred_fallthru
    _
  // Predicated region
  $region18: #{generator_forward.6} parent=0 // pred_check
    _
  $region19: #{generator_forward.6} parent=0 // pred_check_branch
    %19 = sbr.rel (0) target = $region21
  $region20: #{generator_forward.6} parent=0 // pred_region
    _
  $region21: #{generator_forward.6} parent=0 // pred_fallthru
    _
  %v21 = vld [vmem:[%s2] sm:$0x1]
  %v22 = vld [vmem:[%s0] sm:$0xf]
  %v23 = vld [vmem:[%s0 + $0x4] sm:$0xf]
  %v24 = vld [vmem:[%s0 + $0x8] sm:$0xf]
  %v25 = vld [vmem:[%s0 + $0xc] sm:$0xf]
  %v26 = vld [vmem:[%s0 + $0x10] sm:$0xf]
  %v27 = vld [vmem:[%s0 + $0x14] sm:$0xf]
  %v28 = vld [vmem:[%s0 + $0x18] sm:$0xf]
  %v29 = vld [vmem:[%s0 + $0x1c] sm:$0xf]
  %v30 = vld [vmem:[%s0 + $0x20] sm:$0xf]
  %v31 = vld [vmem:[%s0 + $0x24] sm:$0xf]
  %v32 = vld [vmem:[%s0 + $0x28] sm:$0xf]
  %v33 = vld [vmem:[%s0 + $0x2c] sm:$0xf]
  %v34 = vld [vmem:[%s0 + $0x30] sm:$0x1]
  %v35 = vld [vmem:[%s1] sm:$0xf]
  %v36 = vld [vmem:[%s1 + $0x4] sm:$0xf]
  %v37 = vld [vmem:[%s1 + $0x8] sm:$0xf]
  %v38 = vld [vmem:[%s1 + $0xc] sm:$0xf]
  %v39 = vld [vmem:[%s1 + $0x10] sm:$0xf]
  %v40 = vld [vmem:[%s1 + $0x14] sm:$0xf]
  %v41 = vld [vmem:[%s1 + $0x18] sm:$0xf]
  %v42 = vld [vmem:[%s1 + $0x1c] sm:$0xf]
  %v43 = vld [vmem:[%s1 + $0x20] sm:$0xf]
  %v44 = vld [vmem:[%s1 + $0x24] sm:$0xf]
  %v45 = vld [vmem:[%s1 + $0x28] sm:$0xf]
  %v46 = vld [vmem:[%s1 + $0x2c] sm:$0xf]
  %v47 = vld [vmem:[%s1 + $0x30] sm:$0xf]
  %v48 = vld [vmem:[%s1 + $0x34] sm:$0xf]
  %v49 = vld [vmem:[%s1 + $0x38] sm:$0xf]
  %v50 = vld [vmem:[%s1 + $0x3c] sm:$0xf]
  %v52 = vlaneseq
  %v53 = vshrl.u32 %v52, 7
  %v54 = vsub.s32 0, %v53
  %v55 = vrot.slane %v21, %v54
  %v70 = vunpack.c.l.b16 %v22
  %v71 = vunpack.c.l.b16 %v23
  %v72 = vunpack.c.l.b16 %v24
  %v73 = vunpack.c.l.b16 %v25
  %v74 = vunpack.c.l.b16 %v26
  %v75 = vunpack.c.l.b16 %v27
  %v76 = vunpack.c.l.b16 %v28
  %v77 = vunpack.c.l.b16 %v29
  %v78 = vunpack.c.l.b16 %v30
  %v79 = vunpack.c.l.b16 %v31
  %v80 = vunpack.c.l.b16 %v32
  %v81 = vunpack.c.l.b16 %v33
  %v82 = vunpack.c.l.b16 %v34
  %v83 = vpack.c.b16 %v71, %v70
  %v84 = vpack.c.b16 %v73, %v72
  %v85 = vpack.c.b16 %v75, %v74
  %v86 = vpack.c.b16 %v77, %v76
  %v87 = vpack.c.b16 %v79, %v78
  %v88 = vpack.c.b16 %v81, %v80
  %v89 = vpack.c.b16 %v82, %v82
  %v113 = vunpack.c.l.b16 %v35
  %v114 = vunpack.c.l.b16 %v36
  %v115 = vunpack.c.l.b16 %v37
  %v116 = vunpack.c.l.b16 %v38
  %v117 = vunpack.c.l.b16 %v39
  %v118 = vunpack.c.l.b16 %v40
  %v119 = vunpack.c.l.b16 %v41
  %v120 = vunpack.c.l.b16 %v42
  %v121 = vunpack.c.l.b16 %v43
  %v122 = vunpack.c.l.b16 %v44
  %v123 = vunpack.c.l.b16 %v45
  %v124 = vunpack.c.l.b16 %v46
  %v125 = vunpack.c.l.b16 %v47
  %v126 = vunpack.c.l.b16 %v48
  %v127 = vunpack.c.l.b16 %v49
  %v128 = vunpack.c.l.b16 %v50
  %v129 = vpack.c.b16 %v114, %v113
  %v130 = vpack.c.b16 %v116, %v115
  %v131 = vpack.c.b16 %v118, %v117
  %v132 = vpack.c.b16 %v120, %v119
  %v133 = vpack.c.b16 %v122, %v121
  %v134 = vpack.c.b16 %v124, %v123
  %v135 = vpack.c.b16 %v126, %v125
  %v136 = vpack.c.b16 %v128, %v127
  %145 = vmatprep.subr.bf16.mxu0 0
  %146 = vmatpush1.bf16.msra.mxu0 %v129
  %147 = vmatprep.subr.bf16.mxu0 0
  %148 = vmatpush1.bf16.msra.mxu0 %v130
  %149 = vmatprep.subr.bf16.mxu0 0
  %150 = vmatpush1.bf16.msra.mxu0 %v131
  %151 = vmatprep.subr.bf16.mxu0 0
  %152 = vmatpush1.bf16.msra.mxu0 %v132
  %153 = vmatprep.subr.bf16.mxu0 0
  %154 = vmatpush1.bf16.msra.mxu0 %v133
  %155 = vmatprep.subr.bf16.mxu0 0
  %156 = vmatpush1.bf16.msra.mxu0 %v134
  %157 = vmatprep.subr.bf16.mxu0 0
  %158 = vmatpush1.bf16.msra.mxu0 %v135
  %159 = vmatprep.subr.bf16.mxu0 0
  %160 = vmatpush1.bf16.msra.mxu0 %v136
  %161 = vmatprep.subr.bf16.mxu0 0
  %162 = vmatpush1.bf16.msra.mxu0 0
  %163 = vmatprep.subr.bf16.mxu0 0
  %164 = vmatpush1.bf16.msra.mxu0 0
  %165 = vmatprep.subr.bf16.mxu0 0
  %166 = vmatpush1.bf16.msra.mxu0 0
  %167 = vmatprep.subr.bf16.mxu0 0
  %168 = vmatpush1.bf16.msra.mxu0 0
  %169 = vmatprep.subr.bf16.mxu0 0
  %170 = vmatpush1.bf16.msra.mxu0 0
  %171 = vmatprep.subr.bf16.mxu0 0
  %172 = vmatpush1.bf16.msra.mxu0 0
  %173 = vmatprep.subr.bf16.mxu0 0
  %174 = vmatpush1.bf16.msra.mxu0 0
  %175 = vmatprep.subr.bf16.mxu0 0
  %176 = vmatpush1.bf16.msra.mxu0 0
  %177 = vmatprep.mubr.bf16.mxu0 0
  %178 = vmatmul.mubr.bf16.gmra.mrb[0].mxu0 %v83
  %v179 = vpop.f32.mrb[0].mxu0
  %v180 = vadd.f32 %v55, %v179
  %v181 = vpop.f32.mrb[0].mxu0
  %v182 = vpop.f32.mrb[0].mxu0
  %v183 = vadd.f32 %v55, %v182
  %v184 = vpop.f32.mrb[0].mxu0
  %185 = vmatprep.mubr.bf16.mxu0 0
  %186 = vmatmul.mubr.bf16.gmra.mrb[0].mxu0 %v84
  %v187 = vpop.f32.mrb[0].mxu0
  %v188 = vadd.f32 %v55, %v187
  %v189 = vpop.f32.mrb[0].mxu0
  %v190 = vpop.f32.mrb[0].mxu0
  %v191 = vadd.f32 %v55, %v190
  %v192 = vpop.f32.mrb[0].mxu0
  %193 = vmatprep.mubr.bf16.mxu0 0
  %194 = vmatmul.mubr.bf16.gmra.mrb[0].mxu0 %v85
  %v195 = vpop.f32.mrb[0].mxu0
  %v196 = vadd.f32 %v55, %v195
  %v197 = vpop.f32.mrb[0].mxu0
  %v198 = vpop.f32.mrb[0].mxu0
  %v199 = vadd.f32 %v55, %v198
  %v200 = vpop.f32.mrb[0].mxu0
  %201 = vmatprep.mubr.bf16.mxu0 0
  %202 = vmatmul.mubr.bf16.gmra.mrb[0].mxu0 %v86
  %v203 = vpop.f32.mrb[0].mxu0
  %v204 = vadd.f32 %v55, %v203
  %v205 = vpop.f32.mrb[0].mxu0
  %v206 = vpop.f32.mrb[0].mxu0
  %v207 = vadd.f32 %v55, %v206
  %v208 = vpop.f32.mrb[0].mxu0
  %209 = vmatprep.mubr.bf16.mxu0 0
  %210 = vmatmul.mubr.bf16.gmra.mrb[0].mxu0 %v87
  %v211 = vpop.f32.mrb[0].mxu0
  %v212 = vadd.f32 %v55, %v211
  %v213 = vpop.f32.mrb[0].mxu0
  %v214 = vpop.f32.mrb[0].mxu0
  %v215 = vadd.f32 %v55, %v214
  %v216 = vpop.f32.mrb[0].mxu0
  %217 = vmatprep.mubr.bf16.mxu0 0
  %218 = vmatmul.mubr.bf16.gmra.mrb[0].mxu0 %v88
  %v219 = vpop.f32.mrb[0].mxu0
  %v220 = vadd.f32 %v55, %v219
  %v221 = vpop.f32.mrb[0].mxu0
  %v222 = vpop.f32.mrb[0].mxu0
  %v223 = vadd.f32 %v55, %v222
  %v224 = vpop.f32.mrb[0].mxu0
  %225 = vmatprep.mubr.bf16.mxu0 0
  %226 = vmatmul.mubr.bf16.gmra.mrb[0].mxu0 %v89
  %v227 = vpop.f32.mrb[0].mxu0
  %v228 = vadd.f32 %v55, %v227
  %v229 = vpop.f32.mrb[0].mxu0
  %v230 = vpop.f32.mrb[0].mxu0
  %v231 = vpop.f32.mrb[0].mxu0
  %232 = vdwg.mxu0
  %s233 = scalar_lea.vmem %s0, 52
  %v234 = vld [vmem:[%s233] sm:$0xf]
  %v235 = vld [vmem:[%s233 + $0x4] sm:$0xf]
  %v236 = vld [vmem:[%s233 + $0x8] sm:$0xf]
  %v237 = vld [vmem:[%s233 + $0xc] sm:$0xf]
  %v238 = vld [vmem:[%s233 + $0x10] sm:$0xf]
  %v239 = vld [vmem:[%s233 + $0x14] sm:$0xf]
  %v240 = vld [vmem:[%s233 + $0x18] sm:$0xf]
  %v241 = vld [vmem:[%s233 + $0x1c] sm:$0xf]
  %v242 = vld [vmem:[%s233 + $0x20] sm:$0xf]
  %v243 = vld [vmem:[%s233 + $0x24] sm:$0xf]
  %v244 = vld [vmem:[%s233 + $0x28] sm:$0xf]
  %v245 = vld [vmem:[%s233 + $0x2c] sm:$0xf]
  %v246 = vld [vmem:[%s233 + $0x30] sm:$0x1]
  %s247 = scalar_lea.vmem %s1, 64
  %v248 = vld [vmem:[%s247] sm:$0xf]
  %v249 = vld [vmem:[%s247 + $0x4] sm:$0xf]
  %v250 = vld [vmem:[%s247 + $0x8] sm:$0xf]
  %v251 = vld [vmem:[%s247 + $0xc] sm:$0xf]
  %v252 = vld [vmem:[%s247 + $0x10] sm:$0xf]
  %v253 = vld [vmem:[%s247 + $0x14] sm:$0xf]
  %v254 = vld [vmem:[%s247 + $0x18] sm:$0xf]
  %v255 = vld [vmem:[%s247 + $0x1c] sm:$0xf]
  %v256 = vld [vmem:[%s247 + $0x20] sm:$0xf]
  %v257 = vld [vmem:[%s247 + $0x24] sm:$0xf]
  %v258 = vld [vmem:[%s247 + $0x28] sm:$0xf]
  %v259 = vld [vmem:[%s247 + $0x2c] sm:$0xf]
  %v260 = vld [vmem:[%s247 + $0x30] sm:$0xf]
  %v261 = vld [vmem:[%s247 + $0x34] sm:$0xf]
  %v262 = vld [vmem:[%s247 + $0x38] sm:$0xf]
  %v263 = vld [vmem:[%s247 + $0x3c] sm:$0xf]
  %v277 = vunpack.c.l.b16 %v234
  %v278 = vunpack.c.l.b16 %v235
  %v279 = vunpack.c.l.b16 %v236
  %v280 = vunpack.c.l.b16 %v237
  %v281 = vunpack.c.l.b16 %v238
  %v282 = vunpack.c.l.b16 %v239
  %v283 = vunpack.c.l.b16 %v240
  %v284 = vunpack.c.l.b16 %v241
  %v285 = vunpack.c.l.b16 %v242
  %v286 = vunpack.c.l.b16 %v243
  %v287 = vunpack.c.l.b16 %v244
  %v288 = vunpack.c.l.b16 %v245
  %v289 = vunpack.c.l.b16 %v246
  %v290 = vpack.c.b16 %v278, %v277
  %v291 = vpack.c.b16 %v280, %v279
  %v292 = vpack.c.b16 %v282, %v281
  %v293 = vpack.c.b16 %v284, %v283
  %v294 = vpack.c.b16 %v286, %v285
  %v295 = vpack.c.b16 %v288, %v287
  %v296 = vpack.c.b16 %v289, %v289
  %v320 = vunpack.c.l.b16 %v248
  %v321 = vunpack.c.l.b16 %v249
  %v322 = vunpack.c.l.b16 %v250
  %v323 = vunpack.c.l.b16 %v251
  %v324 = vunpack.c.l.b16 %v252
  %v325 = vunpack.c.l.b16 %v253
  %v326 = vunpack.c.l.b16 %v254
  %v327 = vunpack.c.l.b16 %v255
  %v328 = vunpack.c.l.b16 %v256
  %v329 = vunpack.c.l.b16 %v257
  %v330 = vunpack.c.l.b16 %v258
  %v331 = vunpack.c.l.b16 %v259
  %v332 = vunpack.c.l.b16 %v260
  %v333 = vunpack.c.l.b16 %v261
  %v334 = vunpack.c.l.b16 %v262
  %v335 = vunpack.c.l.b16 %v263
  %v336 = vpack.c.b16 %v321, %v320
  %v337 = vpack.c.b16 %v323, %v322
  %v338 = vpack.c.b16 %v325, %v324
  %v339 = vpack.c.b16 %v327, %v326
  %v340 = vpack.c.b16 %v329, %v328
  %v341 = vpack.c.b16 %v331, %v330
  %v342 = vpack.c.b16 %v333, %v332
  %v343 = vpack.c.b16 %v335, %v334
  %352 = vmatprep.subr.bf16.mxu0 0
  %353 = vmatpush1.bf16.msra.mxu0 %v336
  %354 = vmatprep.subr.bf16.mxu0 0
  %355 = vmatpush1.bf16.msra.mxu0 %v337
  %356 = vmatprep.subr.bf16.mxu0 0
  %357 = vmatpush1.bf16.msra.mxu0 %v338
  %358 = vmatprep.subr.bf16.mxu0 0
  %359 = vmatpush1.bf16.msra.mxu0 %v339
  %360 = vmatprep.subr.bf16.mxu0 0
  %361 = vmatpush1.bf16.msra.mxu0 %v340
  %362 = vmatprep.subr.bf16.mxu0 0
  %363 = vmatpush1.bf16.msra.mxu0 %v341
  %364 = vmatprep.subr.bf16.mxu0 0
  %365 = vmatpush1.bf16.msra.mxu0 %v342
  %366 = vmatprep.subr.bf16.mxu0 0
  %367 = vmatpush1.bf16.msra.mxu0 %v343
  %368 = vmatprep.subr.bf16.mxu0 0
  %369 = vmatpush1.bf16.msra.mxu0 0
  %370 = vmatprep.subr.bf16.mxu0 0
  %371 = vmatpush1.bf16.msra.mxu0 0
  %372 = vmatprep.subr.bf16.mxu0 0
  %373 = vmatpush1.bf16.msra.mxu0 0
  %374 = vmatprep.subr.bf16.mxu0 0
  %375 = vmatpush1.bf16.msra.mxu0 0
  %376 = vmatprep.subr.bf16.mxu0 0
  %377 = vmatpush1.bf16.msra.mxu0 0
  %378 = vmatprep.subr.bf16.mxu0 0
  %379 = vmatpush1.bf16.msra.mxu0 0
  %380 = vmatprep.subr.bf16.mxu0 0
  %381 = vmatpush1.bf16.msra.mxu0 0
  %382 = vmatprep.subr.bf16.mxu0 0
  %383 = vmatpush1.bf16.msra.mxu0 0
  %384 = vmatprep.mubr.bf16.mxu0 0
  %385 = vmatmul.mubr.bf16.gmra.mrb[0].mxu0 %v290
  %v386 = vpop.f32.mrb[0].mxu0
  %v387 = vadd.f32 %v55, %v386
  %v388 = vpop.f32.mrb[0].mxu0
  %v389 = vpop.f32.mrb[0].mxu0
  %v390 = vadd.f32 %v55, %v389
  %v391 = vpop.f32.mrb[0].mxu0
  %392 = vmatprep.mubr.bf16.mxu0 0
  %393 = vmatmul.mubr.bf16.gmra.mrb[0].mxu0 %v291
  %v394 = vpop.f32.mrb[0].mxu0
  %v395 = vadd.f32 %v55, %v394
  %v396 = vpop.f32.mrb[0].mxu0
  %v397 = vpop.f32.mrb[0].mxu0
  %v398 = vadd.f32 %v55, %v397
  %v399 = vpop.f32.mrb[0].mxu0
  %400 = vmatprep.mubr.bf16.mxu0 0
  %401 = vmatmul.mubr.bf16.gmra.mrb[0].mxu0 %v292
  %v402 = vpop.f32.mrb[0].mxu0
  %v403 = vadd.f32 %v55, %v402
  %v404 = vpop.f32.mrb[0].mxu0
  %v405 = vpop.f32.mrb[0].mxu0
  %v406 = vadd.f32 %v55, %v405
  %v407 = vpop.f32.mrb[0].mxu0
  %408 = vmatprep.mubr.bf16.mxu0 0
  %409 = vmatmul.mubr.bf16.gmra.mrb[0].mxu0 %v293
  %v410 = vpop.f32.mrb[0].mxu0
  %v411 = vadd.f32 %v55, %v410
  %v412 = vpop.f32.mrb[0].mxu0
  %v413 = vpop.f32.mrb[0].mxu0
  %v414 = vadd.f32 %v55, %v413
  %v415 = vpop.f32.mrb[0].mxu0
  %416 = vmatprep.mubr.bf16.mxu0 0
  %417 = vmatmul.mubr.bf16.gmra.mrb[0].mxu0 %v294
  %v418 = vpop.f32.mrb[0].mxu0
  %v419 = vadd.f32 %v55, %v418
  %v420 = vpop.f32.mrb[0].mxu0
  %v421 = vpop.f32.mrb[0].mxu0
  %v422 = vadd.f32 %v55, %v421
  %v423 = vpop.f32.mrb[0].mxu0
  %424 = vmatprep.mubr.bf16.mxu0 0
  %425 = vmatmul.mubr.bf16.gmra.mrb[0].mxu0 %v295
  %v426 = vpop.f32.mrb[0].mxu0
  %v427 = vadd.f32 %v55, %v426
  %v428 = vpop.f32.mrb[0].mxu0
  %v429 = vpop.f32.mrb[0].mxu0
  %v430 = vadd.f32 %v55, %v429
  %v431 = vpop.f32.mrb[0].mxu0
  %432 = vmatprep.mubr.bf16.mxu0 0
  %433 = vmatmul.mubr.bf16.gmra.mrb[0].mxu0 %v296
  %v434 = vpop.f32.mrb[0].mxu0
  %v435 = vadd.f32 %v55, %v434
  %v436 = vpop.f32.mrb[0].mxu0
  %v437 = vpop.f32.mrb[0].mxu0
  %v438 = vpop.f32.mrb[0].mxu0
  %439 = vdwg.mxu0
  %s440 = scalar_lea.vmem %s0, 104
  %v441 = vld [vmem:[%s440] sm:$0xf]
  %v442 = vld [vmem:[%s440 + $0x4] sm:$0xf]
  %v443 = vld [vmem:[%s440 + $0x8] sm:$0xf]
  %v444 = vld [vmem:[%s440 + $0xc] sm:$0xf]
  %v445 = vld [vmem:[%s440 + $0x10] sm:$0xf]
  %v446 = vld [vmem:[%s440 + $0x14] sm:$0xf]
  %v447 = vld [vmem:[%s440 + $0x18] sm:$0xf]
  %v448 = vld [vmem:[%s440 + $0x1c] sm:$0xf]
  %v449 = vld [vmem:[%s440 + $0x20] sm:$0xf]
  %v450 = vld [vmem:[%s440 + $0x24] sm:$0xf]
  %v451 = vld [vmem:[%s440 + $0x28] sm:$0xf]
  %v452 = vld [vmem:[%s440 + $0x2c] sm:$0xf]
  %v453 = vld [vmem:[%s440 + $0x30] sm:$0x1]
  %s454 = scalar_lea.vmem %s1, 128
  %v455 = vld [vmem:[%s454] sm:$0xf]
  %v456 = vld [vmem:[%s454 + $0x4] sm:$0xf]
  %v457 = vld [vmem:[%s454 + $0x8] sm:$0xf]
  %v458 = vld [vmem:[%s454 + $0xc] sm:$0xf]
  %v459 = vld [vmem:[%s454 + $0x10] sm:$0xf]
  %v460 = vld [vmem:[%s454 + $0x14] sm:$0xf]
  %v461 = vld [vmem:[%s454 + $0x18] sm:$0xf]
  %v462 = vld [vmem:[%s454 + $0x1c] sm:$0xf]
  %v463 = vld [vmem:[%s454 + $0x20] sm:$0xf]
  %v464 = vld [vmem:[%s454 + $0x24] sm:$0xf]
  %v465 = vld [vmem:[%s454 + $0x28] sm:$0xf]
  %v466 = vld [vmem:[%s454 + $0x2c] sm:$0xf]
  %v467 = vld [vmem:[%s454 + $0x30] sm:$0xf]
  %v468 = vld [vmem:[%s454 + $0x34] sm:$0xf]
  %v469 = vld [vmem:[%s454 + $0x38] sm:$0xf]
  %v470 = vld [vmem:[%s454 + $0x3c] sm:$0xf]
  %v484 = vunpack.c.l.b16 %v441
  %v485 = vunpack.c.l.b16 %v442
  %v486 = vunpack.c.l.b16 %v443
  %v487 = vunpack.c.l.b16 %v444
  %v488 = vunpack.c.l.b16 %v445
  %v489 = vunpack.c.l.b16 %v446
  %v490 = vunpack.c.l.b16 %v447
  %v491 = vunpack.c.l.b16 %v448
  %v492 = vunpack.c.l.b16 %v449
  %v493 = vunpack.c.l.b16 %v450
  %v494 = vunpack.c.l.b16 %v451
  %v495 = vunpack.c.l.b16 %v452
  %v496 = vunpack.c.l.b16 %v453
  %v497 = vpack.c.b16 %v485, %v484
  %v498 = vpack.c.b16 %v487, %v486
  %v499 = vpack.c.b16 %v489, %v488
  %v500 = vpack.c.b16 %v491, %v490
  %v501 = vpack.c.b16 %v493, %v492
  %v502 = vpack.c.b16 %v495, %v494
  %v503 = vpack.c.b16 %v496, %v496
  %v527 = vunpack.c.l.b16 %v455
  %v528 = vunpack.c.l.b16 %v456
  %v529 = vunpack.c.l.b16 %v457
  %v530 = vunpack.c.l.b16 %v458
  %v531 = vunpack.c.l.b16 %v459
  %v532 = vunpack.c.l.b16 %v460
  %v533 = vunpack.c.l.b16 %v461
  %v534 = vunpack.c.l.b16 %v462
  %v535 = vunpack.c.l.b16 %v463
  %v536 = vunpack.c.l.b16 %v464
  %v537 = vunpack.c.l.b16 %v465
  %v538 = vunpack.c.l.b16 %v466
  %v539 = vunpack.c.l.b16 %v467
  %v540 = vunpack.c.l.b16 %v468
  %v541 = vunpack.c.l.b16 %v469
  %v542 = vunpack.c.l.b16 %v470
  %v543 = vpack.c.b16 %v528, %v527
  %v544 = vpack.c.b16 %v530, %v529
  %v545 = vpack.c.b16 %v532, %v531
  %v546 = vpack.c.b16 %v534, %v533
  %v547 = vpack.c.b16 %v536, %v535
  %v548 = vpack.c.b16 %v538, %v537
  %v549 = vpack.c.b16 %v540, %v539
  %v550 = vpack.c.b16 %v542, %v541
  %559 = vmatprep.subr.bf16.mxu0 0
  %560 = vmatpush1.bf16.msra.mxu0 %v543
  %561 = vmatprep.subr.bf16.mxu0 0
  %562 = vmatpush1.bf16.msra.mxu0 %v544
  %563 = vmatprep.subr.bf16.mxu0 0
  %564 = vmatpush1.bf16.msra.mxu0 %v545
  %565 = vmatprep.subr.bf16.mxu0 0
  %566 = vmatpush1.bf16.msra.mxu0 %v546
  %567 = vmatprep.subr.bf16.mxu0 0
  %568 = vmatpush1.bf16.msra.mxu0 %v547
  %569 = vmatprep.subr.bf16.mxu0 0
  %570 = vmatpush1.bf16.msra.mxu0 %v548
  %571 = vmatprep.subr.bf16.mxu0 0
  %572 = vmatpush1.bf16.msra.mxu0 %v549
  %573 = vmatprep.subr.bf16.mxu0 0
  %574 = vmatpush1.bf16.msra.mxu0 %v550
  %575 = vmatprep.subr.bf16.mxu0 0
  %576 = vmatpush1.bf16.msra.mxu0 0
  %577 = vmatprep.subr.bf16.mxu0 0
  %578 = vmatpush1.bf16.msra.mxu0 0
  %579 = vmatprep.subr.bf16.mxu0 0
  %580 = vmatpush1.bf16.msra.mxu0 0
  %581 = vmatprep.subr.bf16.mxu0 0
  %582 = vmatpush1.bf16.msra.mxu0 0
  %583 = vmatprep.subr.bf16.mxu0 0
  %584 = vmatpush1.bf16.msra.mxu0 0
  %585 = vmatprep.subr.bf16.mxu0 0
  %586 = vmatpush1.bf16.msra.mxu0 0
  %587 = vmatprep.subr.bf16.mxu0 0
  %588 = vmatpush1.bf16.msra.mxu0 0
  %589 = vmatprep.subr.bf16.mxu0 0
  %590 = vmatpush1.bf16.msra.mxu0 0
  %591 = vmatprep.mubr.bf16.mxu0 0
  %592 = vmatmul.mubr.bf16.gmra.mrb[0].mxu0 %v497
  %v593 = vpop.f32.mrb[0].mxu0
  %v594 = vadd.f32 %v55, %v593
  %v595 = vpop.f32.mrb[0].mxu0
  %v596 = vpop.f32.mrb[0].mxu0
  %v597 = vadd.f32 %v55, %v596
  %v598 = vpop.f32.mrb[0].mxu0
  %599 = vmatprep.mubr.bf16.mxu0 0
  %600 = vmatmul.mubr.bf16.gmra.mrb[0].mxu0 %v498
  %v601 = vpop.f32.mrb[0].mxu0
  %v602 = vadd.f32 %v55, %v601
  %v603 = vpop.f32.mrb[0].mxu0
  %v604 = vpop.f32.mrb[0].mxu0
  %v605 = vadd.f32 %v55, %v604
  %v606 = vpop.f32.mrb[0].mxu0
  %607 = vmatprep.mubr.bf16.mxu0 0
  %608 = vmatmul.mubr.bf16.gmra.mrb[0].mxu0 %v499
  %v609 = vpop.f32.mrb[0].mxu0
  %v610 = vadd.f32 %v55, %v609
  %v611 = vpop.f32.mrb[0].mxu0
  %v612 = vpop.f32.mrb[0].mxu0
  %v613 = vadd.f32 %v55, %v612
  %v614 = vpop.f32.mrb[0].mxu0
  %615 = vmatprep.mubr.bf16.mxu0 0
  %616 = vmatmul.mubr.bf16.gmra.mrb[0].mxu0 %v500
  %v617 = vpop.f32.mrb[0].mxu0
  %v618 = vadd.f32 %v55, %v617
  %v619 = vpop.f32.mrb[0].mxu0
  %v620 = vpop.f32.mrb[0].mxu0
  %v621 = vadd.f32 %v55, %v620
  %v622 = vpop.f32.mrb[0].mxu0
  %623 = vmatprep.mubr.bf16.mxu0 0
  %624 = vmatmul.mubr.bf16.gmra.mrb[0].mxu0 %v501
  %v625 = vpop.f32.mrb[0].mxu0
  %v626 = vadd.f32 %v55, %v625
  %v627 = vpop.f32.mrb[0].mxu0
  %v628 = vpop.f32.mrb[0].mxu0
  %v629 = vadd.f32 %v55, %v628
  %v630 = vpop.f32.mrb[0].mxu0
  %631 = vmatprep.mubr.bf16.mxu0 0
  %632 = vmatmul.mubr.bf16.gmra.mrb[0].mxu0 %v502
  %v633 = vpop.f32.mrb[0].mxu0
  %v634 = vadd.f32 %v55, %v633
  %v635 = vpop.f32.mrb[0].mxu0
  %v636 = vpop.f32.mrb[0].mxu0
  %v637 = vadd.f32 %v55, %v636
  %v638 = vpop.f32.mrb[0].mxu0
  %639 = vmatprep.mubr.bf16.mxu0 0
  %640 = vmatmul.mubr.bf16.gmra.mrb[0].mxu0 %v503
  %v641 = vpop.f32.mrb[0].mxu0
  %v642 = vadd.f32 %v55, %v641
  %v643 = vpop.f32.mrb[0].mxu0
  %v644 = vpop.f32.mrb[0].mxu0
  %v645 = vpop.f32.mrb[0].mxu0
  %646 = vdwg.mxu0
  %s647 = scalar_lea.vmem %s0, 156
  %v648 = vld [vmem:[%s647] sm:$0xf]
  %v649 = vld [vmem:[%s647 + $0x4] sm:$0xf]
  %v650 = vld [vmem:[%s647 + $0x8] sm:$0xf]
  %v651 = vld [vmem:[%s647 + $0xc] sm:$0xf]
  %v652 = vld [vmem:[%s647 + $0x10] sm:$0xf]
  %v653 = vld [vmem:[%s647 + $0x14] sm:$0xf]
  %v654 = vld [vmem:[%s647 + $0x18] sm:$0xf]
  %v655 = vld [vmem:[%s647 + $0x1c] sm:$0xf]
  %v656 = vld [vmem:[%s647 + $0x20] sm:$0xf]
  %v657 = vld [vmem:[%s647 + $0x24] sm:$0xf]
  %v658 = vld [vmem:[%s647 + $0x28] sm:$0xf]
  %v659 = vld [vmem:[%s647 + $0x2c] sm:$0xf]
  %v660 = vld [vmem:[%s647 + $0x30] sm:$0x1]
  %s661 = scalar_lea.vmem %s1, 192
  %v662 = vld [vmem:[%s661] sm:$0xf]
  %v663 = vld [vmem:[%s661 + $0x4] sm:$0xf]
  %v664 = vld [vmem:[%s661 + $0x8] sm:$0xf]
  %v665 = vld [vmem:[%s661 + $0xc] sm:$0xf]
  %v666 = vld [vmem:[%s661 + $0x10] sm:$0xf]
  %v667 = vld [vmem:[%s661 + $0x14] sm:$0xf]
  %v668 = vld [vmem:[%s661 + $0x18] sm:$0xf]
  %v669 = vld [vmem:[%s661 + $0x1c] sm:$0xf]
  %v670 = vld [vmem:[%s661 + $0x20] sm:$0xf]
  %v671 = vld [vmem:[%s661 + $0x24] sm:$0xf]
  %v672 = vld [vmem:[%s661 + $0x28] sm:$0xf]
  %v673 = vld [vmem:[%s661 + $0x2c] sm:$0xf]
  %v674 = vld [vmem:[%s661 + $0x30] sm:$0xf]
  %v675 = vld [vmem:[%s661 + $0x34] sm:$0xf]
  %v676 = vld [vmem:[%s661 + $0x38] sm:$0xf]
  %v677 = vld [vmem:[%s661 + $0x3c] sm:$0xf]
  %v691 = vunpack.c.l.b16 %v648
  %v692 = vunpack.c.l.b16 %v649
  %v693 = vunpack.c.l.b16 %v650
  %v694 = vunpack.c.l.b16 %v651
  %v695 = vunpack.c.l.b16 %v652
  %v696 = vunpack.c.l.b16 %v653
  %v697 = vunpack.c.l.b16 %v654
  %v698 = vunpack.c.l.b16 %v655
  %v699 = vunpack.c.l.b16 %v656
  %v700 = vunpack.c.l.b16 %v657
  %v701 = vunpack.c.l.b16 %v658
  %v702 = vunpack.c.l.b16 %v659
  %v703 = vunpack.c.l.b16 %v660
  %v704 = vpack.c.b16 %v692, %v691
  %v705 = vpack.c.b16 %v694, %v693
  %v706 = vpack.c.b16 %v696, %v695
  %v707 = vpack.c.b16 %v698, %v697
  %v708 = vpack.c.b16 %v700, %v699
  %v709 = vpack.c.b16 %v702, %v701
  %v710 = vpack.c.b16 %v703, %v703
  %v734 = vunpack.c.l.b16 %v662
  %v735 = vunpack.c.l.b16 %v663
  %v736 = vunpack.c.l.b16 %v664
  %v737 = vunpack.c.l.b16 %v665
  %v738 = vunpack.c.l.b16 %v666
  %v739 = vunpack.c.l.b16 %v667
  %v740 = vunpack.c.l.b16 %v668
  %v741 = vunpack.c.l.b16 %v669
  %v742 = vunpack.c.l.b16 %v670
  %v743 = vunpack.c.l.b16 %v671
  %v744 = vunpack.c.l.b16 %v672
  %v745 = vunpack.c.l.b16 %v673
  %v746 = vunpack.c.l.b16 %v674
  %v747 = vunpack.c.l.b16 %v675
  %v748 = vunpack.c.l.b16 %v676
  %v749 = vunpack.c.l.b16 %v677
  %v750 = vpack.c.b16 %v735, %v734
  %v751 = vpack.c.b16 %v737, %v736
  %v752 = vpack.c.b16 %v739, %v738
  %v753 = vpack.c.b16 %v741, %v740
  %v754 = vpack.c.b16 %v743, %v742
  %v755 = vpack.c.b16 %v745, %v744
  %v756 = vpack.c.b16 %v747, %v746
  %v757 = vpack.c.b16 %v749, %v748
  %766 = vmatprep.subr.bf16.mxu0 0
  %767 = vmatpush1.bf16.msra.mxu0 %v750
  %768 = vmatprep.subr.bf16.mxu0 0
  %769 = vmatpush1.bf16.msra.mxu0 %v751
  %770 = vmatprep.subr.bf16.mxu0 0
  %771 = vmatpush1.bf16.msra.mxu0 %v752
  %772 = vmatprep.subr.bf16.mxu0 0
  %773 = vmatpush1.bf16.msra.mxu0 %v753
  %774 = vmatprep.subr.bf16.mxu0 0
  %775 = vmatpush1.bf16.msra.mxu0 %v754
  %776 = vmatprep.subr.bf16.mxu0 0
  %777 = vmatpush1.bf16.msra.mxu0 %v755
  %778 = vmatprep.subr.bf16.mxu0 0
  %779 = vmatpush1.bf16.msra.mxu0 %v756
  %780 = vmatprep.subr.bf16.mxu0 0
  %781 = vmatpush1.bf16.msra.mxu0 %v757
  %782 = vmatprep.subr.bf16.mxu0 0
  %783 = vmatpush1.bf16.msra.mxu0 0
  %784 = vmatprep.subr.bf16.mxu0 0
  %785 = vmatpush1.bf16.msra.mxu0 0
  %786 = vmatprep.subr.bf16.mxu0 0
  %787 = vmatpush1.bf16.msra.mxu0 0
  %788 = vmatprep.subr.bf16.mxu0 0
  %789 = vmatpush1.bf16.msra.mxu0 0
  %790 = vmatprep.subr.bf16.mxu0 0
  %791 = vmatpush1.bf16.msra.mxu0 0
  %792 = vmatprep.subr.bf16.mxu0 0
  %793 = vmatpush1.bf16.msra.mxu0 0
  %794 = vmatprep.subr.bf16.mxu0 0
  %795 = vmatpush1.bf16.msra.mxu0 0
  %796 = vmatprep.subr.bf16.mxu0 0
  %797 = vmatpush1.bf16.msra.mxu0 0
  %798 = vmatprep.mubr.bf16.mxu0 0
  %799 = vmatmul.mubr.bf16.gmra.mrb[0].mxu0 %v704
  %v800 = vpop.f32.mrb[0].mxu0
  %v801 = vadd.f32 %v55, %v800
  %v802 = vpop.f32.mrb[0].mxu0
  %v803 = vpop.f32.mrb[0].mxu0
  %v804 = vadd.f32 %v55, %v803
  %v805 = vpop.f32.mrb[0].mxu0
  %806 = vmatprep.mubr.bf16.mxu0 0
  %807 = vmatmul.mubr.bf16.gmra.mrb[0].mxu0 %v705
  %v808 = vpop.f32.mrb[0].mxu0
  %v809 = vadd.f32 %v55, %v808
  %v810 = vpop.f32.mrb[0].mxu0
  %v811 = vpop.f32.mrb[0].mxu0
  %v812 = vadd.f32 %v55, %v811
  %v813 = vpop.f32.mrb[0].mxu0
  %814 = vmatprep.mubr.bf16.mxu0 0
  %815 = vmatmul.mubr.bf16.gmra.mrb[0].mxu0 %v706
  %v816 = vpop.f32.mrb[0].mxu0
  %v817 = vadd.f32 %v55, %v816
  %v818 = vpop.f32.mrb[0].mxu0
  %v819 = vpop.f32.mrb[0].mxu0
  %v820 = vadd.f32 %v55, %v819
  %v821 = vpop.f32.mrb[0].mxu0
  %822 = vmatprep.mubr.bf16.mxu0 0
  %823 = vmatmul.mubr.bf16.gmra.mrb[0].mxu0 %v707
  %v824 = vpop.f32.mrb[0].mxu0
  %v825 = vadd.f32 %v55, %v824
  %v826 = vpop.f32.mrb[0].mxu0
  %v827 = vpop.f32.mrb[0].mxu0
  %v828 = vadd.f32 %v55, %v827
  %v829 = vpop.f32.mrb[0].mxu0
  %830 = vmatprep.mubr.bf16.mxu0 0
  %831 = vmatmul.mubr.bf16.gmra.mrb[0].mxu0 %v708
  %v832 = vpop.f32.mrb[0].mxu0
  %v833 = vadd.f32 %v55, %v832
  %v834 = vpop.f32.mrb[0].mxu0
  %v835 = vpop.f32.mrb[0].mxu0
  %v836 = vadd.f32 %v55, %v835
  %v837 = vpop.f32.mrb[0].mxu0
  %838 = vmatprep.mubr.bf16.mxu0 0
  %839 = vmatmul.mubr.bf16.gmra.mrb[0].mxu0 %v709
  %v840 = vpop.f32.mrb[0].mxu0
  %v841 = vadd.f32 %v55, %v840
  %v842 = vpop.f32.mrb[0].mxu0
  %v843 = vpop.f32.mrb[0].mxu0
  %v844 = vadd.f32 %v55, %v843
  %v845 = vpop.f32.mrb[0].mxu0
  %846 = vmatprep.mubr.bf16.mxu0 0
  %847 = vmatmul.mubr.bf16.gmra.mrb[0].mxu0 %v710
  %v848 = vpop.f32.mrb[0].mxu0
  %v849 = vadd.f32 %v55, %v848
  %v850 = vpop.f32.mrb[0].mxu0
  %v851 = vpop.f32.mrb[0].mxu0
  %v852 = vpop.f32.mrb[0].mxu0
  %853 = vdwg.mxu0
  %vm854 = vcmask 130048
  %v855 = vsel %vm854, %v180, 0.0
  %v856 = vsel %vm854, %v183, 0.0
  %v857 = vadd.f32 %v855, %v856
  %v858 = vsel %vm854, %v188, 0.0
  %v859 = vadd.f32 %v857, %v858
  %v860 = vsel %vm854, %v191, 0.0
  %v861 = vadd.f32 %v859, %v860
  %v862 = vsel %vm854, %v196, 0.0
  %v863 = vadd.f32 %v861, %v862
  %v864 = vsel %vm854, %v199, 0.0
  %v865 = vadd.f32 %v863, %v864
  %v866 = vsel %vm854, %v204, 0.0
  %v867 = vadd.f32 %v865, %v866
  %v868 = vsel %vm854, %v207, 0.0
  %v869 = vadd.f32 %v867, %v868
  %v870 = vsel %vm854, %v212, 0.0
  %v871 = vadd.f32 %v869, %v870
  %v872 = vsel %vm854, %v215, 0.0
  %v873 = vadd.f32 %v871, %v872
  %v874 = vsel %vm854, %v220, 0.0
  %v875 = vadd.f32 %v873, %v874
  %v876 = vsel %vm854, %v223, 0.0
  %v877 = vadd.f32 %v875, %v876
  %vm878 = vcmask 123904
  %v879 = vsel %vm878, %v228, 0.0
  %v880 = vadd.f32 %v877, %v879
  %v881 = vrot.slane %v880, 4
  %v882 = vadd.f32 %v880, %v881
  %v883 = vrot.slane %v882, 2
  %v884 = vadd.f32 %v882, %v883
  %v885 = vrot.slane %v884, 1
  %v886 = vadd.f32 %v884, %v885
  %v887 = vadd.f32 %v886, 0.0
  %v888 = vsel %vm854, %v387, 0.0
  %v889 = vsel %vm854, %v390, 0.0
  %v890 = vadd.f32 %v888, %v889
  %v891 = vsel %vm854, %v395, 0.0
  %v892 = vadd.f32 %v890, %v891
  %v893 = vsel %vm854, %v398, 0.0
  %v894 = vadd.f32 %v892, %v893
  %v895 = vsel %vm854, %v403, 0.0
  %v896 = vadd.f32 %v894, %v895
  %v897 = vsel %vm854, %v406, 0.0
  %v898 = vadd.f32 %v896, %v897
  %v899 = vsel %vm854, %v411, 0.0
  %v900 = vadd.f32 %v898, %v899
  %v901 = vsel %vm854, %v414, 0.0
  %v902 = vadd.f32 %v900, %v901
  %v903 = vsel %vm854, %v419, 0.0
  %v904 = vadd.f32 %v902, %v903
  %v905 = vsel %vm854, %v422, 0.0
  %v906 = vadd.f32 %v904, %v905
  %v907 = vsel %vm854, %v427, 0.0
  %v908 = vadd.f32 %v906, %v907
  %v909 = vsel %vm854, %v430, 0.0
  %v910 = vadd.f32 %v908, %v909
  %v911 = vsel %vm878, %v435, 0.0
  %v912 = vadd.f32 %v910, %v911
  %v913 = vrot.slane %v912, 4
  %v914 = vadd.f32 %v912, %v913
  %v915 = vrot.slane %v914, 2
  %v916 = vadd.f32 %v914, %v915
  %v917 = vrot.slane %v916, 1
  %v918 = vadd.f32 %v916, %v917
  %v919 = vadd.f32 %v887, %v918
  %v920 = vsel %vm854, %v594, 0.0
  %v921 = vsel %vm854, %v597, 0.0
  %v922 = vadd.f32 %v920, %v921
  %v923 = vsel %vm854, %v602, 0.0
  %v924 = vadd.f32 %v922, %v923
  %v925 = vsel %vm854, %v605, 0.0
  %v926 = vadd.f32 %v924, %v925
  %v927 = vsel %vm854, %v610, 0.0
  %v928 = vadd.f32 %v926, %v927
  %v929 = vsel %vm854, %v613, 0.0
  %v930 = vadd.f32 %v928, %v929
  %v931 = vsel %vm854, %v618, 0.0
  %v932 = vadd.f32 %v930, %v931
  %v933 = vsel %vm854, %v621, 0.0
  %v934 = vadd.f32 %v932, %v933
  %v935 = vsel %vm854, %v626, 0.0
  %v936 = vadd.f32 %v934, %v935
  %v937 = vsel %vm854, %v629, 0.0
  %v938 = vadd.f32 %v936, %v937
  %v939 = vsel %vm854, %v634, 0.0
  %v940 = vadd.f32 %v938, %v939
  %v941 = vsel %vm854, %v637, 0.0
  %v942 = vadd.f32 %v940, %v941
  %v943 = vsel %vm878, %v642, 0.0
  %v944 = vadd.f32 %v942, %v943
  %v945 = vrot.slane %v944, 4
  %v946 = vadd.f32 %v944, %v945
  %v947 = vrot.slane %v946, 2
  %v948 = vadd.f32 %v946, %v947
  %v949 = vrot.slane %v948, 1
  %v950 = vadd.f32 %v948, %v949
  %v951 = vadd.f32 %v919, %v950
  %v952 = vsel %vm854, %v801, 0.0
  %v953 = vsel %vm854, %v804, 0.0
  %v954 = vadd.f32 %v952, %v953
  %v955 = vsel %vm854, %v809, 0.0
  %v956 = vadd.f32 %v954, %v955
  %v957 = vsel %vm854, %v812, 0.0
  %v958 = vadd.f32 %v956, %v957
  %v959 = vsel %vm854, %v817, 0.0
  %v960 = vadd.f32 %v958, %v959
  %v961 = vsel %vm854, %v820, 0.0
  %v962 = vadd.f32 %v960, %v961
  %v963 = vsel %vm854, %v825, 0.0
  %v964 = vadd.f32 %v962, %v963
  %v965 = vsel %vm854, %v828, 0.0
  %v966 = vadd.f32 %v964, %v965
  %v967 = vsel %vm854, %v833, 0.0
  %v968 = vadd.f32 %v966, %v967
  %v969 = vsel %vm854, %v836, 0.0
  %v970 = vadd.f32 %v968, %v969
  %v971 = vsel %vm854, %v841, 0.0
  %v972 = vadd.f32 %v970, %v971
  %v973 = vsel %vm854, %v844, 0.0
  %v974 = vadd.f32 %v972, %v973
  %v975 = vsel %vm878, %v849, 0.0
  %v976 = vadd.f32 %v974, %v975
  %v977 = vrot.slane %v976, 4
  %v978 = vadd.f32 %v976, %v977
  %v979 = vrot.slane %v978, 2
  %v980 = vadd.f32 %v978, %v979
  %v981 = vrot.slane %v980, 1
  %v982 = vadd.f32 %v980, %v981
  %v983 = vadd.f32 %v951, %v982
  %v984 = vmul.f32 %v180, %v180
  %v985 = vmul.f32 %v183, %v183
  %v986 = vmul.f32 %v188, %v188
  %v987 = vmul.f32 %v191, %v191
  %v988 = vmul.f32 %v196, %v196
  %v989 = vmul.f32 %v199, %v199
  %v990 = vmul.f32 %v204, %v204
  %v991 = vmul.f32 %v207, %v207
  %v992 = vmul.f32 %v212, %v212
  %v993 = vmul.f32 %v215, %v215
  %v994 = vmul.f32 %v220, %v220
  %v995 = vmul.f32 %v223, %v223
  %v996 = vmul.f32 %v228, %v228
  %v997 = vsel %vm854, %v984, 0.0
  %v998 = vsel %vm854, %v985, 0.0
  %v999 = vadd.f32 %v997, %v998
  %v1000 = vsel %vm854, %v986, 0.0
  %v1001 = vadd.f32 %v999, %v1000
  %v1002 = vsel %vm854, %v987, 0.0
  %v1003 = vadd.f32 %v1001, %v1002
  %v1004 = vsel %vm854, %v988, 0.0
  %v1005 = vadd.f32 %v1003, %v1004
  %v1006 = vsel %vm854, %v989, 0.0
  %v1007 = vadd.f32 %v1005, %v1006
  %v1008 = vsel %vm854, %v990, 0.0
  %v1009 = vadd.f32 %v1007, %v1008
  %v1010 = vsel %vm854, %v991, 0.0
  %v1011 = vadd.f32 %v1009, %v1010
  %v1012 = vsel %vm854, %v992, 0.0
  %v1013 = vadd.f32 %v1011, %v1012
  %v1014 = vsel %vm854, %v993, 0.0
  %v1015 = vadd.f32 %v1013, %v1014
  %v1016 = vsel %vm854, %v994, 0.0
  %v1017 = vadd.f32 %v1015, %v1016
  %v1018 = vsel %vm854, %v995, 0.0
  %v1019 = vadd.f32 %v1017, %v1018
  %v1020 = vsel %vm878, %v996, 0.0
  %v1021 = vadd.f32 %v1019, %v1020
  %v1022 = vrot.slane %v1021, 4
  %v1023 = vadd.f32 %v1021, %v1022
  %v1024 = vrot.slane %v1023, 2
  %v1025 = vadd.f32 %v1023, %v1024
  %v1026 = vrot.slane %v1025, 1
  %v1027 = vadd.f32 %v1025, %v1026
  %v1028 = vadd.f32 %v1027, 0.0
  %v1029 = vmul.f32 %v387, %v387
  %v1030 = vmul.f32 %v390, %v390
  %v1031 = vmul.f32 %v395, %v395
  %v1032 = vmul.f32 %v398, %v398
  %v1033 = vmul.f32 %v403, %v403
  %v1034 = vmul.f32 %v406, %v406
  %v1035 = vmul.f32 %v411, %v411
  %v1036 = vmul.f32 %v414, %v414
  %v1037 = vmul.f32 %v419, %v419
  %v1038 = vmul.f32 %v422, %v422
  %v1039 = vmul.f32 %v427, %v427
  %v1040 = vmul.f32 %v430, %v430
  %v1041 = vmul.f32 %v435, %v435
  %v1042 = vsel %vm854, %v1029, 0.0
  %v1043 = vsel %vm854, %v1030, 0.0
  %v1044 = vadd.f32 %v1042, %v1043
  %v1045 = vsel %vm854, %v1031, 0.0
  %v1046 = vadd.f32 %v1044, %v1045
  %v1047 = vsel %vm854, %v1032, 0.0
  %v1048 = vadd.f32 %v1046, %v1047
  %v1049 = vsel %vm854, %v1033, 0.0
  %v1050 = vadd.f32 %v1048, %v1049
  %v1051 = vsel %vm854, %v1034, 0.0
  %v1052 = vadd.f32 %v1050, %v1051
  %v1053 = vsel %vm854, %v1035, 0.0
  %v1054 = vadd.f32 %v1052, %v1053
  %v1055 = vsel %vm854, %v1036, 0.0
  %v1056 = vadd.f32 %v1054, %v1055
  %v1057 = vsel %vm854, %v1037, 0.0
  %v1058 = vadd.f32 %v1056, %v1057
  %v1059 = vsel %vm854, %v1038, 0.0
  %v1060 = vadd.f32 %v1058, %v1059
  %v1061 = vsel %vm854, %v1039, 0.0
  %v1062 = vadd.f32 %v1060, %v1061
  %v1063 = vsel %vm854, %v1040, 0.0
  %v1064 = vadd.f32 %v1062, %v1063
  %v1065 = vsel %vm878, %v1041, 0.0
  %v1066 = vadd.f32 %v1064, %v1065
  %v1067 = vrot.slane %v1066, 4
  %v1068 = vadd.f32 %v1066, %v1067
  %v1069 = vrot.slane %v1068, 2
  %v1070 = vadd.f32 %v1068, %v1069
  %v1071 = vrot.slane %v1070, 1
  %v1072 = vadd.f32 %v1070, %v1071
  %v1073 = vadd.f32 %v1028, %v1072
  %v1074 = vmul.f32 %v594, %v594
  %v1075 = vmul.f32 %v597, %v597
  %v1076 = vmul.f32 %v602, %v602
  %v1077 = vmul.f32 %v605, %v605
  %v1078 = vmul.f32 %v610, %v610
  %v1079 = vmul.f32 %v613, %v613
  %v1080 = vmul.f32 %v618, %v618
  %v1081 = vmul.f32 %v621, %v621
  %v1082 = vmul.f32 %v626, %v626
  %v1083 = vmul.f32 %v629, %v629
  %v1084 = vmul.f32 %v634, %v634
  %v1085 = vmul.f32 %v637, %v637
  %v1086 = vmul.f32 %v642, %v642
  %v1087 = vsel %vm854, %v1074, 0.0
  %v1088 = vsel %vm854, %v1075, 0.0
  %v1089 = vadd.f32 %v1087, %v1088
  %v1090 = vsel %vm854, %v1076, 0.0
  %v1091 = vadd.f32 %v1089, %v1090
  %v1092 = vsel %vm854, %v1077, 0.0
  %v1093 = vadd.f32 %v1091, %v1092
  %v1094 = vsel %vm854, %v1078, 0.0
  %v1095 = vadd.f32 %v1093, %v1094
  %v1096 = vsel %vm854, %v1079, 0.0
  %v1097 = vadd.f32 %v1095, %v1096
  %v1098 = vsel %vm854, %v1080, 0.0
  %v1099 = vadd.f32 %v1097, %v1098
  %v1100 = vsel %vm854, %v1081, 0.0
  %v1101 = vadd.f32 %v1099, %v1100
  %v1102 = vsel %vm854, %v1082, 0.0
  %v1103 = vadd.f32 %v1101, %v1102
  %v1104 = vsel %vm854, %v1083, 0.0
  %v1105 = vadd.f32 %v1103, %v1104
  %v1106 = vsel %vm854, %v1084, 0.0
  %v1107 = vadd.f32 %v1105, %v1106
  %v1108 = vsel %vm854, %v1085, 0.0
  %v1109 = vadd.f32 %v1107, %v1108
  %v1110 = vsel %vm878, %v1086, 0.0
  %v1111 = vadd.f32 %v1109, %v1110
  %v1112 = vrot.slane %v1111, 4
  %v1113 = vadd.f32 %v1111, %v1112
  %v1114 = vrot.slane %v1113, 2
  %v1115 = vadd.f32 %v1113, %v1114
  %v1116 = vrot.slane %v1115, 1
  %v1117 = vadd.f32 %v1115, %v1116
  %v1118 = vadd.f32 %v1073, %v1117
  %v1119 = vmul.f32 %v801, %v801
  %v1120 = vmul.f32 %v804, %v804
  %v1121 = vmul.f32 %v809, %v809
  %v1122 = vmul.f32 %v812, %v812
  %v1123 = vmul.f32 %v817, %v817
  %v1124 = vmul.f32 %v820, %v820
  %v1125 = vmul.f32 %v825, %v825
  %v1126 = vmul.f32 %v828, %v828
  %v1127 = vmul.f32 %v833, %v833
  %v1128 = vmul.f32 %v836, %v836
  %v1129 = vmul.f32 %v841, %v841
  %v1130 = vmul.f32 %v844, %v844
  %v1131 = vmul.f32 %v849, %v849
  %v1132 = vsel %vm854, %v1119, 0.0
  %v1133 = vsel %vm854, %v1120, 0.0
  %v1134 = vadd.f32 %v1132, %v1133
  %v1135 = vsel %vm854, %v1121, 0.0
  %v1136 = vadd.f32 %v1134, %v1135
  %v1137 = vsel %vm854, %v1122, 0.0
  %v1138 = vadd.f32 %v1136, %v1137
  %v1139 = vsel %vm854, %v1123, 0.0
  %v1140 = vadd.f32 %v1138, %v1139
  %v1141 = vsel %vm854, %v1124, 0.0
  %v1142 = vadd.f32 %v1140, %v1141
  %v1143 = vsel %vm854, %v1125, 0.0
  %v1144 = vadd.f32 %v1142, %v1143
  %v1145 = vsel %vm854, %v1126, 0.0
  %v1146 = vadd.f32 %v1144, %v1145
  %v1147 = vsel %vm854, %v1127, 0.0
  %v1148 = vadd.f32 %v1146, %v1147
  %v1149 = vsel %vm854, %v1128, 0.0
  %v1150 = vadd.f32 %v1148, %v1149
  %v1151 = vsel %vm854, %v1129, 0.0
  %v1152 = vadd.f32 %v1150, %v1151
  %v1153 = vsel %vm854, %v1130, 0.0
  %v1154 = vadd.f32 %v1152, %v1153
  %v1155 = vsel %vm878, %v1131, 0.0
  %v1156 = vadd.f32 %v1154, %v1155
  %v1157 = vrot.slane %v1156, 4
  %v1158 = vadd.f32 %v1156, %v1157
  %v1159 = vrot.slane %v1158, 2
  %v1160 = vadd.f32 %v1158, %v1159
  %v1161 = vrot.slane %v1160, 1
  %v1162 = vadd.f32 %v1160, %v1161
  %v1163 = vadd.f32 %v1118, %v1162
  %v1164 = vrcp.pop 392.0
  %v1165 = vmul.f32 %v983, %v1164
  %v1166 = vmul.f32 %v1163, %v1164
  %v1167 = vmul.f32 %v1165, %v1165
  %v1168 = vsub.f32 %v1166, %v1167
  %v1169 = vmax.f32 %v1168, 0.0
  %v1170 = vadd.f32 %v1169, 1e-05
  %v1171 = vrsqrt.pop %v1170
  %v1172 = vld [vmem:[%s3] sm:$0x1]
  %v1173 = vmul.f32 %v1171, %v1172
  %v1174 = vld [vmem:[%s4] sm:$0x1]
  %v1175 = vmul.f32 %v1165, %v1173
  %v1176 = vsub.f32 %v1174, %v1175
  %v1177 = vlaneseq
  %v1178 = vshrl.u32 %v1177, 7
  %v1179 = vsub.s32 0, %v1178
  %v1180 = vrot.slane %v1173, %v1179
  %v1181 = vmul.f32 %v180, %v1180
  %v1182 = vmul.f32 %v183, %v1180
  %v1183 = vmul.f32 %v188, %v1180
  %v1184 = vmul.f32 %v191, %v1180
  %v1185 = vmul.f32 %v196, %v1180
  %v1186 = vmul.f32 %v199, %v1180
  %v1187 = vmul.f32 %v204, %v1180
  %v1188 = vmul.f32 %v207, %v1180
  %v1189 = vmul.f32 %v212, %v1180
  %v1190 = vmul.f32 %v215, %v1180
  %v1191 = vmul.f32 %v220, %v1180
  %v1192 = vmul.f32 %v223, %v1180
  %v1193 = vmul.f32 %v228, %v1180
  %v1195 = vlaneseq
  %v1196 = vshrl.u32 %v1195, 7
  %v1197 = vsub.s32 0, %v1196
  %v1198 = vrot.slane %v1176, %v1197
  %v1200 = vadd.f32 %v1181, %v1198
  %v1201 = vadd.f32 %v1182, %v1198
  %v1202 = vadd.f32 %v1183, %v1198
  %v1203 = vadd.f32 %v1184, %v1198
  %v1204 = vadd.f32 %v1185, %v1198
  %v1205 = vadd.f32 %v1186, %v1198
  %v1206 = vadd.f32 %v1187, %v1198
  %v1207 = vadd.f32 %v1188, %v1198
  %v1208 = vadd.f32 %v1189, %v1198
  %v1209 = vadd.f32 %v1190, %v1198
  %v1210 = vadd.f32 %v1191, %v1198
  %v1211 = vadd.f32 %v1192, %v1198
  %v1212 = vadd.f32 %v1193, %v1198
  %v1213 = vmax.f32 %v1200, 0.0
  %v1214 = vmax.f32 %v1201, 0.0
  %v1215 = vmax.f32 %v1202, 0.0
  %v1216 = vmax.f32 %v1203, 0.0
  %v1217 = vmax.f32 %v1204, 0.0
  %v1218 = vmax.f32 %v1205, 0.0
  %v1219 = vmax.f32 %v1206, 0.0
  %v1220 = vmax.f32 %v1207, 0.0
  %v1221 = vmax.f32 %v1208, 0.0
  %v1222 = vmax.f32 %v1209, 0.0
  %v1223 = vmax.f32 %v1210, 0.0
  %v1224 = vmax.f32 %v1211, 0.0
  %v1225 = vmax.f32 %v1212, 0.0
  %1226 = vst.msk [vmem:[%s5] sm:$0xff] %vm854, %v1213
  %1227 = vst.msk [vmem:[%s5 + $0x8] sm:$0xff] %vm854, %v1214
  %1228 = vst.msk [vmem:[%s5 + $0x10] sm:$0xff] %vm854, %v1215
  %1229 = vst.msk [vmem:[%s5 + $0x18] sm:$0xff] %vm854, %v1216
  %1230 = vst.msk [vmem:[%s5 + $0x20] sm:$0xff] %vm854, %v1217
  %1231 = vst.msk [vmem:[%s5 + $0x28] sm:$0xff] %vm854, %v1218
  %1232 = vst.msk [vmem:[%s5 + $0x30] sm:$0xff] %vm854, %v1219
  %1233 = vst.msk [vmem:[%s5 + $0x38] sm:$0xff] %vm854, %v1220
  %1234 = vst.msk [vmem:[%s5 + $0x40] sm:$0xff] %vm854, %v1221
  %1235 = vst.msk [vmem:[%s5 + $0x48] sm:$0xff] %vm854, %v1222
  %1236 = vst.msk [vmem:[%s5 + $0x50] sm:$0xff] %vm854, %v1223
  %1237 = vst.msk [vmem:[%s5 + $0x58] sm:$0xff] %vm854, %v1224
  %1238 = vst.msk [vmem:[%s5 + $0x60] sm:$0x3] %vm878, %v1225
  %v1239 = vmul.f32 %v387, %v1180
  %v1240 = vmul.f32 %v390, %v1180
  %v1241 = vmul.f32 %v395, %v1180
  %v1242 = vmul.f32 %v398, %v1180
  %v1243 = vmul.f32 %v403, %v1180
  %v1244 = vmul.f32 %v406, %v1180
  %v1245 = vmul.f32 %v411, %v1180
  %v1246 = vmul.f32 %v414, %v1180
  %v1247 = vmul.f32 %v419, %v1180
  %v1248 = vmul.f32 %v422, %v1180
  %v1249 = vmul.f32 %v427, %v1180
  %v1250 = vmul.f32 %v430, %v1180
  %v1251 = vmul.f32 %v435, %v1180
  %v1252 = vadd.f32 %v1239, %v1198
  %v1253 = vadd.f32 %v1240, %v1198
  %v1254 = vadd.f32 %v1241, %v1198
  %v1255 = vadd.f32 %v1242, %v1198
  %v1256 = vadd.f32 %v1243, %v1198
  %v1257 = vadd.f32 %v1244, %v1198
  %v1258 = vadd.f32 %v1245, %v1198
  %v1259 = vadd.f32 %v1246, %v1198
  %v1260 = vadd.f32 %v1247, %v1198
  %v1261 = vadd.f32 %v1248, %v1198
  %v1262 = vadd.f32 %v1249, %v1198
  %v1263 = vadd.f32 %v1250, %v1198
  %v1264 = vadd.f32 %v1251, %v1198
  %v1265 = vmax.f32 %v1252, 0.0
  %v1266 = vmax.f32 %v1253, 0.0
  %v1267 = vmax.f32 %v1254, 0.0
  %v1268 = vmax.f32 %v1255, 0.0
  %v1269 = vmax.f32 %v1256, 0.0
  %v1270 = vmax.f32 %v1257, 0.0
  %v1271 = vmax.f32 %v1258, 0.0
  %v1272 = vmax.f32 %v1259, 0.0
  %v1273 = vmax.f32 %v1260, 0.0
  %v1274 = vmax.f32 %v1261, 0.0
  %v1275 = vmax.f32 %v1262, 0.0
  %v1276 = vmax.f32 %v1263, 0.0
  %v1277 = vmax.f32 %v1264, 0.0
  %s1278 = scalar_lea.vmem %s5, 104
  %1279 = vst.msk [vmem:[%s1278] sm:$0xff] %vm854, %v1265
  %1280 = vst.msk [vmem:[%s1278 + $0x8] sm:$0xff] %vm854, %v1266
  %1281 = vst.msk [vmem:[%s1278 + $0x10] sm:$0xff] %vm854, %v1267
  %1282 = vst.msk [vmem:[%s1278 + $0x18] sm:$0xff] %vm854, %v1268
  %1283 = vst.msk [vmem:[%s1278 + $0x20] sm:$0xff] %vm854, %v1269
  %1284 = vst.msk [vmem:[%s1278 + $0x28] sm:$0xff] %vm854, %v1270
  %1285 = vst.msk [vmem:[%s1278 + $0x30] sm:$0xff] %vm854, %v1271
  %1286 = vst.msk [vmem:[%s1278 + $0x38] sm:$0xff] %vm854, %v1272
  %1287 = vst.msk [vmem:[%s1278 + $0x40] sm:$0xff] %vm854, %v1273
  %1288 = vst.msk [vmem:[%s1278 + $0x48] sm:$0xff] %vm854, %v1274
  %1289 = vst.msk [vmem:[%s1278 + $0x50] sm:$0xff] %vm854, %v1275
  %1290 = vst.msk [vmem:[%s1278 + $0x58] sm:$0xff] %vm854, %v1276
  %1291 = vst.msk [vmem:[%s1278 + $0x60] sm:$0x3] %vm878, %v1277
  %v1292 = vmul.f32 %v594, %v1180
  %v1293 = vmul.f32 %v597, %v1180
  %v1294 = vmul.f32 %v602, %v1180
  %v1295 = vmul.f32 %v605, %v1180
  %v1296 = vmul.f32 %v610, %v1180
  %v1297 = vmul.f32 %v613, %v1180
  %v1298 = vmul.f32 %v618, %v1180
  %v1299 = vmul.f32 %v621, %v1180
  %v1300 = vmul.f32 %v626, %v1180
  %v1301 = vmul.f32 %v629, %v1180
  %v1302 = vmul.f32 %v634, %v1180
  %v1303 = vmul.f32 %v637, %v1180
  %v1304 = vmul.f32 %v642, %v1180
  %v1305 = vadd.f32 %v1292, %v1198
  %v1306 = vadd.f32 %v1293, %v1198
  %v1307 = vadd.f32 %v1294, %v1198
  %v1308 = vadd.f32 %v1295, %v1198
  %v1309 = vadd.f32 %v1296, %v1198
  %v1310 = vadd.f32 %v1297, %v1198
  %v1311 = vadd.f32 %v1298, %v1198
  %v1312 = vadd.f32 %v1299, %v1198
  %v1313 = vadd.f32 %v1300, %v1198
  %v1314 = vadd.f32 %v1301, %v1198
  %v1315 = vadd.f32 %v1302, %v1198
  %v1316 = vadd.f32 %v1303, %v1198
  %v1317 = vadd.f32 %v1304, %v1198
  %v1318 = vmax.f32 %v1305, 0.0
  %v1319 = vmax.f32 %v1306, 0.0
  %v1320 = vmax.f32 %v1307, 0.0
  %v1321 = vmax.f32 %v1308, 0.0
  %v1322 = vmax.f32 %v1309, 0.0
  %v1323 = vmax.f32 %v1310, 0.0
  %v1324 = vmax.f32 %v1311, 0.0
  %v1325 = vmax.f32 %v1312, 0.0
  %v1326 = vmax.f32 %v1313, 0.0
  %v1327 = vmax.f32 %v1314, 0.0
  %v1328 = vmax.f32 %v1315, 0.0
  %v1329 = vmax.f32 %v1316, 0.0
  %v1330 = vmax.f32 %v1317, 0.0
  %s1331 = scalar_lea.vmem %s5, 208
  %1332 = vst.msk [vmem:[%s1331] sm:$0xff] %vm854, %v1318
  %1333 = vst.msk [vmem:[%s1331 + $0x8] sm:$0xff] %vm854, %v1319
  %1334 = vst.msk [vmem:[%s1331 + $0x10] sm:$0xff] %vm854, %v1320
  %1335 = vst.msk [vmem:[%s1331 + $0x18] sm:$0xff] %vm854, %v1321
  %1336 = vst.msk [vmem:[%s1331 + $0x20] sm:$0xff] %vm854, %v1322
  %1337 = vst.msk [vmem:[%s1331 + $0x28] sm:$0xff] %vm854, %v1323
  %1338 = vst.msk [vmem:[%s1331 + $0x30] sm:$0xff] %vm854, %v1324
  %1339 = vst.msk [vmem:[%s1331 + $0x38] sm:$0xff] %vm854, %v1325
  %1340 = vst.msk [vmem:[%s1331 + $0x40] sm:$0xff] %vm854, %v1326
  %1341 = vst.msk [vmem:[%s1331 + $0x48] sm:$0xff] %vm854, %v1327
  %1342 = vst.msk [vmem:[%s1331 + $0x50] sm:$0xff] %vm854, %v1328
  %1343 = vst.msk [vmem:[%s1331 + $0x58] sm:$0xff] %vm854, %v1329
  %1344 = vst.msk [vmem:[%s1331 + $0x60] sm:$0x3] %vm878, %v1330
  %v1345 = vmul.f32 %v801, %v1180
  %v1346 = vmul.f32 %v804, %v1180
  %v1347 = vmul.f32 %v809, %v1180
  %v1348 = vmul.f32 %v812, %v1180
  %v1349 = vmul.f32 %v817, %v1180
  %v1350 = vmul.f32 %v820, %v1180
  %v1351 = vmul.f32 %v825, %v1180
  %v1352 = vmul.f32 %v828, %v1180
  %v1353 = vmul.f32 %v833, %v1180
  %v1354 = vmul.f32 %v836, %v1180
  %v1355 = vmul.f32 %v841, %v1180
  %v1356 = vmul.f32 %v844, %v1180
  %v1357 = vmul.f32 %v849, %v1180
  %v1358 = vadd.f32 %v1345, %v1198
  %v1359 = vadd.f32 %v1346, %v1198
  %v1360 = vadd.f32 %v1347, %v1198
  %v1361 = vadd.f32 %v1348, %v1198
  %v1362 = vadd.f32 %v1349, %v1198
  %v1363 = vadd.f32 %v1350, %v1198
  %v1364 = vadd.f32 %v1351, %v1198
  %v1365 = vadd.f32 %v1352, %v1198
  %v1366 = vadd.f32 %v1353, %v1198
  %v1367 = vadd.f32 %v1354, %v1198
  %v1368 = vadd.f32 %v1355, %v1198
  %v1369 = vadd.f32 %v1356, %v1198
  %v1370 = vadd.f32 %v1357, %v1198
  %v1371 = vmax.f32 %v1358, 0.0
  %v1372 = vmax.f32 %v1359, 0.0
  %v1373 = vmax.f32 %v1360, 0.0
  %v1374 = vmax.f32 %v1361, 0.0
  %v1375 = vmax.f32 %v1362, 0.0
  %v1376 = vmax.f32 %v1363, 0.0
  %v1377 = vmax.f32 %v1364, 0.0
  %v1378 = vmax.f32 %v1365, 0.0
  %v1379 = vmax.f32 %v1366, 0.0
  %v1380 = vmax.f32 %v1367, 0.0
  %v1381 = vmax.f32 %v1368, 0.0
  %v1382 = vmax.f32 %v1369, 0.0
  %v1383 = vmax.f32 %v1370, 0.0
  %s1384 = scalar_lea.vmem %s5, 312
  %1385 = vst.msk [vmem:[%s1384] sm:$0xff] %vm854, %v1371
  %1386 = vst.msk [vmem:[%s1384 + $0x8] sm:$0xff] %vm854, %v1372
  %1387 = vst.msk [vmem:[%s1384 + $0x10] sm:$0xff] %vm854, %v1373
  %1388 = vst.msk [vmem:[%s1384 + $0x18] sm:$0xff] %vm854, %v1374
  %1389 = vst.msk [vmem:[%s1384 + $0x20] sm:$0xff] %vm854, %v1375
  %1390 = vst.msk [vmem:[%s1384 + $0x28] sm:$0xff] %vm854, %v1376
  %1391 = vst.msk [vmem:[%s1384 + $0x30] sm:$0xff] %vm854, %v1377
  %1392 = vst.msk [vmem:[%s1384 + $0x38] sm:$0xff] %vm854, %v1378
  %1393 = vst.msk [vmem:[%s1384 + $0x40] sm:$0xff] %vm854, %v1379
  %1394 = vst.msk [vmem:[%s1384 + $0x48] sm:$0xff] %vm854, %v1380
  %1395 = vst.msk [vmem:[%s1384 + $0x50] sm:$0xff] %vm854, %v1381
  %1396 = vst.msk [vmem:[%s1384 + $0x58] sm:$0xff] %vm854, %v1382
  %1397 = vst.msk [vmem:[%s1384 + $0x60] sm:$0x3] %vm878, %v1383
  // Predicated region
  $region22: #{generator_forward.6} parent=0 // pred_check
    _
  $region23: #{generator_forward.6} parent=0 // pred_check_branch
    %1399 = sbr.rel (0) target = $region25
  $region24: #{generator_forward.6} parent=0 // pred_region
    _
  $region25: #{generator_forward.6} parent=0 // pred_fallthru
    _
  // Predicated region
  $region26: #{generator_forward.6} parent=0 // pred_check
    _
  $region27: #{generator_forward.6} parent=0 // pred_check_branch
    %1401 = sbr.rel (0) target = $region29
  $region28: #{generator_forward.6} parent=0 // pred_region
    _
  $region29: #{generator_forward.6} parent=0 // pred_fallthru
    _

// kernel: generator_forward.7
$region0: #{generator_forward.7}
  #allocation0 [shape = 'u32[]', space=smem, size = 0x4, offset = 0x4, fixed_abs, tag = 'smem constant byte address 0x4 - core index']
  #allocation1 [shape = 'u32[144,128]{1,0:T(1,128)}', space=vmem, size = 0x12000, scoped, tag = 'internal scratch']
  %s0 = inlined_call_operand.vmem [shape: bf16[4,392,64], index: 0, kind: input, shape index: {}]
  %s1 = inlined_call_operand.vmem [shape: bf16[4,64,128], index: 1, kind: input, shape index: {}]
  %s2 = inlined_call_operand.vmem [shape: f32[1,128], index: 2, kind: input, shape index: {}]
  %s3 = inlined_call_operand.vmem [shape: f32[4,392,128], index: 3, kind: output, shape index: {}]
  %s4 = sld [smem:[#allocation0]]
  $region22: #{generator_forward.7} parent=0
    _
  %s6 = ssub.s32 1, %s4
  %s7 = scalar_select 0, %s6, %s4
  // Predicated region
  $region2: #{generator_forward.7} parent=0 // pred_check
    _
  $region3: #{generator_forward.7} parent=0 // pred_check_branch
    %9 = sbr.rel (0) target = $region5
  $region4: #{generator_forward.7} parent=0 // pred_region
    _
  $region5: #{generator_forward.7} parent=0 // pred_fallthru
    _
  // Predicated region
  $region6: #{generator_forward.7} parent=0 // pred_check
    _
  $region7: #{generator_forward.7} parent=0 // pred_check_branch
    %11 = sbr.rel (0) target = $region9
  $region8: #{generator_forward.7} parent=0 // pred_region
    _
  $region9: #{generator_forward.7} parent=0 // pred_fallthru
    _
  // Predicated region
  $region10: #{generator_forward.7} parent=0 // pred_check
    _
  $region11: #{generator_forward.7} parent=0 // pred_check_branch
    %13 = sbr.rel (0) target = $region13
  $region12: #{generator_forward.7} parent=0 // pred_region
    _
  $region13: #{generator_forward.7} parent=0 // pred_fallthru
    _
  %v15 = vld [vmem:[%s2] sm:$0x1]
  %v16 = vld [vmem:[%s0] sm:$0xf]
  %v17 = vld [vmem:[%s0 + $0x4] sm:$0xf]
  %v18 = vld [vmem:[%s0 + $0x8] sm:$0xf]
  %v19 = vld [vmem:[%s0 + $0xc] sm:$0xf]
  %v20 = vld [vmem:[%s0 + $0x10] sm:$0xf]
  %v21 = vld [vmem:[%s0 + $0x14] sm:$0xf]
  %v22 = vld [vmem:[%s0 + $0x18] sm:$0xf]
  %v23 = vld [vmem:[%s0 + $0x1c] sm:$0xf]
  %v24 = vld [vmem:[%s0 + $0x20] sm:$0xf]
  %v25 = vld [vmem:[%s0 + $0x24] sm:$0xf]
  %v26 = vld [vmem:[%s0 + $0x28] sm:$0xf]
  %v27 = vld [vmem:[%s0 + $0x2c] sm:$0xf]
  %v28 = vld [vmem:[%s0 + $0x30] sm:$0xf]
  %v29 = vld [vmem:[%s0 + $0x34] sm:$0xf]
  %v30 = vld [vmem:[%s0 + $0x38] sm:$0xf]
  %v31 = vld [vmem:[%s0 + $0x3c] sm:$0xf]
  %v32 = vld [vmem:[%s0 + $0x40] sm:$0xf]
  %v33 = vld [vmem:[%s0 + $0x44] sm:$0xf]
  %v34 = vld [vmem:[%s0 + $0x48] sm:$0xf]
  %v35 = vld [vmem:[%s0 + $0x4c] sm:$0xf]
  %v36 = vld [vmem:[%s0 + $0x50] sm:$0xf]
  %v37 = vld [vmem:[%s0 + $0x54] sm:$0xf]
  %v38 = vld [vmem:[%s0 + $0x58] sm:$0xf]
  %v39 = vld [vmem:[%s0 + $0x5c] sm:$0xf]
  %v40 = vld [vmem:[%s0 + $0x60] sm:$0xf]
  %v41 = vld [vmem:[%s0 + $0x64] sm:$0xf]
  %v42 = vld [vmem:[%s0 + $0x68] sm:$0xf]
  %v43 = vld [vmem:[%s0 + $0x6c] sm:$0xf]
  %v44 = vld [vmem:[%s0 + $0x70] sm:$0xf]
  %v45 = vld [vmem:[%s0 + $0x74] sm:$0xf]
  %v46 = vld [vmem:[%s0 + $0x78] sm:$0xf]
  %v47 = vld [vmem:[%s0 + $0x7c] sm:$0xf]
  %v48 = vld [vmem:[%s0 + $0x80] sm:$0xf]
  %v49 = vld [vmem:[%s0 + $0x84] sm:$0xf]
  %v50 = vld [vmem:[%s0 + $0x88] sm:$0xf]
  %v51 = vld [vmem:[%s0 + $0x8c] sm:$0xf]
  %v52 = vld [vmem:[%s0 + $0x90] sm:$0xf]
  %v53 = vld [vmem:[%s0 + $0x94] sm:$0xf]
  %v54 = vld [vmem:[%s0 + $0x98] sm:$0xf]
  %v55 = vld [vmem:[%s0 + $0x9c] sm:$0xf]
  %v56 = vld [vmem:[%s0 + $0xa0] sm:$0xf]
  %v57 = vld [vmem:[%s0 + $0xa4] sm:$0xf]
  %v58 = vld [vmem:[%s0 + $0xa8] sm:$0xf]
  %v59 = vld [vmem:[%s0 + $0xac] sm:$0xf]
  %v60 = vld [vmem:[%s0 + $0xb0] sm:$0xf]
  %v61 = vld [vmem:[%s0 + $0xb4] sm:$0xf]
  %v62 = vld [vmem:[%s0 + $0xb8] sm:$0xf]
  %v63 = vld [vmem:[%s0 + $0xbc] sm:$0xf]
  %v64 = vld [vmem:[%s0 + $0xc0] sm:$0xf]
  %v65 = vld [vmem:[%s1] sm:$0xf]
  %v66 = vld [vmem:[%s1 + $0x4] sm:$0xf]
  %v67 = vld [vmem:[%s1 + $0x8] sm:$0xf]
  %v68 = vld [vmem:[%s1 + $0xc] sm:$0xf]
  %v69 = vld [vmem:[%s1 + $0x10] sm:$0xf]
  %v70 = vld [vmem:[%s1 + $0x14] sm:$0xf]
  %v71 = vld [vmem:[%s1 + $0x18] sm:$0xf]
  %v72 = vld [vmem:[%s1 + $0x1c] sm:$0xf]
  %v74 = vlaneseq
  %v75 = vshrl.u32 %v74, 7
  %v76 = vsub.s32 0, %v75
  %v77 = vrot.slane %v15, %v76
  %v128 = vunpack.c.l.b16 %v16
  %v129 = vunpack.c.l.b16 %v17
  %v130 = vunpack.c.l.b16 %v18
  %v131 = vunpack.c.l.b16 %v19
  %v132 = vunpack.c.l.b16 %v20
  %v133 = vunpack.c.l.b16 %v21
  %v134 = vunpack.c.l.b16 %v22
  %v135 = vunpack.c.l.b16 %v23
  %v136 = vunpack.c.l.b16 %v24
  %v137 = vunpack.c.l.b16 %v25
  %v138 = vunpack.c.l.b16 %v26
  %v139 = vunpack.c.l.b16 %v27
  %v140 = vunpack.c.l.b16 %v28
  %v141 = vunpack.c.l.b16 %v29
  %v142 = vunpack.c.l.b16 %v30
  %v143 = vunpack.c.l.b16 %v31
  %v144 = vunpack.c.l.b16 %v32
  %v145 = vunpack.c.l.b16 %v33
  %v146 = vunpack.c.l.b16 %v34
  %v147 = vunpack.c.l.b16 %v35
  %v148 = vunpack.c.l.b16 %v36
  %v149 = vunpack.c.l.b16 %v37
  %v150 = vunpack.c.l.b16 %v38
  %v151 = vunpack.c.l.b16 %v39
  %v152 = vunpack.c.l.b16 %v40
  %v153 = vunpack.c.l.b16 %v41
  %v154 = vunpack.c.l.b16 %v42
  %v155 = vunpack.c.l.b16 %v43
  %v156 = vunpack.c.l.b16 %v44
  %v157 = vunpack.c.l.b16 %v45
  %v158 = vunpack.c.l.b16 %v46
  %v159 = vunpack.c.l.b16 %v47
  %v160 = vunpack.c.l.b16 %v48
  %v161 = vunpack.c.l.b16 %v49
  %v162 = vunpack.c.l.b16 %v50
  %v163 = vunpack.c.l.b16 %v51
  %v164 = vunpack.c.l.b16 %v52
  %v165 = vunpack.c.l.b16 %v53
  %v166 = vunpack.c.l.b16 %v54
  %v167 = vunpack.c.l.b16 %v55
  %v168 = vunpack.c.l.b16 %v56
  %v169 = vunpack.c.l.b16 %v57
  %v170 = vunpack.c.l.b16 %v58
  %v171 = vunpack.c.l.b16 %v59
  %v172 = vunpack.c.l.b16 %v60
  %v173 = vunpack.c.l.b16 %v61
  %v174 = vunpack.c.l.b16 %v62
  %v175 = vunpack.c.l.b16 %v63
  %v176 = vunpack.c.l.b16 %v64
  %v177 = vpack.c.b16 %v129, %v128
  %v178 = vpack.c.b16 %v131, %v130
  %v179 = vpack.c.b16 %v133, %v132
  %v180 = vpack.c.b16 %v135, %v134
  %v181 = vpack.c.b16 %v137, %v136
  %v182 = vpack.c.b16 %v139, %v138
  %v183 = vpack.c.b16 %v141, %v140
  %v184 = vpack.c.b16 %v143, %v142
  %v185 = vpack.c.b16 %v145, %v144
  %v186 = vpack.c.b16 %v147, %v146
  %v187 = vpack.c.b16 %v149, %v148
  %v188 = vpack.c.b16 %v151, %v150
  %v189 = vpack.c.b16 %v153, %v152
  %v190 = vpack.c.b16 %v155, %v154
  %v191 = vpack.c.b16 %v157, %v156
  %v192 = vpack.c.b16 %v159, %v158
  %v193 = vpack.c.b16 %v161, %v160
  %v194 = vpack.c.b16 %v163, %v162
  %v195 = vpack.c.b16 %v165, %v164
  %v196 = vpack.c.b16 %v167, %v166
  %v197 = vpack.c.b16 %v169, %v168
  %v198 = vpack.c.b16 %v171, %v170
  %v199 = vpack.c.b16 %v173, %v172
  %v200 = vpack.c.b16 %v175, %v174
  %v201 = vpack.c.b16 %v176, %v176
  %v210 = vunpack.c.l.b16 %v65
  %v211 = vunpack.c.l.b16 %v66
  %v212 = vunpack.c.l.b16 %v67
  %v213 = vunpack.c.l.b16 %v68
  %v214 = vunpack.c.l.b16 %v69
  %v215 = vunpack.c.l.b16 %v70
  %v216 = vunpack.c.l.b16 %v71
  %v217 = vunpack.c.l.b16 %v72
  %v218 = vpack.c.b16 %v211, %v210
  %v219 = vpack.c.b16 %v213, %v212
  %v220 = vpack.c.b16 %v215, %v214
  %v221 = vpack.c.b16 %v217, %v216
  %vm226 = vcmask 523264
  %v228 = vsel %vm226, %v177, 0
  %v231 = vsel %vm226, %v178, 0
  %v234 = vsel %vm226, %v179, 0
  %v237 = vsel %vm226, %v180, 0
  %v240 = vsel %vm226, %v181, 0
  %v243 = vsel %vm226, %v182, 0
  %v246 = vsel %vm226, %v183, 0
  %v249 = vsel %vm226, %v184, 0
  %v252 = vsel %vm226, %v185, 0
  %v255 = vsel %vm226, %v186, 0
  %v258 = vsel %vm226, %v187, 0
  %v261 = vsel %vm226, %v188, 0
  %v264 = vsel %vm226, %v189, 0
  %v267 = vsel %vm226, %v190, 0
  %v270 = vsel %vm226, %v191, 0
  %v273 = vsel %vm226, %v192, 0
  %v276 = vsel %vm226, %v193, 0
  %v279 = vsel %vm226, %v194, 0
  %v282 = vsel %vm226, %v195, 0
  %v285 = vsel %vm226, %v196, 0
  %v288 = vsel %vm226, %v197, 0
  %v291 = vsel %vm226, %v198, 0
  %v294 = vsel %vm226, %v199, 0
  %v297 = vsel %vm226, %v200, 0
  %v300 = vsel %vm226, %v201, 0
  %302 = vmatprep.subr.bf16.mxu0 0
  %303 = vmatpush1.bf16.msra.mxu0 %v218
  %304 = vmatprep.subr.bf16.mxu0 0
  %305 = vmatpush1.bf16.msra.mxu0 %v219
  %306 = vmatprep.subr.bf16.mxu0 0
  %307 = vmatpush1.bf16.msra.mxu0 %v220
  %308 = vmatprep.subr.bf16.mxu0 0
  %309 = vmatpush1.bf16.msra.mxu0 %v221
  %310 = vmatprep.subr.bf16.mxu0 0
  %311 = vmatpush1.bf16.msra.mxu0 0
  %312 = vmatprep.subr.bf16.mxu0 0
  %313 = vmatpush1.bf16.msra.mxu0 0
  %314 = vmatprep.subr.bf16.mxu0 0
  %315 = vmatpush1.bf16.msra.mxu0 0
  %316 = vmatprep.subr.bf16.mxu0 0
  %317 = vmatpush1.bf16.msra.mxu0 0
  %318 = vmatprep.subr.bf16.mxu0 0
  %319 = vmatpush1.bf16.msra.mxu0 0
  %320 = vmatprep.subr.bf16.mxu0 0
  %321 = vmatpush1.bf16.msra.mxu0 0
  %322 = vmatprep.subr.bf16.mxu0 0
  %323 = vmatpush1.bf16.msra.mxu0 0
  %324 = vmatprep.subr.bf16.mxu0 0
  %325 = vmatpush1.bf16.msra.mxu0 0
  %326 = vmatprep.subr.bf16.mxu0 0
  %327 = vmatpush1.bf16.msra.mxu0 0
  %328 = vmatprep.subr.bf16.mxu0 0
  %329 = vmatpush1.bf16.msra.mxu0 0
  %330 = vmatprep.subr.bf16.mxu0 0
  %331 = vmatpush1.bf16.msra.mxu0 0
  %332 = vmatprep.subr.bf16.mxu0 0
  %333 = vmatpush1.bf16.msra.mxu0 0
  %334 = vmatprep.mubr.bf16.mxu0 0
  %335 = vmatmul.mubr.bf16.gmra.mrb[0].mxu0 %v228
  %v336 = vpop.f32.mrb[0].mxu0
  %v337 = vadd.f32 %v77, %v336
  %v338 = vpop.f32.mrb[0].mxu0
  %v339 = vpop.f32.mrb[0].mxu0
  %v340 = vadd.f32 %v77, %v339
  %v341 = vpop.f32.mrb[0].mxu0
  %342 = vmatprep.mubr.bf16.mxu0 0
  %343 = vmatmul.mubr.bf16.gmra.mrb[0].mxu0 %v231
  %v344 = vpop.f32.mrb[0].mxu0
  %v345 = vadd.f32 %v77, %v344
  %v346 = vpop.f32.mrb[0].mxu0
  %v347 = vpop.f32.mrb[0].mxu0
  %v348 = vadd.f32 %v77, %v347
  %v349 = vpop.f32.mrb[0].mxu0
  %350 = vmatprep.mubr.bf16.mxu0 0
  %351 = vmatmul.mubr.bf16.gmra.mrb[0].mxu0 %v234
  %v352 = vpop.f32.mrb[0].mxu0
  %v353 = vadd.f32 %v77, %v352
  %v354 = vpop.f32.mrb[0].mxu0
  %v355 = vpop.f32.mrb[0].mxu0
  %v356 = vadd.f32 %v77, %v355
  %v357 = vpop.f32.mrb[0].mxu0
  %358 = vmatprep.mubr.bf16.mxu0 0
  %359 = vmatmul.mubr.bf16.gmra.mrb[0].mxu0 %v237
  %v360 = vpop.f32.mrb[0].mxu0
  %v361 = vadd.f32 %v77, %v360
  %v362 = vpop.f32.mrb[0].mxu0
  %v363 = vpop.f32.mrb[0].mxu0
  %v364 = vadd.f32 %v77, %v363
  %v365 = vpop.f32.mrb[0].mxu0
  %366 = vmatprep.mubr.bf16.mxu0 0
  %367 = vmatmul.mubr.bf16.gmra.mrb[0].mxu0 %v240
  %v368 = vpop.f32.mrb[0].mxu0
  %v369 = vadd.f32 %v77, %v368
  %v370 = vpop.f32.mrb[0].mxu0
  %v371 = vpop.f32.mrb[0].mxu0
  %v372 = vadd.f32 %v77, %v371
  %v373 = vpop.f32.mrb[0].mxu0
  %374 = vmatprep.mubr.bf16.mxu0 0
  %375 = vmatmul.mubr.bf16.gmra.mrb[0].mxu0 %v243
  %v376 = vpop.f32.mrb[0].mxu0
  %v377 = vadd.f32 %v77, %v376
  %v378 = vpop.f32.mrb[0].mxu0
  %v379 = vpop.f32.mrb[0].mxu0
  %v380 = vadd.f32 %v77, %v379
  %v381 = vpop.f32.mrb[0].mxu0
  %382 = vmatprep.mubr.bf16.mxu0 0
  %383 = vmatmul.mubr.bf16.gmra.mrb[0].mxu0 %v246
  %v384 = vpop.f32.mrb[0].mxu0
  %v385 = vadd.f32 %v77, %v384
  %v386 = vpop.f32.mrb[0].mxu0
  %v387 = vpop.f32.mrb[0].mxu0
  %v388 = vadd.f32 %v77, %v387
  %v389 = vpop.f32.mrb[0].mxu0
  %390 = vmatprep.mubr.bf16.mxu0 0
  %391 = vmatmul.mubr.bf16.gmra.mrb[0].mxu0 %v249
  %v392 = vpop.f32.mrb[0].mxu0
  %v393 = vadd.f32 %v77, %v392
  %v394 = vpop.f32.mrb[0].mxu0
  %v395 = vpop.f32.mrb[0].mxu0
  %v396 = vadd.f32 %v77, %v395
  %v397 = vpop.f32.mrb[0].mxu0
  %398 = vmatprep.mubr.bf16.mxu0 0
  %399 = vmatmul.mubr.bf16.gmra.mrb[0].mxu0 %v252
  %v400 = vpop.f32.mrb[0].mxu0
  %v401 = vadd.f32 %v77, %v400
  %v402 = vpop.f32.mrb[0].mxu0
  %v403 = vpop.f32.mrb[0].mxu0
  %v404 = vadd.f32 %v77, %v403
  %v405 = vpop.f32.mrb[0].mxu0
  %406 = vmatprep.mubr.bf16.mxu0 0
  %407 = vmatmul.mubr.bf16.gmra.mrb[0].mxu0 %v255
  %v408 = vpop.f32.mrb[0].mxu0
  %v409 = vadd.f32 %v77, %v408
  %v410 = vpop.f32.mrb[0].mxu0
  %v411 = vpop.f32.mrb[0].mxu0
  %v412 = vadd.f32 %v77, %v411
  %v413 = vpop.f32.mrb[0].mxu0
  %414 = vmatprep.mubr.bf16.mxu0 0
  %415 = vmatmul.mubr.bf16.gmra.mrb[0].mxu0 %v258
  %v416 = vpop.f32.mrb[0].mxu0
  %v417 = vadd.f32 %v77, %v416
  %v418 = vpop.f32.mrb[0].mxu0
  %v419 = vpop.f32.mrb[0].mxu0
  %v420 = vadd.f32 %v77, %v419
  %v421 = vpop.f32.mrb[0].mxu0
  %422 = vmatprep.mubr.bf16.mxu0 0
  %423 = vmatmul.mubr.bf16.gmra.mrb[0].mxu0 %v261
  %v424 = vpop.f32.mrb[0].mxu0
  %v425 = vadd.f32 %v77, %v424
  %v426 = vpop.f32.mrb[0].mxu0
  %v427 = vpop.f32.mrb[0].mxu0
  %v428 = vadd.f32 %v77, %v427
  %v429 = vpop.f32.mrb[0].mxu0
  %430 = vmatprep.mubr.bf16.mxu0 0
  %431 = vmatmul.mubr.bf16.gmra.mrb[0].mxu0 %v264
  %v432 = vpop.f32.mrb[0].mxu0
  %v433 = vadd.f32 %v77, %v432
  %v434 = vpop.f32.mrb[0].mxu0
  %v435 = vpop.f32.mrb[0].mxu0
  %v436 = vadd.f32 %v77, %v435
  %v437 = vpop.f32.mrb[0].mxu0
  %438 = vmatprep.mubr.bf16.mxu0 0
  %439 = vmatmul.mubr.bf16.gmra.mrb[0].mxu0 %v267
  %v440 = vpop.f32.mrb[0].mxu0
  %v441 = vadd.f32 %v77, %v440
  %v442 = vpop.f32.mrb[0].mxu0
  %v443 = vpop.f32.mrb[0].mxu0
  %v444 = vadd.f32 %v77, %v443
  %v445 = vpop.f32.mrb[0].mxu0
  %446 = vmatprep.mubr.bf16.mxu0 0
  %447 = vmatmul.mubr.bf16.gmra.mrb[0].mxu0 %v270
  %v448 = vpop.f32.mrb[0].mxu0
  %v449 = vadd.f32 %v77, %v448
  %v450 = vpop.f32.mrb[0].mxu0
  %v451 = vpop.f32.mrb[0].mxu0
  %v452 = vadd.f32 %v77, %v451
  %v453 = vpop.f32.mrb[0].mxu0
  %454 = vmatprep.mubr.bf16.mxu0 0
  %455 = vmatmul.mubr.bf16.gmra.mrb[0].mxu0 %v273
  %v456 = vpop.f32.mrb[0].mxu0
  %v457 = vadd.f32 %v77, %v456
  %v458 = vpop.f32.mrb[0].mxu0
  %v459 = vpop.f32.mrb[0].mxu0
  %v460 = vadd.f32 %v77, %v459
  %v461 = vpop.f32.mrb[0].mxu0
  %462 = vmatprep.mubr.bf16.mxu0 0
  %463 = vmatmul.mubr.bf16.gmra.mrb[0].mxu0 %v276
  %v464 = vpop.f32.mrb[0].mxu0
  %v465 = vadd.f32 %v77, %v464
  %v466 = vpop.f32.mrb[0].mxu0
  %v467 = vpop.f32.mrb[0].mxu0
  %v468 = vadd.f32 %v77, %v467
  %v469 = vpop.f32.mrb[0].mxu0
  %470 = vmatprep.mubr.bf16.mxu0 0
  %471 = vmatmul.mubr.bf16.gmra.mrb[0].mxu0 %v279
  %v472 = vpop.f32.mrb[0].mxu0
  %v473 = vadd.f32 %v77, %v472
  %v474 = vpop.f32.mrb[0].mxu0
  %v475 = vpop.f32.mrb[0].mxu0
  %v476 = vadd.f32 %v77, %v475
  %v477 = vpop.f32.mrb[0].mxu0
  %478 = vmatprep.mubr.bf16.mxu0 0
  %479 = vmatmul.mubr.bf16.gmra.mrb[0].mxu0 %v282
  %v480 = vpop.f32.mrb[0].mxu0
  %v481 = vadd.f32 %v77, %v480
  %v482 = vpop.f32.mrb[0].mxu0
  %v483 = vpop.f32.mrb[0].mxu0
  %v484 = vadd.f32 %v77, %v483
  %v485 = vpop.f32.mrb[0].mxu0
  %486 = vmatprep.mubr.bf16.mxu0 0
  %487 = vmatmul.mubr.bf16.gmra.mrb[0].mxu0 %v285
  %v488 = vpop.f32.mrb[0].mxu0
  %v489 = vadd.f32 %v77, %v488
  %v490 = vpop.f32.mrb[0].mxu0
  %v491 = vpop.f32.mrb[0].mxu0
  %v492 = vadd.f32 %v77, %v491
  %v493 = vpop.f32.mrb[0].mxu0
  %494 = vmatprep.mubr.bf16.mxu0 0
  %495 = vmatmul.mubr.bf16.gmra.mrb[0].mxu0 %v288
  %v496 = vpop.f32.mrb[0].mxu0
  %v497 = vadd.f32 %v77, %v496
  %v498 = vpop.f32.mrb[0].mxu0
  %v499 = vpop.f32.mrb[0].mxu0
  %v500 = vadd.f32 %v77, %v499
  %v501 = vpop.f32.mrb[0].mxu0
  %502 = vmatprep.mubr.bf16.mxu0 0
  %503 = vmatmul.mubr.bf16.gmra.mrb[0].mxu0 %v291
  %v504 = vpop.f32.mrb[0].mxu0
  %v505 = vadd.f32 %v77, %v504
  %v506 = vpop.f32.mrb[0].mxu0
  %v507 = vpop.f32.mrb[0].mxu0
  %v508 = vadd.f32 %v77, %v507
  %v509 = vpop.f32.mrb[0].mxu0
  %510 = vmatprep.mubr.bf16.mxu0 0
  %511 = vmatmul.mubr.bf16.gmra.mrb[0].mxu0 %v294
  %v512 = vpop.f32.mrb[0].mxu0
  %v513 = vadd.f32 %v77, %v512
  %v514 = vpop.f32.mrb[0].mxu0
  %v515 = vpop.f32.mrb[0].mxu0
  %v516 = vadd.f32 %v77, %v515
  %v517 = vpop.f32.mrb[0].mxu0
  %518 = vmatprep.mubr.bf16.mxu0 0
  %519 = vmatmul.mubr.bf16.gmra.mrb[0].mxu0 %v297
  %v520 = vpop.f32.mrb[0].mxu0
  %v521 = vadd.f32 %v77, %v520
  %v522 = vpop.f32.mrb[0].mxu0
  %v523 = vpop.f32.mrb[0].mxu0
  %v524 = vadd.f32 %v77, %v523
  %v525 = vpop.f32.mrb[0].mxu0
  %526 = vmatprep.mubr.bf16.mxu0 0
  %527 = vmatmul.mubr.bf16.gmra.mrb[0].mxu0 %v300
  %v528 = vpop.f32.mrb[0].mxu0
  %v529 = vadd.f32 %v77, %v528
  %v530 = vpop.f32.mrb[0].mxu0
  %v531 = vpop.f32.mrb[0].mxu0
  %v532 = vpop.f32.mrb[0].mxu0
  %533 = vdwg.mxu0
  %v534 = vxor.u32 %v337, 2147483648
  %v535 = vxor.u32 %v340, 2147483648
  %v536 = vxor.u32 %v345, 2147483648
  %v537 = vxor.u32 %v348, 2147483648
  %v538 = vxor.u32 %v353, 2147483648
  %v539 = vxor.u32 %v356, 2147483648
  %v540 = vxor.u32 %v361, 2147483648
  %v541 = vxor.u32 %v364, 2147483648
  %v542 = vxor.u32 %v369, 2147483648
  %v543 = vxor.u32 %v372, 2147483648
  %v544 = vxor.u32 %v377, 2147483648
  %v545 = vxor.u32 %v380, 2147483648
  %v546 = vxor.u32 %v385, 2147483648
  %v547 = vxor.u32 %v388, 2147483648
  %v548 = vxor.u32 %v393, 2147483648
  %v549 = vxor.u32 %v396, 2147483648
  %v550 = vxor.u32 %v401, 2147483648
  %v551 = vxor.u32 %v404, 2147483648
  %v552 = vxor.u32 %v409, 2147483648
  %v553 = vxor.u32 %v412, 2147483648
  %v554 = vxor.u32 %v417, 2147483648
  %v555 = vxor.u32 %v420, 2147483648
  %v556 = vxor.u32 %v425, 2147483648
  %v557 = vxor.u32 %v428, 2147483648
  %v558 = vxor.u32 %v433, 2147483648
  %v559 = vxor.u32 %v436, 2147483648
  %v560 = vxor.u32 %v441, 2147483648
  %v561 = vxor.u32 %v444, 2147483648
  %v562 = vxor.u32 %v449, 2147483648
  %v563 = vxor.u32 %v452, 2147483648
  %v564 = vxor.u32 %v457, 2147483648
  %v565 = vxor.u32 %v460, 2147483648
  %v566 = vxor.u32 %v465, 2147483648
  %v567 = vxor.u32 %v468, 2147483648
  %v568 = vxor.u32 %v473, 2147483648
  %v569 = vxor.u32 %v476, 2147483648
  %v570 = vxor.u32 %v481, 2147483648
  %v571 = vxor.u32 %v484, 2147483648
  %v572 = vxor.u32 %v489, 2147483648
  %v573 = vxor.u32 %v492, 2147483648
  %v574 = vxor.u32 %v497, 2147483648
  %v575 = vxor.u32 %v500, 2147483648
  %v576 = vxor.u32 %v505, 2147483648
  %v577 = vxor.u32 %v508, 2147483648
  %v578 = vxor.u32 %v513, 2147483648
  %v579 = vxor.u32 %v516, 2147483648
  %v580 = vxor.u32 %v521, 2147483648
  %v581 = vxor.u32 %v524, 2147483648
  %v582 = vxor.u32 %v529, 2147483648
  %v583 = vmul.f32 %v534, 1.442695
  %v584 = vpow.pop %v583
  %v585 = vmul.f32 %v535, 1.442695
  %v586 = vpow.pop %v585
  %v587 = vmul.f32 %v536, 1.442695
  %v588 = vpow.pop %v587
  %v589 = vmul.f32 %v537, 1.442695
  %v590 = vpow.pop %v589
  %v591 = vmul.f32 %v538, 1.442695
  %v592 = vpow.pop %v591
  %v593 = vmul.f32 %v539, 1.442695
  %v594 = vpow.pop %v593
  %v595 = vmul.f32 %v540, 1.442695
  %v596 = vpow.pop %v595
  %v597 = vmul.f32 %v541, 1.442695
  %v598 = vpow.pop %v597
  %v599 = vmul.f32 %v542, 1.442695
  %v600 = vpow.pop %v599
  %v601 = vmul.f32 %v543, 1.442695
  %v602 = vpow.pop %v601
  %v603 = vmul.f32 %v544, 1.442695
  %v604 = vpow.pop %v603
  %v605 = vmul.f32 %v545, 1.442695
  %v606 = vpow.pop %v605
  %v607 = vmul.f32 %v546, 1.442695
  %v608 = vpow.pop %v607
  %v609 = vmul.f32 %v547, 1.442695
  %v610 = vpow.pop %v609
  %v611 = vmul.f32 %v548, 1.442695
  %v612 = vpow.pop %v611
  %v613 = vmul.f32 %v549, 1.442695
  %v614 = vpow.pop %v613
  %v615 = vmul.f32 %v550, 1.442695
  %v616 = vpow.pop %v615
  %v617 = vmul.f32 %v551, 1.442695
  %v618 = vpow.pop %v617
  %v619 = vmul.f32 %v552, 1.442695
  %v620 = vpow.pop %v619
  %v621 = vmul.f32 %v553, 1.442695
  %v622 = vpow.pop %v621
  %v623 = vmul.f32 %v554, 1.442695
  %v624 = vpow.pop %v623
  %v625 = vmul.f32 %v555, 1.442695
  %v626 = vpow.pop %v625
  %v627 = vmul.f32 %v556, 1.442695
  %v628 = vpow.pop %v627
  %v629 = vmul.f32 %v557, 1.442695
  %v630 = vpow.pop %v629
  %v631 = vmul.f32 %v558, 1.442695
  %v632 = vpow.pop %v631
  %v633 = vmul.f32 %v559, 1.442695
  %v634 = vpow.pop %v633
  %v635 = vmul.f32 %v560, 1.442695
  %v636 = vpow.pop %v635
  %v637 = vmul.f32 %v561, 1.442695
  %v638 = vpow.pop %v637
  %v639 = vmul.f32 %v562, 1.442695
  %v640 = vpow.pop %v639
  %v641 = vmul.f32 %v563, 1.442695
  %v642 = vpow.pop %v641
  %v643 = vmul.f32 %v564, 1.442695
  %v644 = vpow.pop %v643
  %v645 = vmul.f32 %v565, 1.442695
  %v646 = vpow.pop %v645
  %v647 = vmul.f32 %v566, 1.442695
  %v648 = vpow.pop %v647
  %v649 = vmul.f32 %v567, 1.442695
  %v650 = vpow.pop %v649
  %v651 = vmul.f32 %v568, 1.442695
  %v652 = vpow.pop %v651
  %v653 = vmul.f32 %v569, 1.442695
  %v654 = vpow.pop %v653
  %v655 = vmul.f32 %v570, 1.442695
  %v656 = vpow.pop %v655
  %v657 = vmul.f32 %v571, 1.442695
  %v658 = vpow.pop %v657
  %v659 = vmul.f32 %v572, 1.442695
  %v660 = vpow.pop %v659
  %v661 = vmul.f32 %v573, 1.442695
  %v662 = vpow.pop %v661
  %v663 = vmul.f32 %v574, 1.442695
  %v664 = vpow.pop %v663
  %v665 = vmul.f32 %v575, 1.442695
  %v666 = vpow.pop %v665
  %v667 = vmul.f32 %v576, 1.442695
  %v668 = vpow.pop %v667
  %v669 = vmul.f32 %v577, 1.442695
  %v670 = vpow.pop %v669
  %v671 = vmul.f32 %v578, 1.442695
  %v672 = vpow.pop %v671
  %v673 = vmul.f32 %v579, 1.442695
  %v674 = vpow.pop %v673
  %v675 = vmul.f32 %v580, 1.442695
  %v676 = vpow.pop %v675
  %v677 = vmul.f32 %v581, 1.442695
  %v678 = vpow.pop %v677
  %v679 = vmul.f32 %v582, 1.442695
  %v680 = vpow.pop %v679
  %v681 = vadd.f32 %v584, 1.0
  %v682 = vadd.f32 %v586, 1.0
  %v683 = vadd.f32 %v588, 1.0
  %v684 = vadd.f32 %v590, 1.0
  %v685 = vadd.f32 %v592, 1.0
  %v686 = vadd.f32 %v594, 1.0
  %v687 = vadd.f32 %v596, 1.0
  %v688 = vadd.f32 %v598, 1.0
  %v689 = vadd.f32 %v600, 1.0
  %v690 = vadd.f32 %v602, 1.0
  %v691 = vadd.f32 %v604, 1.0
  %v692 = vadd.f32 %v606, 1.0
  %v693 = vadd.f32 %v608, 1.0
  %v694 = vadd.f32 %v610, 1.0
  %v695 = vadd.f32 %v612, 1.0
  %v696 = vadd.f32 %v614, 1.0
  %v697 = vadd.f32 %v616, 1.0
  %v698 = vadd.f32 %v618, 1.0
  %v699 = vadd.f32 %v620, 1.0
  %v700 = vadd.f32 %v622, 1.0
  %v701 = vadd.f32 %v624, 1.0
  %v702 = vadd.f32 %v626, 1.0
  %v703 = vadd.f32 %v628, 1.0
  %v704 = vadd.f32 %v630, 1.0
  %v705 = vadd.f32 %v632, 1.0
  %v706 = vadd.f32 %v634, 1.0
  %v707 = vadd.f32 %v636, 1.0
  %v708 = vadd.f32 %v638, 1.0
  %v709 = vadd.f32 %v640, 1.0
  %v710 = vadd.f32 %v642, 1.0
  %v711 = vadd.f32 %v644, 1.0
  %v712 = vadd.f32 %v646, 1.0
  %v713 = vadd.f32 %v648, 1.0
  %v714 = vadd.f32 %v650, 1.0
  %v715 = vadd.f32 %v652, 1.0
  %v716 = vadd.f32 %v654, 1.0
  %v717 = vadd.f32 %v656, 1.0
  %v718 = vadd.f32 %v658, 1.0
  %v719 = vadd.f32 %v660, 1.0
  %v720 = vadd.f32 %v662, 1.0
  %v721 = vadd.f32 %v664, 1.0
  %v722 = vadd.f32 %v666, 1.0
  %v723 = vadd.f32 %v668, 1.0
  %v724 = vadd.f32 %v670, 1.0
  %v725 = vadd.f32 %v672, 1.0
  %v726 = vadd.f32 %v674, 1.0
  %v727 = vadd.f32 %v676, 1.0
  %v728 = vadd.f32 %v678, 1.0
  %v729 = vadd.f32 %v680, 1.0
  %v730 = vrcp.pop %v681
  %v731 = vmul.f32 1.0, %v730
  %v732 = vrcp.pop %v682
  %v733 = vmul.f32 1.0, %v732
  %v734 = vrcp.pop %v683
  %v735 = vmul.f32 1.0, %v734
  %v736 = vrcp.pop %v684
  %v737 = vmul.f32 1.0, %v736
  %v738 = vrcp.pop %v685
  %v739 = vmul.f32 1.0, %v738
  %v740 = vrcp.pop %v686
  %v741 = vmul.f32 1.0, %v740
  %v742 = vrcp.pop %v687
  %v743 = vmul.f32 1.0, %v742
  %v744 = vrcp.pop %v688
  %v745 = vmul.f32 1.0, %v744
  %v746 = vrcp.pop %v689
  %v747 = vmul.f32 1.0, %v746
  %v748 = vrcp.pop %v690
  %v749 = vmul.f32 1.0, %v748
  %v750 = vrcp.pop %v691
  %v751 = vmul.f32 1.0, %v750
  %v752 = vrcp.pop %v692
  %v753 = vmul.f32 1.0, %v752
  %v754 = vrcp.pop %v693
  %v755 = vmul.f32 1.0, %v754
  %v756 = vrcp.pop %v694
  %v757 = vmul.f32 1.0, %v756
  %v758 = vrcp.pop %v695
  %v759 = vmul.f32 1.0, %v758
  %v760 = vrcp.pop %v696
  %v761 = vmul.f32 1.0, %v760
  %v762 = vrcp.pop %v697
  %v763 = vmul.f32 1.0, %v762
  %v764 = vrcp.pop %v698
  %v765 = vmul.f32 1.0, %v764
  %v766 = vrcp.pop %v699
  %v767 = vmul.f32 1.0, %v766
  %v768 = vrcp.pop %v700
  %v769 = vmul.f32 1.0, %v768
  %v770 = vrcp.pop %v701
  %v771 = vmul.f32 1.0, %v770
  %v772 = vrcp.pop %v702
  %v773 = vmul.f32 1.0, %v772
  %v774 = vrcp.pop %v703
  %v775 = vmul.f32 1.0, %v774
  %v776 = vrcp.pop %v704
  %v777 = vmul.f32 1.0, %v776
  %v778 = vrcp.pop %v705
  %v779 = vmul.f32 1.0, %v778
  %v780 = vrcp.pop %v706
  %v781 = vmul.f32 1.0, %v780
  %v782 = vrcp.pop %v707
  %v783 = vmul.f32 1.0, %v782
  %v784 = vrcp.pop %v708
  %v785 = vmul.f32 1.0, %v784
  %v786 = vrcp.pop %v709
  %v787 = vmul.f32 1.0, %v786
  %v788 = vrcp.pop %v710
  %v789 = vmul.f32 1.0, %v788
  %v790 = vrcp.pop %v711
  %v791 = vmul.f32 1.0, %v790
  %v792 = vrcp.pop %v712
  %v793 = vmul.f32 1.0, %v792
  %v794 = vrcp.pop %v713
  %v795 = vmul.f32 1.0, %v794
  %v796 = vrcp.pop %v714
  %v797 = vmul.f32 1.0, %v796
  %v798 = vrcp.pop %v715
  %v799 = vmul.f32 1.0, %v798
  %v800 = vrcp.pop %v716
  %v801 = vmul.f32 1.0, %v800
  %v802 = vrcp.pop %v717
  %v803 = vmul.f32 1.0, %v802
  %v804 = vrcp.pop %v718
  %v805 = vmul.f32 1.0, %v804
  %v806 = vrcp.pop %v719
  %v807 = vmul.f32 1.0, %v806
  %v808 = vrcp.pop %v720
  %v809 = vmul.f32 1.0, %v808
  %v810 = vrcp.pop %v721
  %v811 = vmul.f32 1.0, %v810
  %v812 = vrcp.pop %v722
  %v813 = vmul.f32 1.0, %v812
  %v814 = vrcp.pop %v723
  %v815 = vmul.f32 1.0, %v814
  %v816 = vrcp.pop %v724
  %v817 = vmul.f32 1.0, %v816
  %v818 = vrcp.pop %v725
  %v819 = vmul.f32 1.0, %v818
  %v820 = vrcp.pop %v726
  %v821 = vmul.f32 1.0, %v820
  %v822 = vrcp.pop %v727
  %v823 = vmul.f32 1.0, %v822
  %v824 = vrcp.pop %v728
  %v825 = vmul.f32 1.0, %v824
  %v826 = vrcp.pop %v729
  %v827 = vmul.f32 1.0, %v826
  %828 = vst [vmem:[%s3] sm:$0xff] %v731
  %829 = vst [vmem:[%s3 + $0x8] sm:$0xff] %v733
  %830 = vst [vmem:[%s3 + $0x10] sm:$0xff] %v735
  %831 = vst [vmem:[%s3 + $0x18] sm:$0xff] %v737
  %832 = vst [vmem:[%s3 + $0x20] sm:$0xff] %v739
  %833 = vst [vmem:[%s3 + $0x28] sm:$0xff] %v741
  %834 = vst [vmem:[%s3 + $0x30] sm:$0xff] %v743
  %835 = vst [vmem:[%s3 + $0x38] sm:$0xff] %v745
  %836 = vst [vmem:[%s3 + $0x40] sm:$0xff] %v747
  %837 = vst [vmem:[%s3 + $0x48] sm:$0xff] %v749
  %838 = vst [vmem:[%s3 + $0x50] sm:$0xff] %v751
  %839 = vst [vmem:[%s3 + $0x58] sm:$0xff] %v753
  %840 = vst [vmem:[%s3 + $0x60] sm:$0xff] %v755
  %841 = vst [vmem:[%s3 + $0x68] sm:$0xff] %v757
  %842 = vst [vmem:[%s3 + $0x70] sm:$0xff] %v759
  %843 = vst [vmem:[%s3 + $0x78] sm:$0xff] %v761
  %844 = vst [vmem:[%s3 + $0x80] sm:$0xff] %v763
  %845 = vst [vmem:[%s3 + $0x88] sm:$0xff] %v765
  %846 = vst [vmem:[%s3 + $0x90] sm:$0xff] %v767
  %847 = vst [vmem:[%s3 + $0x98] sm:$0xff] %v769
  %848 = vst [vmem:[%s3 + $0xa0] sm:$0xff] %v771
  %849 = vst [vmem:[%s3 + $0xa8] sm:$0xff] %v773
  %850 = vst [vmem:[%s3 + $0xb0] sm:$0xff] %v775
  %851 = vst [vmem:[%s3 + $0xb8] sm:$0xff] %v777
  %852 = vst [vmem:[%s3 + $0xc0] sm:$0xff] %v779
  %853 = vst [vmem:[%s3 + $0xc8] sm:$0xff] %v781
  %854 = vst [vmem:[%s3 + $0xd0] sm:$0xff] %v783
  %855 = vst [vmem:[%s3 + $0xd8] sm:$0xff] %v785
  %856 = vst [vmem:[%s3 + $0xe0] sm:$0xff] %v787
  %857 = vst [vmem:[%s3 + $0xe8] sm:$0xff] %v789
  %858 = vst [vmem:[%s3 + $0xf0] sm:$0xff] %v791
  %859 = vst [vmem:[%s3 + $0xf8] sm:$0xff] %v793
  %860 = vst [vmem:[%s3 + $0x100] sm:$0xff] %v795
  %861 = vst [vmem:[%s3 + $0x108] sm:$0xff] %v797
  %862 = vst [vmem:[%s3 + $0x110] sm:$0xff] %v799
  %863 = vst [vmem:[%s3 + $0x118] sm:$0xff] %v801
  %864 = vst [vmem:[%s3 + $0x120] sm:$0xff] %v803
  %865 = vst [vmem:[%s3 + $0x128] sm:$0xff] %v805
  %866 = vst [vmem:[%s3 + $0x130] sm:$0xff] %v807
  %867 = vst [vmem:[%s3 + $0x138] sm:$0xff] %v809
  %868 = vst [vmem:[%s3 + $0x140] sm:$0xff] %v811
  %869 = vst [vmem:[%s3 + $0x148] sm:$0xff] %v813
  %870 = vst [vmem:[%s3 + $0x150] sm:$0xff] %v815
  %871 = vst [vmem:[%s3 + $0x158] sm:$0xff] %v817
  %872 = vst [vmem:[%s3 + $0x160] sm:$0xff] %v819
  %873 = vst [vmem:[%s3 + $0x168] sm:$0xff] %v821
  %874 = vst [vmem:[%s3 + $0x170] sm:$0xff] %v823
  %875 = vst [vmem:[%s3 + $0x178] sm:$0xff] %v825
  %876 = vst [vmem:[%s3 + $0x180] sm:$0xff] %v827
  %s877 = scalar_lea.vmem %s0, 196
  %v878 = vld [vmem:[%s877] sm:$0xf]
  %v879 = vld [vmem:[%s877 + $0x4] sm:$0xf]
  %v880 = vld [vmem:[%s877 + $0x8] sm:$0xf]
  %v881 = vld [vmem:[%s877 + $0xc] sm:$0xf]
  %v882 = vld [vmem:[%s877 + $0x10] sm:$0xf]
  %v883 = vld [vmem:[%s877 + $0x14] sm:$0xf]
  %v884 = vld [vmem:[%s877 + $0x18] sm:$0xf]
  %v885 = vld [vmem:[%s877 + $0x1c] sm:$0xf]
  %v886 = vld [vmem:[%s877 + $0x20] sm:$0xf]
  %v887 = vld [vmem:[%s877 + $0x24] sm:$0xf]
  %v888 = vld [vmem:[%s877 + $0x28] sm:$0xf]
  %v889 = vld [vmem:[%s877 + $0x2c] sm:$0xf]
  %v890 = vld [vmem:[%s877 + $0x30] sm:$0xf]
  %v891 = vld [vmem:[%s877 + $0x34] sm:$0xf]
  %v892 = vld [vmem:[%s877 + $0x38] sm:$0xf]
  %v893 = vld [vmem:[%s877 + $0x3c] sm:$0xf]
  %v894 = vld [vmem:[%s877 + $0x40] sm:$0xf]
  %v895 = vld [vmem:[%s877 + $0x44] sm:$0xf]
  %v896 = vld [vmem:[%s877 + $0x48] sm:$0xf]
  %v897 = vld [vmem:[%s877 + $0x4c] sm:$0xf]
  %v898 = vld [vmem:[%s877 + $0x50] sm:$0xf]
  %v899 = vld [vmem:[%s877 + $0x54] sm:$0xf]
  %v900 = vld [vmem:[%s877 + $0x58] sm:$0xf]
  %v901 = vld [vmem:[%s877 + $0x5c] sm:$0xf]
  %v902 = vld [vmem:[%s877 + $0x60] sm:$0xf]
  %v903 = vld [vmem:[%s877 + $0x64] sm:$0xf]
  %v904 = vld [vmem:[%s877 + $0x68] sm:$0xf]
  %v905 = vld [vmem:[%s877 + $0x6c] sm:$0xf]
  %v906 = vld [vmem:[%s877 + $0x70] sm:$0xf]
  %v907 = vld [vmem:[%s877 + $0x74] sm:$0xf]
  %v908 = vld [vmem:[%s877 + $0x78] sm:$0xf]
  %v909 = vld [vmem:[%s877 + $0x7c] sm:$0xf]
  %v910 = vld [vmem:[%s877 + $0x80] sm:$0xf]
  %v911 = vld [vmem:[%s877 + $0x84] sm:$0xf]
  %v912 = vld [vmem:[%s877 + $0x88] sm:$0xf]
  %v913 = vld [vmem:[%s877 + $0x8c] sm:$0xf]
  %v914 = vld [vmem:[%s877 + $0x90] sm:$0xf]
  %v915 = vld [vmem:[%s877 + $0x94] sm:$0xf]
  %v916 = vld [vmem:[%s877 + $0x98] sm:$0xf]
  %v917 = vld [vmem:[%s877 + $0x9c] sm:$0xf]
  %v918 = vld [vmem:[%s877 + $0xa0] sm:$0xf]
  %v919 = vld [vmem:[%s877 + $0xa4] sm:$0xf]
  %v920 = vld [vmem:[%s877 + $0xa8] sm:$0xf]
  %v921 = vld [vmem:[%s877 + $0xac] sm:$0xf]
  %v922 = vld [vmem:[%s877 + $0xb0] sm:$0xf]
  %v923 = vld [vmem:[%s877 + $0xb4] sm:$0xf]
  %v924 = vld [vmem:[%s877 + $0xb8] sm:$0xf]
  %v925 = vld [vmem:[%s877 + $0xbc] sm:$0xf]
  %v926 = vld [vmem:[%s877 + $0xc0] sm:$0xf]
  %s927 = scalar_lea.vmem %s1, 32
  %v928 = vld [vmem:[%s927] sm:$0xf]
  %v929 = vld [vmem:[%s927 + $0x4] sm:$0xf]
  %v930 = vld [vmem:[%s927 + $0x8] sm:$0xf]
  %v931 = vld [vmem:[%s927 + $0xc] sm:$0xf]
  %v932 = vld [vmem:[%s927 + $0x10] sm:$0xf]
  %v933 = vld [vmem:[%s927 + $0x14] sm:$0xf]
  %v934 = vld [vmem:[%s927 + $0x18] sm:$0xf]
  %v935 = vld [vmem:[%s927 + $0x1c] sm:$0xf]
  %v985 = vunpack.c.l.b16 %v878
  %v986 = vunpack.c.l.b16 %v879
  %v987 = vunpack.c.l.b16 %v880
  %v988 = vunpack.c.l.b16 %v881
  %v989 = vunpack.c.l.b16 %v882
  %v990 = vunpack.c.l.b16 %v883
  %v991 = vunpack.c.l.b16 %v884
  %v992 = vunpack.c.l.b16 %v885
  %v993 = vunpack.c.l.b16 %v886
  %v994 = vunpack.c.l.b16 %v887
  %v995 = vunpack.c.l.b16 %v888
  %v996 = vunpack.c.l.b16 %v889
  %v997 = vunpack.c.l.b16 %v890
  %v998 = vunpack.c.l.b16 %v891
  %v999 = vunpack.c.l.b16 %v892
  %v1000 = vunpack.c.l.b16 %v893
  %v1001 = vunpack.c.l.b16 %v894
  %v1002 = vunpack.c.l.b16 %v895
  %v1003 = vunpack.c.l.b16 %v896
  %v1004 = vunpack.c.l.b16 %v897
  %v1005 = vunpack.c.l.b16 %v898
  %v1006 = vunpack.c.l.b16 %v899
  %v1007 = vunpack.c.l.b16 %v900
  %v1008 = vunpack.c.l.b16 %v901
  %v1009 = vunpack.c.l.b16 %v902
  %v1010 = vunpack.c.l.b16 %v903
  %v1011 = vunpack.c.l.b16 %v904
  %v1012 = vunpack.c.l.b16 %v905
  %v1013 = vunpack.c.l.b16 %v906
  %v1014 = vunpack.c.l.b16 %v907
  %v1015 = vunpack.c.l.b16 %v908
  %v1016 = vunpack.c.l.b16 %v909
  %v1017 = vunpack.c.l.b16 %v910
  %v1018 = vunpack.c.l.b16 %v911
  %v1019 = vunpack.c.l.b16 %v912
  %v1020 = vunpack.c.l.b16 %v913
  %v1021 = vunpack.c.l.b16 %v914
  %v1022 = vunpack.c.l.b16 %v915
  %v1023 = vunpack.c.l.b16 %v916
  %v1024 = vunpack.c.l.b16 %v917
  %v1025 = vunpack.c.l.b16 %v918
  %v1026 = vunpack.c.l.b16 %v919
  %v1027 = vunpack.c.l.b16 %v920
  %v1028 = vunpack.c.l.b16 %v921
  %v1029 = vunpack.c.l.b16 %v922
  %v1030 = vunpack.c.l.b16 %v923
  %v1031 = vunpack.c.l.b16 %v924
  %v1032 = vunpack.c.l.b16 %v925
  %v1033 = vunpack.c.l.b16 %v926
  %v1034 = vpack.c.b16 %v986, %v985
  %v1035 = vpack.c.b16 %v988, %v987
  %v1036 = vpack.c.b16 %v990, %v989
  %v1037 = vpack.c.b16 %v992, %v991
  %v1038 = vpack.c.b16 %v994, %v993
  %v1039 = vpack.c.b16 %v996, %v995
  %v1040 = vpack.c.b16 %v998, %v997
  %v1041 = vpack.c.b16 %v1000, %v999
  %v1042 = vpack.c.b16 %v1002, %v1001
  %v1043 = vpack.c.b16 %v1004, %v1003
  %v1044 = vpack.c.b16 %v1006, %v1005
  %v1045 = vpack.c.b16 %v1008, %v1007
  %v1046 = vpack.c.b16 %v1010, %v1009
  %v1047 = vpack.c.b16 %v1012, %v1011
  %v1048 = vpack.c.b16 %v1014, %v1013
  %v1049 = vpack.c.b16 %v1016, %v1015
  %v1050 = vpack.c.b16 %v1018, %v1017
  %v1051 = vpack.c.b16 %v1020, %v1019
  %v1052 = vpack.c.b16 %v1022, %v1021
  %v1053 = vpack.c.b16 %v1024, %v1023
  %v1054 = vpack.c.b16 %v1026, %v1025
  %v1055 = vpack.c.b16 %v1028, %v1027
  %v1056 = vpack.c.b16 %v1030, %v1029
  %v1057 = vpack.c.b16 %v1032, %v1031
  %v1058 = vpack.c.b16 %v1033, %v1033
  %v1067 = vunpack.c.l.b16 %v928
  %v1068 = vunpack.c.l.b16 %v929
  %v1069 = vunpack.c.l.b16 %v930
  %v1070 = vunpack.c.l.b16 %v931
  %v1071 = vunpack.c.l.b16 %v932
  %v1072 = vunpack.c.l.b16 %v933
  %v1073 = vunpack.c.l.b16 %v934
  %v1074 = vunpack.c.l.b16 %v935
  %v1075 = vpack.c.b16 %v1068, %v1067
  %v1076 = vpack.c.b16 %v1070, %v1069
  %v1077 = vpack.c.b16 %v1072, %v1071
  %v1078 = vpack.c.b16 %v1074, %v1073
  %v1084 = vsel %vm226, %v1034, 0
  %v1087 = vsel %vm226, %v1035, 0
  %v1090 = vsel %vm226, %v1036, 0
  %v1093 = vsel %vm226, %v1037, 0
  %v1096 = vsel %vm226, %v1038, 0
  %v1099 = vsel %vm226, %v1039, 0
  %v1102 = vsel %vm226, %v1040, 0
  %v1105 = vsel %vm226, %v1041, 0
  %v1108 = vsel %vm226, %v1042, 0
  %v1111 = vsel %vm226, %v1043, 0
  %v1114 = vsel %vm226, %v1044, 0
  %v1117 = vsel %vm226, %v1045, 0
  %v1120 = vsel %vm226, %v1046, 0
  %v1123 = vsel %vm226, %v1047, 0
  %v1126 = vsel %vm226, %v1048, 0
  %v1129 = vsel %vm226, %v1049, 0
  %v1132 = vsel %vm226, %v1050, 0
  %v1135 = vsel %vm226, %v1051, 0
  %v1138 = vsel %vm226, %v1052, 0
  %v1141 = vsel %vm226, %v1053, 0
  %v1144 = vsel %vm226, %v1054, 0
  %v1147 = vsel %vm226, %v1055, 0
  %v1150 = vsel %vm226, %v1056, 0
  %v1153 = vsel %vm226, %v1057, 0
  %v1156 = vsel %vm226, %v1058, 0
  %1158 = vmatprep.subr.bf16.mxu0 0
  %1159 = vmatpush1.bf16.msra.mxu0 %v1075
  %1160 = vmatprep.subr.bf16.mxu0 0
  %1161 = vmatpush1.bf16.msra.mxu0 %v1076
  %1162 = vmatprep.subr.bf16.mxu0 0
  %1163 = vmatpush1.bf16.msra.mxu0 %v1077
  %1164 = vmatprep.subr.bf16.mxu0 0
  %1165 = vmatpush1.bf16.msra.mxu0 %v1078
  %1166 = vmatprep.subr.bf16.mxu0 0
  %1167 = vmatpush1.bf16.msra.mxu0 0
  %1168 = vmatprep.subr.bf16.mxu0 0
  %1169 = vmatpush1.bf16.msra.mxu0 0
  %1170 = vmatprep.subr.bf16.mxu0 0
  %1171 = vmatpush1.bf16.msra.mxu0 0
  %1172 = vmatprep.subr.bf16.mxu0 0
  %1173 = vmatpush1.bf16.msra.mxu0 0
  %1174 = vmatprep.subr.bf16.mxu0 0
  %1175 = vmatpush1.bf16.msra.mxu0 0
  %1176 = vmatprep.subr.bf16.mxu0 0
  %1177 = vmatpush1.bf16.msra.mxu0 0
  %1178 = vmatprep.subr.bf16.mxu0 0
  %1179 = vmatpush1.bf16.msra.mxu0 0
  %1180 = vmatprep.subr.bf16.mxu0 0
  %1181 = vmatpush1.bf16.msra.mxu0 0
  %1182 = vmatprep.subr.bf16.mxu0 0
  %1183 = vmatpush1.bf16.msra.mxu0 0
  %1184 = vmatprep.subr.bf16.mxu0 0
  %1185 = vmatpush1.bf16.msra.mxu0 0
  %1186 = vmatprep.subr.bf16.mxu0 0
  %1187 = vmatpush1.bf16.msra.mxu0 0
  %1188 = vmatprep.subr.bf16.mxu0 0
  %1189 = vmatpush1.bf16.msra.mxu0 0
  %1190 = vmatprep.mubr.bf16.mxu0 0
  %1191 = vmatmul.mubr.bf16.gmra.mrb[0].mxu0 %v1084
  %v1192 = vpop.f32.mrb[0].mxu0
  %v1193 = vadd.f32 %v77, %v1192
  %v1194 = vpop.f32.mrb[0].mxu0
  %v1195 = vpop.f32.mrb[0].mxu0
  %v1196 = vadd.f32 %v77, %v1195
  %v1197 = vpop.f32.mrb[0].mxu0
  %1198 = vmatprep.mubr.bf16.mxu0 0
  %1199 = vmatmul.mubr.bf16.gmra.mrb[0].mxu0 %v1087
  %v1200 = vpop.f32.mrb[0].mxu0
  %v1201 = vadd.f32 %v77, %v1200
  %v1202 = vpop.f32.mrb[0].mxu0
  %v1203 = vpop.f32.mrb[0].mxu0
  %v1204 = vadd.f32 %v77, %v1203
  %v1205 = vpop.f32.mrb[0].mxu0
  %1206 = vmatprep.mubr.bf16.mxu0 0
  %1207 = vmatmul.mubr.bf16.gmra.mrb[0].mxu0 %v1090
  %v1208 = vpop.f32.mrb[0].mxu0
  %v1209 = vadd.f32 %v77, %v1208
  %v1210 = vpop.f32.mrb[0].mxu0
  %v1211 = vpop.f32.mrb[0].mxu0
  %v1212 = vadd.f32 %v77, %v1211
  %v1213 = vpop.f32.mrb[0].mxu0
  %1214 = vmatprep.mubr.bf16.mxu0 0
  %1215 = vmatmul.mubr.bf16.gmra.mrb[0].mxu0 %v1093
  %v1216 = vpop.f32.mrb[0].mxu0
  %v1217 = vadd.f32 %v77, %v1216
  %v1218 = vpop.f32.mrb[0].mxu0
  %v1219 = vpop.f32.mrb[0].mxu0
  %v1220 = vadd.f32 %v77, %v1219
  %v1221 = vpop.f32.mrb[0].mxu0
  %1222 = vmatprep.mubr.bf16.mxu0 0
  %1223 = vmatmul.mubr.bf16.gmra.mrb[0].mxu0 %v1096
  %v1224 = vpop.f32.mrb[0].mxu0
  %v1225 = vadd.f32 %v77, %v1224
  %v1226 = vpop.f32.mrb[0].mxu0
  %v1227 = vpop.f32.mrb[0].mxu0
  %v1228 = vadd.f32 %v77, %v1227
  %v1229 = vpop.f32.mrb[0].mxu0
  %1230 = vmatprep.mubr.bf16.mxu0 0
  %1231 = vmatmul.mubr.bf16.gmra.mrb[0].mxu0 %v1099
  %v1232 = vpop.f32.mrb[0].mxu0
  %v1233 = vadd.f32 %v77, %v1232
  %v1234 = vpop.f32.mrb[0].mxu0
  %v1235 = vpop.f32.mrb[0].mxu0
  %v1236 = vadd.f32 %v77, %v1235
  %v1237 = vpop.f32.mrb[0].mxu0
  %1238 = vmatprep.mubr.bf16.mxu0 0
  %1239 = vmatmul.mubr.bf16.gmra.mrb[0].mxu0 %v1102
  %v1240 = vpop.f32.mrb[0].mxu0
  %v1241 = vadd.f32 %v77, %v1240
  %v1242 = vpop.f32.mrb[0].mxu0
  %v1243 = vpop.f32.mrb[0].mxu0
  %v1244 = vadd.f32 %v77, %v1243
  %v1245 = vpop.f32.mrb[0].mxu0
  %1246 = vmatprep.mubr.bf16.mxu0 0
  %1247 = vmatmul.mubr.bf16.gmra.mrb[0].mxu0 %v1105
  %v1248 = vpop.f32.mrb[0].mxu0
  %v1249 = vadd.f32 %v77, %v1248
  %v1250 = vpop.f32.mrb[0].mxu0
  %v1251 = vpop.f32.mrb[0].mxu0
  %v1252 = vadd.f32 %v77, %v1251
  %v1253 = vpop.f32.mrb[0].mxu0
  %1254 = vmatprep.mubr.bf16.mxu0 0
  %1255 = vmatmul.mubr.bf16.gmra.mrb[0].mxu0 %v1108
  %v1256 = vpop.f32.mrb[0].mxu0
  %v1257 = vadd.f32 %v77, %v1256
  %v1258 = vpop.f32.mrb[0].mxu0
  %v1259 = vpop.f32.mrb[0].mxu0
  %v1260 = vadd.f32 %v77, %v1259
  %v1261 = vpop.f32.mrb[0].mxu0
  %1262 = vmatprep.mubr.bf16.mxu0 0
  %1263 = vmatmul.mubr.bf16.gmra.mrb[0].mxu0 %v1111
  %v1264 = vpop.f32.mrb[0].mxu0
  %v1265 = vadd.f32 %v77, %v1264
  %v1266 = vpop.f32.mrb[0].mxu0
  %v1267 = vpop.f32.mrb[0].mxu0
  %v1268 = vadd.f32 %v77, %v1267
  %v1269 = vpop.f32.mrb[0].mxu0
  %1270 = vmatprep.mubr.bf16.mxu0 0
  %1271 = vmatmul.mubr.bf16.gmra.mrb[0].mxu0 %v1114
  %v1272 = vpop.f32.mrb[0].mxu0
  %v1273 = vadd.f32 %v77, %v1272
  %v1274 = vpop.f32.mrb[0].mxu0
  %v1275 = vpop.f32.mrb[0].mxu0
  %v1276 = vadd.f32 %v77, %v1275
  %v1277 = vpop.f32.mrb[0].mxu0
  %1278 = vmatprep.mubr.bf16.mxu0 0
  %1279 = vmatmul.mubr.bf16.gmra.mrb[0].mxu0 %v1117
  %v1280 = vpop.f32.mrb[0].mxu0
  %v1281 = vadd.f32 %v77, %v1280
  %v1282 = vpop.f32.mrb[0].mxu0
  %v1283 = vpop.f32.mrb[0].mxu0
  %v1284 = vadd.f32 %v77, %v1283
  %v1285 = vpop.f32.mrb[0].mxu0
  %1286 = vmatprep.mubr.bf16.mxu0 0
  %1287 = vmatmul.mubr.bf16.gmra.mrb[0].mxu0 %v1120
  %v1288 = vpop.f32.mrb[0].mxu0
  %v1289 = vadd.f32 %v77, %v1288
  %v1290 = vpop.f32.mrb[0].mxu0
  %v1291 = vpop.f32.mrb[0].mxu0
  %v1292 = vadd.f32 %v77, %v1291
  %v1293 = vpop.f32.mrb[0].mxu0
  %1294 = vmatprep.mubr.bf16.mxu0 0
  %1295 = vmatmul.mubr.bf16.gmra.mrb[0].mxu0 %v1123
  %v1296 = vpop.f32.mrb[0].mxu0
  %v1297 = vadd.f32 %v77, %v1296
  %v1298 = vpop.f32.mrb[0].mxu0
  %v1299 = vpop.f32.mrb[0].mxu0
  %v1300 = vadd.f32 %v77, %v1299
  %v1301 = vpop.f32.mrb[0].mxu0
  %1302 = vmatprep.mubr.bf16.mxu0 0
  %1303 = vmatmul.mubr.bf16.gmra.mrb[0].mxu0 %v1126
  %v1304 = vpop.f32.mrb[0].mxu0
  %v1305 = vadd.f32 %v77, %v1304
  %v1306 = vpop.f32.mrb[0].mxu0
  %v1307 = vpop.f32.mrb[0].mxu0
  %v1308 = vadd.f32 %v77, %v1307
  %v1309 = vpop.f32.mrb[0].mxu0
  %1310 = vmatprep.mubr.bf16.mxu0 0
  %1311 = vmatmul.mubr.bf16.gmra.mrb[0].mxu0 %v1129
  %v1312 = vpop.f32.mrb[0].mxu0
  %v1313 = vadd.f32 %v77, %v1312
  %v1314 = vpop.f32.mrb[0].mxu0
  %v1315 = vpop.f32.mrb[0].mxu0
  %v1316 = vadd.f32 %v77, %v1315
  %v1317 = vpop.f32.mrb[0].mxu0
  %1318 = vmatprep.mubr.bf16.mxu0 0
  %1319 = vmatmul.mubr.bf16.gmra.mrb[0].mxu0 %v1132
  %v1320 = vpop.f32.mrb[0].mxu0
  %v1321 = vadd.f32 %v77, %v1320
  %v1322 = vpop.f32.mrb[0].mxu0
  %v1323 = vpop.f32.mrb[0].mxu0
  %v1324 = vadd.f32 %v77, %v1323
  %v1325 = vpop.f32.mrb[0].mxu0
  %1326 = vmatprep.mubr.bf16.mxu0 0
  %1327 = vmatmul.mubr.bf16.gmra.mrb[0].mxu0 %v1135
  %v1328 = vpop.f32.mrb[0].mxu0
  %v1329 = vadd.f32 %v77, %v1328
  %v1330 = vpop.f32.mrb[0].mxu0
  %v1331 = vpop.f32.mrb[0].mxu0
  %v1332 = vadd.f32 %v77, %v1331
  %v1333 = vpop.f32.mrb[0].mxu0
  %1334 = vmatprep.mubr.bf16.mxu0 0
  %1335 = vmatmul.mubr.bf16.gmra.mrb[0].mxu0 %v1138
  %v1336 = vpop.f32.mrb[0].mxu0
  %v1337 = vadd.f32 %v77, %v1336
  %v1338 = vpop.f32.mrb[0].mxu0
  %v1339 = vpop.f32.mrb[0].mxu0
  %v1340 = vadd.f32 %v77, %v1339
  %v1341 = vpop.f32.mrb[0].mxu0
  %1342 = vmatprep.mubr.bf16.mxu0 0
  %1343 = vmatmul.mubr.bf16.gmra.mrb[0].mxu0 %v1141
  %v1344 = vpop.f32.mrb[0].mxu0
  %v1345 = vadd.f32 %v77, %v1344
  %v1346 = vpop.f32.mrb[0].mxu0
  %v1347 = vpop.f32.mrb[0].mxu0
  %v1348 = vadd.f32 %v77, %v1347
  %v1349 = vpop.f32.mrb[0].mxu0
  %1350 = vmatprep.mubr.bf16.mxu0 0
  %1351 = vmatmul.mubr.bf16.gmra.mrb[0].mxu0 %v1144
  %v1352 = vpop.f32.mrb[0].mxu0
  %v1353 = vadd.f32 %v77, %v1352
  %v1354 = vpop.f32.mrb[0].mxu0
  %v1355 = vpop.f32.mrb[0].mxu0
  %v1356 = vadd.f32 %v77, %v1355
  %v1357 = vpop.f32.mrb[0].mxu0
  %1358 = vmatprep.mubr.bf16.mxu0 0
  %1359 = vmatmul.mubr.bf16.gmra.mrb[0].mxu0 %v1147
  %v1360 = vpop.f32.mrb[0].mxu0
  %v1361 = vadd.f32 %v77, %v1360
  %v1362 = vpop.f32.mrb[0].mxu0
  %v1363 = vpop.f32.mrb[0].mxu0
  %v1364 = vadd.f32 %v77, %v1363
  %v1365 = vpop.f32.mrb[0].mxu0
  %1366 = vmatprep.mubr.bf16.mxu0 0
  %1367 = vmatmul.mubr.bf16.gmra.mrb[0].mxu0 %v1150
  %v1368 = vpop.f32.mrb[0].mxu0
  %v1369 = vadd.f32 %v77, %v1368
  %v1370 = vpop.f32.mrb[0].mxu0
  %v1371 = vpop.f32.mrb[0].mxu0
  %v1372 = vadd.f32 %v77, %v1371
  %v1373 = vpop.f32.mrb[0].mxu0
  %1374 = vmatprep.mubr.bf16.mxu0 0
  %1375 = vmatmul.mubr.bf16.gmra.mrb[0].mxu0 %v1153
  %v1376 = vpop.f32.mrb[0].mxu0
  %v1377 = vadd.f32 %v77, %v1376
  %v1378 = vpop.f32.mrb[0].mxu0
  %v1379 = vpop.f32.mrb[0].mxu0
  %v1380 = vadd.f32 %v77, %v1379
  %v1381 = vpop.f32.mrb[0].mxu0
  %1382 = vmatprep.mubr.bf16.mxu0 0
  %1383 = vmatmul.mubr.bf16.gmra.mrb[0].mxu0 %v1156
  %v1384 = vpop.f32.mrb[0].mxu0
  %v1385 = vadd.f32 %v77, %v1384
  %v1386 = vpop.f32.mrb[0].mxu0
  %v1387 = vpop.f32.mrb[0].mxu0
  %v1388 = vpop.f32.mrb[0].mxu0
  %1389 = vdwg.mxu0
  %v1390 = vxor.u32 %v1193, 2147483648
  %v1391 = vxor.u32 %v1196, 2147483648
  %v1392 = vxor.u32 %v1201, 2147483648
  %v1393 = vxor.u32 %v1204, 2147483648
  %v1394 = vxor.u32 %v1209, 2147483648
  %v1395 = vxor.u32 %v1212, 2147483648
  %v1396 = vxor.u32 %v1217, 2147483648
  %v1397 = vxor.u32 %v1220, 2147483648
  %v1398 = vxor.u32 %v1225, 2147483648
  %v1399 = vxor.u32 %v1228, 2147483648
  %v1400 = vxor.u32 %v1233, 2147483648
  %v1401 = vxor.u32 %v1236, 2147483648
  %v1402 = vxor.u32 %v1241, 2147483648
  %v1403 = vxor.u32 %v1244, 2147483648
  %v1404 = vxor.u32 %v1249, 2147483648
  %v1405 = vxor.u32 %v1252, 2147483648
  %v1406 = vxor.u32 %v1257, 2147483648
  %v1407 = vxor.u32 %v1260, 2147483648
  %v1408 = vxor.u32 %v1265, 2147483648
  %v1409 = vxor.u32 %v1268, 2147483648
  %v1410 = vxor.u32 %v1273, 2147483648
  %v1411 = vxor.u32 %v1276, 2147483648
  %v1412 = vxor.u32 %v1281, 2147483648
  %v1413 = vxor.u32 %v1284, 2147483648
  %v1414 = vxor.u32 %v1289, 2147483648
  %v1415 = vxor.u32 %v1292, 2147483648
  %v1416 = vxor.u32 %v1297, 2147483648
  %v1417 = vxor.u32 %v1300, 2147483648
  %v1418 = vxor.u32 %v1305, 2147483648
  %v1419 = vxor.u32 %v1308, 2147483648
  %v1420 = vxor.u32 %v1313, 2147483648
  %v1421 = vxor.u32 %v1316, 2147483648
  %v1422 = vxor.u32 %v1321, 2147483648
  %v1423 = vxor.u32 %v1324, 2147483648
  %v1424 = vxor.u32 %v1329, 2147483648
  %v1425 = vxor.u32 %v1332, 2147483648
  %v1426 = vxor.u32 %v1337, 2147483648
  %v1427 = vxor.u32 %v1340, 2147483648
  %v1428 = vxor.u32 %v1345, 2147483648
  %v1429 = vxor.u32 %v1348, 2147483648
  %v1430 = vxor.u32 %v1353, 2147483648
  %v1431 = vxor.u32 %v1356, 2147483648
  %v1432 = vxor.u32 %v1361, 2147483648
  %v1433 = vxor.u32 %v1364, 2147483648
  %v1434 = vxor.u32 %v1369, 2147483648
  %v1435 = vxor.u32 %v1372, 2147483648
  %v1436 = vxor.u32 %v1377, 2147483648
  %v1437 = vxor.u32 %v1380, 2147483648
  %v1438 = vxor.u32 %v1385, 2147483648
  %v1439 = vmul.f32 %v1390, 1.442695
  %v1440 = vpow.pop %v1439
  %v1441 = vmul.f32 %v1391, 1.442695
  %v1442 = vpow.pop %v1441
  %v1443 = vmul.f32 %v1392, 1.442695
  %v1444 = vpow.pop %v1443
  %v1445 = vmul.f32 %v1393, 1.442695
  %v1446 = vpow.pop %v1445
  %v1447 = vmul.f32 %v1394, 1.442695
  %v1448 = vpow.pop %v1447
  %v1449 = vmul.f32 %v1395, 1.442695
  %v1450 = vpow.pop %v1449
  %v1451 = vmul.f32 %v1396, 1.442695
  %v1452 = vpow.pop %v1451
  %v1453 = vmul.f32 %v1397, 1.442695
  %v1454 = vpow.pop %v1453
  %v1455 = vmul.f32 %v1398, 1.442695
  %v1456 = vpow.pop %v1455
  %v1457 = vmul.f32 %v1399, 1.442695
  %v1458 = vpow.pop %v1457
  %v1459 = vmul.f32 %v1400, 1.442695
  %v1460 = vpow.pop %v1459
  %v1461 = vmul.f32 %v1401, 1.442695
  %v1462 = vpow.pop %v1461
  %v1463 = vmul.f32 %v1402, 1.442695
  %v1464 = vpow.pop %v1463
  %v1465 = vmul.f32 %v1403, 1.442695
  %v1466 = vpow.pop %v1465
  %v1467 = vmul.f32 %v1404, 1.442695
  %v1468 = vpow.pop %v1467
  %v1469 = vmul.f32 %v1405, 1.442695
  %v1470 = vpow.pop %v1469
  %v1471 = vmul.f32 %v1406, 1.442695
  %v1472 = vpow.pop %v1471
  %v1473 = vmul.f32 %v1407, 1.442695
  %v1474 = vpow.pop %v1473
  %v1475 = vmul.f32 %v1408, 1.442695
  %v1476 = vpow.pop %v1475
  %v1477 = vmul.f32 %v1409, 1.442695
  %v1478 = vpow.pop %v1477
  %v1479 = vmul.f32 %v1410, 1.442695
  %v1480 = vpow.pop %v1479
  %v1481 = vmul.f32 %v1411, 1.442695
  %v1482 = vpow.pop %v1481
  %v1483 = vmul.f32 %v1412, 1.442695
  %v1484 = vpow.pop %v1483
  %v1485 = vmul.f32 %v1413, 1.442695
  %v1486 = vpow.pop %v1485
  %v1487 = vmul.f32 %v1414, 1.442695
  %v1488 = vpow.pop %v1487
  %v1489 = vmul.f32 %v1415, 1.442695
  %v1490 = vpow.pop %v1489
  %v1491 = vmul.f32 %v1416, 1.442695
  %v1492 = vpow.pop %v1491
  %v1493 = vmul.f32 %v1417, 1.442695
  %v1494 = vpow.pop %v1493
  %v1495 = vmul.f32 %v1418, 1.442695
  %v1496 = vpow.pop %v1495
  %v1497 = vmul.f32 %v1419, 1.442695
  %v1498 = vpow.pop %v1497
  %v1499 = vmul.f32 %v1420, 1.442695
  %v1500 = vpow.pop %v1499
  %v1501 = vmul.f32 %v1421, 1.442695
  %v1502 = vpow.pop %v1501
  %v1503 = vmul.f32 %v1422, 1.442695
  %v1504 = vpow.pop %v1503
  %v1505 = vmul.f32 %v1423, 1.442695
  %v1506 = vpow.pop %v1505
  %v1507 = vmul.f32 %v1424, 1.442695
  %v1508 = vpow.pop %v1507
  %v1509 = vmul.f32 %v1425, 1.442695
  %v1510 = vpow.pop %v1509
  %v1511 = vmul.f32 %v1426, 1.442695
  %v1512 = vpow.pop %v1511
  %v1513 = vmul.f32 %v1427, 1.442695
  %v1514 = vpow.pop %v1513
  %v1515 = vmul.f32 %v1428, 1.442695
  %v1516 = vpow.pop %v1515
  %v1517 = vmul.f32 %v1429, 1.442695
  %v1518 = vpow.pop %v1517
  %v1519 = vmul.f32 %v1430, 1.442695
  %v1520 = vpow.pop %v1519
  %v1521 = vmul.f32 %v1431, 1.442695
  %v1522 = vpow.pop %v1521
  %v1523 = vmul.f32 %v1432, 1.442695
  %v1524 = vpow.pop %v1523
  %v1525 = vmul.f32 %v1433, 1.442695
  %v1526 = vpow.pop %v1525
  %v1527 = vmul.f32 %v1434, 1.442695
  %v1528 = vpow.pop %v1527
  %v1529 = vmul.f32 %v1435, 1.442695
  %v1530 = vpow.pop %v1529
  %v1531 = vmul.f32 %v1436, 1.442695
  %v1532 = vpow.pop %v1531
  %v1533 = vmul.f32 %v1437, 1.442695
  %v1534 = vpow.pop %v1533
  %v1535 = vmul.f32 %v1438, 1.442695
  %v1536 = vpow.pop %v1535
  %v1537 = vadd.f32 %v1440, 1.0
  %v1538 = vadd.f32 %v1442, 1.0
  %v1539 = vadd.f32 %v1444, 1.0
  %v1540 = vadd.f32 %v1446, 1.0
  %v1541 = vadd.f32 %v1448, 1.0
  %v1542 = vadd.f32 %v1450, 1.0
  %v1543 = vadd.f32 %v1452, 1.0
  %v1544 = vadd.f32 %v1454, 1.0
  %v1545 = vadd.f32 %v1456, 1.0
  %v1546 = vadd.f32 %v1458, 1.0
  %v1547 = vadd.f32 %v1460, 1.0
  %v1548 = vadd.f32 %v1462, 1.0
  %v1549 = vadd.f32 %v1464, 1.0
  %v1550 = vadd.f32 %v1466, 1.0
  %v1551 = vadd.f32 %v1468, 1.0
  %v1552 = vadd.f32 %v1470, 1.0
  %v1553 = vadd.f32 %v1472, 1.0
  %v1554 = vadd.f32 %v1474, 1.0
  %v1555 = vadd.f32 %v1476, 1.0
  %v1556 = vadd.f32 %v1478, 1.0
  %v1557 = vadd.f32 %v1480, 1.0
  %v1558 = vadd.f32 %v1482, 1.0
  %v1559 = vadd.f32 %v1484, 1.0
  %v1560 = vadd.f32 %v1486, 1.0
  %v1561 = vadd.f32 %v1488, 1.0
  %v1562 = vadd.f32 %v1490, 1.0
  %v1563 = vadd.f32 %v1492, 1.0
  %v1564 = vadd.f32 %v1494, 1.0
  %v1565 = vadd.f32 %v1496, 1.0
  %v1566 = vadd.f32 %v1498, 1.0
  %v1567 = vadd.f32 %v1500, 1.0
  %v1568 = vadd.f32 %v1502, 1.0
  %v1569 = vadd.f32 %v1504, 1.0
  %v1570 = vadd.f32 %v1506, 1.0
  %v1571 = vadd.f32 %v1508, 1.0
  %v1572 = vadd.f32 %v1510, 1.0
  %v1573 = vadd.f32 %v1512, 1.0
  %v1574 = vadd.f32 %v1514, 1.0
  %v1575 = vadd.f32 %v1516, 1.0
  %v1576 = vadd.f32 %v1518, 1.0
  %v1577 = vadd.f32 %v1520, 1.0
  %v1578 = vadd.f32 %v1522, 1.0
  %v1579 = vadd.f32 %v1524, 1.0
  %v1580 = vadd.f32 %v1526, 1.0
  %v1581 = vadd.f32 %v1528, 1.0
  %v1582 = vadd.f32 %v1530, 1.0
  %v1583 = vadd.f32 %v1532, 1.0
  %v1584 = vadd.f32 %v1534, 1.0
  %v1585 = vadd.f32 %v1536, 1.0
  %v1586 = vrcp.pop %v1537
  %v1587 = vmul.f32 1.0, %v1586
  %v1588 = vrcp.pop %v1538
  %v1589 = vmul.f32 1.0, %v1588
  %v1590 = vrcp.pop %v1539
  %v1591 = vmul.f32 1.0, %v1590
  %v1592 = vrcp.pop %v1540
  %v1593 = vmul.f32 1.0, %v1592
  %v1594 = vrcp.pop %v1541
  %v1595 = vmul.f32 1.0, %v1594
  %v1596 = vrcp.pop %v1542
  %v1597 = vmul.f32 1.0, %v1596
  %v1598 = vrcp.pop %v1543
  %v1599 = vmul.f32 1.0, %v1598
  %v1600 = vrcp.pop %v1544
  %v1601 = vmul.f32 1.0, %v1600
  %v1602 = vrcp.pop %v1545
  %v1603 = vmul.f32 1.0, %v1602
  %v1604 = vrcp.pop %v1546
  %v1605 = vmul.f32 1.0, %v1604
  %v1606 = vrcp.pop %v1547
  %v1607 = vmul.f32 1.0, %v1606
  %v1608 = vrcp.pop %v1548
  %v1609 = vmul.f32 1.0, %v1608
  %v1610 = vrcp.pop %v1549
  %v1611 = vmul.f32 1.0, %v1610
  %v1612 = vrcp.pop %v1550
  %v1613 = vmul.f32 1.0, %v1612
  %v1614 = vrcp.pop %v1551
  %v1615 = vmul.f32 1.0, %v1614
  %v1616 = vrcp.pop %v1552
  %v1617 = vmul.f32 1.0, %v1616
  %v1618 = vrcp.pop %v1553
  %v1619 = vmul.f32 1.0, %v1618
  %v1620 = vrcp.pop %v1554
  %v1621 = vmul.f32 1.0, %v1620
  %v1622 = vrcp.pop %v1555
  %v1623 = vmul.f32 1.0, %v1622
  %v1624 = vrcp.pop %v1556
  %v1625 = vmul.f32 1.0, %v1624
  %v1626 = vrcp.pop %v1557
  %v1627 = vmul.f32 1.0, %v1626
  %v1628 = vrcp.pop %v1558
  %v1629 = vmul.f32 1.0, %v1628
  %v1630 = vrcp.pop %v1559
  %v1631 = vmul.f32 1.0, %v1630
  %v1632 = vrcp.pop %v1560
  %v1633 = vmul.f32 1.0, %v1632
  %v1634 = vrcp.pop %v1561
  %v1635 = vmul.f32 1.0, %v1634
  %v1636 = vrcp.pop %v1562
  %v1637 = vmul.f32 1.0, %v1636
  %v1638 = vrcp.pop %v1563
  %v1639 = vmul.f32 1.0, %v1638
  %v1640 = vrcp.pop %v1564
  %v1641 = vmul.f32 1.0, %v1640
  %v1642 = vrcp.pop %v1565
  %v1643 = vmul.f32 1.0, %v1642
  %v1644 = vrcp.pop %v1566
  %v1645 = vmul.f32 1.0, %v1644
  %v1646 = vrcp.pop %v1567
  %v1647 = vmul.f32 1.0, %v1646
  %v1648 = vrcp.pop %v1568
  %v1649 = vmul.f32 1.0, %v1648
  %v1650 = vrcp.pop %v1569
  %v1651 = vmul.f32 1.0, %v1650
  %v1652 = vrcp.pop %v1570
  %v1653 = vmul.f32 1.0, %v1652
  %v1654 = vrcp.pop %v1571
  %v1655 = vmul.f32 1.0, %v1654
  %v1656 = vrcp.pop %v1572
  %v1657 = vmul.f32 1.0, %v1656
  %v1658 = vrcp.pop %v1573
  %v1659 = vmul.f32 1.0, %v1658
  %v1660 = vrcp.pop %v1574
  %v1661 = vmul.f32 1.0, %v1660
  %v1662 = vrcp.pop %v1575
  %v1663 = vmul.f32 1.0, %v1662
  %v1664 = vrcp.pop %v1576
  %v1665 = vmul.f32 1.0, %v1664
  %v1666 = vrcp.pop %v1577
  %v1667 = vmul.f32 1.0, %v1666
  %v1668 = vrcp.pop %v1578
  %v1669 = vmul.f32 1.0, %v1668
  %v1670 = vrcp.pop %v1579
  %v1671 = vmul.f32 1.0, %v1670
  %v1672 = vrcp.pop %v1580
  %v1673 = vmul.f32 1.0, %v1672
  %v1674 = vrcp.pop %v1581
  %v1675 = vmul.f32 1.0, %v1674
  %v1676 = vrcp.pop %v1582
  %v1677 = vmul.f32 1.0, %v1676
  %v1678 = vrcp.pop %v1583
  %v1679 = vmul.f32 1.0, %v1678
  %v1680 = vrcp.pop %v1584
  %v1681 = vmul.f32 1.0, %v1680
  %v1682 = vrcp.pop %v1585
  %v1683 = vmul.f32 1.0, %v1682
  %s1684 = scalar_lea.vmem %s3, 392
  %1685 = vst [vmem:[%s1684] sm:$0xff] %v1587
  %1686 = vst [vmem:[%s1684 + $0x8] sm:$0xff] %v1589
  %1687 = vst [vmem:[%s1684 + $0x10] sm:$0xff] %v1591
  %1688 = vst [vmem:[%s1684 + $0x18] sm:$0xff] %v1593
  %1689 = vst [vmem:[%s1684 + $0x20] sm:$0xff] %v1595
  %1690 = vst [vmem:[%s1684 + $0x28] sm:$0xff] %v1597
  %1691 = vst [vmem:[%s1684 + $0x30] sm:$0xff] %v1599
  %1692 = vst [vmem:[%s1684 + $0x38] sm:$0xff] %v1601
  %1693 = vst [vmem:[%s1684 + $0x40] sm:$0xff] %v1603
  %1694 = vst [vmem:[%s1684 + $0x48] sm:$0xff] %v1605
  %1695 = vst [vmem:[%s1684 + $0x50] sm:$0xff] %v1607
  %1696 = vst [vmem:[%s1684 + $0x58] sm:$0xff] %v1609
  %1697 = vst [vmem:[%s1684 + $0x60] sm:$0xff] %v1611
  %1698 = vst [vmem:[%s1684 + $0x68] sm:$0xff] %v1613
  %1699 = vst [vmem:[%s1684 + $0x70] sm:$0xff] %v1615
  %1700 = vst [vmem:[%s1684 + $0x78] sm:$0xff] %v1617
  %1701 = vst [vmem:[%s1684 + $0x80] sm:$0xff] %v1619
  %1702 = vst [vmem:[%s1684 + $0x88] sm:$0xff] %v1621
  %1703 = vst [vmem:[%s1684 + $0x90] sm:$0xff] %v1623
  %1704 = vst [vmem:[%s1684 + $0x98] sm:$0xff] %v1625
  %1705 = vst [vmem:[%s1684 + $0xa0] sm:$0xff] %v1627
  %1706 = vst [vmem:[%s1684 + $0xa8] sm:$0xff] %v1629
  %1707 = vst [vmem:[%s1684 + $0xb0] sm:$0xff] %v1631
  %1708 = vst [vmem:[%s1684 + $0xb8] sm:$0xff] %v1633
  %1709 = vst [vmem:[%s1684 + $0xc0] sm:$0xff] %v1635
  %1710 = vst [vmem:[%s1684 + $0xc8] sm:$0xff] %v1637
  %1711 = vst [vmem:[%s1684 + $0xd0] sm:$0xff] %v1639
  %1712 = vst [vmem:[%s1684 + $0xd8] sm:$0xff] %v1641
  %1713 = vst [vmem:[%s1684 + $0xe0] sm:$0xff] %v1643
  %1714 = vst [vmem:[%s1684 + $0xe8] sm:$0xff] %v1645
  %1715 = vst [vmem:[%s1684 + $0xf0] sm:$0xff] %v1647
  %1716 = vst [vmem:[%s1684 + $0xf8] sm:$0xff] %v1649
  %1717 = vst [vmem:[%s1684 + $0x100] sm:$0xff] %v1651
  %1718 = vst [vmem:[%s1684 + $0x108] sm:$0xff] %v1653
  %1719 = vst [vmem:[%s1684 + $0x110] sm:$0xff] %v1655
  %1720 = vst [vmem:[%s1684 + $0x118] sm:$0xff] %v1657
  %1721 = vst [vmem:[%s1684 + $0x120] sm:$0xff] %v1659
  %1722 = vst [vmem:[%s1684 + $0x128] sm:$0xff] %v1661
  %1723 = vst [vmem:[%s1684 + $0x130] sm:$0xff] %v1663
  %1724 = vst [vmem:[%s1684 + $0x138] sm:$0xff] %v1665
  %1725 = vst [vmem:[%s1684 + $0x140] sm:$0xff] %v1667
  %1726 = vst [vmem:[%s1684 + $0x148] sm:$0xff] %v1669
  %1727 = vst [vmem:[%s1684 + $0x150] sm:$0xff] %v1671
  %1728 = vst [vmem:[%s1684 + $0x158] sm:$0xff] %v1673
  %1729 = vst [vmem:[%s1684 + $0x160] sm:$0xff] %v1675
  %1730 = vst [vmem:[%s1684 + $0x168] sm:$0xff] %v1677
  %1731 = vst [vmem:[%s1684 + $0x170] sm:$0xff] %v1679
  %1732 = vst [vmem:[%s1684 + $0x178] sm:$0xff] %v1681
  %1733 = vst [vmem:[%s1684 + $0x180] sm:$0xff] %v1683
  %s1734 = scalar_lea.vmem %s0, 392
  %v1735 = vld [vmem:[%s1734] sm:$0xf]
  %v1736 = vld [vmem:[%s1734 + $0x4] sm:$0xf]
  %v1737 = vld [vmem:[%s1734 + $0x8] sm:$0xf]
  %v1738 = vld [vmem:[%s1734 + $0xc] sm:$0xf]
  %v1739 = vld [vmem:[%s1734 + $0x10] sm:$0xf]
  %v1740 = vld [vmem:[%s1734 + $0x14] sm:$0xf]
  %v1741 = vld [vmem:[%s1734 + $0x18] sm:$0xf]
  %v1742 = vld [vmem:[%s1734 + $0x1c] sm:$0xf]
  %v1743 = vld [vmem:[%s1734 + $0x20] sm:$0xf]
  %v1744 = vld [vmem:[%s1734 + $0x24] sm:$0xf]
  %v1745 = vld [vmem:[%s1734 + $0x28] sm:$0xf]
  %v1746 = vld [vmem:[%s1734 + $0x2c] sm:$0xf]
  %v1747 = vld [vmem:[%s1734 + $0x30] sm:$0xf]
  %v1748 = vld [vmem:[%s1734 + $0x34] sm:$0xf]
  %v1749 = vld [vmem:[%s1734 + $0x38] sm:$0xf]
  %v1750 = vld [vmem:[%s1734 + $0x3c] sm:$0xf]
  %v1751 = vld [vmem:[%s1734 + $0x40] sm:$0xf]
  %v1752 = vld [vmem:[%s1734 + $0x44] sm:$0xf]
  %v1753 = vld [vmem:[%s1734 + $0x48] sm:$0xf]
  %v1754 = vld [vmem:[%s1734 + $0x4c] sm:$0xf]
  %v1755 = vld [vmem:[%s1734 + $0x50] sm:$0xf]
  %v1756 = vld [vmem:[%s1734 + $0x54] sm:$0xf]
  %v1757 = vld [vmem:[%s1734 + $0x58] sm:$0xf]
  %v1758 = vld [vmem:[%s1734 + $0x5c] sm:$0xf]
  %v1759 = vld [vmem:[%s1734 + $0x60] sm:$0xf]
  %v1760 = vld [vmem:[%s1734 + $0x64] sm:$0xf]
  %v1761 = vld [vmem:[%s1734 + $0x68] sm:$0xf]
  %v1762 = vld [vmem:[%s1734 + $0x6c] sm:$0xf]
  %v1763 = vld [vmem:[%s1734 + $0x70] sm:$0xf]
  %v1764 = vld [vmem:[%s1734 + $0x74] sm:$0xf]
  %v1765 = vld [vmem:[%s1734 + $0x78] sm:$0xf]
  %v1766 = vld [vmem:[%s1734 + $0x7c] sm:$0xf]
  %v1767 = vld [vmem:[%s1734 + $0x80] sm:$0xf]
  %v1768 = vld [vmem:[%s1734 + $0x84] sm:$0xf]
  %v1769 = vld [vmem:[%s1734 + $0x88] sm:$0xf]
  %v1770 = vld [vmem:[%s1734 + $0x8c] sm:$0xf]
  %v1771 = vld [vmem:[%s1734 + $0x90] sm:$0xf]
  %v1772 = vld [vmem:[%s1734 + $0x94] sm:$0xf]
  %v1773 = vld [vmem:[%s1734 + $0x98] sm:$0xf]
  %v1774 = vld [vmem:[%s1734 + $0x9c] sm:$0xf]
  %v1775 = vld [vmem:[%s1734 + $0xa0] sm:$0xf]
  %v1776 = vld [vmem:[%s1734 + $0xa4] sm:$0xf]
  %v1777 = vld [vmem:[%s1734 + $0xa8] sm:$0xf]
  %v1778 = vld [vmem:[%s1734 + $0xac] sm:$0xf]
  %v1779 = vld [vmem:[%s1734 + $0xb0] sm:$0xf]
  %v1780 = vld [vmem:[%s1734 + $0xb4] sm:$0xf]
  %v1781 = vld [vmem:[%s1734 + $0xb8] sm:$0xf]
  %v1782 = vld [vmem:[%s1734 + $0xbc] sm:$0xf]
  %v1783 = vld [vmem:[%s1734 + $0xc0] sm:$0xf]
  %s1784 = scalar_lea.vmem %s1, 64
  %v1785 = vld [vmem:[%s1784] sm:$0xf]
  %v1786 = vld [vmem:[%s1784 + $0x4] sm:$0xf]
  %v1787 = vld [vmem:[%s1784 + $0x8] sm:$0xf]
  %v1788 = vld [vmem:[%s1784 + $0xc] sm:$0xf]
  %v1789 = vld [vmem:[%s1784 + $0x10] sm:$0xf]
  %v1790 = vld [vmem:[%s1784 + $0x14] sm:$0xf]
  %v1791 = vld [vmem:[%s1784 + $0x18] sm:$0xf]
  %v1792 = vld [vmem:[%s1784 + $0x1c] sm:$0xf]
  %v1842 = vunpack.c.l.b16 %v1735
  %v1843 = vunpack.c.l.b16 %v1736
  %v1844 = vunpack.c.l.b16 %v1737
  %v1845 = vunpack.c.l.b16 %v1738
  %v1846 = vunpack.c.l.b16 %v1739
  %v1847 = vunpack.c.l.b16 %v1740
  %v1848 = vunpack.c.l.b16 %v1741
  %v1849 = vunpack.c.l.b16 %v1742
  %v1850 = vunpack.c.l.b16 %v1743
  %v1851 = vunpack.c.l.b16 %v1744
  %v1852 = vunpack.c.l.b16 %v1745
  %v1853 = vunpack.c.l.b16 %v1746
  %v1854 = vunpack.c.l.b16 %v1747
  %v1855 = vunpack.c.l.b16 %v1748
  %v1856 = vunpack.c.l.b16 %v1749
  %v1857 = vunpack.c.l.b16 %v1750
  %v1858 = vunpack.c.l.b16 %v1751
  %v1859 = vunpack.c.l.b16 %v1752
  %v1860 = vunpack.c.l.b16 %v1753
  %v1861 = vunpack.c.l.b16 %v1754
  %v1862 = vunpack.c.l.b16 %v1755
  %v1863 = vunpack.c.l.b16 %v1756
  %v1864 = vunpack.c.l.b16 %v1757
  %v1865 = vunpack.c.l.b16 %v1758
  %v1866 = vunpack.c.l.b16 %v1759
  %v1867 = vunpack.c.l.b16 %v1760
  %v1868 = vunpack.c.l.b16 %v1761
  %v1869 = vunpack.c.l.b16 %v1762
  %v1870 = vunpack.c.l.b16 %v1763
  %v1871 = vunpack.c.l.b16 %v1764
  %v1872 = vunpack.c.l.b16 %v1765
  %v1873 = vunpack.c.l.b16 %v1766
  %v1874 = vunpack.c.l.b16 %v1767
  %v1875 = vunpack.c.l.b16 %v1768
  %v1876 = vunpack.c.l.b16 %v1769
  %v1877 = vunpack.c.l.b16 %v1770
  %v1878 = vunpack.c.l.b16 %v1771
  %v1879 = vunpack.c.l.b16 %v1772
  %v1880 = vunpack.c.l.b16 %v1773
  %v1881 = vunpack.c.l.b16 %v1774
  %v1882 = vunpack.c.l.b16 %v1775
  %v1883 = vunpack.c.l.b16 %v1776
  %v1884 = vunpack.c.l.b16 %v1777
  %v1885 = vunpack.c.l.b16 %v1778
  %v1886 = vunpack.c.l.b16 %v1779
  %v1887 = vunpack.c.l.b16 %v1780
  %v1888 = vunpack.c.l.b16 %v1781
  %v1889 = vunpack.c.l.b16 %v1782
  %v1890 = vunpack.c.l.b16 %v1783
  %v1891 = vpack.c.b16 %v1843, %v1842
  %v1892 = vpack.c.b16 %v1845, %v1844
  %v1893 = vpack.c.b16 %v1847, %v1846
  %v1894 = vpack.c.b16 %v1849, %v1848
  %v1895 = vpack.c.b16 %v1851, %v1850
  %v1896 = vpack.c.b16 %v1853, %v1852
  %v1897 = vpack.c.b16 %v1855, %v1854
  %v1898 = vpack.c.b16 %v1857, %v1856
  %v1899 = vpack.c.b16 %v1859, %v1858
  %v1900 = vpack.c.b16 %v1861, %v1860
  %v1901 = vpack.c.b16 %v1863, %v1862
  %v1902 = vpack.c.b16 %v1865, %v1864
  %v1903 = vpack.c.b16 %v1867, %v1866
  %v1904 = vpack.c.b16 %v1869, %v1868
  %v1905 = vpack.c.b16 %v1871, %v1870
  %v1906 = vpack.c.b16 %v1873, %v1872
  %v1907 = vpack.c.b16 %v1875, %v1874
  %v1908 = vpack.c.b16 %v1877, %v1876
  %v1909 = vpack.c.b16 %v1879, %v1878
  %v1910 = vpack.c.b16 %v1881, %v1880
  %v1911 = vpack.c.b16 %v1883, %v1882
  %v1912 = vpack.c.b16 %v1885, %v1884
  %v1913 = vpack.c.b16 %v1887, %v1886
  %v1914 = vpack.c.b16 %v1889, %v1888
  %v1915 = vpack.c.b16 %v1890, %v1890
  %v1924 = vunpack.c.l.b16 %v1785
  %v1925 = vunpack.c.l.b16 %v1786
  %v1926 = vunpack.c.l.b16 %v1787
  %v1927 = vunpack.c.l.b16 %v1788
  %v1928 = vunpack.c.l.b16 %v1789
  %v1929 = vunpack.c.l.b16 %v1790
  %v1930 = vunpack.c.l.b16 %v1791
  %v1931 = vunpack.c.l.b16 %v1792
  %v1932 = vpack.c.b16 %v1925, %v1924
  %v1933 = vpack.c.b16 %v1927, %v1926
  %v1934 = vpack.c.b16 %v1929, %v1928
  %v1935 = vpack.c.b16 %v1931, %v1930
  %v1941 = vsel %vm226, %v1891, 0
  %v1944 = vsel %vm226, %v1892, 0
  %v1947 = vsel %vm226, %v1893, 0
  %v1950 = vsel %vm226, %v1894, 0
  %v1953 = vsel %vm226, %v1895, 0
  %v1956 = vsel %vm226, %v1896, 0
  %v1959 = vsel %vm226, %v1897, 0
  %v1962 = vsel %vm226, %v1898, 0
  %v1965 = vsel %vm226, %v1899, 0
  %v1968 = vsel %vm226, %v1900, 0
  %v1971 = vsel %vm226, %v1901, 0
  %v1974 = vsel %vm226, %v1902, 0
  %v1977 = vsel %vm226, %v1903, 0
  %v1980 = vsel %vm226, %v1904, 0
  %v1983 = vsel %vm226, %v1905, 0
  %v1986 = vsel %vm226, %v1906, 0
  %v1989 = vsel %vm226, %v1907, 0
  %v1992 = vsel %vm226, %v1908, 0
  %v1995 = vsel %vm226, %v1909, 0
  %v1998 = vsel %vm226, %v1910, 0
  %v2001 = vsel %vm226, %v1911, 0
  %v2004 = vsel %vm226, %v1912, 0
  %v2007 = vsel %vm226, %v1913, 0
  %v2010 = vsel %vm226, %v1914, 0
  %v2013 = vsel %vm226, %v1915, 0
  %2015 = vmatprep.subr.bf16.mxu0 0
  %2016 = vmatpush1.bf16.msra.mxu0 %v1932
  %2017 = vmatprep.subr.bf16.mxu0 0
  %2018 = vmatpush1.bf16.msra.mxu0 %v1933
  %2019 = vmatprep.subr.bf16.mxu0 0
  %2020 = vmatpush1.bf16.msra.mxu0 %v1934
  %2021 = vmatprep.subr.bf16.mxu0 0
  %2022 = vmatpush1.bf16.msra.mxu0 %v1935
  %2023 = vmatprep.subr.bf16.mxu0 0
  %2024 = vmatpush1.bf16.msra.mxu0 0
  %2025 = vmatprep.subr.bf16.mxu0 0
  %2026 = vmatpush1.bf16.msra.mxu0 0
  %2027 = vmatprep.subr.bf16.mxu0 0
  %2028 = vmatpush1.bf16.msra.mxu0 0
  %2029 = vmatprep.subr.bf16.mxu0 0
  %2030 = vmatpush1.bf16.msra.mxu0 0
  %2031 = vmatprep.subr.bf16.mxu0 0
  %2032 = vmatpush1.bf16.msra.mxu0 0
  %2033 = vmatprep.subr.bf16.mxu0 0
  %2034 = vmatpush1.bf16.msra.mxu0 0
  %2035 = vmatprep.subr.bf16.mxu0 0
  %2036 = vmatpush1.bf16.msra.mxu0 0
  %2037 = vmatprep.subr.bf16.mxu0 0
  %2038 = vmatpush1.bf16.msra.mxu0 0
  %2039 = vmatprep.subr.bf16.mxu0 0
  %2040 = vmatpush1.bf16.msra.mxu0 0
  %2041 = vmatprep.subr.bf16.mxu0 0
  %2042 = vmatpush1.bf16.msra.mxu0 0
  %2043 = vmatprep.subr.bf16.mxu0 0
  %2044 = vmatpush1.bf16.msra.mxu0 0
  %2045 = vmatprep.subr.bf16.mxu0 0
  %2046 = vmatpush1.bf16.msra.mxu0 0
  %2047 = vmatprep.mubr.bf16.mxu0 0
  %2048 = vmatmul.mubr.bf16.gmra.mrb[0].mxu0 %v1941
  %v2049 = vpop.f32.mrb[0].mxu0
  %v2050 = vadd.f32 %v77, %v2049
  %v2051 = vpop.f32.mrb[0].mxu0
  %v2052 = vpop.f32.mrb[0].mxu0
  %v2053 = vadd.f32 %v77, %v2052
  %v2054 = vpop.f32.mrb[0].mxu0
  %2055 = vmatprep.mubr.bf16.mxu0 0
  %2056 = vmatmul.mubr.bf16.gmra.mrb[0].mxu0 %v1944
  %v2057 = vpop.f32.mrb[0].mxu0
  %v2058 = vadd.f32 %v77, %v2057
  %v2059 = vpop.f32.mrb[0].mxu0
  %v2060 = vpop.f32.mrb[0].mxu0
  %v2061 = vadd.f32 %v77, %v2060
  %v2062 = vpop.f32.mrb[0].mxu0
  %2063 = vmatprep.mubr.bf16.mxu0 0
  %2064 = vmatmul.mubr.bf16.gmra.mrb[0].mxu0 %v1947
  %v2065 = vpop.f32.mrb[0].mxu0
  %v2066 = vadd.f32 %v77, %v2065
  %v2067 = vpop.f32.mrb[0].mxu0
  %v2068 = vpop.f32.mrb[0].mxu0
  %v2069 = vadd.f32 %v77, %v2068
  %v2070 = vpop.f32.mrb[0].mxu0
  %2071 = vmatprep.mubr.bf16.mxu0 0
  %2072 = vmatmul.mubr.bf16.gmra.mrb[0].mxu0 %v1950
  %v2073 = vpop.f32.mrb[0].mxu0
  %v2074 = vadd.f32 %v77, %v2073
  %v2075 = vpop.f32.mrb[0].mxu0
  %v2076 = vpop.f32.mrb[0].mxu0
  %v2077 = vadd.f32 %v77, %v2076
  %v2078 = vpop.f32.mrb[0].mxu0
  %2079 = vmatprep.mubr.bf16.mxu0 0
  %2080 = vmatmul.mubr.bf16.gmra.mrb[0].mxu0 %v1953
  %v2081 = vpop.f32.mrb[0].mxu0
  %v2082 = vadd.f32 %v77, %v2081
  %v2083 = vpop.f32.mrb[0].mxu0
  %v2084 = vpop.f32.mrb[0].mxu0
  %v2085 = vadd.f32 %v77, %v2084
  %v2086 = vpop.f32.mrb[0].mxu0
  %2087 = vmatprep.mubr.bf16.mxu0 0
  %2088 = vmatmul.mubr.bf16.gmra.mrb[0].mxu0 %v1956
  %v2089 = vpop.f32.mrb[0].mxu0
  %v2090 = vadd.f32 %v77, %v2089
  %v2091 = vpop.f32.mrb[0].mxu0
  %v2092 = vpop.f32.mrb[0].mxu0
  %v2093 = vadd.f32 %v77, %v2092
  %v2094 = vpop.f32.mrb[0].mxu0
  %2095 = vmatprep.mubr.bf16.mxu0 0
  %2096 = vmatmul.mubr.bf16.gmra.mrb[0].mxu0 %v1959
  %v2097 = vpop.f32.mrb[0].mxu0
  %v2098 = vadd.f32 %v77, %v2097
  %v2099 = vpop.f32.mrb[0].mxu0
  %v2100 = vpop.f32.mrb[0].mxu0
  %v2101 = vadd.f32 %v77, %v2100
  %v2102 = vpop.f32.mrb[0].mxu0
  %2103 = vmatprep.mubr.bf16.mxu0 0
  %2104 = vmatmul.mubr.bf16.gmra.mrb[0].mxu0 %v1962
  %v2105 = vpop.f32.mrb[0].mxu0
  %v2106 = vadd.f32 %v77, %v2105
  %v2107 = vpop.f32.mrb[0].mxu0
  %v2108 = vpop.f32.mrb[0].mxu0
  %v2109 = vadd.f32 %v77, %v2108
  %v2110 = vpop.f32.mrb[0].mxu0
  %2111 = vmatprep.mubr.bf16.mxu0 0
  %2112 = vmatmul.mubr.bf16.gmra.mrb[0].mxu0 %v1965
  %v2113 = vpop.f32.mrb[0].mxu0
  %v2114 = vadd.f32 %v77, %v2113
  %v2115 = vpop.f32.mrb[0].mxu0
  %v2116 = vpop.f32.mrb[0].mxu0
  %v2117 = vadd.f32 %v77, %v2116
  %v2118 = vpop.f32.mrb[0].mxu0
  %2119 = vmatprep.mubr.bf16.mxu0 0
  %2120 = vmatmul.mubr.bf16.gmra.mrb[0].mxu0 %v1968
  %v2121 = vpop.f32.mrb[0].mxu0
  %v2122 = vadd.f32 %v77, %v2121
  %v2123 = vpop.f32.mrb[0].mxu0
  %v2124 = vpop.f32.mrb[0].mxu0
  %v2125 = vadd.f32 %v77, %v2124
  %v2126 = vpop.f32.mrb[0].mxu0
  %2127 = vmatprep.mubr.bf16.mxu0 0
  %2128 = vmatmul.mubr.bf16.gmra.mrb[0].mxu0 %v1971
  %v2129 = vpop.f32.mrb[0].mxu0
  %v2130 = vadd.f32 %v77, %v2129
  %v2131 = vpop.f32.mrb[0].mxu0
  %v2132 = vpop.f32.mrb[0].mxu0
  %v2133 = vadd.f32 %v77, %v2132
  %v2134 = vpop.f32.mrb[0].mxu0
  %2135 = vmatprep.mubr.bf16.mxu0 0
  %2136 = vmatmul.mubr.bf16.gmra.mrb[0].mxu0 %v1974
  %v2137 = vpop.f32.mrb[0].mxu0
  %v2138 = vadd.f32 %v77, %v2137
  %v2139 = vpop.f32.mrb[0].mxu0
  %v2140 = vpop.f32.mrb[0].mxu0
  %v2141 = vadd.f32 %v77, %v2140
  %v2142 = vpop.f32.mrb[0].mxu0
  %2143 = vmatprep.mubr.bf16.mxu0 0
  %2144 = vmatmul.mubr.bf16.gmra.mrb[0].mxu0 %v1977
  %v2145 = vpop.f32.mrb[0].mxu0
  %v2146 = vadd.f32 %v77, %v2145
  %v2147 = vpop.f32.mrb[0].mxu0
  %v2148 = vpop.f32.mrb[0].mxu0
  %v2149 = vadd.f32 %v77, %v2148
  %v2150 = vpop.f32.mrb[0].mxu0
  %2151 = vmatprep.mubr.bf16.mxu0 0
  %2152 = vmatmul.mubr.bf16.gmra.mrb[0].mxu0 %v1980
  %v2153 = vpop.f32.mrb[0].mxu0
  %v2154 = vadd.f32 %v77, %v2153
  %v2155 = vpop.f32.mrb[0].mxu0
  %v2156 = vpop.f32.mrb[0].mxu0
  %v2157 = vadd.f32 %v77, %v2156
  %v2158 = vpop.f32.mrb[0].mxu0
  %2159 = vmatprep.mubr.bf16.mxu0 0
  %2160 = vmatmul.mubr.bf16.gmra.mrb[0].mxu0 %v1983
  %v2161 = vpop.f32.mrb[0].mxu0
  %v2162 = vadd.f32 %v77, %v2161
  %v2163 = vpop.f32.mrb[0].mxu0
  %v2164 = vpop.f32.mrb[0].mxu0
  %v2165 = vadd.f32 %v77, %v2164
  %v2166 = vpop.f32.mrb[0].mxu0
  %2167 = vmatprep.mubr.bf16.mxu0 0
  %2168 = vmatmul.mubr.bf16.gmra.mrb[0].mxu0 %v1986
  %v2169 = vpop.f32.mrb[0].mxu0
  %v2170 = vadd.f32 %v77, %v2169
  %v2171 = vpop.f32.mrb[0].mxu0
  %v2172 = vpop.f32.mrb[0].mxu0
  %v2173 = vadd.f32 %v77, %v2172
  %v2174 = vpop.f32.mrb[0].mxu0
  %2175 = vmatprep.mubr.bf16.mxu0 0
  %2176 = vmatmul.mubr.bf16.gmra.mrb[0].mxu0 %v1989
  %v2177 = vpop.f32.mrb[0].mxu0
  %v2178 = vadd.f32 %v77, %v2177
  %v2179 = vpop.f32.mrb[0].mxu0
  %v2180 = vpop.f32.mrb[0].mxu0
  %v2181 = vadd.f32 %v77, %v2180
  %v2182 = vpop.f32.mrb[0].mxu0
  %2183 = vmatprep.mubr.bf16.mxu0 0
  %2184 = vmatmul.mubr.bf16.gmra.mrb[0].mxu0 %v1992
  %v2185 = vpop.f32.mrb[0].mxu0
  %v2186 = vadd.f32 %v77, %v2185
  %v2187 = vpop.f32.mrb[0].mxu0
  %v2188 = vpop.f32.mrb[0].mxu0
  %v2189 = vadd.f32 %v77, %v2188
  %v2190 = vpop.f32.mrb[0].mxu0
  %2191 = vmatprep.mubr.bf16.mxu0 0
  %2192 = vmatmul.mubr.bf16.gmra.mrb[0].mxu0 %v1995
  %v2193 = vpop.f32.mrb[0].mxu0
  %v2194 = vadd.f32 %v77, %v2193
  %v2195 = vpop.f32.mrb[0].mxu0
  %v2196 = vpop.f32.mrb[0].mxu0
  %v2197 = vadd.f32 %v77, %v2196
  %v2198 = vpop.f32.mrb[0].mxu0
  %2199 = vmatprep.mubr.bf16.mxu0 0
  %2200 = vmatmul.mubr.bf16.gmra.mrb[0].mxu0 %v1998
  %v2201 = vpop.f32.mrb[0].mxu0
  %v2202 = vadd.f32 %v77, %v2201
  %v2203 = vpop.f32.mrb[0].mxu0
  %v2204 = vpop.f32.mrb[0].mxu0
  %v2205 = vadd.f32 %v77, %v2204
  %v2206 = vpop.f32.mrb[0].mxu0
  %2207 = vmatprep.mubr.bf16.mxu0 0
  %2208 = vmatmul.mubr.bf16.gmra.mrb[0].mxu0 %v2001
  %v2209 = vpop.f32.mrb[0].mxu0
  %v2210 = vadd.f32 %v77, %v2209
  %v2211 = vpop.f32.mrb[0].mxu0
  %v2212 = vpop.f32.mrb[0].mxu0
  %v2213 = vadd.f32 %v77, %v2212
  %v2214 = vpop.f32.mrb[0].mxu0
  %2215 = vmatprep.mubr.bf16.mxu0 0
  %2216 = vmatmul.mubr.bf16.gmra.mrb[0].mxu0 %v2004
  %v2217 = vpop.f32.mrb[0].mxu0
  %v2218 = vadd.f32 %v77, %v2217
  %v2219 = vpop.f32.mrb[0].mxu0
  %v2220 = vpop.f32.mrb[0].mxu0
  %v2221 = vadd.f32 %v77, %v2220
  %v2222 = vpop.f32.mrb[0].mxu0
  %2223 = vmatprep.mubr.bf16.mxu0 0
  %2224 = vmatmul.mubr.bf16.gmra.mrb[0].mxu0 %v2007
  %v2225 = vpop.f32.mrb[0].mxu0
  %v2226 = vadd.f32 %v77, %v2225
  %v2227 = vpop.f32.mrb[0].mxu0
  %v2228 = vpop.f32.mrb[0].mxu0
  %v2229 = vadd.f32 %v77, %v2228
  %v2230 = vpop.f32.mrb[0].mxu0
  %2231 = vmatprep.mubr.bf16.mxu0 0
  %2232 = vmatmul.mubr.bf16.gmra.mrb[0].mxu0 %v2010
  %v2233 = vpop.f32.mrb[0].mxu0
  %v2234 = vadd.f32 %v77, %v2233
  %v2235 = vpop.f32.mrb[0].mxu0
  %v2236 = vpop.f32.mrb[0].mxu0
  %v2237 = vadd.f32 %v77, %v2236
  %v2238 = vpop.f32.mrb[0].mxu0
  %2239 = vmatprep.mubr.bf16.mxu0 0
  %2240 = vmatmul.mubr.bf16.gmra.mrb[0].mxu0 %v2013
  %v2241 = vpop.f32.mrb[0].mxu0
  %v2242 = vadd.f32 %v77, %v2241
  %v2243 = vpop.f32.mrb[0].mxu0
  %v2244 = vpop.f32.mrb[0].mxu0
  %v2245 = vpop.f32.mrb[0].mxu0
  %2246 = vdwg.mxu0
  %v2247 = vxor.u32 %v2050, 2147483648
  %v2248 = vxor.u32 %v2053, 2147483648
  %v2249 = vxor.u32 %v2058, 2147483648
  %v2250 = vxor.u32 %v2061, 2147483648
  %v2251 = vxor.u32 %v2066, 2147483648
  %v2252 = vxor.u32 %v2069, 2147483648
  %v2253 = vxor.u32 %v2074, 2147483648
  %v2254 = vxor.u32 %v2077, 2147483648
  %v2255 = vxor.u32 %v2082, 2147483648
  %v2256 = vxor.u32 %v2085, 2147483648
  %v2257 = vxor.u32 %v2090, 2147483648
  %v2258 = vxor.u32 %v2093, 2147483648
  %v2259 = vxor.u32 %v2098, 2147483648
  %v2260 = vxor.u32 %v2101, 2147483648
  %v2261 = vxor.u32 %v2106, 2147483648
  %v2262 = vxor.u32 %v2109, 2147483648
  %v2263 = vxor.u32 %v2114, 2147483648
  %v2264 = vxor.u32 %v2117, 2147483648
  %v2265 = vxor.u32 %v2122, 2147483648
  %v2266 = vxor.u32 %v2125, 2147483648
  %v2267 = vxor.u32 %v2130, 2147483648
  %v2268 = vxor.u32 %v2133, 2147483648
  %v2269 = vxor.u32 %v2138, 2147483648
  %v2270 = vxor.u32 %v2141, 2147483648
  %v2271 = vxor.u32 %v2146, 2147483648
  %v2272 = vxor.u32 %v2149, 2147483648
  %v2273 = vxor.u32 %v2154, 2147483648
  %v2274 = vxor.u32 %v2157, 2147483648
  %v2275 = vxor.u32 %v2162, 2147483648
  %v2276 = vxor.u32 %v2165, 2147483648
  %v2277 = vxor.u32 %v2170, 2147483648
  %v2278 = vxor.u32 %v2173, 2147483648
  %v2279 = vxor.u32 %v2178, 2147483648
  %v2280 = vxor.u32 %v2181, 2147483648
  %v2281 = vxor.u32 %v2186, 2147483648
  %v2282 = vxor.u32 %v2189, 2147483648
  %v2283 = vxor.u32 %v2194, 2147483648
  %v2284 = vxor.u32 %v2197, 2147483648
  %v2285 = vxor.u32 %v2202, 2147483648
  %v2286 = vxor.u32 %v2205, 2147483648
  %v2287 = vxor.u32 %v2210, 2147483648
  %v2288 = vxor.u32 %v2213, 2147483648
  %v2289 = vxor.u32 %v2218, 2147483648
  %v2290 = vxor.u32 %v2221, 2147483648
  %v2291 = vxor.u32 %v2226, 2147483648
  %v2292 = vxor.u32 %v2229, 2147483648
  %v2293 = vxor.u32 %v2234, 2147483648
  %v2294 = vxor.u32 %v2237, 2147483648
  %v2295 = vxor.u32 %v2242, 2147483648
  %v2296 = vmul.f32 %v2247, 1.442695
  %v2297 = vpow.pop %v2296
  %v2298 = vmul.f32 %v2248, 1.442695
  %v2299 = vpow.pop %v2298
  %v2300 = vmul.f32 %v2249, 1.442695
  %v2301 = vpow.pop %v2300
  %v2302 = vmul.f32 %v2250, 1.442695
  %v2303 = vpow.pop %v2302
  %v2304 = vmul.f32 %v2251, 1.442695
  %v2305 = vpow.pop %v2304
  %v2306 = vmul.f32 %v2252, 1.442695
  %v2307 = vpow.pop %v2306
  %v2308 = vmul.f32 %v2253, 1.442695
  %v2309 = vpow.pop %v2308
  %v2310 = vmul.f32 %v2254, 1.442695
  %v2311 = vpow.pop %v2310
  %v2312 = vmul.f32 %v2255, 1.442695
  %v2313 = vpow.pop %v2312
  %v2314 = vmul.f32 %v2256, 1.442695
  %v2315 = vpow.pop %v2314
  %v2316 = vmul.f32 %v2257, 1.442695
  %v2317 = vpow.pop %v2316
  %v2318 = vmul.f32 %v2258, 1.442695
  %v2319 = vpow.pop %v2318
  %v2320 = vmul.f32 %v2259, 1.442695
  %v2321 = vpow.pop %v2320
  %v2322 = vmul.f32 %v2260, 1.442695
  %v2323 = vpow.pop %v2322
  %v2324 = vmul.f32 %v2261, 1.442695
  %v2325 = vpow.pop %v2324
  %v2326 = vmul.f32 %v2262, 1.442695
  %v2327 = vpow.pop %v2326
  %v2328 = vmul.f32 %v2263, 1.442695
  %v2329 = vpow.pop %v2328
  %v2330 = vmul.f32 %v2264, 1.442695
  %v2331 = vpow.pop %v2330
  %v2332 = vmul.f32 %v2265, 1.442695
  %v2333 = vpow.pop %v2332
  %v2334 = vmul.f32 %v2266, 1.442695
  %v2335 = vpow.pop %v2334
  %v2336 = vmul.f32 %v2267, 1.442695
  %v2337 = vpow.pop %v2336
  %v2338 = vmul.f32 %v2268, 1.442695
  %v2339 = vpow.pop %v2338
  %v2340 = vmul.f32 %v2269, 1.442695
  %v2341 = vpow.pop %v2340
  %v2342 = vmul.f32 %v2270, 1.442695
  %v2343 = vpow.pop %v2342
  %v2344 = vmul.f32 %v2271, 1.442695
  %v2345 = vpow.pop %v2344
  %v2346 = vmul.f32 %v2272, 1.442695
  %v2347 = vpow.pop %v2346
  %v2348 = vmul.f32 %v2273, 1.442695
  %v2349 = vpow.pop %v2348
  %v2350 = vmul.f32 %v2274, 1.442695
  %v2351 = vpow.pop %v2350
  %v2352 = vmul.f32 %v2275, 1.442695
  %v2353 = vpow.pop %v2352
  %v2354 = vmul.f32 %v2276, 1.442695
  %v2355 = vpow.pop %v2354
  %v2356 = vmul.f32 %v2277, 1.442695
  %v2357 = vpow.pop %v2356
  %v2358 = vmul.f32 %v2278, 1.442695
  %v2359 = vpow.pop %v2358
  %v2360 = vmul.f32 %v2279, 1.442695
  %v2361 = vpow.pop %v2360
  %v2362 = vmul.f32 %v2280, 1.442695
  %v2363 = vpow.pop %v2362
  %v2364 = vmul.f32 %v2281, 1.442695
  %v2365 = vpow.pop %v2364
  %v2366 = vmul.f32 %v2282, 1.442695
  %v2367 = vpow.pop %v2366
  %v2368 = vmul.f32 %v2283, 1.442695
  %v2369 = vpow.pop %v2368
  %v2370 = vmul.f32 %v2284, 1.442695
  %v2371 = vpow.pop %v2370
  %v2372 = vmul.f32 %v2285, 1.442695
  %v2373 = vpow.pop %v2372
  %v2374 = vmul.f32 %v2286, 1.442695
  %v2375 = vpow.pop %v2374
  %v2376 = vmul.f32 %v2287, 1.442695
  %v2377 = vpow.pop %v2376
  %v2378 = vmul.f32 %v2288, 1.442695
  %v2379 = vpow.pop %v2378
  %v2380 = vmul.f32 %v2289, 1.442695
  %v2381 = vpow.pop %v2380
  %v2382 = vmul.f32 %v2290, 1.442695
  %v2383 = vpow.pop %v2382
  %v2384 = vmul.f32 %v2291, 1.442695
  %v2385 = vpow.pop %v2384
  %v2386 = vmul.f32 %v2292, 1.442695
  %v2387 = vpow.pop %v2386
  %v2388 = vmul.f32 %v2293, 1.442695
  %v2389 = vpow.pop %v2388
  %v2390 = vmul.f32 %v2294, 1.442695
  %v2391 = vpow.pop %v2390
  %v2392 = vmul.f32 %v2295, 1.442695
  %v2393 = vpow.pop %v2392
  %v2394 = vadd.f32 %v2297, 1.0
  %v2395 = vadd.f32 %v2299, 1.0
  %v2396 = vadd.f32 %v2301, 1.0
  %v2397 = vadd.f32 %v2303, 1.0
  %v2398 = vadd.f32 %v2305, 1.0
  %v2399 = vadd.f32 %v2307, 1.0
  %v2400 = vadd.f32 %v2309, 1.0
  %v2401 = vadd.f32 %v2311, 1.0
  %v2402 = vadd.f32 %v2313, 1.0
  %v2403 = vadd.f32 %v2315, 1.0
  %v2404 = vadd.f32 %v2317, 1.0
  %v2405 = vadd.f32 %v2319, 1.0
  %v2406 = vadd.f32 %v2321, 1.0
  %v2407 = vadd.f32 %v2323, 1.0
  %v2408 = vadd.f32 %v2325, 1.0
  %v2409 = vadd.f32 %v2327, 1.0
  %v2410 = vadd.f32 %v2329, 1.0
  %v2411 = vadd.f32 %v2331, 1.0
  %v2412 = vadd.f32 %v2333, 1.0
  %v2413 = vadd.f32 %v2335, 1.0
  %v2414 = vadd.f32 %v2337, 1.0
  %v2415 = vadd.f32 %v2339, 1.0
  %v2416 = vadd.f32 %v2341, 1.0
  %v2417 = vadd.f32 %v2343, 1.0
  %v2418 = vadd.f32 %v2345, 1.0
  %v2419 = vadd.f32 %v2347, 1.0
  %v2420 = vadd.f32 %v2349, 1.0
  %v2421 = vadd.f32 %v2351, 1.0
  %v2422 = vadd.f32 %v2353, 1.0
  %v2423 = vadd.f32 %v2355, 1.0
  %v2424 = vadd.f32 %v2357, 1.0
  %v2425 = vadd.f32 %v2359, 1.0
  %v2426 = vadd.f32 %v2361, 1.0
  %v2427 = vadd.f32 %v2363, 1.0
  %v2428 = vadd.f32 %v2365, 1.0
  %v2429 = vadd.f32 %v2367, 1.0
  %v2430 = vadd.f32 %v2369, 1.0
  %v2431 = vadd.f32 %v2371, 1.0
  %v2432 = vadd.f32 %v2373, 1.0
  %v2433 = vadd.f32 %v2375, 1.0
  %v2434 = vadd.f32 %v2377, 1.0
  %v2435 = vadd.f32 %v2379, 1.0
  %v2436 = vadd.f32 %v2381, 1.0
  %v2437 = vadd.f32 %v2383, 1.0
  %v2438 = vadd.f32 %v2385, 1.0
  %v2439 = vadd.f32 %v2387, 1.0
  %v2440 = vadd.f32 %v2389, 1.0
  %v2441 = vadd.f32 %v2391, 1.0
  %v2442 = vadd.f32 %v2393, 1.0
  %v2443 = vrcp.pop %v2394
  %v2444 = vmul.f32 1.0, %v2443
  %v2445 = vrcp.pop %v2395
  %v2446 = vmul.f32 1.0, %v2445
  %v2447 = vrcp.pop %v2396
  %v2448 = vmul.f32 1.0, %v2447
  %v2449 = vrcp.pop %v2397
  %v2450 = vmul.f32 1.0, %v2449
  %v2451 = vrcp.pop %v2398
  %v2452 = vmul.f32 1.0, %v2451
  %v2453 = vrcp.pop %v2399
  %v2454 = vmul.f32 1.0, %v2453
  %v2455 = vrcp.pop %v2400
  %v2456 = vmul.f32 1.0, %v2455
  %v2457 = vrcp.pop %v2401
  %v2458 = vmul.f32 1.0, %v2457
  %v2459 = vrcp.pop %v2402
  %v2460 = vmul.f32 1.0, %v2459
  %v2461 = vrcp.pop %v2403
  %v2462 = vmul.f32 1.0, %v2461
  %v2463 = vrcp.pop %v2404
  %v2464 = vmul.f32 1.0, %v2463
  %v2465 = vrcp.pop %v2405
  %v2466 = vmul.f32 1.0, %v2465
  %v2467 = vrcp.pop %v2406
  %v2468 = vmul.f32 1.0, %v2467
  %v2469 = vrcp.pop %v2407
  %v2470 = vmul.f32 1.0, %v2469
  %v2471 = vrcp.pop %v2408
  %v2472 = vmul.f32 1.0, %v2471
  %v2473 = vrcp.pop %v2409
  %v2474 = vmul.f32 1.0, %v2473
  %v2475 = vrcp.pop %v2410
  %v2476 = vmul.f32 1.0, %v2475
  %v2477 = vrcp.pop %v2411
  %v2478 = vmul.f32 1.0, %v2477
  %v2479 = vrcp.pop %v2412
  %v2480 = vmul.f32 1.0, %v2479
  %v2481 = vrcp.pop %v2413
  %v2482 = vmul.f32 1.0, %v2481
  %v2483 = vrcp.pop %v2414
  %v2484 = vmul.f32 1.0, %v2483
  %v2485 = vrcp.pop %v2415
  %v2486 = vmul.f32 1.0, %v2485
  %v2487 = vrcp.pop %v2416
  %v2488 = vmul.f32 1.0, %v2487
  %v2489 = vrcp.pop %v2417
  %v2490 = vmul.f32 1.0, %v2489
  %v2491 = vrcp.pop %v2418
  %v2492 = vmul.f32 1.0, %v2491
  %v2493 = vrcp.pop %v2419
  %v2494 = vmul.f32 1.0, %v2493
  %v2495 = vrcp.pop %v2420
  %v2496 = vmul.f32 1.0, %v2495
  %v2497 = vrcp.pop %v2421
  %v2498 = vmul.f32 1.0, %v2497
  %v2499 = vrcp.pop %v2422
  %v2500 = vmul.f32 1.0, %v2499
  %v2501 = vrcp.pop %v2423
  %v2502 = vmul.f32 1.0, %v2501
  %v2503 = vrcp.pop %v2424
  %v2504 = vmul.f32 1.0, %v2503
  %v2505 = vrcp.pop %v2425
  %v2506 = vmul.f32 1.0, %v2505
  %v2507 = vrcp.pop %v2426
  %v2508 = vmul.f32 1.0, %v2507
  %v2509 = vrcp.pop %v2427
  %v2510 = vmul.f32 1.0, %v2509
  %v2511 = vrcp.pop %v2428
  %v2512 = vmul.f32 1.0, %v2511
  %v2513 = vrcp.pop %v2429
  %v2514 = vmul.f32 1.0, %v2513
  %v2515 = vrcp.pop %v2430
  %v2516 = vmul.f32 1.0, %v2515
  %v2517 = vrcp.pop %v2431
  %v2518 = vmul.f32 1.0, %v2517
  %v2519 = vrcp.pop %v2432
  %v2520 = vmul.f32 1.0, %v2519
  %v2521 = vrcp.pop %v2433
  %v2522 = vmul.f32 1.0, %v2521
  %v2523 = vrcp.pop %v2434
  %v2524 = vmul.f32 1.0, %v2523
  %v2525 = vrcp.pop %v2435
  %v2526 = vmul.f32 1.0, %v2525
  %v2527 = vrcp.pop %v2436
  %v2528 = vmul.f32 1.0, %v2527
  %v2529 = vrcp.pop %v2437
  %v2530 = vmul.f32 1.0, %v2529
  %v2531 = vrcp.pop %v2438
  %v2532 = vmul.f32 1.0, %v2531
  %v2533 = vrcp.pop %v2439
  %v2534 = vmul.f32 1.0, %v2533
  %v2535 = vrcp.pop %v2440
  %v2536 = vmul.f32 1.0, %v2535
  %v2537 = vrcp.pop %v2441
  %v2538 = vmul.f32 1.0, %v2537
  %v2539 = vrcp.pop %v2442
  %v2540 = vmul.f32 1.0, %v2539
  %s2541 = scalar_lea.vmem %s3, 784
  %2542 = vst [vmem:[%s2541] sm:$0xff] %v2444
  %2543 = vst [vmem:[%s2541 + $0x8] sm:$0xff] %v2446
  %2544 = vst [vmem:[%s2541 + $0x10] sm:$0xff] %v2448
  %2545 = vst [vmem:[%s2541 + $0x18] sm:$0xff] %v2450
  %2546 = vst [vmem:[%s2541 + $0x20] sm:$0xff] %v2452
  %2547 = vst [vmem:[%s2541 + $0x28] sm:$0xff] %v2454
  %2548 = vst [vmem:[%s2541 + $0x30] sm:$0xff] %v2456
  %2549 = vst [vmem:[%s2541 + $0x38] sm:$0xff] %v2458
  %2550 = vst [vmem:[%s2541 + $0x40] sm:$0xff] %v2460
  %2551 = vst [vmem:[%s2541 + $0x48] sm:$0xff] %v2462
  %2552 = vst [vmem:[%s2541 + $0x50] sm:$0xff] %v2464
  %2553 = vst [vmem:[%s2541 + $0x58] sm:$0xff] %v2466
  %2554 = vst [vmem:[%s2541 + $0x60] sm:$0xff] %v2468
  %2555 = vst [vmem:[%s2541 + $0x68] sm:$0xff] %v2470
  %2556 = vst [vmem:[%s2541 + $0x70] sm:$0xff] %v2472
  %2557 = vst [vmem:[%s2541 + $0x78] sm:$0xff] %v2474
  %2558 = vst [vmem:[%s2541 + $0x80] sm:$0xff] %v2476
  %2559 = vst [vmem:[%s2541 + $0x88] sm:$0xff] %v2478
  %2560 = vst [vmem:[%s2541 + $0x90] sm:$0xff] %v2480
  %2561 = vst [vmem:[%s2541 + $0x98] sm:$0xff] %v2482
  %2562 = vst [vmem:[%s2541 + $0xa0] sm:$0xff] %v2484
  %2563 = vst [vmem:[%s2541 + $0xa8] sm:$0xff] %v2486
  %2564 = vst [vmem:[%s2541 + $0xb0] sm:$0xff] %v2488
  %2565 = vst [vmem:[%s2541 + $0xb8] sm:$0xff] %v2490
  %2566 = vst [vmem:[%s2541 + $0xc0] sm:$0xff] %v2492
  %2567 = vst [vmem:[%s2541 + $0xc8] sm:$0xff] %v2494
  %2568 = vst [vmem:[%s2541 + $0xd0] sm:$0xff] %v2496
  %2569 = vst [vmem:[%s2541 + $0xd8] sm:$0xff] %v2498
  %2570 = vst [vmem:[%s2541 + $0xe0] sm:$0xff] %v2500
  %2571 = vst [vmem:[%s2541 + $0xe8] sm:$0xff] %v2502
  %2572 = vst [vmem:[%s2541 + $0xf0] sm:$0xff] %v2504
  %2573 = vst [vmem:[%s2541 + $0xf8] sm:$0xff] %v2506
  %2574 = vst [vmem:[%s2541 + $0x100] sm:$0xff] %v2508
  %2575 = vst [vmem:[%s2541 + $0x108] sm:$0xff] %v2510
  %2576 = vst [vmem:[%s2541 + $0x110] sm:$0xff] %v2512
  %2577 = vst [vmem:[%s2541 + $0x118] sm:$0xff] %v2514
  %2578 = vst [vmem:[%s2541 + $0x120] sm:$0xff] %v2516
  %2579 = vst [vmem:[%s2541 + $0x128] sm:$0xff] %v2518
  %2580 = vst [vmem:[%s2541 + $0x130] sm:$0xff] %v2520
  %2581 = vst [vmem:[%s2541 + $0x138] sm:$0xff] %v2522
  %2582 = vst [vmem:[%s2541 + $0x140] sm:$0xff] %v2524
  %2583 = vst [vmem:[%s2541 + $0x148] sm:$0xff] %v2526
  %2584 = vst [vmem:[%s2541 + $0x150] sm:$0xff] %v2528
  %2585 = vst [vmem:[%s2541 + $0x158] sm:$0xff] %v2530
  %2586 = vst [vmem:[%s2541 + $0x160] sm:$0xff] %v2532
  %2587 = vst [vmem:[%s2541 + $0x168] sm:$0xff] %v2534
  %2588 = vst [vmem:[%s2541 + $0x170] sm:$0xff] %v2536
  %2589 = vst [vmem:[%s2541 + $0x178] sm:$0xff] %v2538
  %2590 = vst [vmem:[%s2541 + $0x180] sm:$0xff] %v2540
  %s2591 = scalar_lea.vmem %s0, 588
  %v2592 = vld [vmem:[%s2591] sm:$0xf]
  %v2593 = vld [vmem:[%s2591 + $0x4] sm:$0xf]
  %v2594 = vld [vmem:[%s2591 + $0x8] sm:$0xf]
  %v2595 = vld [vmem:[%s2591 + $0xc] sm:$0xf]
  %v2596 = vld [vmem:[%s2591 + $0x10] sm:$0xf]
  %v2597 = vld [vmem:[%s2591 + $0x14] sm:$0xf]
  %v2598 = vld [vmem:[%s2591 + $0x18] sm:$0xf]
  %v2599 = vld [vmem:[%s2591 + $0x1c] sm:$0xf]
  %v2600 = vld [vmem:[%s2591 + $0x20] sm:$0xf]
  %v2601 = vld [vmem:[%s2591 + $0x24] sm:$0xf]
  %v2602 = vld [vmem:[%s2591 + $0x28] sm:$0xf]
  %v2603 = vld [vmem:[%s2591 + $0x2c] sm:$0xf]
  %v2604 = vld [vmem:[%s2591 + $0x30] sm:$0xf]
  %v2605 = vld [vmem:[%s2591 + $0x34] sm:$0xf]
  %v2606 = vld [vmem:[%s2591 + $0x38] sm:$0xf]
  %v2607 = vld [vmem:[%s2591 + $0x3c] sm:$0xf]
  %v2608 = vld [vmem:[%s2591 + $0x40] sm:$0xf]
  %v2609 = vld [vmem:[%s2591 + $0x44] sm:$0xf]
  %v2610 = vld [vmem:[%s2591 + $0x48] sm:$0xf]
  %v2611 = vld [vmem:[%s2591 + $0x4c] sm:$0xf]
  %v2612 = vld [vmem:[%s2591 + $0x50] sm:$0xf]
  %v2613 = vld [vmem:[%s2591 + $0x54] sm:$0xf]
  %v2614 = vld [vmem:[%s2591 + $0x58] sm:$0xf]
  %v2615 = vld [vmem:[%s2591 + $0x5c] sm:$0xf]
  %v2616 = vld [vmem:[%s2591 + $0x60] sm:$0xf]
  %v2617 = vld [vmem:[%s2591 + $0x64] sm:$0xf]
  %v2618 = vld [vmem:[%s2591 + $0x68] sm:$0xf]
  %v2619 = vld [vmem:[%s2591 + $0x6c] sm:$0xf]
  %v2620 = vld [vmem:[%s2591 + $0x70] sm:$0xf]
  %v2621 = vld [vmem:[%s2591 + $0x74] sm:$0xf]
  %v2622 = vld [vmem:[%s2591 + $0x78] sm:$0xf]
  %v2623 = vld [vmem:[%s2591 + $0x7c] sm:$0xf]
  %v2624 = vld [vmem:[%s2591 + $0x80] sm:$0xf]
  %v2625 = vld [vmem:[%s2591 + $0x84] sm:$0xf]
  %v2626 = vld [vmem:[%s2591 + $0x88] sm:$0xf]
  %v2627 = vld [vmem:[%s2591 + $0x8c] sm:$0xf]
  %v2628 = vld [vmem:[%s2591 + $0x90] sm:$0xf]
  %v2629 = vld [vmem:[%s2591 + $0x94] sm:$0xf]
  %v2630 = vld [vmem:[%s2591 + $0x98] sm:$0xf]
  %v2631 = vld [vmem:[%s2591 + $0x9c] sm:$0xf]
  %v2632 = vld [vmem:[%s2591 + $0xa0] sm:$0xf]
  %v2633 = vld [vmem:[%s2591 + $0xa4] sm:$0xf]
  %v2634 = vld [vmem:[%s2591 + $0xa8] sm:$0xf]
  %v2635 = vld [vmem:[%s2591 + $0xac] sm:$0xf]
  %v2636 = vld [vmem:[%s2591 + $0xb0] sm:$0xf]
  %v2637 = vld [vmem:[%s2591 + $0xb4] sm:$0xf]
  %v2638 = vld [vmem:[%s2591 + $0xb8] sm:$0xf]
  %v2639 = vld [vmem:[%s2591 + $0xbc] sm:$0xf]
  %v2640 = vld [vmem:[%s2591 + $0xc0] sm:$0xf]
  %s2641 = scalar_lea.vmem %s1, 96
  %v2642 = vld [vmem:[%s2641] sm:$0xf]
  %v2643 = vld [vmem:[%s2641 + $0x4] sm:$0xf]
  %v2644 = vld [vmem:[%s2641 + $0x8] sm:$0xf]
  %v2645 = vld [vmem:[%s2641 + $0xc] sm:$0xf]
  %v2646 = vld [vmem:[%s2641 + $0x10] sm:$0xf]
  %v2647 = vld [vmem:[%s2641 + $0x14] sm:$0xf]
  %v2648 = vld [vmem:[%s2641 + $0x18] sm:$0xf]
  %v2649 = vld [vmem:[%s2641 + $0x1c] sm:$0xf]
  %v2699 = vunpack.c.l.b16 %v2592
  %v2700 = vunpack.c.l.b16 %v2593
  %v2701 = vunpack.c.l.b16 %v2594
  %v2702 = vunpack.c.l.b16 %v2595
  %v2703 = vunpack.c.l.b16 %v2596
  %v2704 = vunpack.c.l.b16 %v2597
  %v2705 = vunpack.c.l.b16 %v2598
  %v2706 = vunpack.c.l.b16 %v2599
  %v2707 = vunpack.c.l.b16 %v2600
  %v2708 = vunpack.c.l.b16 %v2601
  %v2709 = vunpack.c.l.b16 %v2602
  %v2710 = vunpack.c.l.b16 %v2603
  %v2711 = vunpack.c.l.b16 %v2604
  %v2712 = vunpack.c.l.b16 %v2605
  %v2713 = vunpack.c.l.b16 %v2606
  %v2714 = vunpack.c.l.b16 %v2607
  %v2715 = vunpack.c.l.b16 %v2608
  %v2716 = vunpack.c.l.b16 %v2609
  %v2717 = vunpack.c.l.b16 %v2610
  %v2718 = vunpack.c.l.b16 %v2611
  %v2719 = vunpack.c.l.b16 %v2612
  %v2720 = vunpack.c.l.b16 %v2613
  %v2721 = vunpack.c.l.b16 %v2614
  %v2722 = vunpack.c.l.b16 %v2615
  %v2723 = vunpack.c.l.b16 %v2616
  %v2724 = vunpack.c.l.b16 %v2617
  %v2725 = vunpack.c.l.b16 %v2618
  %v2726 = vunpack.c.l.b16 %v2619
  %v2727 = vunpack.c.l.b16 %v2620
  %v2728 = vunpack.c.l.b16 %v2621
  %v2729 = vunpack.c.l.b16 %v2622
  %v2730 = vunpack.c.l.b16 %v2623
  %v2731 = vunpack.c.l.b16 %v2624
  %v2732 = vunpack.c.l.b16 %v2625
  %v2733 = vunpack.c.l.b16 %v2626
  %v2734 = vunpack.c.l.b16 %v2627
  %v2735 = vunpack.c.l.b16 %v2628
  %v2736 = vunpack.c.l.b16 %v2629
  %v2737 = vunpack.c.l.b16 %v2630
  %v2738 = vunpack.c.l.b16 %v2631
  %v2739 = vunpack.c.l.b16 %v2632
  %v2740 = vunpack.c.l.b16 %v2633
  %v2741 = vunpack.c.l.b16 %v2634
  %v2742 = vunpack.c.l.b16 %v2635
  %v2743 = vunpack.c.l.b16 %v2636
  %v2744 = vunpack.c.l.b16 %v2637
  %v2745 = vunpack.c.l.b16 %v2638
  %v2746 = vunpack.c.l.b16 %v2639
  %v2747 = vunpack.c.l.b16 %v2640
  %v2748 = vpack.c.b16 %v2700, %v2699
  %v2749 = vpack.c.b16 %v2702, %v2701
  %v2750 = vpack.c.b16 %v2704, %v2703
  %v2751 = vpack.c.b16 %v2706, %v2705
  %v2752 = vpack.c.b16 %v2708, %v2707
  %v2753 = vpack.c.b16 %v2710, %v2709
  %v2754 = vpack.c.b16 %v2712, %v2711
  %v2755 = vpack.c.b16 %v2714, %v2713
  %v2756 = vpack.c.b16 %v2716, %v2715
  %v2757 = vpack.c.b16 %v2718, %v2717
  %v2758 = vpack.c.b16 %v2720, %v2719
  %v2759 = vpack.c.b16 %v2722, %v2721
  %v2760 = vpack.c.b16 %v2724, %v2723
  %v2761 = vpack.c.b16 %v2726, %v2725
  %v2762 = vpack.c.b16 %v2728, %v2727
  %v2763 = vpack.c.b16 %v2730, %v2729
  %v2764 = vpack.c.b16 %v2732, %v2731
  %v2765 = vpack.c.b16 %v2734, %v2733
  %v2766 = vpack.c.b16 %v2736, %v2735
  %v2767 = vpack.c.b16 %v2738, %v2737
  %v2768 = vpack.c.b16 %v2740, %v2739
  %v2769 = vpack.c.b16 %v2742, %v2741
  %v2770 = vpack.c.b16 %v2744, %v2743
  %v2771 = vpack.c.b16 %v2746, %v2745
  %v2772 = vpack.c.b16 %v2747, %v2747
  %v2781 = vunpack.c.l.b16 %v2642
  %v2782 = vunpack.c.l.b16 %v2643
  %v2783 = vunpack.c.l.b16 %v2644
  %v2784 = vunpack.c.l.b16 %v2645
  %v2785 = vunpack.c.l.b16 %v2646
  %v2786 = vunpack.c.l.b16 %v2647
  %v2787 = vunpack.c.l.b16 %v2648
  %v2788 = vunpack.c.l.b16 %v2649
  %v2789 = vpack.c.b16 %v2782, %v2781
  %v2790 = vpack.c.b16 %v2784, %v2783
  %v2791 = vpack.c.b16 %v2786, %v2785
  %v2792 = vpack.c.b16 %v2788, %v2787
  %v2798 = vsel %vm226, %v2748, 0
  %v2801 = vsel %vm226, %v2749, 0
  %v2804 = vsel %vm226, %v2750, 0
  %v2807 = vsel %vm226, %v2751, 0
  %v2810 = vsel %vm226, %v2752, 0
  %v2813 = vsel %vm226, %v2753, 0
  %v2816 = vsel %vm226, %v2754, 0
  %v2819 = vsel %vm226, %v2755, 0
  %v2822 = vsel %vm226, %v2756, 0
  %v2825 = vsel %vm226, %v2757, 0
  %v2828 = vsel %vm226, %v2758, 0
  %v2831 = vsel %vm226, %v2759, 0
  %v2834 = vsel %vm226, %v2760, 0
  %v2837 = vsel %vm226, %v2761, 0
  %v2840 = vsel %vm226, %v2762, 0
  %v2843 = vsel %vm226, %v2763, 0
  %v2846 = vsel %vm226, %v2764, 0
  %v2849 = vsel %vm226, %v2765, 0
  %v2852 = vsel %vm226, %v2766, 0
  %v2855 = vsel %vm226, %v2767, 0
  %v2858 = vsel %vm226, %v2768, 0
  %v2861 = vsel %vm226, %v2769, 0
  %v2864 = vsel %vm226, %v2770, 0
  %v2867 = vsel %vm226, %v2771, 0
  %v2870 = vsel %vm226, %v2772, 0
  %2872 = vmatprep.subr.bf16.mxu0 0
  %2873 = vmatpush1.bf16.msra.mxu0 %v2789
  %2874 = vmatprep.subr.bf16.mxu0 0
  %2875 = vmatpush1.bf16.msra.mxu0 %v2790
  %2876 = vmatprep.subr.bf16.mxu0 0
  %2877 = vmatpush1.bf16.msra.mxu0 %v2791
  %2878 = vmatprep.subr.bf16.mxu0 0
  %2879 = vmatpush1.bf16.msra.mxu0 %v2792
  %2880 = vmatprep.subr.bf16.mxu0 0
  %2881 = vmatpush1.bf16.msra.mxu0 0
  %2882 = vmatprep.subr.bf16.mxu0 0
  %2883 = vmatpush1.bf16.msra.mxu0 0
  %2884 = vmatprep.subr.bf16.mxu0 0
  %2885 = vmatpush1.bf16.msra.mxu0 0
  %2886 = vmatprep.subr.bf16.mxu0 0
  %2887 = vmatpush1.bf16.msra.mxu0 0
  %2888 = vmatprep.subr.bf16.mxu0 0
  %2889 = vmatpush1.bf16.msra.mxu0 0
  %2890 = vmatprep.subr.bf16.mxu0 0
  %2891 = vmatpush1.bf16.msra.mxu0 0
  %2892 = vmatprep.subr.bf16.mxu0 0
  %2893 = vmatpush1.bf16.msra.mxu0 0
  %2894 = vmatprep.subr.bf16.mxu0 0
  %2895 = vmatpush1.bf16.msra.mxu0 0
  %2896 = vmatprep.subr.bf16.mxu0 0
  %2897 = vmatpush1.bf16.msra.mxu0 0
  %2898 = vmatprep.subr.bf16.mxu0 0
  %2899 = vmatpush1.bf16.msra.mxu0 0
  %2900 = vmatprep.subr.bf16.mxu0 0
  %2901 = vmatpush1.bf16.msra.mxu0 0
  %2902 = vmatprep.subr.bf16.mxu0 0
  %2903 = vmatpush1.bf16.msra.mxu0 0
  %2904 = vmatprep.mubr.bf16.mxu0 0
  %2905 = vmatmul.mubr.bf16.gmra.mrb[0].mxu0 %v2798
  %v2906 = vpop.f32.mrb[0].mxu0
  %v2907 = vadd.f32 %v77, %v2906
  %v2908 = vpop.f32.mrb[0].mxu0
  %v2909 = vpop.f32.mrb[0].mxu0
  %v2910 = vadd.f32 %v77, %v2909
  %v2911 = vpop.f32.mrb[0].mxu0
  %2912 = vmatprep.mubr.bf16.mxu0 0
  %2913 = vmatmul.mubr.bf16.gmra.mrb[0].mxu0 %v2801
  %v2914 = vpop.f32.mrb[0].mxu0
  %v2915 = vadd.f32 %v77, %v2914
  %v2916 = vpop.f32.mrb[0].mxu0
  %v2917 = vpop.f32.mrb[0].mxu0
  %v2918 = vadd.f32 %v77, %v2917
  %v2919 = vpop.f32.mrb[0].mxu0
  %2920 = vmatprep.mubr.bf16.mxu0 0
  %2921 = vmatmul.mubr.bf16.gmra.mrb[0].mxu0 %v2804
  %v2922 = vpop.f32.mrb[0].mxu0
  %v2923 = vadd.f32 %v77, %v2922
  %v2924 = vpop.f32.mrb[0].mxu0
  %v2925 = vpop.f32.mrb[0].mxu0
  %v2926 = vadd.f32 %v77, %v2925
  %v2927 = vpop.f32.mrb[0].mxu0
  %2928 = vmatprep.mubr.bf16.mxu0 0
  %2929 = vmatmul.mubr.bf16.gmra.mrb[0].mxu0 %v2807
  %v2930 = vpop.f32.mrb[0].mxu0
  %v2931 = vadd.f32 %v77, %v2930
  %v2932 = vpop.f32.mrb[0].mxu0
  %v2933 = vpop.f32.mrb[0].mxu0
  %v2934 = vadd.f32 %v77, %v2933
  %v2935 = vpop.f32.mrb[0].mxu0
  %2936 = vmatprep.mubr.bf16.mxu0 0
  %2937 = vmatmul.mubr.bf16.gmra.mrb[0].mxu0 %v2810
  %v2938 = vpop.f32.mrb[0].mxu0
  %v2939 = vadd.f32 %v77, %v2938
  %v2940 = vpop.f32.mrb[0].mxu0
  %v2941 = vpop.f32.mrb[0].mxu0
  %v2942 = vadd.f32 %v77, %v2941
  %v2943 = vpop.f32.mrb[0].mxu0
  %2944 = vmatprep.mubr.bf16.mxu0 0
  %2945 = vmatmul.mubr.bf16.gmra.mrb[0].mxu0 %v2813
  %v2946 = vpop.f32.mrb[0].mxu0
  %v2947 = vadd.f32 %v77, %v2946
  %v2948 = vpop.f32.mrb[0].mxu0
  %v2949 = vpop.f32.mrb[0].mxu0
  %v2950 = vadd.f32 %v77, %v2949
  %v2951 = vpop.f32.mrb[0].mxu0
  %2952 = vmatprep.mubr.bf16.mxu0 0
  %2953 = vmatmul.mubr.bf16.gmra.mrb[0].mxu0 %v2816
  %v2954 = vpop.f32.mrb[0].mxu0
  %v2955 = vadd.f32 %v77, %v2954
  %v2956 = vpop.f32.mrb[0].mxu0
  %v2957 = vpop.f32.mrb[0].mxu0
  %v2958 = vadd.f32 %v77, %v2957
  %v2959 = vpop.f32.mrb[0].mxu0
  %2960 = vmatprep.mubr.bf16.mxu0 0
  %2961 = vmatmul.mubr.bf16.gmra.mrb[0].mxu0 %v2819
  %v2962 = vpop.f32.mrb[0].mxu0
  %v2963 = vadd.f32 %v77, %v2962
  %v2964 = vpop.f32.mrb[0].mxu0
  %v2965 = vpop.f32.mrb[0].mxu0
  %v2966 = vadd.f32 %v77, %v2965
  %v2967 = vpop.f32.mrb[0].mxu0
  %2968 = vmatprep.mubr.bf16.mxu0 0
  %2969 = vmatmul.mubr.bf16.gmra.mrb[0].mxu0 %v2822
  %v2970 = vpop.f32.mrb[0].mxu0
  %v2971 = vadd.f32 %v77, %v2970
  %v2972 = vpop.f32.mrb[0].mxu0
  %v2973 = vpop.f32.mrb[0].mxu0
  %v2974 = vadd.f32 %v77, %v2973
  %v2975 = vpop.f32.mrb[0].mxu0
  %2976 = vmatprep.mubr.bf16.mxu0 0
  %2977 = vmatmul.mubr.bf16.gmra.mrb[0].mxu0 %v2825
  %v2978 = vpop.f32.mrb[0].mxu0
  %v2979 = vadd.f32 %v77, %v2978
  %v2980 = vpop.f32.mrb[0].mxu0
  %v2981 = vpop.f32.mrb[0].mxu0
  %v2982 = vadd.f32 %v77, %v2981
  %v2983 = vpop.f32.mrb[0].mxu0
  %2984 = vmatprep.mubr.bf16.mxu0 0
  %2985 = vmatmul.mubr.bf16.gmra.mrb[0].mxu0 %v2828
  %v2986 = vpop.f32.mrb[0].mxu0
  %v2987 = vadd.f32 %v77, %v2986
  %v2988 = vpop.f32.mrb[0].mxu0
  %v2989 = vpop.f32.mrb[0].mxu0
  %v2990 = vadd.f32 %v77, %v2989
  %v2991 = vpop.f32.mrb[0].mxu0
  %2992 = vmatprep.mubr.bf16.mxu0 0
  %2993 = vmatmul.mubr.bf16.gmra.mrb[0].mxu0 %v2831
  %v2994 = vpop.f32.mrb[0].mxu0
  %v2995 = vadd.f32 %v77, %v2994
  %v2996 = vpop.f32.mrb[0].mxu0
  %v2997 = vpop.f32.mrb[0].mxu0
  %v2998 = vadd.f32 %v77, %v2997
  %v2999 = vpop.f32.mrb[0].mxu0
  %3000 = vmatprep.mubr.bf16.mxu0 0
  %3001 = vmatmul.mubr.bf16.gmra.mrb[0].mxu0 %v2834
  %v3002 = vpop.f32.mrb[0].mxu0
  %v3003 = vadd.f32 %v77, %v3002
  %v3004 = vpop.f32.mrb[0].mxu0
  %v3005 = vpop.f32.mrb[0].mxu0
  %v3006 = vadd.f32 %v77, %v3005
  %v3007 = vpop.f32.mrb[0].mxu0
  %3008 = vmatprep.mubr.bf16.mxu0 0
  %3009 = vmatmul.mubr.bf16.gmra.mrb[0].mxu0 %v2837
  %v3010 = vpop.f32.mrb[0].mxu0
  %v3011 = vadd.f32 %v77, %v3010
  %v3012 = vpop.f32.mrb[0].mxu0
  %v3013 = vpop.f32.mrb[0].mxu0
  %v3014 = vadd.f32 %v77, %v3013
  %v3015 = vpop.f32.mrb[0].mxu0
  %3016 = vmatprep.mubr.bf16.mxu0 0
  %3017 = vmatmul.mubr.bf16.gmra.mrb[0].mxu0 %v2840
  %v3018 = vpop.f32.mrb[0].mxu0
  %v3019 = vadd.f32 %v77, %v3018
  %v3020 = vpop.f32.mrb[0].mxu0
  %v3021 = vpop.f32.mrb[0].mxu0
  %v3022 = vadd.f32 %v77, %v3021
  %v3023 = vpop.f32.mrb[0].mxu0
  %3024 = vmatprep.mubr.bf16.mxu0 0
  %3025 = vmatmul.mubr.bf16.gmra.mrb[0].mxu0 %v2843
  %v3026 = vpop.f32.mrb[0].mxu0
  %v3027 = vadd.f32 %v77, %v3026
  %v3028 = vpop.f32.mrb[0].mxu0
  %v3029 = vpop.f32.mrb[0].mxu0
  %v3030 = vadd.f32 %v77, %v3029
  %v3031 = vpop.f32.mrb[0].mxu0
  %3032 = vmatprep.mubr.bf16.mxu0 0
  %3033 = vmatmul.mubr.bf16.gmra.mrb[0].mxu0 %v2846
  %v3034 = vpop.f32.mrb[0].mxu0
  %v3035 = vadd.f32 %v77, %v3034
  %v3036 = vpop.f32.mrb[0].mxu0
  %v3037 = vpop.f32.mrb[0].mxu0
  %v3038 = vadd.f32 %v77, %v3037
  %v3039 = vpop.f32.mrb[0].mxu0
  %3040 = vmatprep.mubr.bf16.mxu0 0
  %3041 = vmatmul.mubr.bf16.gmra.mrb[0].mxu0 %v2849
  %v3042 = vpop.f32.mrb[0].mxu0
  %v3043 = vadd.f32 %v77, %v3042
  %v3044 = vpop.f32.mrb[0].mxu0
  %v3045 = vpop.f32.mrb[0].mxu0
  %v3046 = vadd.f32 %v77, %v3045
  %v3047 = vpop.f32.mrb[0].mxu0
  %3048 = vmatprep.mubr.bf16.mxu0 0
  %3049 = vmatmul.mubr.bf16.gmra.mrb[0].mxu0 %v2852
  %v3050 = vpop.f32.mrb[0].mxu0
  %v3051 = vadd.f32 %v77, %v3050
  %v3052 = vpop.f32.mrb[0].mxu0
  %v3053 = vpop.f32.mrb[0].mxu0
  %v3054 = vadd.f32 %v77, %v3053
  %v3055 = vpop.f32.mrb[0].mxu0
  %3056 = vmatprep.mubr.bf16.mxu0 0
  %3057 = vmatmul.mubr.bf16.gmra.mrb[0].mxu0 %v2855
  %v3058 = vpop.f32.mrb[0].mxu0
  %v3059 = vadd.f32 %v77, %v3058
  %v3060 = vpop.f32.mrb[0].mxu0
  %v3061 = vpop.f32.mrb[0].mxu0
  %v3062 = vadd.f32 %v77, %v3061
  %v3063 = vpop.f32.mrb[0].mxu0
  %3064 = vmatprep.mubr.bf16.mxu0 0
  %3065 = vmatmul.mubr.bf16.gmra.mrb[0].mxu0 %v2858
  %v3066 = vpop.f32.mrb[0].mxu0
  %v3067 = vadd.f32 %v77, %v3066
  %v3068 = vpop.f32.mrb[0].mxu0
  %v3069 = vpop.f32.mrb[0].mxu0
  %v3070 = vadd.f32 %v77, %v3069
  %v3071 = vpop.f32.mrb[0].mxu0
  %3072 = vmatprep.mubr.bf16.mxu0 0
  %3073 = vmatmul.mubr.bf16.gmra.mrb[0].mxu0 %v2861
  %v3074 = vpop.f32.mrb[0].mxu0
  %v3075 = vadd.f32 %v77, %v3074
  %v3076 = vpop.f32.mrb[0].mxu0
  %v3077 = vpop.f32.mrb[0].mxu0
  %v3078 = vadd.f32 %v77, %v3077
  %v3079 = vpop.f32.mrb[0].mxu0
  %3080 = vmatprep.mubr.bf16.mxu0 0
  %3081 = vmatmul.mubr.bf16.gmra.mrb[0].mxu0 %v2864
  %v3082 = vpop.f32.mrb[0].mxu0
  %v3083 = vadd.f32 %v77, %v3082
  %v3084 = vpop.f32.mrb[0].mxu0
  %v3085 = vpop.f32.mrb[0].mxu0
  %v3086 = vadd.f32 %v77, %v3085
  %v3087 = vpop.f32.mrb[0].mxu0
  %3088 = vmatprep.mubr.bf16.mxu0 0
  %3089 = vmatmul.mubr.bf16.gmra.mrb[0].mxu0 %v2867
  %v3090 = vpop.f32.mrb[0].mxu0
  %v3091 = vadd.f32 %v77, %v3090
  %v3092 = vpop.f32.mrb[0].mxu0
  %v3093 = vpop.f32.mrb[0].mxu0
  %v3094 = vadd.f32 %v77, %v3093
  %v3095 = vpop.f32.mrb[0].mxu0
  %3096 = vmatprep.mubr.bf16.mxu0 0
  %3097 = vmatmul.mubr.bf16.gmra.mrb[0].mxu0 %v2870
  %v3098 = vpop.f32.mrb[0].mxu0
  %v3099 = vadd.f32 %v77, %v3098
  %v3100 = vpop.f32.mrb[0].mxu0
  %v3101 = vpop.f32.mrb[0].mxu0
  %v3102 = vpop.f32.mrb[0].mxu0
  %3103 = vdwg.mxu0
  %v3104 = vxor.u32 %v2907, 2147483648
  %v3105 = vxor.u32 %v2910, 2147483648
  %v3106 = vxor.u32 %v2915, 2147483648
  %v3107 = vxor.u32 %v2918, 2147483648
  %v3108 = vxor.u32 %v2923, 2147483648
  %v3109 = vxor.u32 %v2926, 2147483648
  %v3110 = vxor.u32 %v2931, 2147483648
  %v3111 = vxor.u32 %v2934, 2147483648
  %v3112 = vxor.u32 %v2939, 2147483648
  %v3113 = vxor.u32 %v2942, 2147483648
  %v3114 = vxor.u32 %v2947, 2147483648
  %v3115 = vxor.u32 %v2950, 2147483648
  %v3116 = vxor.u32 %v2955, 2147483648
  %v3117 = vxor.u32 %v2958, 2147483648
  %v3118 = vxor.u32 %v2963, 2147483648
  %v3119 = vxor.u32 %v2966, 2147483648
  %v3120 = vxor.u32 %v2971, 2147483648
  %v3121 = vxor.u32 %v2974, 2147483648
  %v3122 = vxor.u32 %v2979, 2147483648
  %v3123 = vxor.u32 %v2982, 2147483648
  %v3124 = vxor.u32 %v2987, 2147483648
  %v3125 = vxor.u32 %v2990, 2147483648
  %v3126 = vxor.u32 %v2995, 2147483648
  %v3127 = vxor.u32 %v2998, 2147483648
  %v3128 = vxor.u32 %v3003, 2147483648
  %v3129 = vxor.u32 %v3006, 2147483648
  %v3130 = vxor.u32 %v3011, 2147483648
  %v3131 = vxor.u32 %v3014, 2147483648
  %v3132 = vxor.u32 %v3019, 2147483648
  %v3133 = vxor.u32 %v3022, 2147483648
  %v3134 = vxor.u32 %v3027, 2147483648
  %v3135 = vxor.u32 %v3030, 2147483648
  %v3136 = vxor.u32 %v3035, 2147483648
  %v3137 = vxor.u32 %v3038, 2147483648
  %v3138 = vxor.u32 %v3043, 2147483648
  %v3139 = vxor.u32 %v3046, 2147483648
  %v3140 = vxor.u32 %v3051, 2147483648
  %v3141 = vxor.u32 %v3054, 2147483648
  %v3142 = vxor.u32 %v3059, 2147483648
  %v3143 = vxor.u32 %v3062, 2147483648
  %v3144 = vxor.u32 %v3067, 2147483648
  %v3145 = vxor.u32 %v3070, 2147483648
  %v3146 = vxor.u32 %v3075, 2147483648
  %v3147 = vxor.u32 %v3078, 2147483648
  %v3148 = vxor.u32 %v3083, 2147483648
  %v3149 = vxor.u32 %v3086, 2147483648
  %v3150 = vxor.u32 %v3091, 2147483648
  %v3151 = vxor.u32 %v3094, 2147483648
  %v3152 = vxor.u32 %v3099, 2147483648
  %v3153 = vmul.f32 %v3104, 1.442695
  %v3154 = vpow.pop %v3153
  %v3155 = vmul.f32 %v3105, 1.442695
  %v3156 = vpow.pop %v3155
  %v3157 = vmul.f32 %v3106, 1.442695
  %v3158 = vpow.pop %v3157
  %v3159 = vmul.f32 %v3107, 1.442695
  %v3160 = vpow.pop %v3159
  %v3161 = vmul.f32 %v3108, 1.442695
  %v3162 = vpow.pop %v3161
  %v3163 = vmul.f32 %v3109, 1.442695
  %v3164 = vpow.pop %v3163
  %v3165 = vmul.f32 %v3110, 1.442695
  %v3166 = vpow.pop %v3165
  %v3167 = vmul.f32 %v3111, 1.442695
  %v3168 = vpow.pop %v3167
  %v3169 = vmul.f32 %v3112, 1.442695
  %v3170 = vpow.pop %v3169
  %v3171 = vmul.f32 %v3113, 1.442695
  %v3172 = vpow.pop %v3171
  %v3173 = vmul.f32 %v3114, 1.442695
  %v3174 = vpow.pop %v3173
  %v3175 = vmul.f32 %v3115, 1.442695
  %v3176 = vpow.pop %v3175
  %v3177 = vmul.f32 %v3116, 1.442695
  %v3178 = vpow.pop %v3177
  %v3179 = vmul.f32 %v3117, 1.442695
  %v3180 = vpow.pop %v3179
  %v3181 = vmul.f32 %v3118, 1.442695
  %v3182 = vpow.pop %v3181
  %v3183 = vmul.f32 %v3119, 1.442695
  %v3184 = vpow.pop %v3183
  %v3185 = vmul.f32 %v3120, 1.442695
  %v3186 = vpow.pop %v3185
  %v3187 = vmul.f32 %v3121, 1.442695
  %v3188 = vpow.pop %v3187
  %v3189 = vmul.f32 %v3122, 1.442695
  %v3190 = vpow.pop %v3189
  %v3191 = vmul.f32 %v3123, 1.442695
  %v3192 = vpow.pop %v3191
  %v3193 = vmul.f32 %v3124, 1.442695
  %v3194 = vpow.pop %v3193
  %v3195 = vmul.f32 %v3125, 1.442695
  %v3196 = vpow.pop %v3195
  %v3197 = vmul.f32 %v3126, 1.442695
  %v3198 = vpow.pop %v3197
  %v3199 = vmul.f32 %v3127, 1.442695
  %v3200 = vpow.pop %v3199
  %v3201 = vmul.f32 %v3128, 1.442695
  %v3202 = vpow.pop %v3201
  %v3203 = vmul.f32 %v3129, 1.442695
  %v3204 = vpow.pop %v3203
  %v3205 = vmul.f32 %v3130, 1.442695
  %v3206 = vpow.pop %v3205
  %v3207 = vmul.f32 %v3131, 1.442695
  %v3208 = vpow.pop %v3207
  %v3209 = vmul.f32 %v3132, 1.442695
  %v3210 = vpow.pop %v3209
  %v3211 = vmul.f32 %v3133, 1.442695
  %v3212 = vpow.pop %v3211
  %v3213 = vmul.f32 %v3134, 1.442695
  %v3214 = vpow.pop %v3213
  %v3215 = vmul.f32 %v3135, 1.442695
  %v3216 = vpow.pop %v3215
  %v3217 = vmul.f32 %v3136, 1.442695
  %v3218 = vpow.pop %v3217
  %v3219 = vmul.f32 %v3137, 1.442695
  %v3220 = vpow.pop %v3219
  %v3221 = vmul.f32 %v3138, 1.442695
  %v3222 = vpow.pop %v3221
  %v3223 = vmul.f32 %v3139, 1.442695
  %v3224 = vpow.pop %v3223
  %v3225 = vmul.f32 %v3140, 1.442695
  %v3226 = vpow.pop %v3225
  %v3227 = vmul.f32 %v3141, 1.442695
  %v3228 = vpow.pop %v3227
  %v3229 = vmul.f32 %v3142, 1.442695
  %v3230 = vpow.pop %v3229
  %v3231 = vmul.f32 %v3143, 1.442695
  %v3232 = vpow.pop %v3231
  %v3233 = vmul.f32 %v3144, 1.442695
  %v3234 = vpow.pop %v3233
  %v3235 = vmul.f32 %v3145, 1.442695
  %v3236 = vpow.pop %v3235
  %v3237 = vmul.f32 %v3146, 1.442695
  %v3238 = vpow.pop %v3237
  %v3239 = vmul.f32 %v3147, 1.442695
  %v3240 = vpow.pop %v3239
  %v3241 = vmul.f32 %v3148, 1.442695
  %v3242 = vpow.pop %v3241
  %v3243 = vmul.f32 %v3149, 1.442695
  %v3244 = vpow.pop %v3243
  %v3245 = vmul.f32 %v3150, 1.442695
  %v3246 = vpow.pop %v3245
  %v3247 = vmul.f32 %v3151, 1.442695
  %v3248 = vpow.pop %v3247
  %v3249 = vmul.f32 %v3152, 1.442695
  %v3250 = vpow.pop %v3249
  %v3251 = vadd.f32 %v3154, 1.0
  %v3252 = vadd.f32 %v3156, 1.0
  %v3253 = vadd.f32 %v3158, 1.0
  %v3254 = vadd.f32 %v3160, 1.0
  %v3255 = vadd.f32 %v3162, 1.0
  %v3256 = vadd.f32 %v3164, 1.0
  %v3257 = vadd.f32 %v3166, 1.0
  %v3258 = vadd.f32 %v3168, 1.0
  %v3259 = vadd.f32 %v3170, 1.0
  %v3260 = vadd.f32 %v3172, 1.0
  %v3261 = vadd.f32 %v3174, 1.0
  %v3262 = vadd.f32 %v3176, 1.0
  %v3263 = vadd.f32 %v3178, 1.0
  %v3264 = vadd.f32 %v3180, 1.0
  %v3265 = vadd.f32 %v3182, 1.0
  %v3266 = vadd.f32 %v3184, 1.0
  %v3267 = vadd.f32 %v3186, 1.0
  %v3268 = vadd.f32 %v3188, 1.0
  %v3269 = vadd.f32 %v3190, 1.0
  %v3270 = vadd.f32 %v3192, 1.0
  %v3271 = vadd.f32 %v3194, 1.0
  %v3272 = vadd.f32 %v3196, 1.0
  %v3273 = vadd.f32 %v3198, 1.0
  %v3274 = vadd.f32 %v3200, 1.0
  %v3275 = vadd.f32 %v3202, 1.0
  %v3276 = vadd.f32 %v3204, 1.0
  %v3277 = vadd.f32 %v3206, 1.0
  %v3278 = vadd.f32 %v3208, 1.0
  %v3279 = vadd.f32 %v3210, 1.0
  %v3280 = vadd.f32 %v3212, 1.0
  %v3281 = vadd.f32 %v3214, 1.0
  %v3282 = vadd.f32 %v3216, 1.0
  %v3283 = vadd.f32 %v3218, 1.0
  %v3284 = vadd.f32 %v3220, 1.0
  %v3285 = vadd.f32 %v3222, 1.0
  %v3286 = vadd.f32 %v3224, 1.0
  %v3287 = vadd.f32 %v3226, 1.0
  %v3288 = vadd.f32 %v3228, 1.0
  %v3289 = vadd.f32 %v3230, 1.0
  %v3290 = vadd.f32 %v3232, 1.0
  %v3291 = vadd.f32 %v3234, 1.0
  %v3292 = vadd.f32 %v3236, 1.0
  %v3293 = vadd.f32 %v3238, 1.0
  %v3294 = vadd.f32 %v3240, 1.0
  %v3295 = vadd.f32 %v3242, 1.0
  %v3296 = vadd.f32 %v3244, 1.0
  %v3297 = vadd.f32 %v3246, 1.0
  %v3298 = vadd.f32 %v3248, 1.0
  %v3299 = vadd.f32 %v3250, 1.0
  %v3300 = vrcp.pop %v3251
  %v3301 = vmul.f32 1.0, %v3300
  %v3302 = vrcp.pop %v3252
  %v3303 = vmul.f32 1.0, %v3302
  %v3304 = vrcp.pop %v3253
  %v3305 = vmul.f32 1.0, %v3304
  %v3306 = vrcp.pop %v3254
  %v3307 = vmul.f32 1.0, %v3306
  %v3308 = vrcp.pop %v3255
  %v3309 = vmul.f32 1.0, %v3308
  %v3310 = vrcp.pop %v3256
  %v3311 = vmul.f32 1.0, %v3310
  %v3312 = vrcp.pop %v3257
  %v3313 = vmul.f32 1.0, %v3312
  %v3314 = vrcp.pop %v3258
  %v3315 = vmul.f32 1.0, %v3314
  %v3316 = vrcp.pop %v3259
  %v3317 = vmul.f32 1.0, %v3316
  %v3318 = vrcp.pop %v3260
  %v3319 = vmul.f32 1.0, %v3318
  %v3320 = vrcp.pop %v3261
  %v3321 = vmul.f32 1.0, %v3320
  %v3322 = vrcp.pop %v3262
  %v3323 = vmul.f32 1.0, %v3322
  %v3324 = vrcp.pop %v3263
  %v3325 = vmul.f32 1.0, %v3324
  %v3326 = vrcp.pop %v3264
  %v3327 = vmul.f32 1.0, %v3326
  %v3328 = vrcp.pop %v3265
  %v3329 = vmul.f32 1.0, %v3328
  %v3330 = vrcp.pop %v3266
  %v3331 = vmul.f32 1.0, %v3330
  %v3332 = vrcp.pop %v3267
  %v3333 = vmul.f32 1.0, %v3332
  %v3334 = vrcp.pop %v3268
  %v3335 = vmul.f32 1.0, %v3334
  %v3336 = vrcp.pop %v3269
  %v3337 = vmul.f32 1.0, %v3336
  %v3338 = vrcp.pop %v3270
  %v3339 = vmul.f32 1.0, %v3338
  %v3340 = vrcp.pop %v3271
  %v3341 = vmul.f32 1.0, %v3340
  %v3342 = vrcp.pop %v3272
  %v3343 = vmul.f32 1.0, %v3342
  %v3344 = vrcp.pop %v3273
  %v3345 = vmul.f32 1.0, %v3344
  %v3346 = vrcp.pop %v3274
  %v3347 = vmul.f32 1.0, %v3346
  %v3348 = vrcp.pop %v3275
  %v3349 = vmul.f32 1.0, %v3348
  %v3350 = vrcp.pop %v3276
  %v3351 = vmul.f32 1.0, %v3350
  %v3352 = vrcp.pop %v3277
  %v3353 = vmul.f32 1.0, %v3352
  %v3354 = vrcp.pop %v3278
  %v3355 = vmul.f32 1.0, %v3354
  %v3356 = vrcp.pop %v3279
  %v3357 = vmul.f32 1.0, %v3356
  %v3358 = vrcp.pop %v3280
  %v3359 = vmul.f32 1.0, %v3358
  %v3360 = vrcp.pop %v3281
  %v3361 = vmul.f32 1.0, %v3360
  %v3362 = vrcp.pop %v3282
  %v3363 = vmul.f32 1.0, %v3362
  %v3364 = vrcp.pop %v3283
  %v3365 = vmul.f32 1.0, %v3364
  %v3366 = vrcp.pop %v3284
  %v3367 = vmul.f32 1.0, %v3366
  %v3368 = vrcp.pop %v3285
  %v3369 = vmul.f32 1.0, %v3368
  %v3370 = vrcp.pop %v3286
  %v3371 = vmul.f32 1.0, %v3370
  %v3372 = vrcp.pop %v3287
  %v3373 = vmul.f32 1.0, %v3372
  %v3374 = vrcp.pop %v3288
  %v3375 = vmul.f32 1.0, %v3374
  %v3376 = vrcp.pop %v3289
  %v3377 = vmul.f32 1.0, %v3376
  %v3378 = vrcp.pop %v3290
  %v3379 = vmul.f32 1.0, %v3378
  %v3380 = vrcp.pop %v3291
  %v3381 = vmul.f32 1.0, %v3380
  %v3382 = vrcp.pop %v3292
  %v3383 = vmul.f32 1.0, %v3382
  %v3384 = vrcp.pop %v3293
  %v3385 = vmul.f32 1.0, %v3384
  %v3386 = vrcp.pop %v3294
  %v3387 = vmul.f32 1.0, %v3386
  %v3388 = vrcp.pop %v3295
  %v3389 = vmul.f32 1.0, %v3388
  %v3390 = vrcp.pop %v3296
  %v3391 = vmul.f32 1.0, %v3390
  %v3392 = vrcp.pop %v3297
  %v3393 = vmul.f32 1.0, %v3392
  %v3394 = vrcp.pop %v3298
  %v3395 = vmul.f32 1.0, %v3394
  %v3396 = vrcp.pop %v3299
  %v3397 = vmul.f32 1.0, %v3396
  %s3398 = scalar_lea.vmem %s3, 1176
  %3399 = vst [vmem:[%s3398] sm:$0xff] %v3301
  %3400 = vst [vmem:[%s3398 + $0x8] sm:$0xff] %v3303
  %3401 = vst [vmem:[%s3398 + $0x10] sm:$0xff] %v3305
  %3402 = vst [vmem:[%s3398 + $0x18] sm:$0xff] %v3307
  %3403 = vst [vmem:[%s3398 + $0x20] sm:$0xff] %v3309
  %3404 = vst [vmem:[%s3398 + $0x28] sm:$0xff] %v3311
  %3405 = vst [vmem:[%s3398 + $0x30] sm:$0xff] %v3313
  %3406 = vst [vmem:[%s3398 + $0x38] sm:$0xff] %v3315
  %3407 = vst [vmem:[%s3398 + $0x40] sm:$0xff] %v3317
  %3408 = vst [vmem:[%s3398 + $0x48] sm:$0xff] %v3319
  %3409 = vst [vmem:[%s3398 + $0x50] sm:$0xff] %v3321
  %3410 = vst [vmem:[%s3398 + $0x58] sm:$0xff] %v3323
  %3411 = vst [vmem:[%s3398 + $0x60] sm:$0xff] %v3325
  %3412 = vst [vmem:[%s3398 + $0x68] sm:$0xff] %v3327
  %3413 = vst [vmem:[%s3398 + $0x70] sm:$0xff] %v3329
  %3414 = vst [vmem:[%s3398 + $0x78] sm:$0xff] %v3331
  %3415 = vst [vmem:[%s3398 + $0x80] sm:$0xff] %v3333
  %3416 = vst [vmem:[%s3398 + $0x88] sm:$0xff] %v3335
  %3417 = vst [vmem:[%s3398 + $0x90] sm:$0xff] %v3337
  %3418 = vst [vmem:[%s3398 + $0x98] sm:$0xff] %v3339
  %3419 = vst [vmem:[%s3398 + $0xa0] sm:$0xff] %v3341
  %3420 = vst [vmem:[%s3398 + $0xa8] sm:$0xff] %v3343
  %3421 = vst [vmem:[%s3398 + $0xb0] sm:$0xff] %v3345
  %3422 = vst [vmem:[%s3398 + $0xb8] sm:$0xff] %v3347
  %3423 = vst [vmem:[%s3398 + $0xc0] sm:$0xff] %v3349
  %3424 = vst [vmem:[%s3398 + $0xc8] sm:$0xff] %v3351
  %3425 = vst [vmem:[%s3398 + $0xd0] sm:$0xff] %v3353
  %3426 = vst [vmem:[%s3398 + $0xd8] sm:$0xff] %v3355
  %3427 = vst [vmem:[%s3398 + $0xe0] sm:$0xff] %v3357
  %3428 = vst [vmem:[%s3398 + $0xe8] sm:$0xff] %v3359
  %3429 = vst [vmem:[%s3398 + $0xf0] sm:$0xff] %v3361
  %3430 = vst [vmem:[%s3398 + $0xf8] sm:$0xff] %v3363
  %3431 = vst [vmem:[%s3398 + $0x100] sm:$0xff] %v3365
  %3432 = vst [vmem:[%s3398 + $0x108] sm:$0xff] %v3367
  %3433 = vst [vmem:[%s3398 + $0x110] sm:$0xff] %v3369
  %3434 = vst [vmem:[%s3398 + $0x118] sm:$0xff] %v3371
  %3435 = vst [vmem:[%s3398 + $0x120] sm:$0xff] %v3373
  %3436 = vst [vmem:[%s3398 + $0x128] sm:$0xff] %v3375
  %3437 = vst [vmem:[%s3398 + $0x130] sm:$0xff] %v3377
  %3438 = vst [vmem:[%s3398 + $0x138] sm:$0xff] %v3379
  %3439 = vst [vmem:[%s3398 + $0x140] sm:$0xff] %v3381
  %3440 = vst [vmem:[%s3398 + $0x148] sm:$0xff] %v3383
  %3441 = vst [vmem:[%s3398 + $0x150] sm:$0xff] %v3385
  %3442 = vst [vmem:[%s3398 + $0x158] sm:$0xff] %v3387
  %3443 = vst [vmem:[%s3398 + $0x160] sm:$0xff] %v3389
  %3444 = vst [vmem:[%s3398 + $0x168] sm:$0xff] %v3391
  %3445 = vst [vmem:[%s3398 + $0x170] sm:$0xff] %v3393
  %3446 = vst [vmem:[%s3398 + $0x178] sm:$0xff] %v3395
  %3447 = vst [vmem:[%s3398 + $0x180] sm:$0xff] %v3397
  // Predicated region
  $region14: #{generator_forward.7} parent=0 // pred_check
    _
  $region15: #{generator_forward.7} parent=0 // pred_check_branch
    %3449 = sbr.rel (0) target = $region17
  $region16: #{generator_forward.7} parent=0 // pred_region
    _
  $region17: #{generator_forward.7} parent=0 // pred_fallthru
    _
  // Predicated region
  $region18: #{generator_forward.7} parent=0 // pred_check
    _
  $region19: #{generator_forward.7} parent=0 // pred_check_branch
    %3451 = sbr.rel (0) target = $region21
  $region20: #{generator_forward.7} parent=0 // pred_region
    _
  $region21: #{generator_forward.7} parent=0 // pred_fallthru
    _

</llo_original>
